<compile_context>
chip_gen: v7x
topology: tpu7x:2x2x1
jax: 0.10.0
libtpu: 0.0.40
codegen_flags: <defaults>
</compile_context>

<pallas_src>
import jax
import jax.numpy as jnp
from jax.experimental import pallas as pl
from jax.experimental.pallas import tpu as pltpu

# ---- small, shape-consistent config (module constants scaled down) ----
EMBED_SIZE = 16           # nn.Embedding(vocab, EMBED_SIZE)
HIDDEN_SIZE = 32          # total hidden (both directions)
NUM_DIRS = 2              # bidirectional
NUM_LAYERS = 2
PAD_IDX = 0
H_DIR = HIDDEN_SIZE // NUM_DIRS    # per-direction hidden size (16)

VOCAB_SIZE = 50
NUM_TAGS = 8
BATCH = 16
SEQ = 8

LANES = 128               # one vreg lane group: all 4 gates (64 lanes) + pad
GATES = 4 * H_DIR         # 64 real gate lanes (i|f|g|o)


def _num_batch_blocks():
    """2 batch blocks only where a chip has 2 TensorCores (v7x); else 1."""
    try:
        kind = jax.devices()[0].device_kind.lower()
    except Exception:
        return 1
    return 2 if ("v7" in kind or "tpu7" in kind or "tpu v7" in kind) else 1


NB = _num_batch_blocks()
B_BLK = BATCH // NB       # 16 (v5e/v6e) or 8 (v7x) rows per block


# --------------------------------------------------------------------------
# Fused kernel: embed-output -> 2-layer BiLSTM -> Linear -> * mask
# --------------------------------------------------------------------------
def _bilstm_fused_kernel(x_ref, len_ref,
                         w0f_ih, w0b_ih, w1f_ih, w1b_ih,
                         w0f_hh, w0b_hh, w1f_hh, w1b_hh, w_out,
                         b0f, b0b, b1f, b1b, b_out,
                         o_ref,
                         xg0f, xg0b, xg1f, xg1b, l0_ref, hid_ref):
    T, Bb, _ = x_ref.shape
    f32 = jnp.float32
    bf16 = jnp.bfloat16

    # Lane-broadcast sequence lengths; per-step masks are recomputed in-loop
    # (one VALU compare) instead of pinning T mask vregs live.
    len_b = len_ref[...]                                    # (Bb, LANES) f32

    def input_gates(inp2d_bf16, w_ih_ref, b_ref, out_ref):
        # Hoisted input->gate projection for a whole layer & direction:
        # one MXU-friendly (T*Bb, K) @ (K, 128) bf16 matmul, bias folded in.
        g = (jnp.dot(inp2d_bf16, w_ih_ref[...], preferred_element_type=f32)
             + b_ref[...])
        out_ref[...] = g.reshape(T, Bb, LANES)

    def cell(xg_t, h, c, w_hh_ref):
        # Dependent per-step work only: z = xg[t] + h @ W_hh (K = N = 128).
        # Gate layout inside the 128-lane slab: i|f|g|o at k*H (k=0..3), with
        # f/g/o mirrored at 128-k*H so roll-by-k*H aligns gate k onto the
        # state lanes [0, H) regardless of rotate-direction convention.
        z = xg_t + jnp.dot(h.astype(bf16), w_hh_ref[...],
                           preferred_element_type=f32)      # (Bb, LANES) f32
        s = jax.nn.sigmoid(z)                               # i, f, o
        tg = jnp.tanh(z)                                    # g
        f_al = pltpu.roll(s, H_DIR, axis=1)                 # f -> lanes [0, H)
        g_al = pltpu.roll(tg, 2 * H_DIR, axis=1)            # g -> lanes [0, H)
        o_al = pltpu.roll(s, 3 * H_DIR, axis=1)             # o -> lanes [0, H)
        c_n = f_al * c + s * g_al                           # i already aligned
        h_n = o_al * jnp.tanh(c_n)
        # Lanes >= H carry bounded garbage (|c| grows <= +1/step, |h| <= 1);
        # every consumer weight has zero rows there, so it never contributes.
        return h_n, c_n

    # ---- hoisted layer-0 input projections (one matmul per direction) ----
    x2d = x_ref[...].reshape(T * Bb, LANES).astype(bf16)
    input_gates(x2d, w0f_ih, b0f, xg0f)
    input_gates(x2d, w0b_ih, b0b, xg0b)

    zst = jnp.zeros((Bb, LANES), f32)

    # ---- layer 0 recurrence: fully unrolled, both directions per step ----
    h_f = zst; c_f = zst; h_b = zst; c_b = zst
    for t in range(T):
        tb = T - 1 - t
        m_f = len_b > float(t)
        m_b = len_b > float(tb)

        hn, cn = cell(xg0f[t], h_f, c_f, w0f_hh)
        h_f = jnp.where(m_f, hn, h_f)          # packed-seq: freeze state at pads
        c_f = jnp.where(m_f, cn, c_f)
        l0_ref[t, :, 0:LANES] = h_f            # pad positions never consumed

        hn, cn = cell(xg0b[tb], h_b, c_b, w0b_hh)
        h_b = jnp.where(m_b, hn, h_b)
        c_b = jnp.where(m_b, cn, c_b)
        l0_ref[tb, :, LANES:2 * LANES] = h_b

    # TODO(synk): inter-layer dropout (p=0.5, training-only) intentionally omitted.

    # ---- hoisted layer-1 input projections ----
    l0_2d = l0_ref[...].reshape(T * Bb, 2 * LANES).astype(bf16)
    input_gates(l0_2d, w1f_ih, b1f, xg1f)
    input_gates(l0_2d, w1b_ih, b1b, xg1b)

    # ---- layer 1 recurrence ----
    h_f = zst; c_f = zst; h_b = zst; c_b = zst
    for t in range(T):
        tb = T - 1 - t
        m_f = len_b > float(t)
        m_b = len_b > float(tb)

        hn, cn = cell(xg1f[t], h_f, c_f, w1f_hh)
        h_f = jnp.where(m_f, hn, h_f)
        c_f = jnp.where(m_f, cn, c_f)
        hid_ref[t, :, 0:LANES] = h_f

        hn, cn = cell(xg1b[tb], h_b, c_b, w1b_hh)
        h_b = jnp.where(m_b, hn, h_b)
        c_b = jnp.where(m_b, cn, c_b)
        hid_ref[tb, :, LANES:2 * LANES] = h_b

    # ---- output projection: one (T*Bb, 256) @ (256, 128) matmul, + bias,
    #      then mask the result (lane-dense 128-wide store; XLA slices to 8) --
    hid2d = hid_ref[...].reshape(T * Bb, 2 * LANES).astype(bf16)
    proj = (jnp.dot(hid2d, w_out[...], preferred_element_type=f32)
            + b_out[...]).reshape(T, Bb, LANES)
    for t in range(T):
        o_ref[t] = jnp.where(len_b > float(t), proj[t], 0.0)


# --------------------------------------------------------------------------
# Weight packing (compact gate slab, mirrored f/g/o columns, bf16 operands).
# Gate/column order is i, f, g, o (PyTorch order; real checkpoints would need
# W transposed to (in, 4H) and b_ih + b_hh summed).
# --------------------------------------------------------------------------
def _to_gate_slab(w_small):
    """(rows, 4*H_DIR) -> (rows, LANES): gates i|f|g|o at lanes [k*H, (k+1)*H),
    with f/g/o mirrored at [LANES-k*H, LANES-(k-1)*H) so the roll-by-k*H gate
    extraction in the kernel is rotate-direction agnostic."""
    rows = w_small.shape[0]
    out = jnp.zeros((rows, LANES), jnp.float32)
    out = out.at[:, 0:GATES].set(w_small)
    for k in (1, 2, 3):
        out = out.at[:, LANES - k * H_DIR:LANES - (k - 1) * H_DIR].set(
            w_small[:, k * H_DIR:(k + 1) * H_DIR])
    return out


def pack_params(params):
    bf16 = jnp.bfloat16
    packed = {"embed": params["embed"]}

    # layer 0: W_ih rows 0:EMBED_SIZE (embedding lanes of x slab); W_hh rows 0:H.
    for d in ("f", "b"):
        p = params["layer0"][d]
        w_ih = jnp.zeros((LANES, LANES), jnp.float32)
        w_ih = w_ih.at[0:EMBED_SIZE, :].set(_to_gate_slab(p["w_ih"]))
        w_hh = jnp.zeros((LANES, LANES), jnp.float32)
        w_hh = w_hh.at[0:H_DIR, :].set(_to_gate_slab(p["w_hh"]))
        packed[f"w0{d}_ih"] = w_ih.astype(bf16)
        packed[f"w0{d}_hh"] = w_hh.astype(bf16)
        packed[f"b0{d}"] = _to_gate_slab(p["b"])            # (1, LANES) f32

    # layer 1: input rows = [layer0 fwd h slab (128), layer0 bwd h slab (128)];
    # only rows 0:H and 128:128+H are nonzero (garbage lanes hit zero rows).
    for d in ("f", "b"):
        p = params["layer1"][d]
        w_ih = jnp.zeros((2 * LANES, LANES), jnp.float32)
        w_ih = w_ih.at[0:H_DIR, :].set(_to_gate_slab(p["w_ih"][0:H_DIR]))
        w_ih = w_ih.at[LANES:LANES + H_DIR, :].set(
            _to_gate_slab(p["w_ih"][H_DIR:2 * H_DIR]))
        w_hh = jnp.zeros((LANES, LANES), jnp.float32)
        w_hh = w_hh.at[0:H_DIR, :].set(_to_gate_slab(p["w_hh"]))
        packed[f"w1{d}_ih"] = w_ih.astype(bf16)
        packed[f"w1{d}_hh"] = w_hh.astype(bf16)
        packed[f"b1{d}"] = _to_gate_slab(p["b"])

    # output projection: rows = [l1 fwd h slab, l1 bwd h slab]; cols padded to 128.
    w_out = jnp.zeros((2 * LANES, LANES), jnp.float32)
    w_out = w_out.at[0:H_DIR, 0:NUM_TAGS].set(params["w_out"][0:H_DIR])
    w_out = w_out.at[LANES:LANES + H_DIR, 0:NUM_TAGS].set(
        params["w_out"][H_DIR:2 * H_DIR])
    b_out = jnp.zeros((1, LANES), jnp.float32)
    b_out = b_out.at[:, 0:NUM_TAGS].set(params["b_out"])
    packed["w_out"] = w_out.astype(bf16)
    packed["b_out"] = b_out
    return packed


# --------------------------------------------------------------------------
# Forward (glue in XLA: embedding gather, lane padding, final transpose/slice)
# --------------------------------------------------------------------------
@jax.jit
def lstm_forward(packed, tokens, mask):
    B, T = tokens.shape
    lengths = jnp.sum(mask.astype(jnp.float32), axis=1)               # (B,)
    emb = jnp.take(packed["embed"], tokens, axis=0)                   # (B, T, E)
    x = jnp.transpose(emb, (1, 0, 2)).astype(jnp.float32)             # (T, B, E)
    x_pad = jnp.pad(x, ((0, 0), (0, 0), (0, LANES - EMBED_SIZE)))     # (T, B, 128)
    len_b = jnp.broadcast_to(lengths[:, None], (B, LANES))            # lane-dense

    def full(a):
        n = a.ndim
        return pl.BlockSpec(a.shape, lambda i, _n=n: (0,) * _n)

    out_tb = pl.pallas_call(
        _bilstm_fused_kernel,
        out_shape=jax.ShapeDtypeStruct((T, B, LANES), jnp.float32),
        grid=(NB,),
        in_specs=[
            pl.BlockSpec((T, B_BLK, LANES), lambda i: (0, i, 0)),     # x
            pl.BlockSpec((B_BLK, LANES), lambda i: (i, 0)),           # lengths
            full(packed["w0f_ih"]), full(packed["w0b_ih"]),
            full(packed["w1f_ih"]), full(packed["w1b_ih"]),
            full(packed["w0f_hh"]), full(packed["w0b_hh"]),
            full(packed["w1f_hh"]), full(packed["w1b_hh"]),
            full(packed["w_out"]),
            full(packed["b0f"]), full(packed["b0b"]),
            full(packed["b1f"]), full(packed["b1b"]),
            full(packed["b_out"]),
        ],
        out_specs=pl.BlockSpec((T, B_BLK, LANES), lambda i: (0, i, 0)),
        scratch_shapes=[
            pltpu.VMEM((T, B_BLK, LANES), jnp.float32),        # xg layer0 fwd
            pltpu.VMEM((T, B_BLK, LANES), jnp.float32),        # xg layer0 bwd
            pltpu.VMEM((T, B_BLK, LANES), jnp.float32),        # xg layer1 fwd
            pltpu.VMEM((T, B_BLK, LANES), jnp.float32),        # xg layer1 bwd
            pltpu.VMEM((T, B_BLK, 2 * LANES), jnp.float32),    # layer0 h slabs
            pltpu.VMEM((T, B_BLK, 2 * LANES), jnp.float32),    # layer1 h slabs
        ],
        compiler_params=pltpu.CompilerParams(
            dimension_semantics=("parallel",)),
    )(x_pad, len_b,
      packed["w0f_ih"], packed["w0b_ih"], packed["w1f_ih"], packed["w1b_ih"],
      packed["w0f_hh"], packed["w0b_hh"], packed["w1f_hh"], packed["w1b_hh"],
      packed["w_out"],
      packed["b0f"], packed["b0b"], packed["b1f"], packed["b1b"],
      packed["b_out"])

    return jnp.transpose(out_tb, (1, 0, 2))[:, :, :NUM_TAGS]          # (B, T, NT)


# --------------------------------------------------------------------------
# Parameter init + pure-JAX reference (same math, unpacked weights, f32)
# --------------------------------------------------------------------------
def init_params(key):
    ks = jax.random.split(key, 16)
    it = iter(ks)
    scale = 0.1

    embed = scale * jax.random.normal(next(it), (VOCAB_SIZE, EMBED_SIZE),
                                      jnp.float32)
    embed = embed.at[PAD_IDX].set(0.0)
    params = {"embed": embed}

    for layer in range(NUM_LAYERS):
        in_size = EMBED_SIZE if layer == 0 else HIDDEN_SIZE
        lp = {}
        for d in ("f", "b"):
            lp[d] = {
                "w_ih": scale * jax.random.normal(next(it), (in_size, 4 * H_DIR),
                                                  jnp.float32),
                "w_hh": scale * jax.random.normal(next(it), (H_DIR, 4 * H_DIR),
                                                  jnp.float32),
                # PyTorch b_ih + b_hh folded into one row
                "b": scale * jax.random.normal(next(it), (1, 4 * H_DIR),
                                               jnp.float32),
            }
        params[f"layer{layer}"] = lp

    params["w_out"] = scale * jax.random.normal(next(it), (HIDDEN_SIZE, NUM_TAGS),
                                                jnp.float32)
    params["b_out"] = scale * jax.random.normal(next(it), (1, NUM_TAGS),
                                                jnp.float32)
    return params


def lstm_reference(params, tokens, mask):
    hp = jax.lax.Precision.HIGHEST
    B, T = tokens.shape
    emb = jnp.take(params["embed"], tokens, axis=0).astype(jnp.float32)
    m = mask.astype(jnp.float32)

    def run_dir(x_seq, w_ih, w_hh, b, reverse):
        h = jnp.zeros((B, H_DIR), jnp.float32)
        c = jnp.zeros((B, H_DIR), jnp.float32)
        outs = [None] * T
        order = range(T - 1, -1, -1) if reverse else range(T)
        for t in order:
            x_t = x_seq[:, t, :]
            m_t = m[:, t:t + 1]
            gates = (jnp.dot(x_t, w_ih, precision=hp)
                     + jnp.dot(h, w_hh, precision=hp) + b)
            i_g = jax.nn.sigmoid(gates[:, 0:H_DIR])
            f_g = jax.nn.sigmoid(gates[:, H_DIR:2 * H_DIR])
            g_g = jnp.tanh(gates[:, 2 * H_DIR:3 * H_DIR])
            o_g = jax.nn.sigmoid(gates[:, 3 * H_DIR:4 * H_DIR])
            c_n = f_g * c + i_g * g_g
            h_n = o_g * jnp.tanh(c_n)
            h = jnp.where(m_t > 0, h_n, h)
            c = jnp.where(m_t > 0, c_n, c)
            outs[t] = h * m_t
        return jnp.stack(outs, axis=1)

    layer_in = emb
    for layer in range(NUM_LAYERS):
        p = params[f"layer{layer}"]
        hf = run_dir(layer_in, p["f"]["w_ih"], p["f"]["w_hh"], p["f"]["b"], False)
        hb = run_dir(layer_in, p["b"]["w_ih"], p["b"]["w_hh"], p["b"]["b"], True)
        layer_in = jnp.concatenate([hf, hb], axis=-1)
    out = jnp.dot(layer_in, params["w_out"], precision=hp) + params["b_out"]
    return out * m[:, :, None]


if __name__ == "__main__":
    assert BATCH % NB == 0 and B_BLK % 8 == 0
    key = jax.random.PRNGKey(0)
    pkey, tkey = jax.random.split(key)
    params = init_params(pkey)
    packed = pack_params(params)

    # right-padded batch, lengths sorted descending (enforce_sorted=True)
    lengths = jnp.array([8, 8, 8, 7, 7, 6, 6, 5, 5, 4, 4, 3, 3, 2, 2, 1],
                        dtype=jnp.int32)                               # (B,)
    pos = jnp.arange(SEQ)[None, :]                                     # (1, T)
    mask = (pos < lengths[:, None]).astype(jnp.float32)                # (B, T)

    tokens = jax.random.randint(tkey, (BATCH, SEQ), 1, VOCAB_SIZE, dtype=jnp.int32)
    tokens = jnp.where(mask > 0, tokens, PAD_IDX).astype(jnp.int32)    # (B, T)

    out = lstm_forward(packed, tokens, mask)
    jax.block_until_ready(out)
    assert out.shape == (BATCH, SEQ, NUM_TAGS)

    ref = jax.jit(lstm_reference)(params, tokens, mask)
    # bf16 matmul operands (f32 accumulation/elementwise) vs f32 HIGHEST reference.
    err = float(jnp.max(jnp.abs(out - ref)))
    assert err < 1e-2, f"max abs error vs reference: {err}"
    print("KERNEL_OK")
</pallas_src>

<mosaic_0001>
module attributes {stable_mosaic.version = 11 : i64} {
  func.func @_bilstm_fused_kernel(%arg0: i32, %arg1: memref<8x16x128xf32, #tpu.memory_space<vmem>>, %arg2: memref<16x128xf32, #tpu.memory_space<vmem>>, %arg3: memref<128x128xbf16, #tpu.memory_space<vmem>>, %arg4: memref<128x128xbf16, #tpu.memory_space<vmem>>, %arg5: memref<256x128xbf16, #tpu.memory_space<vmem>>, %arg6: memref<256x128xbf16, #tpu.memory_space<vmem>>, %arg7: memref<128x128xbf16, #tpu.memory_space<vmem>>, %arg8: memref<128x128xbf16, #tpu.memory_space<vmem>>, %arg9: memref<128x128xbf16, #tpu.memory_space<vmem>>, %arg10: memref<128x128xbf16, #tpu.memory_space<vmem>>, %arg11: memref<256x128xbf16, #tpu.memory_space<vmem>>, %arg12: memref<1x128xf32, #tpu.memory_space<vmem>>, %arg13: memref<1x128xf32, #tpu.memory_space<vmem>>, %arg14: memref<1x128xf32, #tpu.memory_space<vmem>>, %arg15: memref<1x128xf32, #tpu.memory_space<vmem>>, %arg16: memref<1x128xf32, #tpu.memory_space<vmem>>, %arg17: memref<8x16x128xf32, #tpu.memory_space<vmem>>, %arg18: memref<8x16x128xf32, #tpu.memory_space<vmem>>, %arg19: memref<8x16x128xf32, #tpu.memory_space<vmem>>, %arg20: memref<8x16x128xf32, #tpu.memory_space<vmem>>, %arg21: memref<8x16x128xf32, #tpu.memory_space<vmem>>, %arg22: memref<8x16x256xf32, #tpu.memory_space<vmem>>, %arg23: memref<8x16x256xf32, #tpu.memory_space<vmem>>) attributes {dimension_semantics = [#tpu.dimension_semantics<parallel>], iteration_bounds = array<i64: 1>, scalar_prefetch = 0 : i64, scratch_operands = 6 : i64, tpu.core_type = #tpu.core_type<tc>, window_params = [{transform_indices = @transform_0, window_bounds = array<i64: 8, 16, 128>}, {transform_indices = @transform_1, window_bounds = array<i64: 16, 128>}, {pipeline_mode = #tpu.pipeline_mode<synchronous>, transform_indices = @transform_2, window_bounds = array<i64: 128, 128>}, {pipeline_mode = #tpu.pipeline_mode<synchronous>, transform_indices = @transform_3, window_bounds = array<i64: 128, 128>}, {pipeline_mode = #tpu.pipeline_mode<synchronous>, transform_indices = @transform_4, window_bounds = array<i64: 256, 128>}, {pipeline_mode = #tpu.pipeline_mode<synchronous>, transform_indices = @transform_5, window_bounds = array<i64: 256, 128>}, {pipeline_mode = #tpu.pipeline_mode<synchronous>, transform_indices = @transform_6, window_bounds = array<i64: 128, 128>}, {pipeline_mode = #tpu.pipeline_mode<synchronous>, transform_indices = @transform_7, window_bounds = array<i64: 128, 128>}, {pipeline_mode = #tpu.pipeline_mode<synchronous>, transform_indices = @transform_8, window_bounds = array<i64: 128, 128>}, {pipeline_mode = #tpu.pipeline_mode<synchronous>, transform_indices = @transform_9, window_bounds = array<i64: 128, 128>}, {pipeline_mode = #tpu.pipeline_mode<synchronous>, transform_indices = @transform_10, window_bounds = array<i64: 256, 128>}, {pipeline_mode = #tpu.pipeline_mode<synchronous>, transform_indices = @transform_11, window_bounds = array<i64: 1, 128>}, {pipeline_mode = #tpu.pipeline_mode<synchronous>, transform_indices = @transform_12, window_bounds = array<i64: 1, 128>}, {pipeline_mode = #tpu.pipeline_mode<synchronous>, transform_indices = @transform_13, window_bounds = array<i64: 1, 128>}, {pipeline_mode = #tpu.pipeline_mode<synchronous>, transform_indices = @transform_14, window_bounds = array<i64: 1, 128>}, {pipeline_mode = #tpu.pipeline_mode<synchronous>, transform_indices = @transform_15, window_bounds = array<i64: 1, 128>}, {transform_indices = @transform_16, window_bounds = array<i64: 8, 16, 128>}]} {
    %c0 = arith.constant 0 : index
    %c0_0 = arith.constant 0 : index
    %0 = vector.load %arg2[%c0, %c0_0] : memref<16x128xf32, #tpu.memory_space<vmem>>, vector<16x128xf32>
    %c0_1 = arith.constant 0 : index
    %c0_2 = arith.constant 0 : index
    %c0_3 = arith.constant 0 : index
    %1 = vector.load %arg1[%c0_1, %c0_2, %c0_3] : memref<8x16x128xf32, #tpu.memory_space<vmem>>, vector<8x16x128xf32>
    %2 = vector.shape_cast %1 : vector<8x16x128xf32> to vector<128x128xf32>
    %3 = arith.truncf %2 : vector<128x128xf32> to vector<128x128xbf16>
    %c0_4 = arith.constant 0 : index
    %c0_5 = arith.constant 0 : index
    %4 = vector.load %arg3[%c0_4, %c0_5] : memref<128x128xbf16, #tpu.memory_space<vmem>>, vector<128x128xbf16>
    %cst = arith.constant dense<0.000000e+00> : vector<128x128xf32>
    %5 = tpu.matmul %3, %4, %cst {dimension_numbers = #tpu.dot_dimension_numbers<[1], [0], [0], [1], [0, 0, 1, 1], [], []>} : vector<128x128xbf16>, vector<128x128xbf16>, vector<128x128xf32> -> vector<128x128xf32>
    %c0_6 = arith.constant 0 : index
    %c0_7 = arith.constant 0 : index
    %6 = vector.load %arg12[%c0_6, %c0_7] : memref<1x128xf32, #tpu.memory_space<vmem>>, vector<1x128xf32>
    %7 = vector.broadcast %6 : vector<1x128xf32> to vector<128x128xf32>
    %8 = arith.addf %5, %7 : vector<128x128xf32>
    %9 = vector.shape_cast %8 : vector<128x128xf32> to vector<8x16x128xf32>
    %c0_8 = arith.constant 0 : index
    %c0_9 = arith.constant 0 : index
    %c0_10 = arith.constant 0 : index
    %10 = vector.load %arg18[%c0_8, %c0_9, %c0_10] : memref<8x16x128xf32, #tpu.memory_space<vmem>>, vector<8x16x128xf32>
    tpu.vector_store %arg18[%c0_8, %c0_9, %c0_10], %9 {strides = array<i32>} : memref<8x16x128xf32, #tpu.memory_space<vmem>>, vector<8x16x128xf32>,
    %c0_11 = arith.constant 0 : index
    %c0_12 = arith.constant 0 : index
    %11 = vector.load %arg4[%c0_11, %c0_12] : memref<128x128xbf16, #tpu.memory_space<vmem>>, vector<128x128xbf16>
    %cst_13 = arith.constant dense<0.000000e+00> : vector<128x128xf32>
    %12 = tpu.matmul %3, %11, %cst_13 {dimension_numbers = #tpu.dot_dimension_numbers<[1], [0], [0], [1], [0, 0, 1, 1], [], []>} : vector<128x128xbf16>, vector<128x128xbf16>, vector<128x128xf32> -> vector<128x128xf32>
    %c0_14 = arith.constant 0 : index
    %c0_15 = arith.constant 0 : index
    %13 = vector.load %arg13[%c0_14, %c0_15] : memref<1x128xf32, #tpu.memory_space<vmem>>, vector<1x128xf32>
    %14 = vector.broadcast %13 : vector<1x128xf32> to vector<128x128xf32>
    %15 = arith.addf %12, %14 : vector<128x128xf32>
    %16 = vector.shape_cast %15 : vector<128x128xf32> to vector<8x16x128xf32>
    %c0_16 = arith.constant 0 : index
    %c0_17 = arith.constant 0 : index
    %c0_18 = arith.constant 0 : index
    %17 = vector.load %arg19[%c0_16, %c0_17, %c0_18] : memref<8x16x128xf32, #tpu.memory_space<vmem>>, vector<8x16x128xf32>
    tpu.vector_store %arg19[%c0_16, %c0_17, %c0_18], %16 {strides = array<i32>} : memref<8x16x128xf32, #tpu.memory_space<vmem>>, vector<8x16x128xf32>,
    %cst_19 = arith.constant 0.000000e+00 : f32
    %18 = vector.broadcast %cst_19 : f32 to vector<16x128xf32>
    %cst_20 = arith.constant 0.000000e+00 : f32
    %19 = vector.broadcast %cst_20 : f32 to vector<16x128xf32>
    %20 = arith.cmpf ogt, %0, %19 : vector<16x128xf32>
    %cst_21 = arith.constant 7.000000e+00 : f32
    %21 = vector.broadcast %cst_21 : f32 to vector<16x128xf32>
    %22 = arith.cmpf ogt, %0, %21 : vector<16x128xf32>
    %c0_22 = arith.constant 0 : index
    %c0_23 = arith.constant 0 : index
    %c0_24 = arith.constant 0 : index
    %23 = vector.load %arg18[%c0_22, %c0_23, %c0_24] : memref<8x16x128xf32, #tpu.memory_space<vmem>>, vector<1x16x128xf32>
    %24 = vector.shape_cast %23 : vector<1x16x128xf32> to vector<16x128xf32>
    %25 = arith.truncf %18 : vector<16x128xf32> to vector<16x128xbf16>
    %c0_25 = arith.constant 0 : index
    %c0_26 = arith.constant 0 : index
    %26 = vector.load %arg7[%c0_25, %c0_26] : memref<128x128xbf16, #tpu.memory_space<vmem>>, vector<128x128xbf16>
    %cst_27 = arith.constant dense<0.000000e+00> : vector<16x128xf32>
    %27 = tpu.matmul %25, %26, %cst_27 {dimension_numbers = #tpu.dot_dimension_numbers<[1], [0], [0], [1], [0, 0, 1, 1], [], []>} : vector<16x128xbf16>, vector<128x128xbf16>, vector<16x128xf32> -> vector<16x128xf32>
    %28 = arith.addf %24, %27 : vector<16x128xf32>
    %29 = arith.negf %28 : vector<16x128xf32>
    %30 = math.exp %29 : vector<16x128xf32>
    %cst_28 = arith.constant 1.000000e+00 : f32
    %31 = vector.broadcast %cst_28 : f32 to vector<16x128xf32>
    %32 = arith.addf %31, %30 : vector<16x128xf32>
    %33 = arith.divf %31, %32 : vector<16x128xf32>
    %34 = math.tanh %28 : vector<16x128xf32>
    %c16_i32 = arith.constant 16 : i32
    %35 = tpu.dynamic_rotate %33 by %c16_i32 dim 1 : vector<16x128xf32>, i32 -> vector<16x128xf32>
    %c32_i32 = arith.constant 32 : i32
    %36 = tpu.dynamic_rotate %34 by %c32_i32 dim 1 : vector<16x128xf32>, i32 -> vector<16x128xf32>
    %c48_i32 = arith.constant 48 : i32
    %37 = tpu.dynamic_rotate %33 by %c48_i32 dim 1 : vector<16x128xf32>, i32 -> vector<16x128xf32>
    %38 = arith.mulf %35, %18 : vector<16x128xf32>
    %39 = arith.mulf %33, %36 : vector<16x128xf32>
    %40 = arith.addf %38, %39 : vector<16x128xf32>
    %41 = math.tanh %40 : vector<16x128xf32>
    %42 = arith.mulf %37, %41 : vector<16x128xf32>
    %43 = arith.select %20, %42, %18 : vector<16x128xi1>, vector<16x128xf32>
    %44 = arith.select %20, %40, %18 : vector<16x128xi1>, vector<16x128xf32>
    %c0_29 = arith.constant 0 : index
    %c0_30 = arith.constant 0 : index
    %c0_31 = arith.constant 0 : index
    %45 = vector.load %arg22[%c0_29, %c0_30, %c0_31] : memref<8x16x256xf32, #tpu.memory_space<vmem>>, vector<1x16x128xf32>
    %46 = vector.shape_cast %45 : vector<1x16x128xf32> to vector<16x128xf32>
    %47 = vector.shape_cast %43 : vector<16x128xf32> to vector<1x16x128xf32>
    tpu.vector_store %arg22[%c0_29, %c0_30, %c0_31], %47 {strides = array<i32>} : memref<8x16x256xf32, #tpu.memory_space<vmem>>, vector<1x16x128xf32>,
    %c7 = arith.constant 7 : index
    %c0_32 = arith.constant 0 : index
    %c0_33 = arith.constant 0 : index
    %48 = vector.load %arg19[%c7, %c0_32, %c0_33] : memref<8x16x128xf32, #tpu.memory_space<vmem>>, vector<1x16x128xf32>
    %49 = vector.shape_cast %48 : vector<1x16x128xf32> to vector<16x128xf32>
    %50 = arith.truncf %18 : vector<16x128xf32> to vector<16x128xbf16>
    %c0_34 = arith.constant 0 : index
    %c0_35 = arith.constant 0 : index
    %51 = vector.load %arg8[%c0_34, %c0_35] : memref<128x128xbf16, #tpu.memory_space<vmem>>, vector<128x128xbf16>
    %cst_36 = arith.constant dense<0.000000e+00> : vector<16x128xf32>
    %52 = tpu.matmul %50, %51, %cst_36 {dimension_numbers = #tpu.dot_dimension_numbers<[1], [0], [0], [1], [0, 0, 1, 1], [], []>} : vector<16x128xbf16>, vector<128x128xbf16>, vector<16x128xf32> -> vector<16x128xf32>
    %53 = arith.addf %49, %52 : vector<16x128xf32>
    %54 = arith.negf %53 : vector<16x128xf32>
    %55 = math.exp %54 : vector<16x128xf32>
    %cst_37 = arith.constant 1.000000e+00 : f32
    %56 = vector.broadcast %cst_37 : f32 to vector<16x128xf32>
    %57 = arith.addf %56, %55 : vector<16x128xf32>
    %58 = arith.divf %56, %57 : vector<16x128xf32>
    %59 = math.tanh %53 : vector<16x128xf32>
    %c16_i32_38 = arith.constant 16 : i32
    %60 = tpu.dynamic_rotate %58 by %c16_i32_38 dim 1 : vector<16x128xf32>, i32 -> vector<16x128xf32>
    %c32_i32_39 = arith.constant 32 : i32
    %61 = tpu.dynamic_rotate %59 by %c32_i32_39 dim 1 : vector<16x128xf32>, i32 -> vector<16x128xf32>
    %c48_i32_40 = arith.constant 48 : i32
    %62 = tpu.dynamic_rotate %58 by %c48_i32_40 dim 1 : vector<16x128xf32>, i32 -> vector<16x128xf32>
    %63 = arith.mulf %60, %18 : vector<16x128xf32>
    %64 = arith.mulf %58, %61 : vector<16x128xf32>
    %65 = arith.addf %63, %64 : vector<16x128xf32>
    %66 = math.tanh %65 : vector<16x128xf32>
    %67 = arith.mulf %62, %66 : vector<16x128xf32>
    %68 = arith.select %22, %67, %18 : vector<16x128xi1>, vector<16x128xf32>
    %69 = arith.select %22, %65, %18 : vector<16x128xi1>, vector<16x128xf32>
    %c7_41 = arith.constant 7 : index
    %c0_42 = arith.constant 0 : index
    %c128 = arith.constant 128 : index
    %70 = vector.load %arg22[%c7_41, %c0_42, %c128] : memref<8x16x256xf32, #tpu.memory_space<vmem>>, vector<1x16x128xf32>
    %71 = vector.shape_cast %70 : vector<1x16x128xf32> to vector<16x128xf32>
    %72 = vector.shape_cast %68 : vector<16x128xf32> to vector<1x16x128xf32>
    tpu.vector_store %arg22[%c7_41, %c0_42, %c128], %72 {strides = array<i32>} : memref<8x16x256xf32, #tpu.memory_space<vmem>>, vector<1x16x128xf32>,
    %cst_43 = arith.constant 1.000000e+00 : f32
    %73 = vector.broadcast %cst_43 : f32 to vector<16x128xf32>
    %74 = arith.cmpf ogt, %0, %73 : vector<16x128xf32>
    %cst_44 = arith.constant 6.000000e+00 : f32
    %75 = vector.broadcast %cst_44 : f32 to vector<16x128xf32>
    %76 = arith.cmpf ogt, %0, %75 : vector<16x128xf32>
    %c1 = arith.constant 1 : index
    %c0_45 = arith.constant 0 : index
    %c0_46 = arith.constant 0 : index
    %77 = vector.load %arg18[%c1, %c0_45, %c0_46] : memref<8x16x128xf32, #tpu.memory_space<vmem>>, vector<1x16x128xf32>
    %78 = vector.shape_cast %77 : vector<1x16x128xf32> to vector<16x128xf32>
    %79 = arith.truncf %43 : vector<16x128xf32> to vector<16x128xbf16>
    %c0_47 = arith.constant 0 : index
    %c0_48 = arith.constant 0 : index
    %80 = vector.load %arg7[%c0_47, %c0_48] : memref<128x128xbf16, #tpu.memory_space<vmem>>, vector<128x128xbf16>
    %cst_49 = arith.constant dense<0.000000e+00> : vector<16x128xf32>
    %81 = tpu.matmul %79, %80, %cst_49 {dimension_numbers = #tpu.dot_dimension_numbers<[1], [0], [0], [1], [0, 0, 1, 1], [], []>} : vector<16x128xbf16>, vector<128x128xbf16>, vector<16x128xf32> -> vector<16x128xf32>
    %82 = arith.addf %78, %81 : vector<16x128xf32>
    %83 = arith.negf %82 : vector<16x128xf32>
    %84 = math.exp %83 : vector<16x128xf32>
    %cst_50 = arith.constant 1.000000e+00 : f32
    %85 = vector.broadcast %cst_50 : f32 to vector<16x128xf32>
    %86 = arith.addf %85, %84 : vector<16x128xf32>
    %87 = arith.divf %85, %86 : vector<16x128xf32>
    %88 = math.tanh %82 : vector<16x128xf32>
    %c16_i32_51 = arith.constant 16 : i32
    %89 = tpu.dynamic_rotate %87 by %c16_i32_51 dim 1 : vector<16x128xf32>, i32 -> vector<16x128xf32>
    %c32_i32_52 = arith.constant 32 : i32
    %90 = tpu.dynamic_rotate %88 by %c32_i32_52 dim 1 : vector<16x128xf32>, i32 -> vector<16x128xf32>
    %c48_i32_53 = arith.constant 48 : i32
    %91 = tpu.dynamic_rotate %87 by %c48_i32_53 dim 1 : vector<16x128xf32>, i32 -> vector<16x128xf32>
    %92 = arith.mulf %89, %44 : vector<16x128xf32>
    %93 = arith.mulf %87, %90 : vector<16x128xf32>
    %94 = arith.addf %92, %93 : vector<16x128xf32>
    %95 = math.tanh %94 : vector<16x128xf32>
    %96 = arith.mulf %91, %95 : vector<16x128xf32>
    %97 = arith.select %74, %96, %43 : vector<16x128xi1>, vector<16x128xf32>
    %98 = arith.select %74, %94, %44 : vector<16x128xi1>, vector<16x128xf32>
    %c1_54 = arith.constant 1 : index
    %c0_55 = arith.constant 0 : index
    %c0_56 = arith.constant 0 : index
    %99 = vector.load %arg22[%c1_54, %c0_55, %c0_56] : memref<8x16x256xf32, #tpu.memory_space<vmem>>, vector<1x16x128xf32>
    %100 = vector.shape_cast %99 : vector<1x16x128xf32> to vector<16x128xf32>
    %101 = vector.shape_cast %97 : vector<16x128xf32> to vector<1x16x128xf32>
    tpu.vector_store %arg22[%c1_54, %c0_55, %c0_56], %101 {strides = array<i32>} : memref<8x16x256xf32, #tpu.memory_space<vmem>>, vector<1x16x128xf32>,
    %c6 = arith.constant 6 : index
    %c0_57 = arith.constant 0 : index
    %c0_58 = arith.constant 0 : index
    %102 = vector.load %arg19[%c6, %c0_57, %c0_58] : memref<8x16x128xf32, #tpu.memory_space<vmem>>, vector<1x16x128xf32>
    %103 = vector.shape_cast %102 : vector<1x16x128xf32> to vector<16x128xf32>
    %104 = arith.truncf %68 : vector<16x128xf32> to vector<16x128xbf16>
    %c0_59 = arith.constant 0 : index
    %c0_60 = arith.constant 0 : index
    %105 = vector.load %arg8[%c0_59, %c0_60] : memref<128x128xbf16, #tpu.memory_space<vmem>>, vector<128x128xbf16>
    %cst_61 = arith.constant dense<0.000000e+00> : vector<16x128xf32>
    %106 = tpu.matmul %104, %105, %cst_61 {dimension_numbers = #tpu.dot_dimension_numbers<[1], [0], [0], [1], [0, 0, 1, 1], [], []>} : vector<16x128xbf16>, vector<128x128xbf16>, vector<16x128xf32> -> vector<16x128xf32>
    %107 = arith.addf %103, %106 : vector<16x128xf32>
    %108 = arith.negf %107 : vector<16x128xf32>
    %109 = math.exp %108 : vector<16x128xf32>
    %cst_62 = arith.constant 1.000000e+00 : f32
    %110 = vector.broadcast %cst_62 : f32 to vector<16x128xf32>
    %111 = arith.addf %110, %109 : vector<16x128xf32>
    %112 = arith.divf %110, %111 : vector<16x128xf32>
    %113 = math.tanh %107 : vector<16x128xf32>
    %c16_i32_63 = arith.constant 16 : i32
    %114 = tpu.dynamic_rotate %112 by %c16_i32_63 dim 1 : vector<16x128xf32>, i32 -> vector<16x128xf32>
    %c32_i32_64 = arith.constant 32 : i32
    %115 = tpu.dynamic_rotate %113 by %c32_i32_64 dim 1 : vector<16x128xf32>, i32 -> vector<16x128xf32>
    %c48_i32_65 = arith.constant 48 : i32
    %116 = tpu.dynamic_rotate %112 by %c48_i32_65 dim 1 : vector<16x128xf32>, i32 -> vector<16x128xf32>
    %117 = arith.mulf %114, %69 : vector<16x128xf32>
    %118 = arith.mulf %112, %115 : vector<16x128xf32>
    %119 = arith.addf %117, %118 : vector<16x128xf32>
    %120 = math.tanh %119 : vector<16x128xf32>
    %121 = arith.mulf %116, %120 : vector<16x128xf32>
    %122 = arith.select %76, %121, %68 : vector<16x128xi1>, vector<16x128xf32>
    %123 = arith.select %76, %119, %69 : vector<16x128xi1>, vector<16x128xf32>
    %c6_66 = arith.constant 6 : index
    %c0_67 = arith.constant 0 : index
    %c128_68 = arith.constant 128 : index
    %124 = vector.load %arg22[%c6_66, %c0_67, %c128_68] : memref<8x16x256xf32, #tpu.memory_space<vmem>>, vector<1x16x128xf32>
    %125 = vector.shape_cast %124 : vector<1x16x128xf32> to vector<16x128xf32>
    %126 = vector.shape_cast %122 : vector<16x128xf32> to vector<1x16x128xf32>
    tpu.vector_store %arg22[%c6_66, %c0_67, %c128_68], %126 {strides = array<i32>} : memref<8x16x256xf32, #tpu.memory_space<vmem>>, vector<1x16x128xf32>,
    %cst_69 = arith.constant 2.000000e+00 : f32
    %127 = vector.broadcast %cst_69 : f32 to vector<16x128xf32>
    %128 = arith.cmpf ogt, %0, %127 : vector<16x128xf32>
    %cst_70 = arith.constant 5.000000e+00 : f32
    %129 = vector.broadcast %cst_70 : f32 to vector<16x128xf32>
    %130 = arith.cmpf ogt, %0, %129 : vector<16x128xf32>
    %c2 = arith.constant 2 : index
    %c0_71 = arith.constant 0 : index
    %c0_72 = arith.constant 0 : index
    %131 = vector.load %arg18[%c2, %c0_71, %c0_72] : memref<8x16x128xf32, #tpu.memory_space<vmem>>, vector<1x16x128xf32>
    %132 = vector.shape_cast %131 : vector<1x16x128xf32> to vector<16x128xf32>
    %133 = arith.truncf %97 : vector<16x128xf32> to vector<16x128xbf16>
    %c0_73 = arith.constant 0 : index
    %c0_74 = arith.constant 0 : index
    %134 = vector.load %arg7[%c0_73, %c0_74] : memref<128x128xbf16, #tpu.memory_space<vmem>>, vector<128x128xbf16>
    %cst_75 = arith.constant dense<0.000000e+00> : vector<16x128xf32>
    %135 = tpu.matmul %133, %134, %cst_75 {dimension_numbers = #tpu.dot_dimension_numbers<[1], [0], [0], [1], [0, 0, 1, 1], [], []>} : vector<16x128xbf16>, vector<128x128xbf16>, vector<16x128xf32> -> vector<16x128xf32>
    %136 = arith.addf %132, %135 : vector<16x128xf32>
    %137 = arith.negf %136 : vector<16x128xf32>
    %138 = math.exp %137 : vector<16x128xf32>
    %cst_76 = arith.constant 1.000000e+00 : f32
    %139 = vector.broadcast %cst_76 : f32 to vector<16x128xf32>
    %140 = arith.addf %139, %138 : vector<16x128xf32>
    %141 = arith.divf %139, %140 : vector<16x128xf32>
    %142 = math.tanh %136 : vector<16x128xf32>
    %c16_i32_77 = arith.constant 16 : i32
    %143 = tpu.dynamic_rotate %141 by %c16_i32_77 dim 1 : vector<16x128xf32>, i32 -> vector<16x128xf32>
    %c32_i32_78 = arith.constant 32 : i32
    %144 = tpu.dynamic_rotate %142 by %c32_i32_78 dim 1 : vector<16x128xf32>, i32 -> vector<16x128xf32>
    %c48_i32_79 = arith.constant 48 : i32
    %145 = tpu.dynamic_rotate %141 by %c48_i32_79 dim 1 : vector<16x128xf32>, i32 -> vector<16x128xf32>
    %146 = arith.mulf %143, %98 : vector<16x128xf32>
    %147 = arith.mulf %141, %144 : vector<16x128xf32>
    %148 = arith.addf %146, %147 : vector<16x128xf32>
    %149 = math.tanh %148 : vector<16x128xf32>
    %150 = arith.mulf %145, %149 : vector<16x128xf32>
    %151 = arith.select %128, %150, %97 : vector<16x128xi1>, vector<16x128xf32>
    %152 = arith.select %128, %148, %98 : vector<16x128xi1>, vector<16x128xf32>
    %c2_80 = arith.constant 2 : index
    %c0_81 = arith.constant 0 : index
    %c0_82 = arith.constant 0 : index
    %153 = vector.load %arg22[%c2_80, %c0_81, %c0_82] : memref<8x16x256xf32, #tpu.memory_space<vmem>>, vector<1x16x128xf32>
    %154 = vector.shape_cast %153 : vector<1x16x128xf32> to vector<16x128xf32>
    %155 = vector.shape_cast %151 : vector<16x128xf32> to vector<1x16x128xf32>
    tpu.vector_store %arg22[%c2_80, %c0_81, %c0_82], %155 {strides = array<i32>} : memref<8x16x256xf32, #tpu.memory_space<vmem>>, vector<1x16x128xf32>,
    %c5 = arith.constant 5 : index
    %c0_83 = arith.constant 0 : index
    %c0_84 = arith.constant 0 : index
    %156 = vector.load %arg19[%c5, %c0_83, %c0_84] : memref<8x16x128xf32, #tpu.memory_space<vmem>>, vector<1x16x128xf32>
    %157 = vector.shape_cast %156 : vector<1x16x128xf32> to vector<16x128xf32>
    %158 = arith.truncf %122 : vector<16x128xf32> to vector<16x128xbf16>
    %c0_85 = arith.constant 0 : index
    %c0_86 = arith.constant 0 : index
    %159 = vector.load %arg8[%c0_85, %c0_86] : memref<128x128xbf16, #tpu.memory_space<vmem>>, vector<128x128xbf16>
    %cst_87 = arith.constant dense<0.000000e+00> : vector<16x128xf32>
    %160 = tpu.matmul %158, %159, %cst_87 {dimension_numbers = #tpu.dot_dimension_numbers<[1], [0], [0], [1], [0, 0, 1, 1], [], []>} : vector<16x128xbf16>, vector<128x128xbf16>, vector<16x128xf32> -> vector<16x128xf32>
    %161 = arith.addf %157, %160 : vector<16x128xf32>
    %162 = arith.negf %161 : vector<16x128xf32>
    %163 = math.exp %162 : vector<16x128xf32>
    %cst_88 = arith.constant 1.000000e+00 : f32
    %164 = vector.broadcast %cst_88 : f32 to vector<16x128xf32>
    %165 = arith.addf %164, %163 : vector<16x128xf32>
    %166 = arith.divf %164, %165 : vector<16x128xf32>
    %167 = math.tanh %161 : vector<16x128xf32>
    %c16_i32_89 = arith.constant 16 : i32
    %168 = tpu.dynamic_rotate %166 by %c16_i32_89 dim 1 : vector<16x128xf32>, i32 -> vector<16x128xf32>
    %c32_i32_90 = arith.constant 32 : i32
    %169 = tpu.dynamic_rotate %167 by %c32_i32_90 dim 1 : vector<16x128xf32>, i32 -> vector<16x128xf32>
    %c48_i32_91 = arith.constant 48 : i32
    %170 = tpu.dynamic_rotate %166 by %c48_i32_91 dim 1 : vector<16x128xf32>, i32 -> vector<16x128xf32>
    %171 = arith.mulf %168, %123 : vector<16x128xf32>
    %172 = arith.mulf %166, %169 : vector<16x128xf32>
    %173 = arith.addf %171, %172 : vector<16x128xf32>
    %174 = math.tanh %173 : vector<16x128xf32>
    %175 = arith.mulf %170, %174 : vector<16x128xf32>
    %176 = arith.select %130, %175, %122 : vector<16x128xi1>, vector<16x128xf32>
    %177 = arith.select %130, %173, %123 : vector<16x128xi1>, vector<16x128xf32>
    %c5_92 = arith.constant 5 : index
    %c0_93 = arith.constant 0 : index
    %c128_94 = arith.constant 128 : index
    %178 = vector.load %arg22[%c5_92, %c0_93, %c128_94] : memref<8x16x256xf32, #tpu.memory_space<vmem>>, vector<1x16x128xf32>
    %179 = vector.shape_cast %178 : vector<1x16x128xf32> to vector<16x128xf32>
    %180 = vector.shape_cast %176 : vector<16x128xf32> to vector<1x16x128xf32>
    tpu.vector_store %arg22[%c5_92, %c0_93, %c128_94], %180 {strides = array<i32>} : memref<8x16x256xf32, #tpu.memory_space<vmem>>, vector<1x16x128xf32>,
    %cst_95 = arith.constant 3.000000e+00 : f32
    %181 = vector.broadcast %cst_95 : f32 to vector<16x128xf32>
    %182 = arith.cmpf ogt, %0, %181 : vector<16x128xf32>
    %cst_96 = arith.constant 4.000000e+00 : f32
    %183 = vector.broadcast %cst_96 : f32 to vector<16x128xf32>
    %184 = arith.cmpf ogt, %0, %183 : vector<16x128xf32>
    %c3 = arith.constant 3 : index
    %c0_97 = arith.constant 0 : index
    %c0_98 = arith.constant 0 : index
    %185 = vector.load %arg18[%c3, %c0_97, %c0_98] : memref<8x16x128xf32, #tpu.memory_space<vmem>>, vector<1x16x128xf32>
    %186 = vector.shape_cast %185 : vector<1x16x128xf32> to vector<16x128xf32>
    %187 = arith.truncf %151 : vector<16x128xf32> to vector<16x128xbf16>
    %c0_99 = arith.constant 0 : index
    %c0_100 = arith.constant 0 : index
    %188 = vector.load %arg7[%c0_99, %c0_100] : memref<128x128xbf16, #tpu.memory_space<vmem>>, vector<128x128xbf16>
    %cst_101 = arith.constant dense<0.000000e+00> : vector<16x128xf32>
    %189 = tpu.matmul %187, %188, %cst_101 {dimension_numbers = #tpu.dot_dimension_numbers<[1], [0], [0], [1], [0, 0, 1, 1], [], []>} : vector<16x128xbf16>, vector<128x128xbf16>, vector<16x128xf32> -> vector<16x128xf32>
    %190 = arith.addf %186, %189 : vector<16x128xf32>
    %191 = arith.negf %190 : vector<16x128xf32>
    %192 = math.exp %191 : vector<16x128xf32>
    %cst_102 = arith.constant 1.000000e+00 : f32
    %193 = vector.broadcast %cst_102 : f32 to vector<16x128xf32>
    %194 = arith.addf %193, %192 : vector<16x128xf32>
    %195 = arith.divf %193, %194 : vector<16x128xf32>
    %196 = math.tanh %190 : vector<16x128xf32>
    %c16_i32_103 = arith.constant 16 : i32
    %197 = tpu.dynamic_rotate %195 by %c16_i32_103 dim 1 : vector<16x128xf32>, i32 -> vector<16x128xf32>
    %c32_i32_104 = arith.constant 32 : i32
    %198 = tpu.dynamic_rotate %196 by %c32_i32_104 dim 1 : vector<16x128xf32>, i32 -> vector<16x128xf32>
    %c48_i32_105 = arith.constant 48 : i32
    %199 = tpu.dynamic_rotate %195 by %c48_i32_105 dim 1 : vector<16x128xf32>, i32 -> vector<16x128xf32>
    %200 = arith.mulf %197, %152 : vector<16x128xf32>
    %201 = arith.mulf %195, %198 : vector<16x128xf32>
    %202 = arith.addf %200, %201 : vector<16x128xf32>
    %203 = math.tanh %202 : vector<16x128xf32>
    %204 = arith.mulf %199, %203 : vector<16x128xf32>
    %205 = arith.select %182, %204, %151 : vector<16x128xi1>, vector<16x128xf32>
    %206 = arith.select %182, %202, %152 : vector<16x128xi1>, vector<16x128xf32>
    %c3_106 = arith.constant 3 : index
    %c0_107 = arith.constant 0 : index
    %c0_108 = arith.constant 0 : index
    %207 = vector.load %arg22[%c3_106, %c0_107, %c0_108] : memref<8x16x256xf32, #tpu.memory_space<vmem>>, vector<1x16x128xf32>
    %208 = vector.shape_cast %207 : vector<1x16x128xf32> to vector<16x128xf32>
    %209 = vector.shape_cast %205 : vector<16x128xf32> to vector<1x16x128xf32>
    tpu.vector_store %arg22[%c3_106, %c0_107, %c0_108], %209 {strides = array<i32>} : memref<8x16x256xf32, #tpu.memory_space<vmem>>, vector<1x16x128xf32>,
    %c4 = arith.constant 4 : index
    %c0_109 = arith.constant 0 : index
    %c0_110 = arith.constant 0 : index
    %210 = vector.load %arg19[%c4, %c0_109, %c0_110] : memref<8x16x128xf32, #tpu.memory_space<vmem>>, vector<1x16x128xf32>
    %211 = vector.shape_cast %210 : vector<1x16x128xf32> to vector<16x128xf32>
    %212 = arith.truncf %176 : vector<16x128xf32> to vector<16x128xbf16>
    %c0_111 = arith.constant 0 : index
    %c0_112 = arith.constant 0 : index
    %213 = vector.load %arg8[%c0_111, %c0_112] : memref<128x128xbf16, #tpu.memory_space<vmem>>, vector<128x128xbf16>
    %cst_113 = arith.constant dense<0.000000e+00> : vector<16x128xf32>
    %214 = tpu.matmul %212, %213, %cst_113 {dimension_numbers = #tpu.dot_dimension_numbers<[1], [0], [0], [1], [0, 0, 1, 1], [], []>} : vector<16x128xbf16>, vector<128x128xbf16>, vector<16x128xf32> -> vector<16x128xf32>
    %215 = arith.addf %211, %214 : vector<16x128xf32>
    %216 = arith.negf %215 : vector<16x128xf32>
    %217 = math.exp %216 : vector<16x128xf32>
    %cst_114 = arith.constant 1.000000e+00 : f32
    %218 = vector.broadcast %cst_114 : f32 to vector<16x128xf32>
    %219 = arith.addf %218, %217 : vector<16x128xf32>
    %220 = arith.divf %218, %219 : vector<16x128xf32>
    %221 = math.tanh %215 : vector<16x128xf32>
    %c16_i32_115 = arith.constant 16 : i32
    %222 = tpu.dynamic_rotate %220 by %c16_i32_115 dim 1 : vector<16x128xf32>, i32 -> vector<16x128xf32>
    %c32_i32_116 = arith.constant 32 : i32
    %223 = tpu.dynamic_rotate %221 by %c32_i32_116 dim 1 : vector<16x128xf32>, i32 -> vector<16x128xf32>
    %c48_i32_117 = arith.constant 48 : i32
    %224 = tpu.dynamic_rotate %220 by %c48_i32_117 dim 1 : vector<16x128xf32>, i32 -> vector<16x128xf32>
    %225 = arith.mulf %222, %177 : vector<16x128xf32>
    %226 = arith.mulf %220, %223 : vector<16x128xf32>
    %227 = arith.addf %225, %226 : vector<16x128xf32>
    %228 = math.tanh %227 : vector<16x128xf32>
    %229 = arith.mulf %224, %228 : vector<16x128xf32>
    %230 = arith.select %184, %229, %176 : vector<16x128xi1>, vector<16x128xf32>
    %231 = arith.select %184, %227, %177 : vector<16x128xi1>, vector<16x128xf32>
    %c4_118 = arith.constant 4 : index
    %c0_119 = arith.constant 0 : index
    %c128_120 = arith.constant 128 : index
    %232 = vector.load %arg22[%c4_118, %c0_119, %c128_120] : memref<8x16x256xf32, #tpu.memory_space<vmem>>, vector<1x16x128xf32>
    %233 = vector.shape_cast %232 : vector<1x16x128xf32> to vector<16x128xf32>
    %234 = vector.shape_cast %230 : vector<16x128xf32> to vector<1x16x128xf32>
    tpu.vector_store %arg22[%c4_118, %c0_119, %c128_120], %234 {strides = array<i32>} : memref<8x16x256xf32, #tpu.memory_space<vmem>>, vector<1x16x128xf32>,
    %cst_121 = arith.constant 4.000000e+00 : f32
    %235 = vector.broadcast %cst_121 : f32 to vector<16x128xf32>
    %236 = arith.cmpf ogt, %0, %235 : vector<16x128xf32>
    %cst_122 = arith.constant 3.000000e+00 : f32
    %237 = vector.broadcast %cst_122 : f32 to vector<16x128xf32>
    %238 = arith.cmpf ogt, %0, %237 : vector<16x128xf32>
    %c4_123 = arith.constant 4 : index
    %c0_124 = arith.constant 0 : index
    %c0_125 = arith.constant 0 : index
    %239 = vector.load %arg18[%c4_123, %c0_124, %c0_125] : memref<8x16x128xf32, #tpu.memory_space<vmem>>, vector<1x16x128xf32>
    %240 = vector.shape_cast %239 : vector<1x16x128xf32> to vector<16x128xf32>
    %241 = arith.truncf %205 : vector<16x128xf32> to vector<16x128xbf16>
    %c0_126 = arith.constant 0 : index
    %c0_127 = arith.constant 0 : index
    %242 = vector.load %arg7[%c0_126, %c0_127] : memref<128x128xbf16, #tpu.memory_space<vmem>>, vector<128x128xbf16>
    %cst_128 = arith.constant dense<0.000000e+00> : vector<16x128xf32>
    %243 = tpu.matmul %241, %242, %cst_128 {dimension_numbers = #tpu.dot_dimension_numbers<[1], [0], [0], [1], [0, 0, 1, 1], [], []>} : vector<16x128xbf16>, vector<128x128xbf16>, vector<16x128xf32> -> vector<16x128xf32>
    %244 = arith.addf %240, %243 : vector<16x128xf32>
    %245 = arith.negf %244 : vector<16x128xf32>
    %246 = math.exp %245 : vector<16x128xf32>
    %cst_129 = arith.constant 1.000000e+00 : f32
    %247 = vector.broadcast %cst_129 : f32 to vector<16x128xf32>
    %248 = arith.addf %247, %246 : vector<16x128xf32>
    %249 = arith.divf %247, %248 : vector<16x128xf32>
    %250 = math.tanh %244 : vector<16x128xf32>
    %c16_i32_130 = arith.constant 16 : i32
    %251 = tpu.dynamic_rotate %249 by %c16_i32_130 dim 1 : vector<16x128xf32>, i32 -> vector<16x128xf32>
    %c32_i32_131 = arith.constant 32 : i32
    %252 = tpu.dynamic_rotate %250 by %c32_i32_131 dim 1 : vector<16x128xf32>, i32 -> vector<16x128xf32>
    %c48_i32_132 = arith.constant 48 : i32
    %253 = tpu.dynamic_rotate %249 by %c48_i32_132 dim 1 : vector<16x128xf32>, i32 -> vector<16x128xf32>
    %254 = arith.mulf %251, %206 : vector<16x128xf32>
    %255 = arith.mulf %249, %252 : vector<16x128xf32>
    %256 = arith.addf %254, %255 : vector<16x128xf32>
    %257 = math.tanh %256 : vector<16x128xf32>
    %258 = arith.mulf %253, %257 : vector<16x128xf32>
    %259 = arith.select %236, %258, %205 : vector<16x128xi1>, vector<16x128xf32>
    %260 = arith.select %236, %256, %206 : vector<16x128xi1>, vector<16x128xf32>
    %c4_133 = arith.constant 4 : index
    %c0_134 = arith.constant 0 : index
    %c0_135 = arith.constant 0 : index
    %261 = vector.load %arg22[%c4_133, %c0_134, %c0_135] : memref<8x16x256xf32, #tpu.memory_space<vmem>>, vector<1x16x128xf32>
    %262 = vector.shape_cast %261 : vector<1x16x128xf32> to vector<16x128xf32>
    %263 = vector.shape_cast %259 : vector<16x128xf32> to vector<1x16x128xf32>
    tpu.vector_store %arg22[%c4_133, %c0_134, %c0_135], %263 {strides = array<i32>} : memref<8x16x256xf32, #tpu.memory_space<vmem>>, vector<1x16x128xf32>,
    %c3_136 = arith.constant 3 : index
    %c0_137 = arith.constant 0 : index
    %c0_138 = arith.constant 0 : index
    %264 = vector.load %arg19[%c3_136, %c0_137, %c0_138] : memref<8x16x128xf32, #tpu.memory_space<vmem>>, vector<1x16x128xf32>
    %265 = vector.shape_cast %264 : vector<1x16x128xf32> to vector<16x128xf32>
    %266 = arith.truncf %230 : vector<16x128xf32> to vector<16x128xbf16>
    %c0_139 = arith.constant 0 : index
    %c0_140 = arith.constant 0 : index
    %267 = vector.load %arg8[%c0_139, %c0_140] : memref<128x128xbf16, #tpu.memory_space<vmem>>, vector<128x128xbf16>
    %cst_141 = arith.constant dense<0.000000e+00> : vector<16x128xf32>
    %268 = tpu.matmul %266, %267, %cst_141 {dimension_numbers = #tpu.dot_dimension_numbers<[1], [0], [0], [1], [0, 0, 1, 1], [], []>} : vector<16x128xbf16>, vector<128x128xbf16>, vector<16x128xf32> -> vector<16x128xf32>
    %269 = arith.addf %265, %268 : vector<16x128xf32>
    %270 = arith.negf %269 : vector<16x128xf32>
    %271 = math.exp %270 : vector<16x128xf32>
    %cst_142 = arith.constant 1.000000e+00 : f32
    %272 = vector.broadcast %cst_142 : f32 to vector<16x128xf32>
    %273 = arith.addf %272, %271 : vector<16x128xf32>
    %274 = arith.divf %272, %273 : vector<16x128xf32>
    %275 = math.tanh %269 : vector<16x128xf32>
    %c16_i32_143 = arith.constant 16 : i32
    %276 = tpu.dynamic_rotate %274 by %c16_i32_143 dim 1 : vector<16x128xf32>, i32 -> vector<16x128xf32>
    %c32_i32_144 = arith.constant 32 : i32
    %277 = tpu.dynamic_rotate %275 by %c32_i32_144 dim 1 : vector<16x128xf32>, i32 -> vector<16x128xf32>
    %c48_i32_145 = arith.constant 48 : i32
    %278 = tpu.dynamic_rotate %274 by %c48_i32_145 dim 1 : vector<16x128xf32>, i32 -> vector<16x128xf32>
    %279 = arith.mulf %276, %231 : vector<16x128xf32>
    %280 = arith.mulf %274, %277 : vector<16x128xf32>
    %281 = arith.addf %279, %280 : vector<16x128xf32>
    %282 = math.tanh %281 : vector<16x128xf32>
    %283 = arith.mulf %278, %282 : vector<16x128xf32>
    %284 = arith.select %238, %283, %230 : vector<16x128xi1>, vector<16x128xf32>
    %285 = arith.select %238, %281, %231 : vector<16x128xi1>, vector<16x128xf32>
    %c3_146 = arith.constant 3 : index
    %c0_147 = arith.constant 0 : index
    %c128_148 = arith.constant 128 : index
    %286 = vector.load %arg22[%c3_146, %c0_147, %c128_148] : memref<8x16x256xf32, #tpu.memory_space<vmem>>, vector<1x16x128xf32>
    %287 = vector.shape_cast %286 : vector<1x16x128xf32> to vector<16x128xf32>
    %288 = vector.shape_cast %284 : vector<16x128xf32> to vector<1x16x128xf32>
    tpu.vector_store %arg22[%c3_146, %c0_147, %c128_148], %288 {strides = array<i32>} : memref<8x16x256xf32, #tpu.memory_space<vmem>>, vector<1x16x128xf32>,
    %cst_149 = arith.constant 5.000000e+00 : f32
    %289 = vector.broadcast %cst_149 : f32 to vector<16x128xf32>
    %290 = arith.cmpf ogt, %0, %289 : vector<16x128xf32>
    %cst_150 = arith.constant 2.000000e+00 : f32
    %291 = vector.broadcast %cst_150 : f32 to vector<16x128xf32>
    %292 = arith.cmpf ogt, %0, %291 : vector<16x128xf32>
    %c5_151 = arith.constant 5 : index
    %c0_152 = arith.constant 0 : index
    %c0_153 = arith.constant 0 : index
    %293 = vector.load %arg18[%c5_151, %c0_152, %c0_153] : memref<8x16x128xf32, #tpu.memory_space<vmem>>, vector<1x16x128xf32>
    %294 = vector.shape_cast %293 : vector<1x16x128xf32> to vector<16x128xf32>
    %295 = arith.truncf %259 : vector<16x128xf32> to vector<16x128xbf16>
    %c0_154 = arith.constant 0 : index
    %c0_155 = arith.constant 0 : index
    %296 = vector.load %arg7[%c0_154, %c0_155] : memref<128x128xbf16, #tpu.memory_space<vmem>>, vector<128x128xbf16>
    %cst_156 = arith.constant dense<0.000000e+00> : vector<16x128xf32>
    %297 = tpu.matmul %295, %296, %cst_156 {dimension_numbers = #tpu.dot_dimension_numbers<[1], [0], [0], [1], [0, 0, 1, 1], [], []>} : vector<16x128xbf16>, vector<128x128xbf16>, vector<16x128xf32> -> vector<16x128xf32>
    %298 = arith.addf %294, %297 : vector<16x128xf32>
    %299 = arith.negf %298 : vector<16x128xf32>
    %300 = math.exp %299 : vector<16x128xf32>
    %cst_157 = arith.constant 1.000000e+00 : f32
    %301 = vector.broadcast %cst_157 : f32 to vector<16x128xf32>
    %302 = arith.addf %301, %300 : vector<16x128xf32>
    %303 = arith.divf %301, %302 : vector<16x128xf32>
    %304 = math.tanh %298 : vector<16x128xf32>
    %c16_i32_158 = arith.constant 16 : i32
    %305 = tpu.dynamic_rotate %303 by %c16_i32_158 dim 1 : vector<16x128xf32>, i32 -> vector<16x128xf32>
    %c32_i32_159 = arith.constant 32 : i32
    %306 = tpu.dynamic_rotate %304 by %c32_i32_159 dim 1 : vector<16x128xf32>, i32 -> vector<16x128xf32>
    %c48_i32_160 = arith.constant 48 : i32
    %307 = tpu.dynamic_rotate %303 by %c48_i32_160 dim 1 : vector<16x128xf32>, i32 -> vector<16x128xf32>
    %308 = arith.mulf %305, %260 : vector<16x128xf32>
    %309 = arith.mulf %303, %306 : vector<16x128xf32>
    %310 = arith.addf %308, %309 : vector<16x128xf32>
    %311 = math.tanh %310 : vector<16x128xf32>
    %312 = arith.mulf %307, %311 : vector<16x128xf32>
    %313 = arith.select %290, %312, %259 : vector<16x128xi1>, vector<16x128xf32>
    %314 = arith.select %290, %310, %260 : vector<16x128xi1>, vector<16x128xf32>
    %c5_161 = arith.constant 5 : index
    %c0_162 = arith.constant 0 : index
    %c0_163 = arith.constant 0 : index
    %315 = vector.load %arg22[%c5_161, %c0_162, %c0_163] : memref<8x16x256xf32, #tpu.memory_space<vmem>>, vector<1x16x128xf32>
    %316 = vector.shape_cast %315 : vector<1x16x128xf32> to vector<16x128xf32>
    %317 = vector.shape_cast %313 : vector<16x128xf32> to vector<1x16x128xf32>
    tpu.vector_store %arg22[%c5_161, %c0_162, %c0_163], %317 {strides = array<i32>} : memref<8x16x256xf32, #tpu.memory_space<vmem>>, vector<1x16x128xf32>,
    %c2_164 = arith.constant 2 : index
    %c0_165 = arith.constant 0 : index
    %c0_166 = arith.constant 0 : index
    %318 = vector.load %arg19[%c2_164, %c0_165, %c0_166] : memref<8x16x128xf32, #tpu.memory_space<vmem>>, vector<1x16x128xf32>
    %319 = vector.shape_cast %318 : vector<1x16x128xf32> to vector<16x128xf32>
    %320 = arith.truncf %284 : vector<16x128xf32> to vector<16x128xbf16>
    %c0_167 = arith.constant 0 : index
    %c0_168 = arith.constant 0 : index
    %321 = vector.load %arg8[%c0_167, %c0_168] : memref<128x128xbf16, #tpu.memory_space<vmem>>, vector<128x128xbf16>
    %cst_169 = arith.constant dense<0.000000e+00> : vector<16x128xf32>
    %322 = tpu.matmul %320, %321, %cst_169 {dimension_numbers = #tpu.dot_dimension_numbers<[1], [0], [0], [1], [0, 0, 1, 1], [], []>} : vector<16x128xbf16>, vector<128x128xbf16>, vector<16x128xf32> -> vector<16x128xf32>
    %323 = arith.addf %319, %322 : vector<16x128xf32>
    %324 = arith.negf %323 : vector<16x128xf32>
    %325 = math.exp %324 : vector<16x128xf32>
    %cst_170 = arith.constant 1.000000e+00 : f32
    %326 = vector.broadcast %cst_170 : f32 to vector<16x128xf32>
    %327 = arith.addf %326, %325 : vector<16x128xf32>
    %328 = arith.divf %326, %327 : vector<16x128xf32>
    %329 = math.tanh %323 : vector<16x128xf32>
    %c16_i32_171 = arith.constant 16 : i32
    %330 = tpu.dynamic_rotate %328 by %c16_i32_171 dim 1 : vector<16x128xf32>, i32 -> vector<16x128xf32>
    %c32_i32_172 = arith.constant 32 : i32
    %331 = tpu.dynamic_rotate %329 by %c32_i32_172 dim 1 : vector<16x128xf32>, i32 -> vector<16x128xf32>
    %c48_i32_173 = arith.constant 48 : i32
    %332 = tpu.dynamic_rotate %328 by %c48_i32_173 dim 1 : vector<16x128xf32>, i32 -> vector<16x128xf32>
    %333 = arith.mulf %330, %285 : vector<16x128xf32>
    %334 = arith.mulf %328, %331 : vector<16x128xf32>
    %335 = arith.addf %333, %334 : vector<16x128xf32>
    %336 = math.tanh %335 : vector<16x128xf32>
    %337 = arith.mulf %332, %336 : vector<16x128xf32>
    %338 = arith.select %292, %337, %284 : vector<16x128xi1>, vector<16x128xf32>
    %339 = arith.select %292, %335, %285 : vector<16x128xi1>, vector<16x128xf32>
    %c2_174 = arith.constant 2 : index
    %c0_175 = arith.constant 0 : index
    %c128_176 = arith.constant 128 : index
    %340 = vector.load %arg22[%c2_174, %c0_175, %c128_176] : memref<8x16x256xf32, #tpu.memory_space<vmem>>, vector<1x16x128xf32>
    %341 = vector.shape_cast %340 : vector<1x16x128xf32> to vector<16x128xf32>
    %342 = vector.shape_cast %338 : vector<16x128xf32> to vector<1x16x128xf32>
    tpu.vector_store %arg22[%c2_174, %c0_175, %c128_176], %342 {strides = array<i32>} : memref<8x16x256xf32, #tpu.memory_space<vmem>>, vector<1x16x128xf32>,
    %cst_177 = arith.constant 6.000000e+00 : f32
    %343 = vector.broadcast %cst_177 : f32 to vector<16x128xf32>
    %344 = arith.cmpf ogt, %0, %343 : vector<16x128xf32>
    %cst_178 = arith.constant 1.000000e+00 : f32
    %345 = vector.broadcast %cst_178 : f32 to vector<16x128xf32>
    %346 = arith.cmpf ogt, %0, %345 : vector<16x128xf32>
    %c6_179 = arith.constant 6 : index
    %c0_180 = arith.constant 0 : index
    %c0_181 = arith.constant 0 : index
    %347 = vector.load %arg18[%c6_179, %c0_180, %c0_181] : memref<8x16x128xf32, #tpu.memory_space<vmem>>, vector<1x16x128xf32>
    %348 = vector.shape_cast %347 : vector<1x16x128xf32> to vector<16x128xf32>
    %349 = arith.truncf %313 : vector<16x128xf32> to vector<16x128xbf16>
    %c0_182 = arith.constant 0 : index
    %c0_183 = arith.constant 0 : index
    %350 = vector.load %arg7[%c0_182, %c0_183] : memref<128x128xbf16, #tpu.memory_space<vmem>>, vector<128x128xbf16>
    %cst_184 = arith.constant dense<0.000000e+00> : vector<16x128xf32>
    %351 = tpu.matmul %349, %350, %cst_184 {dimension_numbers = #tpu.dot_dimension_numbers<[1], [0], [0], [1], [0, 0, 1, 1], [], []>} : vector<16x128xbf16>, vector<128x128xbf16>, vector<16x128xf32> -> vector<16x128xf32>
    %352 = arith.addf %348, %351 : vector<16x128xf32>
    %353 = arith.negf %352 : vector<16x128xf32>
    %354 = math.exp %353 : vector<16x128xf32>
    %cst_185 = arith.constant 1.000000e+00 : f32
    %355 = vector.broadcast %cst_185 : f32 to vector<16x128xf32>
    %356 = arith.addf %355, %354 : vector<16x128xf32>
    %357 = arith.divf %355, %356 : vector<16x128xf32>
    %358 = math.tanh %352 : vector<16x128xf32>
    %c16_i32_186 = arith.constant 16 : i32
    %359 = tpu.dynamic_rotate %357 by %c16_i32_186 dim 1 : vector<16x128xf32>, i32 -> vector<16x128xf32>
    %c32_i32_187 = arith.constant 32 : i32
    %360 = tpu.dynamic_rotate %358 by %c32_i32_187 dim 1 : vector<16x128xf32>, i32 -> vector<16x128xf32>
    %c48_i32_188 = arith.constant 48 : i32
    %361 = tpu.dynamic_rotate %357 by %c48_i32_188 dim 1 : vector<16x128xf32>, i32 -> vector<16x128xf32>
    %362 = arith.mulf %359, %314 : vector<16x128xf32>
    %363 = arith.mulf %357, %360 : vector<16x128xf32>
    %364 = arith.addf %362, %363 : vector<16x128xf32>
    %365 = math.tanh %364 : vector<16x128xf32>
    %366 = arith.mulf %361, %365 : vector<16x128xf32>
    %367 = arith.select %344, %366, %313 : vector<16x128xi1>, vector<16x128xf32>
    %368 = arith.select %344, %364, %314 : vector<16x128xi1>, vector<16x128xf32>
    %c6_189 = arith.constant 6 : index
    %c0_190 = arith.constant 0 : index
    %c0_191 = arith.constant 0 : index
    %369 = vector.load %arg22[%c6_189, %c0_190, %c0_191] : memref<8x16x256xf32, #tpu.memory_space<vmem>>, vector<1x16x128xf32>
    %370 = vector.shape_cast %369 : vector<1x16x128xf32> to vector<16x128xf32>
    %371 = vector.shape_cast %367 : vector<16x128xf32> to vector<1x16x128xf32>
    tpu.vector_store %arg22[%c6_189, %c0_190, %c0_191], %371 {strides = array<i32>} : memref<8x16x256xf32, #tpu.memory_space<vmem>>, vector<1x16x128xf32>,
    %c1_192 = arith.constant 1 : index
    %c0_193 = arith.constant 0 : index
    %c0_194 = arith.constant 0 : index
    %372 = vector.load %arg19[%c1_192, %c0_193, %c0_194] : memref<8x16x128xf32, #tpu.memory_space<vmem>>, vector<1x16x128xf32>
    %373 = vector.shape_cast %372 : vector<1x16x128xf32> to vector<16x128xf32>
    %374 = arith.truncf %338 : vector<16x128xf32> to vector<16x128xbf16>
    %c0_195 = arith.constant 0 : index
    %c0_196 = arith.constant 0 : index
    %375 = vector.load %arg8[%c0_195, %c0_196] : memref<128x128xbf16, #tpu.memory_space<vmem>>, vector<128x128xbf16>
    %cst_197 = arith.constant dense<0.000000e+00> : vector<16x128xf32>
    %376 = tpu.matmul %374, %375, %cst_197 {dimension_numbers = #tpu.dot_dimension_numbers<[1], [0], [0], [1], [0, 0, 1, 1], [], []>} : vector<16x128xbf16>, vector<128x128xbf16>, vector<16x128xf32> -> vector<16x128xf32>
    %377 = arith.addf %373, %376 : vector<16x128xf32>
    %378 = arith.negf %377 : vector<16x128xf32>
    %379 = math.exp %378 : vector<16x128xf32>
    %cst_198 = arith.constant 1.000000e+00 : f32
    %380 = vector.broadcast %cst_198 : f32 to vector<16x128xf32>
    %381 = arith.addf %380, %379 : vector<16x128xf32>
    %382 = arith.divf %380, %381 : vector<16x128xf32>
    %383 = math.tanh %377 : vector<16x128xf32>
    %c16_i32_199 = arith.constant 16 : i32
    %384 = tpu.dynamic_rotate %382 by %c16_i32_199 dim 1 : vector<16x128xf32>, i32 -> vector<16x128xf32>
    %c32_i32_200 = arith.constant 32 : i32
    %385 = tpu.dynamic_rotate %383 by %c32_i32_200 dim 1 : vector<16x128xf32>, i32 -> vector<16x128xf32>
    %c48_i32_201 = arith.constant 48 : i32
    %386 = tpu.dynamic_rotate %382 by %c48_i32_201 dim 1 : vector<16x128xf32>, i32 -> vector<16x128xf32>
    %387 = arith.mulf %384, %339 : vector<16x128xf32>
    %388 = arith.mulf %382, %385 : vector<16x128xf32>
    %389 = arith.addf %387, %388 : vector<16x128xf32>
    %390 = math.tanh %389 : vector<16x128xf32>
    %391 = arith.mulf %386, %390 : vector<16x128xf32>
    %392 = arith.select %346, %391, %338 : vector<16x128xi1>, vector<16x128xf32>
    %393 = arith.select %346, %389, %339 : vector<16x128xi1>, vector<16x128xf32>
    %c1_202 = arith.constant 1 : index
    %c0_203 = arith.constant 0 : index
    %c128_204 = arith.constant 128 : index
    %394 = vector.load %arg22[%c1_202, %c0_203, %c128_204] : memref<8x16x256xf32, #tpu.memory_space<vmem>>, vector<1x16x128xf32>
    %395 = vector.shape_cast %394 : vector<1x16x128xf32> to vector<16x128xf32>
    %396 = vector.shape_cast %392 : vector<16x128xf32> to vector<1x16x128xf32>
    tpu.vector_store %arg22[%c1_202, %c0_203, %c128_204], %396 {strides = array<i32>} : memref<8x16x256xf32, #tpu.memory_space<vmem>>, vector<1x16x128xf32>,
    %cst_205 = arith.constant 7.000000e+00 : f32
    %397 = vector.broadcast %cst_205 : f32 to vector<16x128xf32>
    %398 = arith.cmpf ogt, %0, %397 : vector<16x128xf32>
    %cst_206 = arith.constant 0.000000e+00 : f32
    %399 = vector.broadcast %cst_206 : f32 to vector<16x128xf32>
    %400 = arith.cmpf ogt, %0, %399 : vector<16x128xf32>
    %c7_207 = arith.constant 7 : index
    %c0_208 = arith.constant 0 : index
    %c0_209 = arith.constant 0 : index
    %401 = vector.load %arg18[%c7_207, %c0_208, %c0_209] : memref<8x16x128xf32, #tpu.memory_space<vmem>>, vector<1x16x128xf32>
    %402 = vector.shape_cast %401 : vector<1x16x128xf32> to vector<16x128xf32>
    %403 = arith.truncf %367 : vector<16x128xf32> to vector<16x128xbf16>
    %c0_210 = arith.constant 0 : index
    %c0_211 = arith.constant 0 : index
    %404 = vector.load %arg7[%c0_210, %c0_211] : memref<128x128xbf16, #tpu.memory_space<vmem>>, vector<128x128xbf16>
    %cst_212 = arith.constant dense<0.000000e+00> : vector<16x128xf32>
    %405 = tpu.matmul %403, %404, %cst_212 {dimension_numbers = #tpu.dot_dimension_numbers<[1], [0], [0], [1], [0, 0, 1, 1], [], []>} : vector<16x128xbf16>, vector<128x128xbf16>, vector<16x128xf32> -> vector<16x128xf32>
    %406 = arith.addf %402, %405 : vector<16x128xf32>
    %407 = arith.negf %406 : vector<16x128xf32>
    %408 = math.exp %407 : vector<16x128xf32>
    %cst_213 = arith.constant 1.000000e+00 : f32
    %409 = vector.broadcast %cst_213 : f32 to vector<16x128xf32>
    %410 = arith.addf %409, %408 : vector<16x128xf32>
    %411 = arith.divf %409, %410 : vector<16x128xf32>
    %412 = math.tanh %406 : vector<16x128xf32>
    %c16_i32_214 = arith.constant 16 : i32
    %413 = tpu.dynamic_rotate %411 by %c16_i32_214 dim 1 : vector<16x128xf32>, i32 -> vector<16x128xf32>
    %c32_i32_215 = arith.constant 32 : i32
    %414 = tpu.dynamic_rotate %412 by %c32_i32_215 dim 1 : vector<16x128xf32>, i32 -> vector<16x128xf32>
    %c48_i32_216 = arith.constant 48 : i32
    %415 = tpu.dynamic_rotate %411 by %c48_i32_216 dim 1 : vector<16x128xf32>, i32 -> vector<16x128xf32>
    %416 = arith.mulf %413, %368 : vector<16x128xf32>
    %417 = arith.mulf %411, %414 : vector<16x128xf32>
    %418 = arith.addf %416, %417 : vector<16x128xf32>
    %419 = math.tanh %418 : vector<16x128xf32>
    %420 = arith.mulf %415, %419 : vector<16x128xf32>
    %421 = arith.select %398, %420, %367 : vector<16x128xi1>, vector<16x128xf32>
    %c7_217 = arith.constant 7 : index
    %c0_218 = arith.constant 0 : index
    %c0_219 = arith.constant 0 : index
    %422 = vector.load %arg22[%c7_217, %c0_218, %c0_219] : memref<8x16x256xf32, #tpu.memory_space<vmem>>, vector<1x16x128xf32>
    %423 = vector.shape_cast %422 : vector<1x16x128xf32> to vector<16x128xf32>
    %424 = vector.shape_cast %421 : vector<16x128xf32> to vector<1x16x128xf32>
    tpu.vector_store %arg22[%c7_217, %c0_218, %c0_219], %424 {strides = array<i32>} : memref<8x16x256xf32, #tpu.memory_space<vmem>>, vector<1x16x128xf32>,
    %c0_220 = arith.constant 0 : index
    %c0_221 = arith.constant 0 : index
    %c0_222 = arith.constant 0 : index
    %425 = vector.load %arg19[%c0_220, %c0_221, %c0_222] : memref<8x16x128xf32, #tpu.memory_space<vmem>>, vector<1x16x128xf32>
    %426 = vector.shape_cast %425 : vector<1x16x128xf32> to vector<16x128xf32>
    %427 = arith.truncf %392 : vector<16x128xf32> to vector<16x128xbf16>
    %c0_223 = arith.constant 0 : index
    %c0_224 = arith.constant 0 : index
    %428 = vector.load %arg8[%c0_223, %c0_224] : memref<128x128xbf16, #tpu.memory_space<vmem>>, vector<128x128xbf16>
    %cst_225 = arith.constant dense<0.000000e+00> : vector<16x128xf32>
    %429 = tpu.matmul %427, %428, %cst_225 {dimension_numbers = #tpu.dot_dimension_numbers<[1], [0], [0], [1], [0, 0, 1, 1], [], []>} : vector<16x128xbf16>, vector<128x128xbf16>, vector<16x128xf32> -> vector<16x128xf32>
    %430 = arith.addf %426, %429 : vector<16x128xf32>
    %431 = arith.negf %430 : vector<16x128xf32>
    %432 = math.exp %431 : vector<16x128xf32>
    %cst_226 = arith.constant 1.000000e+00 : f32
    %433 = vector.broadcast %cst_226 : f32 to vector<16x128xf32>
    %434 = arith.addf %433, %432 : vector<16x128xf32>
    %435 = arith.divf %433, %434 : vector<16x128xf32>
    %436 = math.tanh %430 : vector<16x128xf32>
    %c16_i32_227 = arith.constant 16 : i32
    %437 = tpu.dynamic_rotate %435 by %c16_i32_227 dim 1 : vector<16x128xf32>, i32 -> vector<16x128xf32>
    %c32_i32_228 = arith.constant 32 : i32
    %438 = tpu.dynamic_rotate %436 by %c32_i32_228 dim 1 : vector<16x128xf32>, i32 -> vector<16x128xf32>
    %c48_i32_229 = arith.constant 48 : i32
    %439 = tpu.dynamic_rotate %435 by %c48_i32_229 dim 1 : vector<16x128xf32>, i32 -> vector<16x128xf32>
    %440 = arith.mulf %437, %393 : vector<16x128xf32>
    %441 = arith.mulf %435, %438 : vector<16x128xf32>
    %442 = arith.addf %440, %441 : vector<16x128xf32>
    %443 = math.tanh %442 : vector<16x128xf32>
    %444 = arith.mulf %439, %443 : vector<16x128xf32>
    %445 = arith.select %400, %444, %392 : vector<16x128xi1>, vector<16x128xf32>
    %c0_230 = arith.constant 0 : index
    %c0_231 = arith.constant 0 : index
    %c128_232 = arith.constant 128 : index
    %446 = vector.load %arg22[%c0_230, %c0_231, %c128_232] : memref<8x16x256xf32, #tpu.memory_space<vmem>>, vector<1x16x128xf32>
    %447 = vector.shape_cast %446 : vector<1x16x128xf32> to vector<16x128xf32>
    %448 = vector.shape_cast %445 : vector<16x128xf32> to vector<1x16x128xf32>
    tpu.vector_store %arg22[%c0_230, %c0_231, %c128_232], %448 {strides = array<i32>} : memref<8x16x256xf32, #tpu.memory_space<vmem>>, vector<1x16x128xf32>,
    %c0_233 = arith.constant 0 : index
    %c0_234 = arith.constant 0 : index
    %c0_235 = arith.constant 0 : index
    %449 = vector.load %arg22[%c0_233, %c0_234, %c0_235] : memref<8x16x256xf32, #tpu.memory_space<vmem>>, vector<8x16x256xf32>
    %450 = vector.shape_cast %449 : vector<8x16x256xf32> to vector<128x256xf32>
    %451 = arith.truncf %450 : vector<128x256xf32> to vector<128x256xbf16>
    %c0_236 = arith.constant 0 : index
    %c0_237 = arith.constant 0 : index
    %452 = vector.load %arg5[%c0_236, %c0_237] : memref<256x128xbf16, #tpu.memory_space<vmem>>, vector<256x128xbf16>
    %cst_238 = arith.constant dense<0.000000e+00> : vector<128x128xf32>
    %453 = tpu.matmul %451, %452, %cst_238 {dimension_numbers = #tpu.dot_dimension_numbers<[1], [0], [0], [1], [0, 0, 1, 1], [], []>} : vector<128x256xbf16>, vector<256x128xbf16>, vector<128x128xf32> -> vector<128x128xf32>
    %c0_239 = arith.constant 0 : index
    %c0_240 = arith.constant 0 : index
    %454 = vector.load %arg14[%c0_239, %c0_240] : memref<1x128xf32, #tpu.memory_space<vmem>>, vector<1x128xf32>
    %455 = vector.broadcast %454 : vector<1x128xf32> to vector<128x128xf32>
    %456 = arith.addf %453, %455 : vector<128x128xf32>
    %457 = vector.shape_cast %456 : vector<128x128xf32> to vector<8x16x128xf32>
    %c0_241 = arith.constant 0 : index
    %c0_242 = arith.constant 0 : index
    %c0_243 = arith.constant 0 : index
    %458 = vector.load %arg20[%c0_241, %c0_242, %c0_243] : memref<8x16x128xf32, #tpu.memory_space<vmem>>, vector<8x16x128xf32>
    tpu.vector_store %arg20[%c0_241, %c0_242, %c0_243], %457 {strides = array<i32>} : memref<8x16x128xf32, #tpu.memory_space<vmem>>, vector<8x16x128xf32>,
    %c0_244 = arith.constant 0 : index
    %c0_245 = arith.constant 0 : index
    %459 = vector.load %arg6[%c0_244, %c0_245] : memref<256x128xbf16, #tpu.memory_space<vmem>>, vector<256x128xbf16>
    %cst_246 = arith.constant dense<0.000000e+00> : vector<128x128xf32>
    %460 = tpu.matmul %451, %459, %cst_246 {dimension_numbers = #tpu.dot_dimension_numbers<[1], [0], [0], [1], [0, 0, 1, 1], [], []>} : vector<128x256xbf16>, vector<256x128xbf16>, vector<128x128xf32> -> vector<128x128xf32>
    %c0_247 = arith.constant 0 : index
    %c0_248 = arith.constant 0 : index
    %461 = vector.load %arg15[%c0_247, %c0_248] : memref<1x128xf32, #tpu.memory_space<vmem>>, vector<1x128xf32>
    %462 = vector.broadcast %461 : vector<1x128xf32> to vector<128x128xf32>
    %463 = arith.addf %460, %462 : vector<128x128xf32>
    %464 = vector.shape_cast %463 : vector<128x128xf32> to vector<8x16x128xf32>
    %c0_249 = arith.constant 0 : index
    %c0_250 = arith.constant 0 : index
    %c0_251 = arith.constant 0 : index
    %465 = vector.load %arg21[%c0_249, %c0_250, %c0_251] : memref<8x16x128xf32, #tpu.memory_space<vmem>>, vector<8x16x128xf32>
    tpu.vector_store %arg21[%c0_249, %c0_250, %c0_251], %464 {strides = array<i32>} : memref<8x16x128xf32, #tpu.memory_space<vmem>>, vector<8x16x128xf32>,
    %cst_252 = arith.constant 0.000000e+00 : f32
    %466 = vector.broadcast %cst_252 : f32 to vector<16x128xf32>
    %467 = arith.cmpf ogt, %0, %466 : vector<16x128xf32>
    %cst_253 = arith.constant 7.000000e+00 : f32
    %468 = vector.broadcast %cst_253 : f32 to vector<16x128xf32>
    %469 = arith.cmpf ogt, %0, %468 : vector<16x128xf32>
    %c0_254 = arith.constant 0 : index
    %c0_255 = arith.constant 0 : index
    %c0_256 = arith.constant 0 : index
    %470 = vector.load %arg20[%c0_254, %c0_255, %c0_256] : memref<8x16x128xf32, #tpu.memory_space<vmem>>, vector<1x16x128xf32>
    %471 = vector.shape_cast %470 : vector<1x16x128xf32> to vector<16x128xf32>
    %472 = arith.truncf %18 : vector<16x128xf32> to vector<16x128xbf16>
    %c0_257 = arith.constant 0 : index
    %c0_258 = arith.constant 0 : index
    %473 = vector.load %arg9[%c0_257, %c0_258] : memref<128x128xbf16, #tpu.memory_space<vmem>>, vector<128x128xbf16>
    %cst_259 = arith.constant dense<0.000000e+00> : vector<16x128xf32>
    %474 = tpu.matmul %472, %473, %cst_259 {dimension_numbers = #tpu.dot_dimension_numbers<[1], [0], [0], [1], [0, 0, 1, 1], [], []>} : vector<16x128xbf16>, vector<128x128xbf16>, vector<16x128xf32> -> vector<16x128xf32>
    %475 = arith.addf %471, %474 : vector<16x128xf32>
    %476 = arith.negf %475 : vector<16x128xf32>
    %477 = math.exp %476 : vector<16x128xf32>
    %cst_260 = arith.constant 1.000000e+00 : f32
    %478 = vector.broadcast %cst_260 : f32 to vector<16x128xf32>
    %479 = arith.addf %478, %477 : vector<16x128xf32>
    %480 = arith.divf %478, %479 : vector<16x128xf32>
    %481 = math.tanh %475 : vector<16x128xf32>
    %c16_i32_261 = arith.constant 16 : i32
    %482 = tpu.dynamic_rotate %480 by %c16_i32_261 dim 1 : vector<16x128xf32>, i32 -> vector<16x128xf32>
    %c32_i32_262 = arith.constant 32 : i32
    %483 = tpu.dynamic_rotate %481 by %c32_i32_262 dim 1 : vector<16x128xf32>, i32 -> vector<16x128xf32>
    %c48_i32_263 = arith.constant 48 : i32
    %484 = tpu.dynamic_rotate %480 by %c48_i32_263 dim 1 : vector<16x128xf32>, i32 -> vector<16x128xf32>
    %485 = arith.mulf %482, %18 : vector<16x128xf32>
    %486 = arith.mulf %480, %483 : vector<16x128xf32>
    %487 = arith.addf %485, %486 : vector<16x128xf32>
    %488 = math.tanh %487 : vector<16x128xf32>
    %489 = arith.mulf %484, %488 : vector<16x128xf32>
    %490 = arith.select %467, %489, %18 : vector<16x128xi1>, vector<16x128xf32>
    %491 = arith.select %467, %487, %18 : vector<16x128xi1>, vector<16x128xf32>
    %c0_264 = arith.constant 0 : index
    %c0_265 = arith.constant 0 : index
    %c0_266 = arith.constant 0 : index
    %492 = vector.load %arg23[%c0_264, %c0_265, %c0_266] : memref<8x16x256xf32, #tpu.memory_space<vmem>>, vector<1x16x128xf32>
    %493 = vector.shape_cast %492 : vector<1x16x128xf32> to vector<16x128xf32>
    %494 = vector.shape_cast %490 : vector<16x128xf32> to vector<1x16x128xf32>
    tpu.vector_store %arg23[%c0_264, %c0_265, %c0_266], %494 {strides = array<i32>} : memref<8x16x256xf32, #tpu.memory_space<vmem>>, vector<1x16x128xf32>,
    %c7_267 = arith.constant 7 : index
    %c0_268 = arith.constant 0 : index
    %c0_269 = arith.constant 0 : index
    %495 = vector.load %arg21[%c7_267, %c0_268, %c0_269] : memref<8x16x128xf32, #tpu.memory_space<vmem>>, vector<1x16x128xf32>
    %496 = vector.shape_cast %495 : vector<1x16x128xf32> to vector<16x128xf32>
    %497 = arith.truncf %18 : vector<16x128xf32> to vector<16x128xbf16>
    %c0_270 = arith.constant 0 : index
    %c0_271 = arith.constant 0 : index
    %498 = vector.load %arg10[%c0_270, %c0_271] : memref<128x128xbf16, #tpu.memory_space<vmem>>, vector<128x128xbf16>
    %cst_272 = arith.constant dense<0.000000e+00> : vector<16x128xf32>
    %499 = tpu.matmul %497, %498, %cst_272 {dimension_numbers = #tpu.dot_dimension_numbers<[1], [0], [0], [1], [0, 0, 1, 1], [], []>} : vector<16x128xbf16>, vector<128x128xbf16>, vector<16x128xf32> -> vector<16x128xf32>
    %500 = arith.addf %496, %499 : vector<16x128xf32>
    %501 = arith.negf %500 : vector<16x128xf32>
    %502 = math.exp %501 : vector<16x128xf32>
    %cst_273 = arith.constant 1.000000e+00 : f32
    %503 = vector.broadcast %cst_273 : f32 to vector<16x128xf32>
    %504 = arith.addf %503, %502 : vector<16x128xf32>
    %505 = arith.divf %503, %504 : vector<16x128xf32>
    %506 = math.tanh %500 : vector<16x128xf32>
    %c16_i32_274 = arith.constant 16 : i32
    %507 = tpu.dynamic_rotate %505 by %c16_i32_274 dim 1 : vector<16x128xf32>, i32 -> vector<16x128xf32>
    %c32_i32_275 = arith.constant 32 : i32
    %508 = tpu.dynamic_rotate %506 by %c32_i32_275 dim 1 : vector<16x128xf32>, i32 -> vector<16x128xf32>
    %c48_i32_276 = arith.constant 48 : i32
    %509 = tpu.dynamic_rotate %505 by %c48_i32_276 dim 1 : vector<16x128xf32>, i32 -> vector<16x128xf32>
    %510 = arith.mulf %507, %18 : vector<16x128xf32>
    %511 = arith.mulf %505, %508 : vector<16x128xf32>
    %512 = arith.addf %510, %511 : vector<16x128xf32>
    %513 = math.tanh %512 : vector<16x128xf32>
    %514 = arith.mulf %509, %513 : vector<16x128xf32>
    %515 = arith.select %469, %514, %18 : vector<16x128xi1>, vector<16x128xf32>
    %516 = arith.select %469, %512, %18 : vector<16x128xi1>, vector<16x128xf32>
    %c7_277 = arith.constant 7 : index
    %c0_278 = arith.constant 0 : index
    %c128_279 = arith.constant 128 : index
    %517 = vector.load %arg23[%c7_277, %c0_278, %c128_279] : memref<8x16x256xf32, #tpu.memory_space<vmem>>, vector<1x16x128xf32>
    %518 = vector.shape_cast %517 : vector<1x16x128xf32> to vector<16x128xf32>
    %519 = vector.shape_cast %515 : vector<16x128xf32> to vector<1x16x128xf32>
    tpu.vector_store %arg23[%c7_277, %c0_278, %c128_279], %519 {strides = array<i32>} : memref<8x16x256xf32, #tpu.memory_space<vmem>>, vector<1x16x128xf32>,
    %cst_280 = arith.constant 1.000000e+00 : f32
    %520 = vector.broadcast %cst_280 : f32 to vector<16x128xf32>
    %521 = arith.cmpf ogt, %0, %520 : vector<16x128xf32>
    %cst_281 = arith.constant 6.000000e+00 : f32
    %522 = vector.broadcast %cst_281 : f32 to vector<16x128xf32>
    %523 = arith.cmpf ogt, %0, %522 : vector<16x128xf32>
    %c1_282 = arith.constant 1 : index
    %c0_283 = arith.constant 0 : index
    %c0_284 = arith.constant 0 : index
    %524 = vector.load %arg20[%c1_282, %c0_283, %c0_284] : memref<8x16x128xf32, #tpu.memory_space<vmem>>, vector<1x16x128xf32>
    %525 = vector.shape_cast %524 : vector<1x16x128xf32> to vector<16x128xf32>
    %526 = arith.truncf %490 : vector<16x128xf32> to vector<16x128xbf16>
    %c0_285 = arith.constant 0 : index
    %c0_286 = arith.constant 0 : index
    %527 = vector.load %arg9[%c0_285, %c0_286] : memref<128x128xbf16, #tpu.memory_space<vmem>>, vector<128x128xbf16>
    %cst_287 = arith.constant dense<0.000000e+00> : vector<16x128xf32>
    %528 = tpu.matmul %526, %527, %cst_287 {dimension_numbers = #tpu.dot_dimension_numbers<[1], [0], [0], [1], [0, 0, 1, 1], [], []>} : vector<16x128xbf16>, vector<128x128xbf16>, vector<16x128xf32> -> vector<16x128xf32>
    %529 = arith.addf %525, %528 : vector<16x128xf32>
    %530 = arith.negf %529 : vector<16x128xf32>
    %531 = math.exp %530 : vector<16x128xf32>
    %cst_288 = arith.constant 1.000000e+00 : f32
    %532 = vector.broadcast %cst_288 : f32 to vector<16x128xf32>
    %533 = arith.addf %532, %531 : vector<16x128xf32>
    %534 = arith.divf %532, %533 : vector<16x128xf32>
    %535 = math.tanh %529 : vector<16x128xf32>
    %c16_i32_289 = arith.constant 16 : i32
    %536 = tpu.dynamic_rotate %534 by %c16_i32_289 dim 1 : vector<16x128xf32>, i32 -> vector<16x128xf32>
    %c32_i32_290 = arith.constant 32 : i32
    %537 = tpu.dynamic_rotate %535 by %c32_i32_290 dim 1 : vector<16x128xf32>, i32 -> vector<16x128xf32>
    %c48_i32_291 = arith.constant 48 : i32
    %538 = tpu.dynamic_rotate %534 by %c48_i32_291 dim 1 : vector<16x128xf32>, i32 -> vector<16x128xf32>
    %539 = arith.mulf %536, %491 : vector<16x128xf32>
    %540 = arith.mulf %534, %537 : vector<16x128xf32>
    %541 = arith.addf %539, %540 : vector<16x128xf32>
    %542 = math.tanh %541 : vector<16x128xf32>
    %543 = arith.mulf %538, %542 : vector<16x128xf32>
    %544 = arith.select %521, %543, %490 : vector<16x128xi1>, vector<16x128xf32>
    %545 = arith.select %521, %541, %491 : vector<16x128xi1>, vector<16x128xf32>
    %c1_292 = arith.constant 1 : index
    %c0_293 = arith.constant 0 : index
    %c0_294 = arith.constant 0 : index
    %546 = vector.load %arg23[%c1_292, %c0_293, %c0_294] : memref<8x16x256xf32, #tpu.memory_space<vmem>>, vector<1x16x128xf32>
    %547 = vector.shape_cast %546 : vector<1x16x128xf32> to vector<16x128xf32>
    %548 = vector.shape_cast %544 : vector<16x128xf32> to vector<1x16x128xf32>
    tpu.vector_store %arg23[%c1_292, %c0_293, %c0_294], %548 {strides = array<i32>} : memref<8x16x256xf32, #tpu.memory_space<vmem>>, vector<1x16x128xf32>,
    %c6_295 = arith.constant 6 : index
    %c0_296 = arith.constant 0 : index
    %c0_297 = arith.constant 0 : index
    %549 = vector.load %arg21[%c6_295, %c0_296, %c0_297] : memref<8x16x128xf32, #tpu.memory_space<vmem>>, vector<1x16x128xf32>
    %550 = vector.shape_cast %549 : vector<1x16x128xf32> to vector<16x128xf32>
    %551 = arith.truncf %515 : vector<16x128xf32> to vector<16x128xbf16>
    %c0_298 = arith.constant 0 : index
    %c0_299 = arith.constant 0 : index
    %552 = vector.load %arg10[%c0_298, %c0_299] : memref<128x128xbf16, #tpu.memory_space<vmem>>, vector<128x128xbf16>
    %cst_300 = arith.constant dense<0.000000e+00> : vector<16x128xf32>
    %553 = tpu.matmul %551, %552, %cst_300 {dimension_numbers = #tpu.dot_dimension_numbers<[1], [0], [0], [1], [0, 0, 1, 1], [], []>} : vector<16x128xbf16>, vector<128x128xbf16>, vector<16x128xf32> -> vector<16x128xf32>
    %554 = arith.addf %550, %553 : vector<16x128xf32>
    %555 = arith.negf %554 : vector<16x128xf32>
    %556 = math.exp %555 : vector<16x128xf32>
    %cst_301 = arith.constant 1.000000e+00 : f32
    %557 = vector.broadcast %cst_301 : f32 to vector<16x128xf32>
    %558 = arith.addf %557, %556 : vector<16x128xf32>
    %559 = arith.divf %557, %558 : vector<16x128xf32>
    %560 = math.tanh %554 : vector<16x128xf32>
    %c16_i32_302 = arith.constant 16 : i32
    %561 = tpu.dynamic_rotate %559 by %c16_i32_302 dim 1 : vector<16x128xf32>, i32 -> vector<16x128xf32>
    %c32_i32_303 = arith.constant 32 : i32
    %562 = tpu.dynamic_rotate %560 by %c32_i32_303 dim 1 : vector<16x128xf32>, i32 -> vector<16x128xf32>
    %c48_i32_304 = arith.constant 48 : i32
    %563 = tpu.dynamic_rotate %559 by %c48_i32_304 dim 1 : vector<16x128xf32>, i32 -> vector<16x128xf32>
    %564 = arith.mulf %561, %516 : vector<16x128xf32>
    %565 = arith.mulf %559, %562 : vector<16x128xf32>
    %566 = arith.addf %564, %565 : vector<16x128xf32>
    %567 = math.tanh %566 : vector<16x128xf32>
    %568 = arith.mulf %563, %567 : vector<16x128xf32>
    %569 = arith.select %523, %568, %515 : vector<16x128xi1>, vector<16x128xf32>
    %570 = arith.select %523, %566, %516 : vector<16x128xi1>, vector<16x128xf32>
    %c6_305 = arith.constant 6 : index
    %c0_306 = arith.constant 0 : index
    %c128_307 = arith.constant 128 : index
    %571 = vector.load %arg23[%c6_305, %c0_306, %c128_307] : memref<8x16x256xf32, #tpu.memory_space<vmem>>, vector<1x16x128xf32>
    %572 = vector.shape_cast %571 : vector<1x16x128xf32> to vector<16x128xf32>
    %573 = vector.shape_cast %569 : vector<16x128xf32> to vector<1x16x128xf32>
    tpu.vector_store %arg23[%c6_305, %c0_306, %c128_307], %573 {strides = array<i32>} : memref<8x16x256xf32, #tpu.memory_space<vmem>>, vector<1x16x128xf32>,
    %cst_308 = arith.constant 2.000000e+00 : f32
    %574 = vector.broadcast %cst_308 : f32 to vector<16x128xf32>
    %575 = arith.cmpf ogt, %0, %574 : vector<16x128xf32>
    %cst_309 = arith.constant 5.000000e+00 : f32
    %576 = vector.broadcast %cst_309 : f32 to vector<16x128xf32>
    %577 = arith.cmpf ogt, %0, %576 : vector<16x128xf32>
    %c2_310 = arith.constant 2 : index
    %c0_311 = arith.constant 0 : index
    %c0_312 = arith.constant 0 : index
    %578 = vector.load %arg20[%c2_310, %c0_311, %c0_312] : memref<8x16x128xf32, #tpu.memory_space<vmem>>, vector<1x16x128xf32>
    %579 = vector.shape_cast %578 : vector<1x16x128xf32> to vector<16x128xf32>
    %580 = arith.truncf %544 : vector<16x128xf32> to vector<16x128xbf16>
    %c0_313 = arith.constant 0 : index
    %c0_314 = arith.constant 0 : index
    %581 = vector.load %arg9[%c0_313, %c0_314] : memref<128x128xbf16, #tpu.memory_space<vmem>>, vector<128x128xbf16>
    %cst_315 = arith.constant dense<0.000000e+00> : vector<16x128xf32>
    %582 = tpu.matmul %580, %581, %cst_315 {dimension_numbers = #tpu.dot_dimension_numbers<[1], [0], [0], [1], [0, 0, 1, 1], [], []>} : vector<16x128xbf16>, vector<128x128xbf16>, vector<16x128xf32> -> vector<16x128xf32>
    %583 = arith.addf %579, %582 : vector<16x128xf32>
    %584 = arith.negf %583 : vector<16x128xf32>
    %585 = math.exp %584 : vector<16x128xf32>
    %cst_316 = arith.constant 1.000000e+00 : f32
    %586 = vector.broadcast %cst_316 : f32 to vector<16x128xf32>
    %587 = arith.addf %586, %585 : vector<16x128xf32>
    %588 = arith.divf %586, %587 : vector<16x128xf32>
    %589 = math.tanh %583 : vector<16x128xf32>
    %c16_i32_317 = arith.constant 16 : i32
    %590 = tpu.dynamic_rotate %588 by %c16_i32_317 dim 1 : vector<16x128xf32>, i32 -> vector<16x128xf32>
    %c32_i32_318 = arith.constant 32 : i32
    %591 = tpu.dynamic_rotate %589 by %c32_i32_318 dim 1 : vector<16x128xf32>, i32 -> vector<16x128xf32>
    %c48_i32_319 = arith.constant 48 : i32
    %592 = tpu.dynamic_rotate %588 by %c48_i32_319 dim 1 : vector<16x128xf32>, i32 -> vector<16x128xf32>
    %593 = arith.mulf %590, %545 : vector<16x128xf32>
    %594 = arith.mulf %588, %591 : vector<16x128xf32>
    %595 = arith.addf %593, %594 : vector<16x128xf32>
    %596 = math.tanh %595 : vector<16x128xf32>
    %597 = arith.mulf %592, %596 : vector<16x128xf32>
    %598 = arith.select %575, %597, %544 : vector<16x128xi1>, vector<16x128xf32>
    %599 = arith.select %575, %595, %545 : vector<16x128xi1>, vector<16x128xf32>
    %c2_320 = arith.constant 2 : index
    %c0_321 = arith.constant 0 : index
    %c0_322 = arith.constant 0 : index
    %600 = vector.load %arg23[%c2_320, %c0_321, %c0_322] : memref<8x16x256xf32, #tpu.memory_space<vmem>>, vector<1x16x128xf32>
    %601 = vector.shape_cast %600 : vector<1x16x128xf32> to vector<16x128xf32>
    %602 = vector.shape_cast %598 : vector<16x128xf32> to vector<1x16x128xf32>
    tpu.vector_store %arg23[%c2_320, %c0_321, %c0_322], %602 {strides = array<i32>} : memref<8x16x256xf32, #tpu.memory_space<vmem>>, vector<1x16x128xf32>,
    %c5_323 = arith.constant 5 : index
    %c0_324 = arith.constant 0 : index
    %c0_325 = arith.constant 0 : index
    %603 = vector.load %arg21[%c5_323, %c0_324, %c0_325] : memref<8x16x128xf32, #tpu.memory_space<vmem>>, vector<1x16x128xf32>
    %604 = vector.shape_cast %603 : vector<1x16x128xf32> to vector<16x128xf32>
    %605 = arith.truncf %569 : vector<16x128xf32> to vector<16x128xbf16>
    %c0_326 = arith.constant 0 : index
    %c0_327 = arith.constant 0 : index
    %606 = vector.load %arg10[%c0_326, %c0_327] : memref<128x128xbf16, #tpu.memory_space<vmem>>, vector<128x128xbf16>
    %cst_328 = arith.constant dense<0.000000e+00> : vector<16x128xf32>
    %607 = tpu.matmul %605, %606, %cst_328 {dimension_numbers = #tpu.dot_dimension_numbers<[1], [0], [0], [1], [0, 0, 1, 1], [], []>} : vector<16x128xbf16>, vector<128x128xbf16>, vector<16x128xf32> -> vector<16x128xf32>
    %608 = arith.addf %604, %607 : vector<16x128xf32>
    %609 = arith.negf %608 : vector<16x128xf32>
    %610 = math.exp %609 : vector<16x128xf32>
    %cst_329 = arith.constant 1.000000e+00 : f32
    %611 = vector.broadcast %cst_329 : f32 to vector<16x128xf32>
    %612 = arith.addf %611, %610 : vector<16x128xf32>
    %613 = arith.divf %611, %612 : vector<16x128xf32>
    %614 = math.tanh %608 : vector<16x128xf32>
    %c16_i32_330 = arith.constant 16 : i32
    %615 = tpu.dynamic_rotate %613 by %c16_i32_330 dim 1 : vector<16x128xf32>, i32 -> vector<16x128xf32>
    %c32_i32_331 = arith.constant 32 : i32
    %616 = tpu.dynamic_rotate %614 by %c32_i32_331 dim 1 : vector<16x128xf32>, i32 -> vector<16x128xf32>
    %c48_i32_332 = arith.constant 48 : i32
    %617 = tpu.dynamic_rotate %613 by %c48_i32_332 dim 1 : vector<16x128xf32>, i32 -> vector<16x128xf32>
    %618 = arith.mulf %615, %570 : vector<16x128xf32>
    %619 = arith.mulf %613, %616 : vector<16x128xf32>
    %620 = arith.addf %618, %619 : vector<16x128xf32>
    %621 = math.tanh %620 : vector<16x128xf32>
    %622 = arith.mulf %617, %621 : vector<16x128xf32>
    %623 = arith.select %577, %622, %569 : vector<16x128xi1>, vector<16x128xf32>
    %624 = arith.select %577, %620, %570 : vector<16x128xi1>, vector<16x128xf32>
    %c5_333 = arith.constant 5 : index
    %c0_334 = arith.constant 0 : index
    %c128_335 = arith.constant 128 : index
    %625 = vector.load %arg23[%c5_333, %c0_334, %c128_335] : memref<8x16x256xf32, #tpu.memory_space<vmem>>, vector<1x16x128xf32>
    %626 = vector.shape_cast %625 : vector<1x16x128xf32> to vector<16x128xf32>
    %627 = vector.shape_cast %623 : vector<16x128xf32> to vector<1x16x128xf32>
    tpu.vector_store %arg23[%c5_333, %c0_334, %c128_335], %627 {strides = array<i32>} : memref<8x16x256xf32, #tpu.memory_space<vmem>>, vector<1x16x128xf32>,
    %cst_336 = arith.constant 3.000000e+00 : f32
    %628 = vector.broadcast %cst_336 : f32 to vector<16x128xf32>
    %629 = arith.cmpf ogt, %0, %628 : vector<16x128xf32>
    %cst_337 = arith.constant 4.000000e+00 : f32
    %630 = vector.broadcast %cst_337 : f32 to vector<16x128xf32>
    %631 = arith.cmpf ogt, %0, %630 : vector<16x128xf32>
    %c3_338 = arith.constant 3 : index
    %c0_339 = arith.constant 0 : index
    %c0_340 = arith.constant 0 : index
    %632 = vector.load %arg20[%c3_338, %c0_339, %c0_340] : memref<8x16x128xf32, #tpu.memory_space<vmem>>, vector<1x16x128xf32>
    %633 = vector.shape_cast %632 : vector<1x16x128xf32> to vector<16x128xf32>
    %634 = arith.truncf %598 : vector<16x128xf32> to vector<16x128xbf16>
    %c0_341 = arith.constant 0 : index
    %c0_342 = arith.constant 0 : index
    %635 = vector.load %arg9[%c0_341, %c0_342] : memref<128x128xbf16, #tpu.memory_space<vmem>>, vector<128x128xbf16>
    %cst_343 = arith.constant dense<0.000000e+00> : vector<16x128xf32>
    %636 = tpu.matmul %634, %635, %cst_343 {dimension_numbers = #tpu.dot_dimension_numbers<[1], [0], [0], [1], [0, 0, 1, 1], [], []>} : vector<16x128xbf16>, vector<128x128xbf16>, vector<16x128xf32> -> vector<16x128xf32>
    %637 = arith.addf %633, %636 : vector<16x128xf32>
    %638 = arith.negf %637 : vector<16x128xf32>
    %639 = math.exp %638 : vector<16x128xf32>
    %cst_344 = arith.constant 1.000000e+00 : f32
    %640 = vector.broadcast %cst_344 : f32 to vector<16x128xf32>
    %641 = arith.addf %640, %639 : vector<16x128xf32>
    %642 = arith.divf %640, %641 : vector<16x128xf32>
    %643 = math.tanh %637 : vector<16x128xf32>
    %c16_i32_345 = arith.constant 16 : i32
    %644 = tpu.dynamic_rotate %642 by %c16_i32_345 dim 1 : vector<16x128xf32>, i32 -> vector<16x128xf32>
    %c32_i32_346 = arith.constant 32 : i32
    %645 = tpu.dynamic_rotate %643 by %c32_i32_346 dim 1 : vector<16x128xf32>, i32 -> vector<16x128xf32>
    %c48_i32_347 = arith.constant 48 : i32
    %646 = tpu.dynamic_rotate %642 by %c48_i32_347 dim 1 : vector<16x128xf32>, i32 -> vector<16x128xf32>
    %647 = arith.mulf %644, %599 : vector<16x128xf32>
    %648 = arith.mulf %642, %645 : vector<16x128xf32>
    %649 = arith.addf %647, %648 : vector<16x128xf32>
    %650 = math.tanh %649 : vector<16x128xf32>
    %651 = arith.mulf %646, %650 : vector<16x128xf32>
    %652 = arith.select %629, %651, %598 : vector<16x128xi1>, vector<16x128xf32>
    %653 = arith.select %629, %649, %599 : vector<16x128xi1>, vector<16x128xf32>
    %c3_348 = arith.constant 3 : index
    %c0_349 = arith.constant 0 : index
    %c0_350 = arith.constant 0 : index
    %654 = vector.load %arg23[%c3_348, %c0_349, %c0_350] : memref<8x16x256xf32, #tpu.memory_space<vmem>>, vector<1x16x128xf32>
    %655 = vector.shape_cast %654 : vector<1x16x128xf32> to vector<16x128xf32>
    %656 = vector.shape_cast %652 : vector<16x128xf32> to vector<1x16x128xf32>
    tpu.vector_store %arg23[%c3_348, %c0_349, %c0_350], %656 {strides = array<i32>} : memref<8x16x256xf32, #tpu.memory_space<vmem>>, vector<1x16x128xf32>,
    %c4_351 = arith.constant 4 : index
    %c0_352 = arith.constant 0 : index
    %c0_353 = arith.constant 0 : index
    %657 = vector.load %arg21[%c4_351, %c0_352, %c0_353] : memref<8x16x128xf32, #tpu.memory_space<vmem>>, vector<1x16x128xf32>
    %658 = vector.shape_cast %657 : vector<1x16x128xf32> to vector<16x128xf32>
    %659 = arith.truncf %623 : vector<16x128xf32> to vector<16x128xbf16>
    %c0_354 = arith.constant 0 : index
    %c0_355 = arith.constant 0 : index
    %660 = vector.load %arg10[%c0_354, %c0_355] : memref<128x128xbf16, #tpu.memory_space<vmem>>, vector<128x128xbf16>
    %cst_356 = arith.constant dense<0.000000e+00> : vector<16x128xf32>
    %661 = tpu.matmul %659, %660, %cst_356 {dimension_numbers = #tpu.dot_dimension_numbers<[1], [0], [0], [1], [0, 0, 1, 1], [], []>} : vector<16x128xbf16>, vector<128x128xbf16>, vector<16x128xf32> -> vector<16x128xf32>
    %662 = arith.addf %658, %661 : vector<16x128xf32>
    %663 = arith.negf %662 : vector<16x128xf32>
    %664 = math.exp %663 : vector<16x128xf32>
    %cst_357 = arith.constant 1.000000e+00 : f32
    %665 = vector.broadcast %cst_357 : f32 to vector<16x128xf32>
    %666 = arith.addf %665, %664 : vector<16x128xf32>
    %667 = arith.divf %665, %666 : vector<16x128xf32>
    %668 = math.tanh %662 : vector<16x128xf32>
    %c16_i32_358 = arith.constant 16 : i32
    %669 = tpu.dynamic_rotate %667 by %c16_i32_358 dim 1 : vector<16x128xf32>, i32 -> vector<16x128xf32>
    %c32_i32_359 = arith.constant 32 : i32
    %670 = tpu.dynamic_rotate %668 by %c32_i32_359 dim 1 : vector<16x128xf32>, i32 -> vector<16x128xf32>
    %c48_i32_360 = arith.constant 48 : i32
    %671 = tpu.dynamic_rotate %667 by %c48_i32_360 dim 1 : vector<16x128xf32>, i32 -> vector<16x128xf32>
    %672 = arith.mulf %669, %624 : vector<16x128xf32>
    %673 = arith.mulf %667, %670 : vector<16x128xf32>
    %674 = arith.addf %672, %673 : vector<16x128xf32>
    %675 = math.tanh %674 : vector<16x128xf32>
    %676 = arith.mulf %671, %675 : vector<16x128xf32>
    %677 = arith.select %631, %676, %623 : vector<16x128xi1>, vector<16x128xf32>
    %678 = arith.select %631, %674, %624 : vector<16x128xi1>, vector<16x128xf32>
    %c4_361 = arith.constant 4 : index
    %c0_362 = arith.constant 0 : index
    %c128_363 = arith.constant 128 : index
    %679 = vector.load %arg23[%c4_361, %c0_362, %c128_363] : memref<8x16x256xf32, #tpu.memory_space<vmem>>, vector<1x16x128xf32>
    %680 = vector.shape_cast %679 : vector<1x16x128xf32> to vector<16x128xf32>
    %681 = vector.shape_cast %677 : vector<16x128xf32> to vector<1x16x128xf32>
    tpu.vector_store %arg23[%c4_361, %c0_362, %c128_363], %681 {strides = array<i32>} : memref<8x16x256xf32, #tpu.memory_space<vmem>>, vector<1x16x128xf32>,
    %cst_364 = arith.constant 4.000000e+00 : f32
    %682 = vector.broadcast %cst_364 : f32 to vector<16x128xf32>
    %683 = arith.cmpf ogt, %0, %682 : vector<16x128xf32>
    %cst_365 = arith.constant 3.000000e+00 : f32
    %684 = vector.broadcast %cst_365 : f32 to vector<16x128xf32>
    %685 = arith.cmpf ogt, %0, %684 : vector<16x128xf32>
    %c4_366 = arith.constant 4 : index
    %c0_367 = arith.constant 0 : index
    %c0_368 = arith.constant 0 : index
    %686 = vector.load %arg20[%c4_366, %c0_367, %c0_368] : memref<8x16x128xf32, #tpu.memory_space<vmem>>, vector<1x16x128xf32>
    %687 = vector.shape_cast %686 : vector<1x16x128xf32> to vector<16x128xf32>
    %688 = arith.truncf %652 : vector<16x128xf32> to vector<16x128xbf16>
    %c0_369 = arith.constant 0 : index
    %c0_370 = arith.constant 0 : index
    %689 = vector.load %arg9[%c0_369, %c0_370] : memref<128x128xbf16, #tpu.memory_space<vmem>>, vector<128x128xbf16>
    %cst_371 = arith.constant dense<0.000000e+00> : vector<16x128xf32>
    %690 = tpu.matmul %688, %689, %cst_371 {dimension_numbers = #tpu.dot_dimension_numbers<[1], [0], [0], [1], [0, 0, 1, 1], [], []>} : vector<16x128xbf16>, vector<128x128xbf16>, vector<16x128xf32> -> vector<16x128xf32>
    %691 = arith.addf %687, %690 : vector<16x128xf32>
    %692 = arith.negf %691 : vector<16x128xf32>
    %693 = math.exp %692 : vector<16x128xf32>
    %cst_372 = arith.constant 1.000000e+00 : f32
    %694 = vector.broadcast %cst_372 : f32 to vector<16x128xf32>
    %695 = arith.addf %694, %693 : vector<16x128xf32>
    %696 = arith.divf %694, %695 : vector<16x128xf32>
    %697 = math.tanh %691 : vector<16x128xf32>
    %c16_i32_373 = arith.constant 16 : i32
    %698 = tpu.dynamic_rotate %696 by %c16_i32_373 dim 1 : vector<16x128xf32>, i32 -> vector<16x128xf32>
    %c32_i32_374 = arith.constant 32 : i32
    %699 = tpu.dynamic_rotate %697 by %c32_i32_374 dim 1 : vector<16x128xf32>, i32 -> vector<16x128xf32>
    %c48_i32_375 = arith.constant 48 : i32
    %700 = tpu.dynamic_rotate %696 by %c48_i32_375 dim 1 : vector<16x128xf32>, i32 -> vector<16x128xf32>
    %701 = arith.mulf %698, %653 : vector<16x128xf32>
    %702 = arith.mulf %696, %699 : vector<16x128xf32>
    %703 = arith.addf %701, %702 : vector<16x128xf32>
    %704 = math.tanh %703 : vector<16x128xf32>
    %705 = arith.mulf %700, %704 : vector<16x128xf32>
    %706 = arith.select %683, %705, %652 : vector<16x128xi1>, vector<16x128xf32>
    %707 = arith.select %683, %703, %653 : vector<16x128xi1>, vector<16x128xf32>
    %c4_376 = arith.constant 4 : index
    %c0_377 = arith.constant 0 : index
    %c0_378 = arith.constant 0 : index
    %708 = vector.load %arg23[%c4_376, %c0_377, %c0_378] : memref<8x16x256xf32, #tpu.memory_space<vmem>>, vector<1x16x128xf32>
    %709 = vector.shape_cast %708 : vector<1x16x128xf32> to vector<16x128xf32>
    %710 = vector.shape_cast %706 : vector<16x128xf32> to vector<1x16x128xf32>
    tpu.vector_store %arg23[%c4_376, %c0_377, %c0_378], %710 {strides = array<i32>} : memref<8x16x256xf32, #tpu.memory_space<vmem>>, vector<1x16x128xf32>,
    %c3_379 = arith.constant 3 : index
    %c0_380 = arith.constant 0 : index
    %c0_381 = arith.constant 0 : index
    %711 = vector.load %arg21[%c3_379, %c0_380, %c0_381] : memref<8x16x128xf32, #tpu.memory_space<vmem>>, vector<1x16x128xf32>
    %712 = vector.shape_cast %711 : vector<1x16x128xf32> to vector<16x128xf32>
    %713 = arith.truncf %677 : vector<16x128xf32> to vector<16x128xbf16>
    %c0_382 = arith.constant 0 : index
    %c0_383 = arith.constant 0 : index
    %714 = vector.load %arg10[%c0_382, %c0_383] : memref<128x128xbf16, #tpu.memory_space<vmem>>, vector<128x128xbf16>
    %cst_384 = arith.constant dense<0.000000e+00> : vector<16x128xf32>
    %715 = tpu.matmul %713, %714, %cst_384 {dimension_numbers = #tpu.dot_dimension_numbers<[1], [0], [0], [1], [0, 0, 1, 1], [], []>} : vector<16x128xbf16>, vector<128x128xbf16>, vector<16x128xf32> -> vector<16x128xf32>
    %716 = arith.addf %712, %715 : vector<16x128xf32>
    %717 = arith.negf %716 : vector<16x128xf32>
    %718 = math.exp %717 : vector<16x128xf32>
    %cst_385 = arith.constant 1.000000e+00 : f32
    %719 = vector.broadcast %cst_385 : f32 to vector<16x128xf32>
    %720 = arith.addf %719, %718 : vector<16x128xf32>
    %721 = arith.divf %719, %720 : vector<16x128xf32>
    %722 = math.tanh %716 : vector<16x128xf32>
    %c16_i32_386 = arith.constant 16 : i32
    %723 = tpu.dynamic_rotate %721 by %c16_i32_386 dim 1 : vector<16x128xf32>, i32 -> vector<16x128xf32>
    %c32_i32_387 = arith.constant 32 : i32
    %724 = tpu.dynamic_rotate %722 by %c32_i32_387 dim 1 : vector<16x128xf32>, i32 -> vector<16x128xf32>
    %c48_i32_388 = arith.constant 48 : i32
    %725 = tpu.dynamic_rotate %721 by %c48_i32_388 dim 1 : vector<16x128xf32>, i32 -> vector<16x128xf32>
    %726 = arith.mulf %723, %678 : vector<16x128xf32>
    %727 = arith.mulf %721, %724 : vector<16x128xf32>
    %728 = arith.addf %726, %727 : vector<16x128xf32>
    %729 = math.tanh %728 : vector<16x128xf32>
    %730 = arith.mulf %725, %729 : vector<16x128xf32>
    %731 = arith.select %685, %730, %677 : vector<16x128xi1>, vector<16x128xf32>
    %732 = arith.select %685, %728, %678 : vector<16x128xi1>, vector<16x128xf32>
    %c3_389 = arith.constant 3 : index
    %c0_390 = arith.constant 0 : index
    %c128_391 = arith.constant 128 : index
    %733 = vector.load %arg23[%c3_389, %c0_390, %c128_391] : memref<8x16x256xf32, #tpu.memory_space<vmem>>, vector<1x16x128xf32>
    %734 = vector.shape_cast %733 : vector<1x16x128xf32> to vector<16x128xf32>
    %735 = vector.shape_cast %731 : vector<16x128xf32> to vector<1x16x128xf32>
    tpu.vector_store %arg23[%c3_389, %c0_390, %c128_391], %735 {strides = array<i32>} : memref<8x16x256xf32, #tpu.memory_space<vmem>>, vector<1x16x128xf32>,
    %cst_392 = arith.constant 5.000000e+00 : f32
    %736 = vector.broadcast %cst_392 : f32 to vector<16x128xf32>
    %737 = arith.cmpf ogt, %0, %736 : vector<16x128xf32>
    %cst_393 = arith.constant 2.000000e+00 : f32
    %738 = vector.broadcast %cst_393 : f32 to vector<16x128xf32>
    %739 = arith.cmpf ogt, %0, %738 : vector<16x128xf32>
    %c5_394 = arith.constant 5 : index
    %c0_395 = arith.constant 0 : index
    %c0_396 = arith.constant 0 : index
    %740 = vector.load %arg20[%c5_394, %c0_395, %c0_396] : memref<8x16x128xf32, #tpu.memory_space<vmem>>, vector<1x16x128xf32>
    %741 = vector.shape_cast %740 : vector<1x16x128xf32> to vector<16x128xf32>
    %742 = arith.truncf %706 : vector<16x128xf32> to vector<16x128xbf16>
    %c0_397 = arith.constant 0 : index
    %c0_398 = arith.constant 0 : index
    %743 = vector.load %arg9[%c0_397, %c0_398] : memref<128x128xbf16, #tpu.memory_space<vmem>>, vector<128x128xbf16>
    %cst_399 = arith.constant dense<0.000000e+00> : vector<16x128xf32>
    %744 = tpu.matmul %742, %743, %cst_399 {dimension_numbers = #tpu.dot_dimension_numbers<[1], [0], [0], [1], [0, 0, 1, 1], [], []>} : vector<16x128xbf16>, vector<128x128xbf16>, vector<16x128xf32> -> vector<16x128xf32>
    %745 = arith.addf %741, %744 : vector<16x128xf32>
    %746 = arith.negf %745 : vector<16x128xf32>
    %747 = math.exp %746 : vector<16x128xf32>
    %cst_400 = arith.constant 1.000000e+00 : f32
    %748 = vector.broadcast %cst_400 : f32 to vector<16x128xf32>
    %749 = arith.addf %748, %747 : vector<16x128xf32>
    %750 = arith.divf %748, %749 : vector<16x128xf32>
    %751 = math.tanh %745 : vector<16x128xf32>
    %c16_i32_401 = arith.constant 16 : i32
    %752 = tpu.dynamic_rotate %750 by %c16_i32_401 dim 1 : vector<16x128xf32>, i32 -> vector<16x128xf32>
    %c32_i32_402 = arith.constant 32 : i32
    %753 = tpu.dynamic_rotate %751 by %c32_i32_402 dim 1 : vector<16x128xf32>, i32 -> vector<16x128xf32>
    %c48_i32_403 = arith.constant 48 : i32
    %754 = tpu.dynamic_rotate %750 by %c48_i32_403 dim 1 : vector<16x128xf32>, i32 -> vector<16x128xf32>
    %755 = arith.mulf %752, %707 : vector<16x128xf32>
    %756 = arith.mulf %750, %753 : vector<16x128xf32>
    %757 = arith.addf %755, %756 : vector<16x128xf32>
    %758 = math.tanh %757 : vector<16x128xf32>
    %759 = arith.mulf %754, %758 : vector<16x128xf32>
    %760 = arith.select %737, %759, %706 : vector<16x128xi1>, vector<16x128xf32>
    %761 = arith.select %737, %757, %707 : vector<16x128xi1>, vector<16x128xf32>
    %c5_404 = arith.constant 5 : index
    %c0_405 = arith.constant 0 : index
    %c0_406 = arith.constant 0 : index
    %762 = vector.load %arg23[%c5_404, %c0_405, %c0_406] : memref<8x16x256xf32, #tpu.memory_space<vmem>>, vector<1x16x128xf32>
    %763 = vector.shape_cast %762 : vector<1x16x128xf32> to vector<16x128xf32>
    %764 = vector.shape_cast %760 : vector<16x128xf32> to vector<1x16x128xf32>
    tpu.vector_store %arg23[%c5_404, %c0_405, %c0_406], %764 {strides = array<i32>} : memref<8x16x256xf32, #tpu.memory_space<vmem>>, vector<1x16x128xf32>,
    %c2_407 = arith.constant 2 : index
    %c0_408 = arith.constant 0 : index
    %c0_409 = arith.constant 0 : index
    %765 = vector.load %arg21[%c2_407, %c0_408, %c0_409] : memref<8x16x128xf32, #tpu.memory_space<vmem>>, vector<1x16x128xf32>
    %766 = vector.shape_cast %765 : vector<1x16x128xf32> to vector<16x128xf32>
    %767 = arith.truncf %731 : vector<16x128xf32> to vector<16x128xbf16>
    %c0_410 = arith.constant 0 : index
    %c0_411 = arith.constant 0 : index
    %768 = vector.load %arg10[%c0_410, %c0_411] : memref<128x128xbf16, #tpu.memory_space<vmem>>, vector<128x128xbf16>
    %cst_412 = arith.constant dense<0.000000e+00> : vector<16x128xf32>
    %769 = tpu.matmul %767, %768, %cst_412 {dimension_numbers = #tpu.dot_dimension_numbers<[1], [0], [0], [1], [0, 0, 1, 1], [], []>} : vector<16x128xbf16>, vector<128x128xbf16>, vector<16x128xf32> -> vector<16x128xf32>
    %770 = arith.addf %766, %769 : vector<16x128xf32>
    %771 = arith.negf %770 : vector<16x128xf32>
    %772 = math.exp %771 : vector<16x128xf32>
    %cst_413 = arith.constant 1.000000e+00 : f32
    %773 = vector.broadcast %cst_413 : f32 to vector<16x128xf32>
    %774 = arith.addf %773, %772 : vector<16x128xf32>
    %775 = arith.divf %773, %774 : vector<16x128xf32>
    %776 = math.tanh %770 : vector<16x128xf32>
    %c16_i32_414 = arith.constant 16 : i32
    %777 = tpu.dynamic_rotate %775 by %c16_i32_414 dim 1 : vector<16x128xf32>, i32 -> vector<16x128xf32>
    %c32_i32_415 = arith.constant 32 : i32
    %778 = tpu.dynamic_rotate %776 by %c32_i32_415 dim 1 : vector<16x128xf32>, i32 -> vector<16x128xf32>
    %c48_i32_416 = arith.constant 48 : i32
    %779 = tpu.dynamic_rotate %775 by %c48_i32_416 dim 1 : vector<16x128xf32>, i32 -> vector<16x128xf32>
    %780 = arith.mulf %777, %732 : vector<16x128xf32>
    %781 = arith.mulf %775, %778 : vector<16x128xf32>
    %782 = arith.addf %780, %781 : vector<16x128xf32>
    %783 = math.tanh %782 : vector<16x128xf32>
    %784 = arith.mulf %779, %783 : vector<16x128xf32>
    %785 = arith.select %739, %784, %731 : vector<16x128xi1>, vector<16x128xf32>
    %786 = arith.select %739, %782, %732 : vector<16x128xi1>, vector<16x128xf32>
    %c2_417 = arith.constant 2 : index
    %c0_418 = arith.constant 0 : index
    %c128_419 = arith.constant 128 : index
    %787 = vector.load %arg23[%c2_417, %c0_418, %c128_419] : memref<8x16x256xf32, #tpu.memory_space<vmem>>, vector<1x16x128xf32>
    %788 = vector.shape_cast %787 : vector<1x16x128xf32> to vector<16x128xf32>
    %789 = vector.shape_cast %785 : vector<16x128xf32> to vector<1x16x128xf32>
    tpu.vector_store %arg23[%c2_417, %c0_418, %c128_419], %789 {strides = array<i32>} : memref<8x16x256xf32, #tpu.memory_space<vmem>>, vector<1x16x128xf32>,
    %cst_420 = arith.constant 6.000000e+00 : f32
    %790 = vector.broadcast %cst_420 : f32 to vector<16x128xf32>
    %791 = arith.cmpf ogt, %0, %790 : vector<16x128xf32>
    %cst_421 = arith.constant 1.000000e+00 : f32
    %792 = vector.broadcast %cst_421 : f32 to vector<16x128xf32>
    %793 = arith.cmpf ogt, %0, %792 : vector<16x128xf32>
    %c6_422 = arith.constant 6 : index
    %c0_423 = arith.constant 0 : index
    %c0_424 = arith.constant 0 : index
    %794 = vector.load %arg20[%c6_422, %c0_423, %c0_424] : memref<8x16x128xf32, #tpu.memory_space<vmem>>, vector<1x16x128xf32>
    %795 = vector.shape_cast %794 : vector<1x16x128xf32> to vector<16x128xf32>
    %796 = arith.truncf %760 : vector<16x128xf32> to vector<16x128xbf16>
    %c0_425 = arith.constant 0 : index
    %c0_426 = arith.constant 0 : index
    %797 = vector.load %arg9[%c0_425, %c0_426] : memref<128x128xbf16, #tpu.memory_space<vmem>>, vector<128x128xbf16>
    %cst_427 = arith.constant dense<0.000000e+00> : vector<16x128xf32>
    %798 = tpu.matmul %796, %797, %cst_427 {dimension_numbers = #tpu.dot_dimension_numbers<[1], [0], [0], [1], [0, 0, 1, 1], [], []>} : vector<16x128xbf16>, vector<128x128xbf16>, vector<16x128xf32> -> vector<16x128xf32>
    %799 = arith.addf %795, %798 : vector<16x128xf32>
    %800 = arith.negf %799 : vector<16x128xf32>
    %801 = math.exp %800 : vector<16x128xf32>
    %cst_428 = arith.constant 1.000000e+00 : f32
    %802 = vector.broadcast %cst_428 : f32 to vector<16x128xf32>
    %803 = arith.addf %802, %801 : vector<16x128xf32>
    %804 = arith.divf %802, %803 : vector<16x128xf32>
    %805 = math.tanh %799 : vector<16x128xf32>
    %c16_i32_429 = arith.constant 16 : i32
    %806 = tpu.dynamic_rotate %804 by %c16_i32_429 dim 1 : vector<16x128xf32>, i32 -> vector<16x128xf32>
    %c32_i32_430 = arith.constant 32 : i32
    %807 = tpu.dynamic_rotate %805 by %c32_i32_430 dim 1 : vector<16x128xf32>, i32 -> vector<16x128xf32>
    %c48_i32_431 = arith.constant 48 : i32
    %808 = tpu.dynamic_rotate %804 by %c48_i32_431 dim 1 : vector<16x128xf32>, i32 -> vector<16x128xf32>
    %809 = arith.mulf %806, %761 : vector<16x128xf32>
    %810 = arith.mulf %804, %807 : vector<16x128xf32>
    %811 = arith.addf %809, %810 : vector<16x128xf32>
    %812 = math.tanh %811 : vector<16x128xf32>
    %813 = arith.mulf %808, %812 : vector<16x128xf32>
    %814 = arith.select %791, %813, %760 : vector<16x128xi1>, vector<16x128xf32>
    %815 = arith.select %791, %811, %761 : vector<16x128xi1>, vector<16x128xf32>
    %c6_432 = arith.constant 6 : index
    %c0_433 = arith.constant 0 : index
    %c0_434 = arith.constant 0 : index
    %816 = vector.load %arg23[%c6_432, %c0_433, %c0_434] : memref<8x16x256xf32, #tpu.memory_space<vmem>>, vector<1x16x128xf32>
    %817 = vector.shape_cast %816 : vector<1x16x128xf32> to vector<16x128xf32>
    %818 = vector.shape_cast %814 : vector<16x128xf32> to vector<1x16x128xf32>
    tpu.vector_store %arg23[%c6_432, %c0_433, %c0_434], %818 {strides = array<i32>} : memref<8x16x256xf32, #tpu.memory_space<vmem>>, vector<1x16x128xf32>,
    %c1_435 = arith.constant 1 : index
    %c0_436 = arith.constant 0 : index
    %c0_437 = arith.constant 0 : index
    %819 = vector.load %arg21[%c1_435, %c0_436, %c0_437] : memref<8x16x128xf32, #tpu.memory_space<vmem>>, vector<1x16x128xf32>
    %820 = vector.shape_cast %819 : vector<1x16x128xf32> to vector<16x128xf32>
    %821 = arith.truncf %785 : vector<16x128xf32> to vector<16x128xbf16>
    %c0_438 = arith.constant 0 : index
    %c0_439 = arith.constant 0 : index
    %822 = vector.load %arg10[%c0_438, %c0_439] : memref<128x128xbf16, #tpu.memory_space<vmem>>, vector<128x128xbf16>
    %cst_440 = arith.constant dense<0.000000e+00> : vector<16x128xf32>
    %823 = tpu.matmul %821, %822, %cst_440 {dimension_numbers = #tpu.dot_dimension_numbers<[1], [0], [0], [1], [0, 0, 1, 1], [], []>} : vector<16x128xbf16>, vector<128x128xbf16>, vector<16x128xf32> -> vector<16x128xf32>
    %824 = arith.addf %820, %823 : vector<16x128xf32>
    %825 = arith.negf %824 : vector<16x128xf32>
    %826 = math.exp %825 : vector<16x128xf32>
    %cst_441 = arith.constant 1.000000e+00 : f32
    %827 = vector.broadcast %cst_441 : f32 to vector<16x128xf32>
    %828 = arith.addf %827, %826 : vector<16x128xf32>
    %829 = arith.divf %827, %828 : vector<16x128xf32>
    %830 = math.tanh %824 : vector<16x128xf32>
    %c16_i32_442 = arith.constant 16 : i32
    %831 = tpu.dynamic_rotate %829 by %c16_i32_442 dim 1 : vector<16x128xf32>, i32 -> vector<16x128xf32>
    %c32_i32_443 = arith.constant 32 : i32
    %832 = tpu.dynamic_rotate %830 by %c32_i32_443 dim 1 : vector<16x128xf32>, i32 -> vector<16x128xf32>
    %c48_i32_444 = arith.constant 48 : i32
    %833 = tpu.dynamic_rotate %829 by %c48_i32_444 dim 1 : vector<16x128xf32>, i32 -> vector<16x128xf32>
    %834 = arith.mulf %831, %786 : vector<16x128xf32>
    %835 = arith.mulf %829, %832 : vector<16x128xf32>
    %836 = arith.addf %834, %835 : vector<16x128xf32>
    %837 = math.tanh %836 : vector<16x128xf32>
    %838 = arith.mulf %833, %837 : vector<16x128xf32>
    %839 = arith.select %793, %838, %785 : vector<16x128xi1>, vector<16x128xf32>
    %840 = arith.select %793, %836, %786 : vector<16x128xi1>, vector<16x128xf32>
    %c1_445 = arith.constant 1 : index
    %c0_446 = arith.constant 0 : index
    %c128_447 = arith.constant 128 : index
    %841 = vector.load %arg23[%c1_445, %c0_446, %c128_447] : memref<8x16x256xf32, #tpu.memory_space<vmem>>, vector<1x16x128xf32>
    %842 = vector.shape_cast %841 : vector<1x16x128xf32> to vector<16x128xf32>
    %843 = vector.shape_cast %839 : vector<16x128xf32> to vector<1x16x128xf32>
    tpu.vector_store %arg23[%c1_445, %c0_446, %c128_447], %843 {strides = array<i32>} : memref<8x16x256xf32, #tpu.memory_space<vmem>>, vector<1x16x128xf32>,
    %cst_448 = arith.constant 7.000000e+00 : f32
    %844 = vector.broadcast %cst_448 : f32 to vector<16x128xf32>
    %845 = arith.cmpf ogt, %0, %844 : vector<16x128xf32>
    %cst_449 = arith.constant 0.000000e+00 : f32
    %846 = vector.broadcast %cst_449 : f32 to vector<16x128xf32>
    %847 = arith.cmpf ogt, %0, %846 : vector<16x128xf32>
    %c7_450 = arith.constant 7 : index
    %c0_451 = arith.constant 0 : index
    %c0_452 = arith.constant 0 : index
    %848 = vector.load %arg20[%c7_450, %c0_451, %c0_452] : memref<8x16x128xf32, #tpu.memory_space<vmem>>, vector<1x16x128xf32>
    %849 = vector.shape_cast %848 : vector<1x16x128xf32> to vector<16x128xf32>
    %850 = arith.truncf %814 : vector<16x128xf32> to vector<16x128xbf16>
    %c0_453 = arith.constant 0 : index
    %c0_454 = arith.constant 0 : index
    %851 = vector.load %arg9[%c0_453, %c0_454] : memref<128x128xbf16, #tpu.memory_space<vmem>>, vector<128x128xbf16>
    %cst_455 = arith.constant dense<0.000000e+00> : vector<16x128xf32>
    %852 = tpu.matmul %850, %851, %cst_455 {dimension_numbers = #tpu.dot_dimension_numbers<[1], [0], [0], [1], [0, 0, 1, 1], [], []>} : vector<16x128xbf16>, vector<128x128xbf16>, vector<16x128xf32> -> vector<16x128xf32>
    %853 = arith.addf %849, %852 : vector<16x128xf32>
    %854 = arith.negf %853 : vector<16x128xf32>
    %855 = math.exp %854 : vector<16x128xf32>
    %cst_456 = arith.constant 1.000000e+00 : f32
    %856 = vector.broadcast %cst_456 : f32 to vector<16x128xf32>
    %857 = arith.addf %856, %855 : vector<16x128xf32>
    %858 = arith.divf %856, %857 : vector<16x128xf32>
    %859 = math.tanh %853 : vector<16x128xf32>
    %c16_i32_457 = arith.constant 16 : i32
    %860 = tpu.dynamic_rotate %858 by %c16_i32_457 dim 1 : vector<16x128xf32>, i32 -> vector<16x128xf32>
    %c32_i32_458 = arith.constant 32 : i32
    %861 = tpu.dynamic_rotate %859 by %c32_i32_458 dim 1 : vector<16x128xf32>, i32 -> vector<16x128xf32>
    %c48_i32_459 = arith.constant 48 : i32
    %862 = tpu.dynamic_rotate %858 by %c48_i32_459 dim 1 : vector<16x128xf32>, i32 -> vector<16x128xf32>
    %863 = arith.mulf %860, %815 : vector<16x128xf32>
    %864 = arith.mulf %858, %861 : vector<16x128xf32>
    %865 = arith.addf %863, %864 : vector<16x128xf32>
    %866 = math.tanh %865 : vector<16x128xf32>
    %867 = arith.mulf %862, %866 : vector<16x128xf32>
    %868 = arith.select %845, %867, %814 : vector<16x128xi1>, vector<16x128xf32>
    %c7_460 = arith.constant 7 : index
    %c0_461 = arith.constant 0 : index
    %c0_462 = arith.constant 0 : index
    %869 = vector.load %arg23[%c7_460, %c0_461, %c0_462] : memref<8x16x256xf32, #tpu.memory_space<vmem>>, vector<1x16x128xf32>
    %870 = vector.shape_cast %869 : vector<1x16x128xf32> to vector<16x128xf32>
    %871 = vector.shape_cast %868 : vector<16x128xf32> to vector<1x16x128xf32>
    tpu.vector_store %arg23[%c7_460, %c0_461, %c0_462], %871 {strides = array<i32>} : memref<8x16x256xf32, #tpu.memory_space<vmem>>, vector<1x16x128xf32>,
    %c0_463 = arith.constant 0 : index
    %c0_464 = arith.constant 0 : index
    %c0_465 = arith.constant 0 : index
    %872 = vector.load %arg21[%c0_463, %c0_464, %c0_465] : memref<8x16x128xf32, #tpu.memory_space<vmem>>, vector<1x16x128xf32>
    %873 = vector.shape_cast %872 : vector<1x16x128xf32> to vector<16x128xf32>
    %874 = arith.truncf %839 : vector<16x128xf32> to vector<16x128xbf16>
    %c0_466 = arith.constant 0 : index
    %c0_467 = arith.constant 0 : index
    %875 = vector.load %arg10[%c0_466, %c0_467] : memref<128x128xbf16, #tpu.memory_space<vmem>>, vector<128x128xbf16>
    %cst_468 = arith.constant dense<0.000000e+00> : vector<16x128xf32>
    %876 = tpu.matmul %874, %875, %cst_468 {dimension_numbers = #tpu.dot_dimension_numbers<[1], [0], [0], [1], [0, 0, 1, 1], [], []>} : vector<16x128xbf16>, vector<128x128xbf16>, vector<16x128xf32> -> vector<16x128xf32>
    %877 = arith.addf %873, %876 : vector<16x128xf32>
    %878 = arith.negf %877 : vector<16x128xf32>
    %879 = math.exp %878 : vector<16x128xf32>
    %cst_469 = arith.constant 1.000000e+00 : f32
    %880 = vector.broadcast %cst_469 : f32 to vector<16x128xf32>
    %881 = arith.addf %880, %879 : vector<16x128xf32>
    %882 = arith.divf %880, %881 : vector<16x128xf32>
    %883 = math.tanh %877 : vector<16x128xf32>
    %c16_i32_470 = arith.constant 16 : i32
    %884 = tpu.dynamic_rotate %882 by %c16_i32_470 dim 1 : vector<16x128xf32>, i32 -> vector<16x128xf32>
    %c32_i32_471 = arith.constant 32 : i32
    %885 = tpu.dynamic_rotate %883 by %c32_i32_471 dim 1 : vector<16x128xf32>, i32 -> vector<16x128xf32>
    %c48_i32_472 = arith.constant 48 : i32
    %886 = tpu.dynamic_rotate %882 by %c48_i32_472 dim 1 : vector<16x128xf32>, i32 -> vector<16x128xf32>
    %887 = arith.mulf %884, %840 : vector<16x128xf32>
    %888 = arith.mulf %882, %885 : vector<16x128xf32>
    %889 = arith.addf %887, %888 : vector<16x128xf32>
    %890 = math.tanh %889 : vector<16x128xf32>
    %891 = arith.mulf %886, %890 : vector<16x128xf32>
    %892 = arith.select %847, %891, %839 : vector<16x128xi1>, vector<16x128xf32>
    %c0_473 = arith.constant 0 : index
    %c0_474 = arith.constant 0 : index
    %c128_475 = arith.constant 128 : index
    %893 = vector.load %arg23[%c0_473, %c0_474, %c128_475] : memref<8x16x256xf32, #tpu.memory_space<vmem>>, vector<1x16x128xf32>
    %894 = vector.shape_cast %893 : vector<1x16x128xf32> to vector<16x128xf32>
    %895 = vector.shape_cast %892 : vector<16x128xf32> to vector<1x16x128xf32>
    tpu.vector_store %arg23[%c0_473, %c0_474, %c128_475], %895 {strides = array<i32>} : memref<8x16x256xf32, #tpu.memory_space<vmem>>, vector<1x16x128xf32>,
    %c0_476 = arith.constant 0 : index
    %c0_477 = arith.constant 0 : index
    %c0_478 = arith.constant 0 : index
    %896 = vector.load %arg23[%c0_476, %c0_477, %c0_478] : memref<8x16x256xf32, #tpu.memory_space<vmem>>, vector<8x16x256xf32>
    %897 = vector.shape_cast %896 : vector<8x16x256xf32> to vector<128x256xf32>
    %898 = arith.truncf %897 : vector<128x256xf32> to vector<128x256xbf16>
    %c0_479 = arith.constant 0 : index
    %c0_480 = arith.constant 0 : index
    %899 = vector.load %arg11[%c0_479, %c0_480] : memref<256x128xbf16, #tpu.memory_space<vmem>>, vector<256x128xbf16>
    %cst_481 = arith.constant dense<0.000000e+00> : vector<128x128xf32>
    %900 = tpu.matmul %898, %899, %cst_481 {dimension_numbers = #tpu.dot_dimension_numbers<[1], [0], [0], [1], [0, 0, 1, 1], [], []>} : vector<128x256xbf16>, vector<256x128xbf16>, vector<128x128xf32> -> vector<128x128xf32>
    %c0_482 = arith.constant 0 : index
    %c0_483 = arith.constant 0 : index
    %901 = vector.load %arg16[%c0_482, %c0_483] : memref<1x128xf32, #tpu.memory_space<vmem>>, vector<1x128xf32>
    %902 = vector.broadcast %901 : vector<1x128xf32> to vector<128x128xf32>
    %903 = arith.addf %900, %902 : vector<128x128xf32>
    %904 = vector.shape_cast %903 : vector<128x128xf32> to vector<8x16x128xf32>
    %cst_484 = arith.constant 0.000000e+00 : f32
    %905 = vector.broadcast %cst_484 : f32 to vector<16x128xf32>
    %906 = arith.cmpf ogt, %0, %905 : vector<16x128xf32>
    %907 = vector.extract_strided_slice %904 {offsets = [0, 0, 0], sizes = [1, 16, 128], strides = [1, 1, 1]} : vector<8x16x128xf32> to vector<1x16x128xf32>
    %908 = vector.shape_cast %907 : vector<1x16x128xf32> to vector<16x128xf32>
    %cst_485 = arith.constant 0.000000e+00 : f32
    %909 = vector.broadcast %cst_485 : f32 to vector<16x128xf32>
    %910 = arith.select %906, %908, %909 : vector<16x128xi1>, vector<16x128xf32>
    %c0_486 = arith.constant 0 : index
    %c0_487 = arith.constant 0 : index
    %c0_488 = arith.constant 0 : index
    %911 = vector.load %arg17[%c0_486, %c0_487, %c0_488] : memref<8x16x128xf32, #tpu.memory_space<vmem>>, vector<1x16x128xf32>
    %912 = vector.shape_cast %911 : vector<1x16x128xf32> to vector<16x128xf32>
    %913 = vector.shape_cast %910 : vector<16x128xf32> to vector<1x16x128xf32>
    tpu.vector_store %arg17[%c0_486, %c0_487, %c0_488], %913 {strides = array<i32>} : memref<8x16x128xf32, #tpu.memory_space<vmem>>, vector<1x16x128xf32>,
    %cst_489 = arith.constant 1.000000e+00 : f32
    %914 = vector.broadcast %cst_489 : f32 to vector<16x128xf32>
    %915 = arith.cmpf ogt, %0, %914 : vector<16x128xf32>
    %916 = vector.extract_strided_slice %904 {offsets = [1, 0, 0], sizes = [1, 16, 128], strides = [1, 1, 1]} : vector<8x16x128xf32> to vector<1x16x128xf32>
    %917 = vector.shape_cast %916 : vector<1x16x128xf32> to vector<16x128xf32>
    %cst_490 = arith.constant 0.000000e+00 : f32
    %918 = vector.broadcast %cst_490 : f32 to vector<16x128xf32>
    %919 = arith.select %915, %917, %918 : vector<16x128xi1>, vector<16x128xf32>
    %c1_491 = arith.constant 1 : index
    %c0_492 = arith.constant 0 : index
    %c0_493 = arith.constant 0 : index
    %920 = vector.load %arg17[%c1_491, %c0_492, %c0_493] : memref<8x16x128xf32, #tpu.memory_space<vmem>>, vector<1x16x128xf32>
    %921 = vector.shape_cast %920 : vector<1x16x128xf32> to vector<16x128xf32>
    %922 = vector.shape_cast %919 : vector<16x128xf32> to vector<1x16x128xf32>
    tpu.vector_store %arg17[%c1_491, %c0_492, %c0_493], %922 {strides = array<i32>} : memref<8x16x128xf32, #tpu.memory_space<vmem>>, vector<1x16x128xf32>,
    %cst_494 = arith.constant 2.000000e+00 : f32
    %923 = vector.broadcast %cst_494 : f32 to vector<16x128xf32>
    %924 = arith.cmpf ogt, %0, %923 : vector<16x128xf32>
    %925 = vector.extract_strided_slice %904 {offsets = [2, 0, 0], sizes = [1, 16, 128], strides = [1, 1, 1]} : vector<8x16x128xf32> to vector<1x16x128xf32>
    %926 = vector.shape_cast %925 : vector<1x16x128xf32> to vector<16x128xf32>
    %cst_495 = arith.constant 0.000000e+00 : f32
    %927 = vector.broadcast %cst_495 : f32 to vector<16x128xf32>
    %928 = arith.select %924, %926, %927 : vector<16x128xi1>, vector<16x128xf32>
    %c2_496 = arith.constant 2 : index
    %c0_497 = arith.constant 0 : index
    %c0_498 = arith.constant 0 : index
    %929 = vector.load %arg17[%c2_496, %c0_497, %c0_498] : memref<8x16x128xf32, #tpu.memory_space<vmem>>, vector<1x16x128xf32>
    %930 = vector.shape_cast %929 : vector<1x16x128xf32> to vector<16x128xf32>
    %931 = vector.shape_cast %928 : vector<16x128xf32> to vector<1x16x128xf32>
    tpu.vector_store %arg17[%c2_496, %c0_497, %c0_498], %931 {strides = array<i32>} : memref<8x16x128xf32, #tpu.memory_space<vmem>>, vector<1x16x128xf32>,
    %cst_499 = arith.constant 3.000000e+00 : f32
    %932 = vector.broadcast %cst_499 : f32 to vector<16x128xf32>
    %933 = arith.cmpf ogt, %0, %932 : vector<16x128xf32>
    %934 = vector.extract_strided_slice %904 {offsets = [3, 0, 0], sizes = [1, 16, 128], strides = [1, 1, 1]} : vector<8x16x128xf32> to vector<1x16x128xf32>
    %935 = vector.shape_cast %934 : vector<1x16x128xf32> to vector<16x128xf32>
    %cst_500 = arith.constant 0.000000e+00 : f32
    %936 = vector.broadcast %cst_500 : f32 to vector<16x128xf32>
    %937 = arith.select %933, %935, %936 : vector<16x128xi1>, vector<16x128xf32>
    %c3_501 = arith.constant 3 : index
    %c0_502 = arith.constant 0 : index
    %c0_503 = arith.constant 0 : index
    %938 = vector.load %arg17[%c3_501, %c0_502, %c0_503] : memref<8x16x128xf32, #tpu.memory_space<vmem>>, vector<1x16x128xf32>
    %939 = vector.shape_cast %938 : vector<1x16x128xf32> to vector<16x128xf32>
    %940 = vector.shape_cast %937 : vector<16x128xf32> to vector<1x16x128xf32>
    tpu.vector_store %arg17[%c3_501, %c0_502, %c0_503], %940 {strides = array<i32>} : memref<8x16x128xf32, #tpu.memory_space<vmem>>, vector<1x16x128xf32>,
    %cst_504 = arith.constant 4.000000e+00 : f32
    %941 = vector.broadcast %cst_504 : f32 to vector<16x128xf32>
    %942 = arith.cmpf ogt, %0, %941 : vector<16x128xf32>
    %943 = vector.extract_strided_slice %904 {offsets = [4, 0, 0], sizes = [1, 16, 128], strides = [1, 1, 1]} : vector<8x16x128xf32> to vector<1x16x128xf32>
    %944 = vector.shape_cast %943 : vector<1x16x128xf32> to vector<16x128xf32>
    %cst_505 = arith.constant 0.000000e+00 : f32
    %945 = vector.broadcast %cst_505 : f32 to vector<16x128xf32>
    %946 = arith.select %942, %944, %945 : vector<16x128xi1>, vector<16x128xf32>
    %c4_506 = arith.constant 4 : index
    %c0_507 = arith.constant 0 : index
    %c0_508 = arith.constant 0 : index
    %947 = vector.load %arg17[%c4_506, %c0_507, %c0_508] : memref<8x16x128xf32, #tpu.memory_space<vmem>>, vector<1x16x128xf32>
    %948 = vector.shape_cast %947 : vector<1x16x128xf32> to vector<16x128xf32>
    %949 = vector.shape_cast %946 : vector<16x128xf32> to vector<1x16x128xf32>
    tpu.vector_store %arg17[%c4_506, %c0_507, %c0_508], %949 {strides = array<i32>} : memref<8x16x128xf32, #tpu.memory_space<vmem>>, vector<1x16x128xf32>,
    %cst_509 = arith.constant 5.000000e+00 : f32
    %950 = vector.broadcast %cst_509 : f32 to vector<16x128xf32>
    %951 = arith.cmpf ogt, %0, %950 : vector<16x128xf32>
    %952 = vector.extract_strided_slice %904 {offsets = [5, 0, 0], sizes = [1, 16, 128], strides = [1, 1, 1]} : vector<8x16x128xf32> to vector<1x16x128xf32>
    %953 = vector.shape_cast %952 : vector<1x16x128xf32> to vector<16x128xf32>
    %cst_510 = arith.constant 0.000000e+00 : f32
    %954 = vector.broadcast %cst_510 : f32 to vector<16x128xf32>
    %955 = arith.select %951, %953, %954 : vector<16x128xi1>, vector<16x128xf32>
    %c5_511 = arith.constant 5 : index
    %c0_512 = arith.constant 0 : index
    %c0_513 = arith.constant 0 : index
    %956 = vector.load %arg17[%c5_511, %c0_512, %c0_513] : memref<8x16x128xf32, #tpu.memory_space<vmem>>, vector<1x16x128xf32>
    %957 = vector.shape_cast %956 : vector<1x16x128xf32> to vector<16x128xf32>
    %958 = vector.shape_cast %955 : vector<16x128xf32> to vector<1x16x128xf32>
    tpu.vector_store %arg17[%c5_511, %c0_512, %c0_513], %958 {strides = array<i32>} : memref<8x16x128xf32, #tpu.memory_space<vmem>>, vector<1x16x128xf32>,
    %cst_514 = arith.constant 6.000000e+00 : f32
    %959 = vector.broadcast %cst_514 : f32 to vector<16x128xf32>
    %960 = arith.cmpf ogt, %0, %959 : vector<16x128xf32>
    %961 = vector.extract_strided_slice %904 {offsets = [6, 0, 0], sizes = [1, 16, 128], strides = [1, 1, 1]} : vector<8x16x128xf32> to vector<1x16x128xf32>
    %962 = vector.shape_cast %961 : vector<1x16x128xf32> to vector<16x128xf32>
    %cst_515 = arith.constant 0.000000e+00 : f32
    %963 = vector.broadcast %cst_515 : f32 to vector<16x128xf32>
    %964 = arith.select %960, %962, %963 : vector<16x128xi1>, vector<16x128xf32>
    %c6_516 = arith.constant 6 : index
    %c0_517 = arith.constant 0 : index
    %c0_518 = arith.constant 0 : index
    %965 = vector.load %arg17[%c6_516, %c0_517, %c0_518] : memref<8x16x128xf32, #tpu.memory_space<vmem>>, vector<1x16x128xf32>
    %966 = vector.shape_cast %965 : vector<1x16x128xf32> to vector<16x128xf32>
    %967 = vector.shape_cast %964 : vector<16x128xf32> to vector<1x16x128xf32>
    tpu.vector_store %arg17[%c6_516, %c0_517, %c0_518], %967 {strides = array<i32>} : memref<8x16x128xf32, #tpu.memory_space<vmem>>, vector<1x16x128xf32>,
    %cst_519 = arith.constant 7.000000e+00 : f32
    %968 = vector.broadcast %cst_519 : f32 to vector<16x128xf32>
    %969 = arith.cmpf ogt, %0, %968 : vector<16x128xf32>
    %970 = vector.extract_strided_slice %904 {offsets = [7, 0, 0], sizes = [1, 16, 128], strides = [1, 1, 1]} : vector<8x16x128xf32> to vector<1x16x128xf32>
    %971 = vector.shape_cast %970 : vector<1x16x128xf32> to vector<16x128xf32>
    %cst_520 = arith.constant 0.000000e+00 : f32
    %972 = vector.broadcast %cst_520 : f32 to vector<16x128xf32>
    %973 = arith.select %969, %971, %972 : vector<16x128xi1>, vector<16x128xf32>
    %c7_521 = arith.constant 7 : index
    %c0_522 = arith.constant 0 : index
    %c0_523 = arith.constant 0 : index
    %974 = vector.load %arg17[%c7_521, %c0_522, %c0_523] : memref<8x16x128xf32, #tpu.memory_space<vmem>>, vector<1x16x128xf32>
    %975 = vector.shape_cast %974 : vector<1x16x128xf32> to vector<16x128xf32>
    %976 = vector.shape_cast %973 : vector<16x128xf32> to vector<1x16x128xf32>
    tpu.vector_store %arg17[%c7_521, %c0_522, %c0_523], %976 {strides = array<i32>} : memref<8x16x128xf32, #tpu.memory_space<vmem>>, vector<1x16x128xf32>,
    return
  }
  func.func @transform_0(%arg0: i32) -> (i32, i32, i32) {
    %c0_i32 = arith.constant 0 : i32
    %c0_i32_0 = arith.constant 0 : i32
    %c0_i32_1 = arith.constant 0 : i32
    return %c0_i32, %arg0, %c0_i32_0 : i32, i32, i32
  }
  func.func @transform_1(%arg0: i32) -> (i32, i32) {
    %c0_i32 = arith.constant 0 : i32
    %c0_i32_0 = arith.constant 0 : i32
    return %arg0, %c0_i32 : i32, i32
  }
  func.func @transform_2(%arg0: i32) -> (i32, i32) {
    %c0_i32 = arith.constant 0 : i32
    %c0_i32_0 = arith.constant 0 : i32
    %c0_i32_1 = arith.constant 0 : i32
    return %c0_i32, %c0_i32_0 : i32, i32
  }
  func.func @transform_3(%arg0: i32) -> (i32, i32) {
    %c0_i32 = arith.constant 0 : i32
    %c0_i32_0 = arith.constant 0 : i32
    %c0_i32_1 = arith.constant 0 : i32
    return %c0_i32, %c0_i32_0 : i32, i32
  }
  func.func @transform_4(%arg0: i32) -> (i32, i32) {
    %c0_i32 = arith.constant 0 : i32
    %c0_i32_0 = arith.constant 0 : i32
    %c0_i32_1 = arith.constant 0 : i32
    return %c0_i32, %c0_i32_0 : i32, i32
  }
  func.func @transform_5(%arg0: i32) -> (i32, i32) {
    %c0_i32 = arith.constant 0 : i32
    %c0_i32_0 = arith.constant 0 : i32
    %c0_i32_1 = arith.constant 0 : i32
    return %c0_i32, %c0_i32_0 : i32, i32
  }
  func.func @transform_6(%arg0: i32) -> (i32, i32) {
    %c0_i32 = arith.constant 0 : i32
    %c0_i32_0 = arith.constant 0 : i32
    %c0_i32_1 = arith.constant 0 : i32
    return %c0_i32, %c0_i32_0 : i32, i32
  }
  func.func @transform_7(%arg0: i32) -> (i32, i32) {
    %c0_i32 = arith.constant 0 : i32
    %c0_i32_0 = arith.constant 0 : i32
    %c0_i32_1 = arith.constant 0 : i32
    return %c0_i32, %c0_i32_0 : i32, i32
  }
  func.func @transform_8(%arg0: i32) -> (i32, i32) {
    %c0_i32 = arith.constant 0 : i32
    %c0_i32_0 = arith.constant 0 : i32
    %c0_i32_1 = arith.constant 0 : i32
    return %c0_i32, %c0_i32_0 : i32, i32
  }
  func.func @transform_9(%arg0: i32) -> (i32, i32) {
    %c0_i32 = arith.constant 0 : i32
    %c0_i32_0 = arith.constant 0 : i32
    %c0_i32_1 = arith.constant 0 : i32
    return %c0_i32, %c0_i32_0 : i32, i32
  }
  func.func @transform_10(%arg0: i32) -> (i32, i32) {
    %c0_i32 = arith.constant 0 : i32
    %c0_i32_0 = arith.constant 0 : i32
    %c0_i32_1 = arith.constant 0 : i32
    return %c0_i32, %c0_i32_0 : i32, i32
  }
  func.func @transform_11(%arg0: i32) -> (i32, i32) {
    %c0_i32 = arith.constant 0 : i32
    %c0_i32_0 = arith.constant 0 : i32
    %c0_i32_1 = arith.constant 0 : i32
    return %c0_i32, %c0_i32_0 : i32, i32
  }
  func.func @transform_12(%arg0: i32) -> (i32, i32) {
    %c0_i32 = arith.constant 0 : i32
    %c0_i32_0 = arith.constant 0 : i32
    %c0_i32_1 = arith.constant 0 : i32
    return %c0_i32, %c0_i32_0 : i32, i32
  }
  func.func @transform_13(%arg0: i32) -> (i32, i32) {
    %c0_i32 = arith.constant 0 : i32
    %c0_i32_0 = arith.constant 0 : i32
    %c0_i32_1 = arith.constant 0 : i32
    return %c0_i32, %c0_i32_0 : i32, i32
  }
  func.func @transform_14(%arg0: i32) -> (i32, i32) {
    %c0_i32 = arith.constant 0 : i32
    %c0_i32_0 = arith.constant 0 : i32
    %c0_i32_1 = arith.constant 0 : i32
    return %c0_i32, %c0_i32_0 : i32, i32
  }
  func.func @transform_15(%arg0: i32) -> (i32, i32) {
    %c0_i32 = arith.constant 0 : i32
    %c0_i32_0 = arith.constant 0 : i32
    %c0_i32_1 = arith.constant 0 : i32
    return %c0_i32, %c0_i32_0 : i32, i32
  }
  func.func @transform_16(%arg0: i32) -> (i32, i32, i32) {
    %c0_i32 = arith.constant 0 : i32
    %c0_i32_0 = arith.constant 0 : i32
    %c0_i32_1 = arith.constant 0 : i32
    return %c0_i32, %arg0, %c0_i32_0 : i32, i32, i32
  }
}

</mosaic_0001>

<llo_original>
// kernel: lstm_forward.1
$region0: #{lstm_forward.1}
  #allocation0 [shape = 'u32[]', space=smem, size = 0x4, offset = 0x4, fixed_abs, tag = 'smem constant byte address 0x4 - core index']
  #allocation1 [shape = 'u32[144,128]{1,0:T(1,128)}', space=vmem, size = 0x12000, scoped, tag = 'internal scratch']
  #allocation2 [shape = 'f32[8,16,128]{2,1,0:T(8,128)}', space=vmem, size = 0x10000, scoped, tag = 'scratch operand']
  #allocation3 [shape = 'f32[8,16,128]{2,1,0:T(8,128)}', space=vmem, size = 0x10000, scoped, tag = 'scratch operand']
  #allocation4 [shape = 'f32[8,16,128]{2,1,0:T(8,128)}', space=vmem, size = 0x10000, scoped, tag = 'scratch operand']
  #allocation5 [shape = 'f32[8,16,128]{2,1,0:T(8,128)}', space=vmem, size = 0x10000, scoped, tag = 'scratch operand']
  #allocation6 [shape = 'f32[8,16,256]{2,1,0:T(8,128)}', space=vmem, size = 0x20000, scoped, tag = 'scratch operand']
  #allocation7 [shape = 'f32[8,16,256]{2,1,0:T(8,128)}', space=vmem, size = 0x20000, scoped, tag = 'scratch operand']
  %s0 = inlined_call_operand.vmem [shape: f32[8,16,128], index: 0, kind: input, shape index: {}]
  %s1 = inlined_call_operand.vmem [shape: f32[16,128], index: 1, kind: input, shape index: {}]
  %s2 = inlined_call_operand.vmem [shape: bf16[128,128], index: 2, kind: input, shape index: {}]
  %s3 = inlined_call_operand.vmem [shape: bf16[128,128], index: 3, kind: input, shape index: {}]
  %s4 = inlined_call_operand.vmem [shape: bf16[256,128], index: 4, kind: input, shape index: {}]
  %s5 = inlined_call_operand.vmem [shape: bf16[256,128], index: 5, kind: input, shape index: {}]
  %s6 = inlined_call_operand.vmem [shape: bf16[128,128], index: 6, kind: input, shape index: {}]
  %s7 = inlined_call_operand.vmem [shape: bf16[128,128], index: 7, kind: input, shape index: {}]
  %s8 = inlined_call_operand.vmem [shape: bf16[128,128], index: 8, kind: input, shape index: {}]
  %s9 = inlined_call_operand.vmem [shape: bf16[128,128], index: 9, kind: input, shape index: {}]
  %s10 = inlined_call_operand.vmem [shape: bf16[256,128], index: 10, kind: input, shape index: {}]
  %s11 = inlined_call_operand.vmem [shape: f32[1,128], index: 11, kind: input, shape index: {}]
  %s12 = inlined_call_operand.vmem [shape: f32[1,128], index: 12, kind: input, shape index: {}]
  %s13 = inlined_call_operand.vmem [shape: f32[1,128], index: 13, kind: input, shape index: {}]
  %s14 = inlined_call_operand.vmem [shape: f32[1,128], index: 14, kind: input, shape index: {}]
  %s15 = inlined_call_operand.vmem [shape: f32[1,128], index: 15, kind: input, shape index: {}]
  %s16 = inlined_call_operand.vmem [shape: f32[8,16,128], index: 16, kind: output, shape index: {}]
  %s17 = sld [smem:[#allocation0]]
  $region74: #{lstm_forward.1} parent=0
    _
  %s19 = ssub.s32 1, %s17
  %s20 = scalar_select 0, %s19, %s17
  // Predicated region
  $region2: #{lstm_forward.1} parent=0 // pred_check
    _
  $region3: #{lstm_forward.1} parent=0 // pred_check_branch
    %22 = sbr.rel (0) target = $region5
  $region4: #{lstm_forward.1} parent=0 // pred_region
    _
  $region5: #{lstm_forward.1} parent=0 // pred_fallthru
    _
  // Predicated region
  $region6: #{lstm_forward.1} parent=0 // pred_check
    _
  $region7: #{lstm_forward.1} parent=0 // pred_check_branch
    %24 = sbr.rel (0) target = $region9
  $region8: #{lstm_forward.1} parent=0 // pred_region
    _
  $region9: #{lstm_forward.1} parent=0 // pred_fallthru
    _
  // Predicated region
  $region10: #{lstm_forward.1} parent=0 // pred_check
    _
  $region11: #{lstm_forward.1} parent=0 // pred_check_branch
    %26 = sbr.rel (0) target = $region13
  $region12: #{lstm_forward.1} parent=0 // pred_region
    _
  $region13: #{lstm_forward.1} parent=0 // pred_fallthru
    _
  // Predicated region
  $region14: #{lstm_forward.1} parent=0 // pred_check
    _
  $region15: #{lstm_forward.1} parent=0 // pred_check_branch
    %28 = sbr.rel (0) target = $region17
  $region16: #{lstm_forward.1} parent=0 // pred_region
    _
  $region17: #{lstm_forward.1} parent=0 // pred_fallthru
    _
  // Predicated region
  $region18: #{lstm_forward.1} parent=0 // pred_check
    _
  $region19: #{lstm_forward.1} parent=0 // pred_check_branch
    %30 = sbr.rel (0) target = $region21
  $region20: #{lstm_forward.1} parent=0 // pred_region
    _
  $region21: #{lstm_forward.1} parent=0 // pred_fallthru
    _
  // Predicated region
  $region22: #{lstm_forward.1} parent=0 // pred_check
    _
  $region23: #{lstm_forward.1} parent=0 // pred_check_branch
    %32 = sbr.rel (0) target = $region25
  $region24: #{lstm_forward.1} parent=0 // pred_region
    _
  $region25: #{lstm_forward.1} parent=0 // pred_fallthru
    _
  // Predicated region
  $region26: #{lstm_forward.1} parent=0 // pred_check
    _
  $region27: #{lstm_forward.1} parent=0 // pred_check_branch
    %34 = sbr.rel (0) target = $region29
  $region28: #{lstm_forward.1} parent=0 // pred_region
    _
  $region29: #{lstm_forward.1} parent=0 // pred_fallthru
    _
  // Predicated region
  $region30: #{lstm_forward.1} parent=0 // pred_check
    _
  $region31: #{lstm_forward.1} parent=0 // pred_check_branch
    %36 = sbr.rel (0) target = $region33
  $region32: #{lstm_forward.1} parent=0 // pred_region
    _
  $region33: #{lstm_forward.1} parent=0 // pred_fallthru
    _
  // Predicated region
  $region34: #{lstm_forward.1} parent=0 // pred_check
    _
  $region35: #{lstm_forward.1} parent=0 // pred_check_branch
    %38 = sbr.rel (0) target = $region37
  $region36: #{lstm_forward.1} parent=0 // pred_region
    _
  $region37: #{lstm_forward.1} parent=0 // pred_fallthru
    _
  // Predicated region
  $region38: #{lstm_forward.1} parent=0 // pred_check
    _
  $region39: #{lstm_forward.1} parent=0 // pred_check_branch
    %40 = sbr.rel (0) target = $region41
  $region40: #{lstm_forward.1} parent=0 // pred_region
    _
  $region41: #{lstm_forward.1} parent=0 // pred_fallthru
    _
  // Predicated region
  $region42: #{lstm_forward.1} parent=0 // pred_check
    _
  $region43: #{lstm_forward.1} parent=0 // pred_check_branch
    %42 = sbr.rel (0) target = $region45
  $region44: #{lstm_forward.1} parent=0 // pred_region
    _
  $region45: #{lstm_forward.1} parent=0 // pred_fallthru
    _
  // Predicated region
  $region46: #{lstm_forward.1} parent=0 // pred_check
    _
  $region47: #{lstm_forward.1} parent=0 // pred_check_branch
    %44 = sbr.rel (0) target = $region49
  $region48: #{lstm_forward.1} parent=0 // pred_region
    _
  $region49: #{lstm_forward.1} parent=0 // pred_fallthru
    _
  // Predicated region
  $region50: #{lstm_forward.1} parent=0 // pred_check
    _
  $region51: #{lstm_forward.1} parent=0 // pred_check_branch
    %46 = sbr.rel (0) target = $region53
  $region52: #{lstm_forward.1} parent=0 // pred_region
    _
  $region53: #{lstm_forward.1} parent=0 // pred_fallthru
    _
  // Predicated region
  $region54: #{lstm_forward.1} parent=0 // pred_check
    _
  $region55: #{lstm_forward.1} parent=0 // pred_check_branch
    %48 = sbr.rel (0) target = $region57
  $region56: #{lstm_forward.1} parent=0 // pred_region
    _
  $region57: #{lstm_forward.1} parent=0 // pred_fallthru
    _
  // Predicated region
  $region58: #{lstm_forward.1} parent=0 // pred_check
    _
  $region59: #{lstm_forward.1} parent=0 // pred_check_branch
    %50 = sbr.rel (0) target = $region61
  $region60: #{lstm_forward.1} parent=0 // pred_region
    _
  $region61: #{lstm_forward.1} parent=0 // pred_fallthru
    _
  // Predicated region
  $region62: #{lstm_forward.1} parent=0 // pred_check
    _
  $region63: #{lstm_forward.1} parent=0 // pred_check_branch
    %52 = sbr.rel (0) target = $region65
  $region64: #{lstm_forward.1} parent=0 // pred_region
    _
  $region65: #{lstm_forward.1} parent=0 // pred_fallthru
    _
  %v54 = vld [vmem:[%s1] sm:$0xff]
  %v55 = vld [vmem:[%s1 + $0x8] sm:$0xff]
  %v56 = vld [vmem:[%s0] sm:$0xff]
  %v57 = vld [vmem:[%s0 + $0x8] sm:$0xff]
  %v58 = vld [vmem:[%s0 + $0x10] sm:$0xff]
  %v59 = vld [vmem:[%s0 + $0x18] sm:$0xff]
  %v60 = vld [vmem:[%s0 + $0x20] sm:$0xff]
  %v61 = vld [vmem:[%s0 + $0x28] sm:$0xff]
  %v62 = vld [vmem:[%s0 + $0x30] sm:$0xff]
  %v63 = vld [vmem:[%s0 + $0x38] sm:$0xff]
  %v64 = vld [vmem:[%s0 + $0x40] sm:$0xff]
  %v65 = vld [vmem:[%s0 + $0x48] sm:$0xff]
  %v66 = vld [vmem:[%s0 + $0x50] sm:$0xff]
  %v67 = vld [vmem:[%s0 + $0x58] sm:$0xff]
  %v68 = vld [vmem:[%s0 + $0x60] sm:$0xff]
  %v69 = vld [vmem:[%s0 + $0x68] sm:$0xff]
  %v70 = vld [vmem:[%s0 + $0x70] sm:$0xff]
  %v71 = vld [vmem:[%s0 + $0x78] sm:$0xff]
  %v72 = vpack.c.bf16 %v57, %v56
  %v73 = vpack.c.bf16 %v59, %v58
  %v74 = vpack.c.bf16 %v61, %v60
  %v75 = vpack.c.bf16 %v63, %v62
  %v76 = vpack.c.bf16 %v65, %v64
  %v77 = vpack.c.bf16 %v67, %v66
  %v78 = vpack.c.bf16 %v69, %v68
  %v79 = vpack.c.bf16 %v71, %v70
  %v80 = vld [vmem:[%s2] sm:$0xf]
  %v81 = vld [vmem:[%s2 + $0x4] sm:$0xf]
  %v82 = vld [vmem:[%s2 + $0x8] sm:$0xf]
  %v83 = vld [vmem:[%s2 + $0xc] sm:$0xf]
  %v84 = vld [vmem:[%s2 + $0x10] sm:$0xf]
  %v85 = vld [vmem:[%s2 + $0x14] sm:$0xf]
  %v86 = vld [vmem:[%s2 + $0x18] sm:$0xf]
  %v87 = vld [vmem:[%s2 + $0x1c] sm:$0xf]
  %v88 = vld [vmem:[%s2 + $0x20] sm:$0xf]
  %v89 = vld [vmem:[%s2 + $0x24] sm:$0xf]
  %v90 = vld [vmem:[%s2 + $0x28] sm:$0xf]
  %v91 = vld [vmem:[%s2 + $0x2c] sm:$0xf]
  %v92 = vld [vmem:[%s2 + $0x30] sm:$0xf]
  %v93 = vld [vmem:[%s2 + $0x34] sm:$0xf]
  %v94 = vld [vmem:[%s2 + $0x38] sm:$0xf]
  %v95 = vld [vmem:[%s2 + $0x3c] sm:$0xf]
  %v96 = vld [vmem:[%s11] sm:$0x1]
  %v98 = vlaneseq
  %v99 = vshrl.u32 %v98, 7
  %v100 = vsub.s32 0, %v99
  %v101 = vrot.slane %v96, %v100
  %v119 = vunpack.c.l.b16 %v80
  %v120 = vunpack.c.l.b16 %v81
  %v121 = vunpack.c.l.b16 %v82
  %v122 = vunpack.c.l.b16 %v83
  %v123 = vunpack.c.l.b16 %v84
  %v124 = vunpack.c.l.b16 %v85
  %v125 = vunpack.c.l.b16 %v86
  %v126 = vunpack.c.l.b16 %v87
  %v127 = vunpack.c.l.b16 %v88
  %v128 = vunpack.c.l.b16 %v89
  %v129 = vunpack.c.l.b16 %v90
  %v130 = vunpack.c.l.b16 %v91
  %v131 = vunpack.c.l.b16 %v92
  %v132 = vunpack.c.l.b16 %v93
  %v133 = vunpack.c.l.b16 %v94
  %v134 = vunpack.c.l.b16 %v95
  %v135 = vpack.c.b16 %v120, %v119
  %v136 = vpack.c.b16 %v122, %v121
  %v137 = vpack.c.b16 %v124, %v123
  %v138 = vpack.c.b16 %v126, %v125
  %v139 = vpack.c.b16 %v128, %v127
  %v140 = vpack.c.b16 %v130, %v129
  %v141 = vpack.c.b16 %v132, %v131
  %v142 = vpack.c.b16 %v134, %v133
  %151 = vmatprep.subr.bf16.mxu0 0
  %152 = vmatpush1.bf16.msra.mxu0 %v135
  %153 = vmatprep.subr.bf16.mxu0 0
  %154 = vmatpush1.bf16.msra.mxu0 %v136
  %155 = vmatprep.subr.bf16.mxu0 0
  %156 = vmatpush1.bf16.msra.mxu0 %v137
  %157 = vmatprep.subr.bf16.mxu0 0
  %158 = vmatpush1.bf16.msra.mxu0 %v138
  %159 = vmatprep.subr.bf16.mxu0 0
  %160 = vmatpush1.bf16.msra.mxu0 %v139
  %161 = vmatprep.subr.bf16.mxu0 0
  %162 = vmatpush1.bf16.msra.mxu0 %v140
  %163 = vmatprep.subr.bf16.mxu0 0
  %164 = vmatpush1.bf16.msra.mxu0 %v141
  %165 = vmatprep.subr.bf16.mxu0 0
  %166 = vmatpush1.bf16.msra.mxu0 %v142
  %167 = vmatprep.subr.bf16.mxu0 0
  %168 = vmatpush1.bf16.msra.mxu0 0
  %169 = vmatprep.subr.bf16.mxu0 0
  %170 = vmatpush1.bf16.msra.mxu0 0
  %171 = vmatprep.subr.bf16.mxu0 0
  %172 = vmatpush1.bf16.msra.mxu0 0
  %173 = vmatprep.subr.bf16.mxu0 0
  %174 = vmatpush1.bf16.msra.mxu0 0
  %175 = vmatprep.subr.bf16.mxu0 0
  %176 = vmatpush1.bf16.msra.mxu0 0
  %177 = vmatprep.subr.bf16.mxu0 0
  %178 = vmatpush1.bf16.msra.mxu0 0
  %179 = vmatprep.subr.bf16.mxu0 0
  %180 = vmatpush1.bf16.msra.mxu0 0
  %181 = vmatprep.subr.bf16.mxu0 0
  %182 = vmatpush1.bf16.msra.mxu0 0
  %183 = vmatprep.mubr.bf16.mxu0 0
  %184 = vmatmul.mubr.bf16.gmra.mrb[0].mxu0 %v72
  %v185 = vpop.f32.mrb[0].mxu0
  %v186 = vadd.f32 %v101, %v185
  %v187 = vpop.f32.mrb[0].mxu0
  %v188 = vpop.f32.mrb[0].mxu0
  %v189 = vadd.f32 %v101, %v188
  %v190 = vpop.f32.mrb[0].mxu0
  %191 = vmatprep.mubr.bf16.mxu0 0
  %192 = vmatmul.mubr.bf16.gmra.mrb[0].mxu0 %v73
  %v193 = vpop.f32.mrb[0].mxu0
  %v194 = vadd.f32 %v101, %v193
  %v195 = vpop.f32.mrb[0].mxu0
  %v196 = vpop.f32.mrb[0].mxu0
  %v197 = vadd.f32 %v101, %v196
  %v198 = vpop.f32.mrb[0].mxu0
  %199 = vmatprep.mubr.bf16.mxu0 0
  %200 = vmatmul.mubr.bf16.gmra.mrb[0].mxu0 %v74
  %v201 = vpop.f32.mrb[0].mxu0
  %v202 = vadd.f32 %v101, %v201
  %v203 = vpop.f32.mrb[0].mxu0
  %v204 = vpop.f32.mrb[0].mxu0
  %v205 = vadd.f32 %v101, %v204
  %v206 = vpop.f32.mrb[0].mxu0
  %207 = vmatprep.mubr.bf16.mxu0 0
  %208 = vmatmul.mubr.bf16.gmra.mrb[0].mxu0 %v75
  %v209 = vpop.f32.mrb[0].mxu0
  %v210 = vadd.f32 %v101, %v209
  %v211 = vpop.f32.mrb[0].mxu0
  %v212 = vpop.f32.mrb[0].mxu0
  %v213 = vadd.f32 %v101, %v212
  %v214 = vpop.f32.mrb[0].mxu0
  %215 = vmatprep.mubr.bf16.mxu0 0
  %216 = vmatmul.mubr.bf16.gmra.mrb[0].mxu0 %v76
  %v217 = vpop.f32.mrb[0].mxu0
  %v218 = vadd.f32 %v101, %v217
  %v219 = vpop.f32.mrb[0].mxu0
  %v220 = vpop.f32.mrb[0].mxu0
  %v221 = vadd.f32 %v101, %v220
  %v222 = vpop.f32.mrb[0].mxu0
  %223 = vmatprep.mubr.bf16.mxu0 0
  %224 = vmatmul.mubr.bf16.gmra.mrb[0].mxu0 %v77
  %v225 = vpop.f32.mrb[0].mxu0
  %v226 = vadd.f32 %v101, %v225
  %v227 = vpop.f32.mrb[0].mxu0
  %v228 = vpop.f32.mrb[0].mxu0
  %v229 = vadd.f32 %v101, %v228
  %v230 = vpop.f32.mrb[0].mxu0
  %231 = vmatprep.mubr.bf16.mxu0 0
  %232 = vmatmul.mubr.bf16.gmra.mrb[0].mxu0 %v78
  %v233 = vpop.f32.mrb[0].mxu0
  %v234 = vadd.f32 %v101, %v233
  %v235 = vpop.f32.mrb[0].mxu0
  %v236 = vpop.f32.mrb[0].mxu0
  %v237 = vadd.f32 %v101, %v236
  %v238 = vpop.f32.mrb[0].mxu0
  %239 = vmatprep.mubr.bf16.mxu0 0
  %240 = vmatmul.mubr.bf16.gmra.mrb[0].mxu0 %v79
  %v241 = vpop.f32.mrb[0].mxu0
  %v242 = vadd.f32 %v101, %v241
  %v243 = vpop.f32.mrb[0].mxu0
  %v244 = vpop.f32.mrb[0].mxu0
  %v245 = vadd.f32 %v101, %v244
  %v246 = vpop.f32.mrb[0].mxu0
  %247 = vdwg.mxu0
  %248 = vst [vmem:[#allocation2] sm:$0xff] %v186
  %249 = vst [vmem:[#allocation2 + $0x8] sm:$0xff] %v189
  %250 = vst [vmem:[#allocation2 + $0x10] sm:$0xff] %v194
  %251 = vst [vmem:[#allocation2 + $0x18] sm:$0xff] %v197
  %252 = vst [vmem:[#allocation2 + $0x20] sm:$0xff] %v202
  %253 = vst [vmem:[#allocation2 + $0x28] sm:$0xff] %v205
  %254 = vst [vmem:[#allocation2 + $0x30] sm:$0xff] %v210
  %255 = vst [vmem:[#allocation2 + $0x38] sm:$0xff] %v213
  %256 = vst [vmem:[#allocation2 + $0x40] sm:$0xff] %v218
  %257 = vst [vmem:[#allocation2 + $0x48] sm:$0xff] %v221
  %258 = vst [vmem:[#allocation2 + $0x50] sm:$0xff] %v226
  %259 = vst [vmem:[#allocation2 + $0x58] sm:$0xff] %v229
  %260 = vst [vmem:[#allocation2 + $0x60] sm:$0xff] %v234
  %261 = vst [vmem:[#allocation2 + $0x68] sm:$0xff] %v237
  %262 = vst [vmem:[#allocation2 + $0x70] sm:$0xff] %v242
  %263 = vst [vmem:[#allocation2 + $0x78] sm:$0xff] %v245
  %v264 = vld [vmem:[%s3] sm:$0xf]
  %v265 = vld [vmem:[%s3 + $0x4] sm:$0xf]
  %v266 = vld [vmem:[%s3 + $0x8] sm:$0xf]
  %v267 = vld [vmem:[%s3 + $0xc] sm:$0xf]
  %v268 = vld [vmem:[%s3 + $0x10] sm:$0xf]
  %v269 = vld [vmem:[%s3 + $0x14] sm:$0xf]
  %v270 = vld [vmem:[%s3 + $0x18] sm:$0xf]
  %v271 = vld [vmem:[%s3 + $0x1c] sm:$0xf]
  %v272 = vld [vmem:[%s3 + $0x20] sm:$0xf]
  %v273 = vld [vmem:[%s3 + $0x24] sm:$0xf]
  %v274 = vld [vmem:[%s3 + $0x28] sm:$0xf]
  %v275 = vld [vmem:[%s3 + $0x2c] sm:$0xf]
  %v276 = vld [vmem:[%s3 + $0x30] sm:$0xf]
  %v277 = vld [vmem:[%s3 + $0x34] sm:$0xf]
  %v278 = vld [vmem:[%s3 + $0x38] sm:$0xf]
  %v279 = vld [vmem:[%s3 + $0x3c] sm:$0xf]
  %v280 = vld [vmem:[%s12] sm:$0x1]
  %v282 = vlaneseq
  %v283 = vshrl.u32 %v282, 7
  %v284 = vsub.s32 0, %v283
  %v285 = vrot.slane %v280, %v284
  %v303 = vunpack.c.l.b16 %v264
  %v304 = vunpack.c.l.b16 %v265
  %v305 = vunpack.c.l.b16 %v266
  %v306 = vunpack.c.l.b16 %v267
  %v307 = vunpack.c.l.b16 %v268
  %v308 = vunpack.c.l.b16 %v269
  %v309 = vunpack.c.l.b16 %v270
  %v310 = vunpack.c.l.b16 %v271
  %v311 = vunpack.c.l.b16 %v272
  %v312 = vunpack.c.l.b16 %v273
  %v313 = vunpack.c.l.b16 %v274
  %v314 = vunpack.c.l.b16 %v275
  %v315 = vunpack.c.l.b16 %v276
  %v316 = vunpack.c.l.b16 %v277
  %v317 = vunpack.c.l.b16 %v278
  %v318 = vunpack.c.l.b16 %v279
  %v319 = vpack.c.b16 %v304, %v303
  %v320 = vpack.c.b16 %v306, %v305
  %v321 = vpack.c.b16 %v308, %v307
  %v322 = vpack.c.b16 %v310, %v309
  %v323 = vpack.c.b16 %v312, %v311
  %v324 = vpack.c.b16 %v314, %v313
  %v325 = vpack.c.b16 %v316, %v315
  %v326 = vpack.c.b16 %v318, %v317
  %335 = vmatprep.subr.bf16.mxu0 0
  %336 = vmatpush1.bf16.msra.mxu0 %v319
  %337 = vmatprep.subr.bf16.mxu0 0
  %338 = vmatpush1.bf16.msra.mxu0 %v320
  %339 = vmatprep.subr.bf16.mxu0 0
  %340 = vmatpush1.bf16.msra.mxu0 %v321
  %341 = vmatprep.subr.bf16.mxu0 0
  %342 = vmatpush1.bf16.msra.mxu0 %v322
  %343 = vmatprep.subr.bf16.mxu0 0
  %344 = vmatpush1.bf16.msra.mxu0 %v323
  %345 = vmatprep.subr.bf16.mxu0 0
  %346 = vmatpush1.bf16.msra.mxu0 %v324
  %347 = vmatprep.subr.bf16.mxu0 0
  %348 = vmatpush1.bf16.msra.mxu0 %v325
  %349 = vmatprep.subr.bf16.mxu0 0
  %350 = vmatpush1.bf16.msra.mxu0 %v326
  %351 = vmatprep.subr.bf16.mxu0 0
  %352 = vmatpush1.bf16.msra.mxu0 0
  %353 = vmatprep.subr.bf16.mxu0 0
  %354 = vmatpush1.bf16.msra.mxu0 0
  %355 = vmatprep.subr.bf16.mxu0 0
  %356 = vmatpush1.bf16.msra.mxu0 0
  %357 = vmatprep.subr.bf16.mxu0 0
  %358 = vmatpush1.bf16.msra.mxu0 0
  %359 = vmatprep.subr.bf16.mxu0 0
  %360 = vmatpush1.bf16.msra.mxu0 0
  %361 = vmatprep.subr.bf16.mxu0 0
  %362 = vmatpush1.bf16.msra.mxu0 0
  %363 = vmatprep.subr.bf16.mxu0 0
  %364 = vmatpush1.bf16.msra.mxu0 0
  %365 = vmatprep.subr.bf16.mxu0 0
  %366 = vmatpush1.bf16.msra.mxu0 0
  %367 = vmatprep.mubr.bf16.mxu0 0
  %368 = vmatmul.mubr.bf16.gmra.mrb[0].mxu0 %v72
  %v369 = vpop.f32.mrb[0].mxu0
  %v370 = vadd.f32 %v285, %v369
  %v371 = vpop.f32.mrb[0].mxu0
  %v372 = vpop.f32.mrb[0].mxu0
  %v373 = vadd.f32 %v285, %v372
  %v374 = vpop.f32.mrb[0].mxu0
  %375 = vmatprep.mubr.bf16.mxu0 0
  %376 = vmatmul.mubr.bf16.gmra.mrb[0].mxu0 %v73
  %v377 = vpop.f32.mrb[0].mxu0
  %v378 = vadd.f32 %v285, %v377
  %v379 = vpop.f32.mrb[0].mxu0
  %v380 = vpop.f32.mrb[0].mxu0
  %v381 = vadd.f32 %v285, %v380
  %v382 = vpop.f32.mrb[0].mxu0
  %383 = vmatprep.mubr.bf16.mxu0 0
  %384 = vmatmul.mubr.bf16.gmra.mrb[0].mxu0 %v74
  %v385 = vpop.f32.mrb[0].mxu0
  %v386 = vadd.f32 %v285, %v385
  %v387 = vpop.f32.mrb[0].mxu0
  %v388 = vpop.f32.mrb[0].mxu0
  %v389 = vadd.f32 %v285, %v388
  %v390 = vpop.f32.mrb[0].mxu0
  %391 = vmatprep.mubr.bf16.mxu0 0
  %392 = vmatmul.mubr.bf16.gmra.mrb[0].mxu0 %v75
  %v393 = vpop.f32.mrb[0].mxu0
  %v394 = vadd.f32 %v285, %v393
  %v395 = vpop.f32.mrb[0].mxu0
  %v396 = vpop.f32.mrb[0].mxu0
  %v397 = vadd.f32 %v285, %v396
  %v398 = vpop.f32.mrb[0].mxu0
  %399 = vmatprep.mubr.bf16.mxu0 0
  %400 = vmatmul.mubr.bf16.gmra.mrb[0].mxu0 %v76
  %v401 = vpop.f32.mrb[0].mxu0
  %v402 = vadd.f32 %v285, %v401
  %v403 = vpop.f32.mrb[0].mxu0
  %v404 = vpop.f32.mrb[0].mxu0
  %v405 = vadd.f32 %v285, %v404
  %v406 = vpop.f32.mrb[0].mxu0
  %407 = vmatprep.mubr.bf16.mxu0 0
  %408 = vmatmul.mubr.bf16.gmra.mrb[0].mxu0 %v77
  %v409 = vpop.f32.mrb[0].mxu0
  %v410 = vadd.f32 %v285, %v409
  %v411 = vpop.f32.mrb[0].mxu0
  %v412 = vpop.f32.mrb[0].mxu0
  %v413 = vadd.f32 %v285, %v412
  %v414 = vpop.f32.mrb[0].mxu0
  %415 = vmatprep.mubr.bf16.mxu0 0
  %416 = vmatmul.mubr.bf16.gmra.mrb[0].mxu0 %v78
  %v417 = vpop.f32.mrb[0].mxu0
  %v418 = vadd.f32 %v285, %v417
  %v419 = vpop.f32.mrb[0].mxu0
  %v420 = vpop.f32.mrb[0].mxu0
  %v421 = vadd.f32 %v285, %v420
  %v422 = vpop.f32.mrb[0].mxu0
  %423 = vmatprep.mubr.bf16.mxu0 0
  %424 = vmatmul.mubr.bf16.gmra.mrb[0].mxu0 %v79
  %v425 = vpop.f32.mrb[0].mxu0
  %v426 = vadd.f32 %v285, %v425
  %v427 = vpop.f32.mrb[0].mxu0
  %v428 = vpop.f32.mrb[0].mxu0
  %v429 = vadd.f32 %v285, %v428
  %v430 = vpop.f32.mrb[0].mxu0
  %431 = vdwg.mxu0
  %432 = vst [vmem:[#allocation3] sm:$0xff] %v370
  %433 = vst [vmem:[#allocation3 + $0x8] sm:$0xff] %v373
  %434 = vst [vmem:[#allocation3 + $0x10] sm:$0xff] %v378
  %435 = vst [vmem:[#allocation3 + $0x18] sm:$0xff] %v381
  %436 = vst [vmem:[#allocation3 + $0x20] sm:$0xff] %v386
  %437 = vst [vmem:[#allocation3 + $0x28] sm:$0xff] %v389
  %438 = vst [vmem:[#allocation3 + $0x30] sm:$0xff] %v394
  %439 = vst [vmem:[#allocation3 + $0x38] sm:$0xff] %v397
  %440 = vst [vmem:[#allocation3 + $0x40] sm:$0xff] %v402
  %441 = vst [vmem:[#allocation3 + $0x48] sm:$0xff] %v405
  %442 = vst [vmem:[#allocation3 + $0x50] sm:$0xff] %v410
  %443 = vst [vmem:[#allocation3 + $0x58] sm:$0xff] %v413
  %444 = vst [vmem:[#allocation3 + $0x60] sm:$0xff] %v418
  %445 = vst [vmem:[#allocation3 + $0x68] sm:$0xff] %v421
  %446 = vst [vmem:[#allocation3 + $0x70] sm:$0xff] %v426
  %447 = vst [vmem:[#allocation3 + $0x78] sm:$0xff] %v429
  %vm448 = vcmp.gt.f32.partialorder %v54, 0.0
  %vm449 = vcmp.gt.f32.partialorder %v55, 0.0
  %vm450 = vcmp.gt.f32.partialorder %v54, 7.0
  %vm451 = vcmp.gt.f32.partialorder %v55, 7.0
  %v452 = vld [vmem:[#allocation2] sm:$0xff]
  %v453 = vld [vmem:[#allocation2 + $0x8] sm:$0xff]
  %v454 = vld [vmem:[%s6] sm:$0xf]
  %v455 = vld [vmem:[%s6 + $0x4] sm:$0xf]
  %v456 = vld [vmem:[%s6 + $0x8] sm:$0xf]
  %v457 = vld [vmem:[%s6 + $0xc] sm:$0xf]
  %v458 = vld [vmem:[%s6 + $0x10] sm:$0xf]
  %v459 = vld [vmem:[%s6 + $0x14] sm:$0xf]
  %v460 = vld [vmem:[%s6 + $0x18] sm:$0xf]
  %v461 = vld [vmem:[%s6 + $0x1c] sm:$0xf]
  %v462 = vld [vmem:[%s6 + $0x20] sm:$0xf]
  %v463 = vld [vmem:[%s6 + $0x24] sm:$0xf]
  %v464 = vld [vmem:[%s6 + $0x28] sm:$0xf]
  %v465 = vld [vmem:[%s6 + $0x2c] sm:$0xf]
  %v466 = vld [vmem:[%s6 + $0x30] sm:$0xf]
  %v467 = vld [vmem:[%s6 + $0x34] sm:$0xf]
  %v468 = vld [vmem:[%s6 + $0x38] sm:$0xf]
  %v469 = vld [vmem:[%s6 + $0x3c] sm:$0xf]
  %v486 = vunpack.c.l.b16 %v454
  %v487 = vunpack.c.l.b16 %v455
  %v488 = vunpack.c.l.b16 %v456
  %v489 = vunpack.c.l.b16 %v457
  %v490 = vunpack.c.l.b16 %v458
  %v491 = vunpack.c.l.b16 %v459
  %v492 = vunpack.c.l.b16 %v460
  %v493 = vunpack.c.l.b16 %v461
  %v494 = vunpack.c.l.b16 %v462
  %v495 = vunpack.c.l.b16 %v463
  %v496 = vunpack.c.l.b16 %v464
  %v497 = vunpack.c.l.b16 %v465
  %v498 = vunpack.c.l.b16 %v466
  %v499 = vunpack.c.l.b16 %v467
  %v500 = vunpack.c.l.b16 %v468
  %v501 = vunpack.c.l.b16 %v469
  %v502 = vpack.c.b16 %v487, %v486
  %v503 = vpack.c.b16 %v489, %v488
  %v504 = vpack.c.b16 %v491, %v490
  %v505 = vpack.c.b16 %v493, %v492
  %v506 = vpack.c.b16 %v495, %v494
  %v507 = vpack.c.b16 %v497, %v496
  %v508 = vpack.c.b16 %v499, %v498
  %v509 = vpack.c.b16 %v501, %v500
  %518 = vmatprep.subr.bf16.mxu0 0
  %519 = vmatpush1.bf16.msra.mxu0 %v502
  %520 = vmatprep.subr.bf16.mxu0 0
  %521 = vmatpush1.bf16.msra.mxu0 %v503
  %522 = vmatprep.subr.bf16.mxu0 0
  %523 = vmatpush1.bf16.msra.mxu0 %v504
  %524 = vmatprep.subr.bf16.mxu0 0
  %525 = vmatpush1.bf16.msra.mxu0 %v505
  %526 = vmatprep.subr.bf16.mxu0 0
  %527 = vmatpush1.bf16.msra.mxu0 %v506
  %528 = vmatprep.subr.bf16.mxu0 0
  %529 = vmatpush1.bf16.msra.mxu0 %v507
  %530 = vmatprep.subr.bf16.mxu0 0
  %531 = vmatpush1.bf16.msra.mxu0 %v508
  %532 = vmatprep.subr.bf16.mxu0 0
  %533 = vmatpush1.bf16.msra.mxu0 %v509
  %534 = vmatprep.subr.bf16.mxu0 0
  %535 = vmatpush1.bf16.msra.mxu0 0
  %536 = vmatprep.subr.bf16.mxu0 0
  %537 = vmatpush1.bf16.msra.mxu0 0
  %538 = vmatprep.subr.bf16.mxu0 0
  %539 = vmatpush1.bf16.msra.mxu0 0
  %540 = vmatprep.subr.bf16.mxu0 0
  %541 = vmatpush1.bf16.msra.mxu0 0
  %542 = vmatprep.subr.bf16.mxu0 0
  %543 = vmatpush1.bf16.msra.mxu0 0
  %544 = vmatprep.subr.bf16.mxu0 0
  %545 = vmatpush1.bf16.msra.mxu0 0
  %546 = vmatprep.subr.bf16.mxu0 0
  %547 = vmatpush1.bf16.msra.mxu0 0
  %548 = vmatprep.subr.bf16.mxu0 0
  %549 = vmatpush1.bf16.msra.mxu0 0
  %550 = vmatprep.mubr.bf16.mxu0 0
  %551 = vmatmul.mubr.bf16.gmra.mrb[0].mxu0 0
  %v552 = vpop.f32.mrb[0].mxu0
  %v553 = vadd.f32 0.0, %v552
  %v554 = vpop.f32.mrb[0].mxu0
  %v555 = vpop.f32.mrb[0].mxu0
  %v556 = vadd.f32 0.0, %v555
  %v557 = vpop.f32.mrb[0].mxu0
  %558 = vdwg.mxu0
  %v559 = vadd.f32 %v452, %v553
  %v560 = vadd.f32 %v453, %v556
  %v561 = vxor.u32 %v559, 2147483648
  %v562 = vxor.u32 %v560, 2147483648
  %v563 = vmul.f32 %v561, 1.442695
  %v564 = vpow.pop %v563
  %v565 = vmul.f32 %v562, 1.442695
  %v566 = vpow.pop %v565
  %v567 = vadd.f32 %v564, 1.0
  %v568 = vadd.f32 %v566, 1.0
  %v569 = vrcp.pop %v567
  %v570 = vmul.f32 1.0, %v569
  %v571 = vrcp.pop %v568
  %v572 = vmul.f32 1.0, %v571
  %v573 = vtanh.pop %v559
  %v574 = vtanh.pop %v560
  %575 = vrot.lane.b32.xlu0 %v570, 16
  %v576 = vpop.permute.xlu0 %575
  %577 = vrot.lane.b32.xlu0 %v572, 16
  %v578 = vpop.permute.xlu0 %577
  %579 = vrot.lane.b32.xlu0 %v573, 32
  %v580 = vpop.permute.xlu0 %579
  %581 = vrot.lane.b32.xlu0 %v574, 32
  %v582 = vpop.permute.xlu0 %581
  %583 = vrot.lane.b32.xlu0 %v570, 48
  %v584 = vpop.permute.xlu0 %583
  %585 = vrot.lane.b32.xlu0 %v572, 48
  %v586 = vpop.permute.xlu0 %585
  %v587 = vmul.f32 %v576, 0.0
  %v588 = vmul.f32 %v578, 0.0
  %v589 = vmul.f32 %v570, %v580
  %v590 = vmul.f32 %v572, %v582
  %v591 = vadd.f32 %v587, %v589
  %v592 = vadd.f32 %v588, %v590
  %v593 = vtanh.pop %v591
  %v594 = vtanh.pop %v592
  %v595 = vmul.f32 %v584, %v593
  %v596 = vmul.f32 %v586, %v594
  %v597 = vsel %vm448, %v595, 0.0
  %v598 = vsel %vm449, %v596, 0.0
  %v599 = vsel %vm448, %v591, 0.0
  %v600 = vsel %vm449, %v592, 0.0
  %601 = vst [vmem:[#allocation6] sm:$0xff] %v597
  %602 = vst [vmem:[#allocation6 + $0x10] sm:$0xff] %v598
  %s603 = scalar_lea.vmem [#allocation3], 112
  %v604 = vld [vmem:[%s603] sm:$0xff]
  %v605 = vld [vmem:[%s603 + $0x8] sm:$0xff]
  %v606 = vld [vmem:[%s7] sm:$0xf]
  %v607 = vld [vmem:[%s7 + $0x4] sm:$0xf]
  %v608 = vld [vmem:[%s7 + $0x8] sm:$0xf]
  %v609 = vld [vmem:[%s7 + $0xc] sm:$0xf]
  %v610 = vld [vmem:[%s7 + $0x10] sm:$0xf]
  %v611 = vld [vmem:[%s7 + $0x14] sm:$0xf]
  %v612 = vld [vmem:[%s7 + $0x18] sm:$0xf]
  %v613 = vld [vmem:[%s7 + $0x1c] sm:$0xf]
  %v614 = vld [vmem:[%s7 + $0x20] sm:$0xf]
  %v615 = vld [vmem:[%s7 + $0x24] sm:$0xf]
  %v616 = vld [vmem:[%s7 + $0x28] sm:$0xf]
  %v617 = vld [vmem:[%s7 + $0x2c] sm:$0xf]
  %v618 = vld [vmem:[%s7 + $0x30] sm:$0xf]
  %v619 = vld [vmem:[%s7 + $0x34] sm:$0xf]
  %v620 = vld [vmem:[%s7 + $0x38] sm:$0xf]
  %v621 = vld [vmem:[%s7 + $0x3c] sm:$0xf]
  %v638 = vunpack.c.l.b16 %v606
  %v639 = vunpack.c.l.b16 %v607
  %v640 = vunpack.c.l.b16 %v608
  %v641 = vunpack.c.l.b16 %v609
  %v642 = vunpack.c.l.b16 %v610
  %v643 = vunpack.c.l.b16 %v611
  %v644 = vunpack.c.l.b16 %v612
  %v645 = vunpack.c.l.b16 %v613
  %v646 = vunpack.c.l.b16 %v614
  %v647 = vunpack.c.l.b16 %v615
  %v648 = vunpack.c.l.b16 %v616
  %v649 = vunpack.c.l.b16 %v617
  %v650 = vunpack.c.l.b16 %v618
  %v651 = vunpack.c.l.b16 %v619
  %v652 = vunpack.c.l.b16 %v620
  %v653 = vunpack.c.l.b16 %v621
  %v654 = vpack.c.b16 %v639, %v638
  %v655 = vpack.c.b16 %v641, %v640
  %v656 = vpack.c.b16 %v643, %v642
  %v657 = vpack.c.b16 %v645, %v644
  %v658 = vpack.c.b16 %v647, %v646
  %v659 = vpack.c.b16 %v649, %v648
  %v660 = vpack.c.b16 %v651, %v650
  %v661 = vpack.c.b16 %v653, %v652
  %670 = vmatprep.subr.bf16.mxu0 0
  %671 = vmatpush1.bf16.msra.mxu0 %v654
  %672 = vmatprep.subr.bf16.mxu0 0
  %673 = vmatpush1.bf16.msra.mxu0 %v655
  %674 = vmatprep.subr.bf16.mxu0 0
  %675 = vmatpush1.bf16.msra.mxu0 %v656
  %676 = vmatprep.subr.bf16.mxu0 0
  %677 = vmatpush1.bf16.msra.mxu0 %v657
  %678 = vmatprep.subr.bf16.mxu0 0
  %679 = vmatpush1.bf16.msra.mxu0 %v658
  %680 = vmatprep.subr.bf16.mxu0 0
  %681 = vmatpush1.bf16.msra.mxu0 %v659
  %682 = vmatprep.subr.bf16.mxu0 0
  %683 = vmatpush1.bf16.msra.mxu0 %v660
  %684 = vmatprep.subr.bf16.mxu0 0
  %685 = vmatpush1.bf16.msra.mxu0 %v661
  %686 = vmatprep.subr.bf16.mxu0 0
  %687 = vmatpush1.bf16.msra.mxu0 0
  %688 = vmatprep.subr.bf16.mxu0 0
  %689 = vmatpush1.bf16.msra.mxu0 0
  %690 = vmatprep.subr.bf16.mxu0 0
  %691 = vmatpush1.bf16.msra.mxu0 0
  %692 = vmatprep.subr.bf16.mxu0 0
  %693 = vmatpush1.bf16.msra.mxu0 0
  %694 = vmatprep.subr.bf16.mxu0 0
  %695 = vmatpush1.bf16.msra.mxu0 0
  %696 = vmatprep.subr.bf16.mxu0 0
  %697 = vmatpush1.bf16.msra.mxu0 0
  %698 = vmatprep.subr.bf16.mxu0 0
  %699 = vmatpush1.bf16.msra.mxu0 0
  %700 = vmatprep.subr.bf16.mxu0 0
  %701 = vmatpush1.bf16.msra.mxu0 0
  %702 = vmatprep.mubr.bf16.mxu0 0
  %703 = vmatmul.mubr.bf16.gmra.mrb[0].mxu0 0
  %v704 = vpop.f32.mrb[0].mxu0
  %v705 = vadd.f32 0.0, %v704
  %v706 = vpop.f32.mrb[0].mxu0
  %v707 = vpop.f32.mrb[0].mxu0
  %v708 = vadd.f32 0.0, %v707
  %v709 = vpop.f32.mrb[0].mxu0
  %710 = vdwg.mxu0
  %v711 = vadd.f32 %v604, %v705
  %v712 = vadd.f32 %v605, %v708
  %v713 = vxor.u32 %v711, 2147483648
  %v714 = vxor.u32 %v712, 2147483648
  %v715 = vmul.f32 %v713, 1.442695
  %v716 = vpow.pop %v715
  %v717 = vmul.f32 %v714, 1.442695
  %v718 = vpow.pop %v717
  %v719 = vadd.f32 %v716, 1.0
  %v720 = vadd.f32 %v718, 1.0
  %v721 = vrcp.pop %v719
  %v722 = vmul.f32 1.0, %v721
  %v723 = vrcp.pop %v720
  %v724 = vmul.f32 1.0, %v723
  %v725 = vtanh.pop %v711
  %v726 = vtanh.pop %v712
  %727 = vrot.lane.b32.xlu0 %v722, 16
  %v728 = vpop.permute.xlu0 %727
  %729 = vrot.lane.b32.xlu0 %v724, 16
  %v730 = vpop.permute.xlu0 %729
  %731 = vrot.lane.b32.xlu0 %v725, 32
  %v732 = vpop.permute.xlu0 %731
  %733 = vrot.lane.b32.xlu0 %v726, 32
  %v734 = vpop.permute.xlu0 %733
  %735 = vrot.lane.b32.xlu0 %v722, 48
  %v736 = vpop.permute.xlu0 %735
  %737 = vrot.lane.b32.xlu0 %v724, 48
  %v738 = vpop.permute.xlu0 %737
  %v739 = vmul.f32 %v728, 0.0
  %v740 = vmul.f32 %v730, 0.0
  %v741 = vmul.f32 %v722, %v732
  %v742 = vmul.f32 %v724, %v734
  %v743 = vadd.f32 %v739, %v741
  %v744 = vadd.f32 %v740, %v742
  %v745 = vtanh.pop %v743
  %v746 = vtanh.pop %v744
  %v747 = vmul.f32 %v736, %v745
  %v748 = vmul.f32 %v738, %v746
  %v749 = vsel %vm450, %v747, 0.0
  %v750 = vsel %vm451, %v748, 0.0
  %v751 = vsel %vm450, %v743, 0.0
  %v752 = vsel %vm451, %v744, 0.0
  %s753 = scalar_lea.vmem [#allocation6], 224
  %754 = vst [vmem:[%s753 + $0x8] sm:$0xff] %v749
  %755 = vst [vmem:[%s753 + $0x18] sm:$0xff] %v750
  %vm756 = vcmp.gt.f32.partialorder %v54, 1.0
  %vm757 = vcmp.gt.f32.partialorder %v55, 1.0
  %vm758 = vcmp.gt.f32.partialorder %v54, 6.0
  %vm759 = vcmp.gt.f32.partialorder %v55, 6.0
  %s760 = scalar_lea.vmem [#allocation2], 16
  %v761 = vld [vmem:[%s760] sm:$0xff]
  %v762 = vld [vmem:[%s760 + $0x8] sm:$0xff]
  %v763 = vpack.c.bf16 %v598, %v597
  %v764 = vld [vmem:[%s6] sm:$0xf]
  %v765 = vld [vmem:[%s6 + $0x4] sm:$0xf]
  %v766 = vld [vmem:[%s6 + $0x8] sm:$0xf]
  %v767 = vld [vmem:[%s6 + $0xc] sm:$0xf]
  %v768 = vld [vmem:[%s6 + $0x10] sm:$0xf]
  %v769 = vld [vmem:[%s6 + $0x14] sm:$0xf]
  %v770 = vld [vmem:[%s6 + $0x18] sm:$0xf]
  %v771 = vld [vmem:[%s6 + $0x1c] sm:$0xf]
  %v772 = vld [vmem:[%s6 + $0x20] sm:$0xf]
  %v773 = vld [vmem:[%s6 + $0x24] sm:$0xf]
  %v774 = vld [vmem:[%s6 + $0x28] sm:$0xf]
  %v775 = vld [vmem:[%s6 + $0x2c] sm:$0xf]
  %v776 = vld [vmem:[%s6 + $0x30] sm:$0xf]
  %v777 = vld [vmem:[%s6 + $0x34] sm:$0xf]
  %v778 = vld [vmem:[%s6 + $0x38] sm:$0xf]
  %v779 = vld [vmem:[%s6 + $0x3c] sm:$0xf]
  %v796 = vunpack.c.l.b16 %v764
  %v797 = vunpack.c.l.b16 %v765
  %v798 = vunpack.c.l.b16 %v766
  %v799 = vunpack.c.l.b16 %v767
  %v800 = vunpack.c.l.b16 %v768
  %v801 = vunpack.c.l.b16 %v769
  %v802 = vunpack.c.l.b16 %v770
  %v803 = vunpack.c.l.b16 %v771
  %v804 = vunpack.c.l.b16 %v772
  %v805 = vunpack.c.l.b16 %v773
  %v806 = vunpack.c.l.b16 %v774
  %v807 = vunpack.c.l.b16 %v775
  %v808 = vunpack.c.l.b16 %v776
  %v809 = vunpack.c.l.b16 %v777
  %v810 = vunpack.c.l.b16 %v778
  %v811 = vunpack.c.l.b16 %v779
  %v812 = vpack.c.b16 %v797, %v796
  %v813 = vpack.c.b16 %v799, %v798
  %v814 = vpack.c.b16 %v801, %v800
  %v815 = vpack.c.b16 %v803, %v802
  %v816 = vpack.c.b16 %v805, %v804
  %v817 = vpack.c.b16 %v807, %v806
  %v818 = vpack.c.b16 %v809, %v808
  %v819 = vpack.c.b16 %v811, %v810
  %828 = vmatprep.subr.bf16.mxu0 0
  %829 = vmatpush1.bf16.msra.mxu0 %v812
  %830 = vmatprep.subr.bf16.mxu0 0
  %831 = vmatpush1.bf16.msra.mxu0 %v813
  %832 = vmatprep.subr.bf16.mxu0 0
  %833 = vmatpush1.bf16.msra.mxu0 %v814
  %834 = vmatprep.subr.bf16.mxu0 0
  %835 = vmatpush1.bf16.msra.mxu0 %v815
  %836 = vmatprep.subr.bf16.mxu0 0
  %837 = vmatpush1.bf16.msra.mxu0 %v816
  %838 = vmatprep.subr.bf16.mxu0 0
  %839 = vmatpush1.bf16.msra.mxu0 %v817
  %840 = vmatprep.subr.bf16.mxu0 0
  %841 = vmatpush1.bf16.msra.mxu0 %v818
  %842 = vmatprep.subr.bf16.mxu0 0
  %843 = vmatpush1.bf16.msra.mxu0 %v819
  %844 = vmatprep.subr.bf16.mxu0 0
  %845 = vmatpush1.bf16.msra.mxu0 0
  %846 = vmatprep.subr.bf16.mxu0 0
  %847 = vmatpush1.bf16.msra.mxu0 0
  %848 = vmatprep.subr.bf16.mxu0 0
  %849 = vmatpush1.bf16.msra.mxu0 0
  %850 = vmatprep.subr.bf16.mxu0 0
  %851 = vmatpush1.bf16.msra.mxu0 0
  %852 = vmatprep.subr.bf16.mxu0 0
  %853 = vmatpush1.bf16.msra.mxu0 0
  %854 = vmatprep.subr.bf16.mxu0 0
  %855 = vmatpush1.bf16.msra.mxu0 0
  %856 = vmatprep.subr.bf16.mxu0 0
  %857 = vmatpush1.bf16.msra.mxu0 0
  %858 = vmatprep.subr.bf16.mxu0 0
  %859 = vmatpush1.bf16.msra.mxu0 0
  %860 = vmatprep.mubr.bf16.mxu0 0
  %861 = vmatmul.mubr.bf16.gmra.mrb[0].mxu0 %v763
  %v862 = vpop.f32.mrb[0].mxu0
  %v863 = vadd.f32 0.0, %v862
  %v864 = vpop.f32.mrb[0].mxu0
  %v865 = vpop.f32.mrb[0].mxu0
  %v866 = vadd.f32 0.0, %v865
  %v867 = vpop.f32.mrb[0].mxu0
  %868 = vdwg.mxu0
  %v869 = vadd.f32 %v761, %v863
  %v870 = vadd.f32 %v762, %v866
  %v871 = vxor.u32 %v869, 2147483648
  %v872 = vxor.u32 %v870, 2147483648
  %v873 = vmul.f32 %v871, 1.442695
  %v874 = vpow.pop %v873
  %v875 = vmul.f32 %v872, 1.442695
  %v876 = vpow.pop %v875
  %v877 = vadd.f32 %v874, 1.0
  %v878 = vadd.f32 %v876, 1.0
  %v879 = vrcp.pop %v877
  %v880 = vmul.f32 1.0, %v879
  %v881 = vrcp.pop %v878
  %v882 = vmul.f32 1.0, %v881
  %v883 = vtanh.pop %v869
  %v884 = vtanh.pop %v870
  %885 = vrot.lane.b32.xlu0 %v880, 16
  %v886 = vpop.permute.xlu0 %885
  %887 = vrot.lane.b32.xlu0 %v882, 16
  %v888 = vpop.permute.xlu0 %887
  %889 = vrot.lane.b32.xlu0 %v883, 32
  %v890 = vpop.permute.xlu0 %889
  %891 = vrot.lane.b32.xlu0 %v884, 32
  %v892 = vpop.permute.xlu0 %891
  %893 = vrot.lane.b32.xlu0 %v880, 48
  %v894 = vpop.permute.xlu0 %893
  %895 = vrot.lane.b32.xlu0 %v882, 48
  %v896 = vpop.permute.xlu0 %895
  %v897 = vmul.f32 %v886, %v599
  %v898 = vmul.f32 %v888, %v600
  %v899 = vmul.f32 %v880, %v890
  %v900 = vmul.f32 %v882, %v892
  %v901 = vadd.f32 %v897, %v899
  %v902 = vadd.f32 %v898, %v900
  %v903 = vtanh.pop %v901
  %v904 = vtanh.pop %v902
  %v905 = vmul.f32 %v894, %v903
  %v906 = vmul.f32 %v896, %v904
  %v907 = vsel %vm756, %v905, %v597
  %v908 = vsel %vm757, %v906, %v598
  %v909 = vsel %vm756, %v901, %v599
  %v910 = vsel %vm757, %v902, %v600
  %s911 = scalar_lea.vmem [#allocation6], 32
  %912 = vst [vmem:[%s911] sm:$0xff] %v907
  %913 = vst [vmem:[%s911 + $0x10] sm:$0xff] %v908
  %s914 = scalar_lea.vmem [#allocation3], 96
  %v915 = vld [vmem:[%s914] sm:$0xff]
  %v916 = vld [vmem:[%s914 + $0x8] sm:$0xff]
  %v917 = vpack.c.bf16 %v750, %v749
  %v918 = vld [vmem:[%s7] sm:$0xf]
  %v919 = vld [vmem:[%s7 + $0x4] sm:$0xf]
  %v920 = vld [vmem:[%s7 + $0x8] sm:$0xf]
  %v921 = vld [vmem:[%s7 + $0xc] sm:$0xf]
  %v922 = vld [vmem:[%s7 + $0x10] sm:$0xf]
  %v923 = vld [vmem:[%s7 + $0x14] sm:$0xf]
  %v924 = vld [vmem:[%s7 + $0x18] sm:$0xf]
  %v925 = vld [vmem:[%s7 + $0x1c] sm:$0xf]
  %v926 = vld [vmem:[%s7 + $0x20] sm:$0xf]
  %v927 = vld [vmem:[%s7 + $0x24] sm:$0xf]
  %v928 = vld [vmem:[%s7 + $0x28] sm:$0xf]
  %v929 = vld [vmem:[%s7 + $0x2c] sm:$0xf]
  %v930 = vld [vmem:[%s7 + $0x30] sm:$0xf]
  %v931 = vld [vmem:[%s7 + $0x34] sm:$0xf]
  %v932 = vld [vmem:[%s7 + $0x38] sm:$0xf]
  %v933 = vld [vmem:[%s7 + $0x3c] sm:$0xf]
  %v950 = vunpack.c.l.b16 %v918
  %v951 = vunpack.c.l.b16 %v919
  %v952 = vunpack.c.l.b16 %v920
  %v953 = vunpack.c.l.b16 %v921
  %v954 = vunpack.c.l.b16 %v922
  %v955 = vunpack.c.l.b16 %v923
  %v956 = vunpack.c.l.b16 %v924
  %v957 = vunpack.c.l.b16 %v925
  %v958 = vunpack.c.l.b16 %v926
  %v959 = vunpack.c.l.b16 %v927
  %v960 = vunpack.c.l.b16 %v928
  %v961 = vunpack.c.l.b16 %v929
  %v962 = vunpack.c.l.b16 %v930
  %v963 = vunpack.c.l.b16 %v931
  %v964 = vunpack.c.l.b16 %v932
  %v965 = vunpack.c.l.b16 %v933
  %v966 = vpack.c.b16 %v951, %v950
  %v967 = vpack.c.b16 %v953, %v952
  %v968 = vpack.c.b16 %v955, %v954
  %v969 = vpack.c.b16 %v957, %v956
  %v970 = vpack.c.b16 %v959, %v958
  %v971 = vpack.c.b16 %v961, %v960
  %v972 = vpack.c.b16 %v963, %v962
  %v973 = vpack.c.b16 %v965, %v964
  %982 = vmatprep.subr.bf16.mxu0 0
  %983 = vmatpush1.bf16.msra.mxu0 %v966
  %984 = vmatprep.subr.bf16.mxu0 0
  %985 = vmatpush1.bf16.msra.mxu0 %v967
  %986 = vmatprep.subr.bf16.mxu0 0
  %987 = vmatpush1.bf16.msra.mxu0 %v968
  %988 = vmatprep.subr.bf16.mxu0 0
  %989 = vmatpush1.bf16.msra.mxu0 %v969
  %990 = vmatprep.subr.bf16.mxu0 0
  %991 = vmatpush1.bf16.msra.mxu0 %v970
  %992 = vmatprep.subr.bf16.mxu0 0
  %993 = vmatpush1.bf16.msra.mxu0 %v971
  %994 = vmatprep.subr.bf16.mxu0 0
  %995 = vmatpush1.bf16.msra.mxu0 %v972
  %996 = vmatprep.subr.bf16.mxu0 0
  %997 = vmatpush1.bf16.msra.mxu0 %v973
  %998 = vmatprep.subr.bf16.mxu0 0
  %999 = vmatpush1.bf16.msra.mxu0 0
  %1000 = vmatprep.subr.bf16.mxu0 0
  %1001 = vmatpush1.bf16.msra.mxu0 0
  %1002 = vmatprep.subr.bf16.mxu0 0
  %1003 = vmatpush1.bf16.msra.mxu0 0
  %1004 = vmatprep.subr.bf16.mxu0 0
  %1005 = vmatpush1.bf16.msra.mxu0 0
  %1006 = vmatprep.subr.bf16.mxu0 0
  %1007 = vmatpush1.bf16.msra.mxu0 0
  %1008 = vmatprep.subr.bf16.mxu0 0
  %1009 = vmatpush1.bf16.msra.mxu0 0
  %1010 = vmatprep.subr.bf16.mxu0 0
  %1011 = vmatpush1.bf16.msra.mxu0 0
  %1012 = vmatprep.subr.bf16.mxu0 0
  %1013 = vmatpush1.bf16.msra.mxu0 0
  %1014 = vmatprep.mubr.bf16.mxu0 0
  %1015 = vmatmul.mubr.bf16.gmra.mrb[0].mxu0 %v917
  %v1016 = vpop.f32.mrb[0].mxu0
  %v1017 = vadd.f32 0.0, %v1016
  %v1018 = vpop.f32.mrb[0].mxu0
  %v1019 = vpop.f32.mrb[0].mxu0
  %v1020 = vadd.f32 0.0, %v1019
  %v1021 = vpop.f32.mrb[0].mxu0
  %1022 = vdwg.mxu0
  %v1023 = vadd.f32 %v915, %v1017
  %v1024 = vadd.f32 %v916, %v1020
  %v1025 = vxor.u32 %v1023, 2147483648
  %v1026 = vxor.u32 %v1024, 2147483648
  %v1027 = vmul.f32 %v1025, 1.442695
  %v1028 = vpow.pop %v1027
  %v1029 = vmul.f32 %v1026, 1.442695
  %v1030 = vpow.pop %v1029
  %v1031 = vadd.f32 %v1028, 1.0
  %v1032 = vadd.f32 %v1030, 1.0
  %v1033 = vrcp.pop %v1031
  %v1034 = vmul.f32 1.0, %v1033
  %v1035 = vrcp.pop %v1032
  %v1036 = vmul.f32 1.0, %v1035
  %v1037 = vtanh.pop %v1023
  %v1038 = vtanh.pop %v1024
  %1039 = vrot.lane.b32.xlu0 %v1034, 16
  %v1040 = vpop.permute.xlu0 %1039
  %1041 = vrot.lane.b32.xlu0 %v1036, 16
  %v1042 = vpop.permute.xlu0 %1041
  %1043 = vrot.lane.b32.xlu0 %v1037, 32
  %v1044 = vpop.permute.xlu0 %1043
  %1045 = vrot.lane.b32.xlu0 %v1038, 32
  %v1046 = vpop.permute.xlu0 %1045
  %1047 = vrot.lane.b32.xlu0 %v1034, 48
  %v1048 = vpop.permute.xlu0 %1047
  %1049 = vrot.lane.b32.xlu0 %v1036, 48
  %v1050 = vpop.permute.xlu0 %1049
  %v1051 = vmul.f32 %v1040, %v751
  %v1052 = vmul.f32 %v1042, %v752
  %v1053 = vmul.f32 %v1034, %v1044
  %v1054 = vmul.f32 %v1036, %v1046
  %v1055 = vadd.f32 %v1051, %v1053
  %v1056 = vadd.f32 %v1052, %v1054
  %v1057 = vtanh.pop %v1055
  %v1058 = vtanh.pop %v1056
  %v1059 = vmul.f32 %v1048, %v1057
  %v1060 = vmul.f32 %v1050, %v1058
  %v1061 = vsel %vm758, %v1059, %v749
  %v1062 = vsel %vm759, %v1060, %v750
  %v1063 = vsel %vm758, %v1055, %v751
  %v1064 = vsel %vm759, %v1056, %v752
  %s1065 = scalar_lea.vmem [#allocation6], 192
  %1066 = vst [vmem:[%s1065 + $0x8] sm:$0xff] %v1061
  %1067 = vst [vmem:[%s1065 + $0x18] sm:$0xff] %v1062
  %vm1068 = vcmp.gt.f32.partialorder %v54, 2.0
  %vm1069 = vcmp.gt.f32.partialorder %v55, 2.0
  %vm1070 = vcmp.gt.f32.partialorder %v54, 5.0
  %vm1071 = vcmp.gt.f32.partialorder %v55, 5.0
  %s1072 = scalar_lea.vmem [#allocation2], 32
  %v1073 = vld [vmem:[%s1072] sm:$0xff]
  %v1074 = vld [vmem:[%s1072 + $0x8] sm:$0xff]
  %v1075 = vpack.c.bf16 %v908, %v907
  %v1076 = vld [vmem:[%s6] sm:$0xf]
  %v1077 = vld [vmem:[%s6 + $0x4] sm:$0xf]
  %v1078 = vld [vmem:[%s6 + $0x8] sm:$0xf]
  %v1079 = vld [vmem:[%s6 + $0xc] sm:$0xf]
  %v1080 = vld [vmem:[%s6 + $0x10] sm:$0xf]
  %v1081 = vld [vmem:[%s6 + $0x14] sm:$0xf]
  %v1082 = vld [vmem:[%s6 + $0x18] sm:$0xf]
  %v1083 = vld [vmem:[%s6 + $0x1c] sm:$0xf]
  %v1084 = vld [vmem:[%s6 + $0x20] sm:$0xf]
  %v1085 = vld [vmem:[%s6 + $0x24] sm:$0xf]
  %v1086 = vld [vmem:[%s6 + $0x28] sm:$0xf]
  %v1087 = vld [vmem:[%s6 + $0x2c] sm:$0xf]
  %v1088 = vld [vmem:[%s6 + $0x30] sm:$0xf]
  %v1089 = vld [vmem:[%s6 + $0x34] sm:$0xf]
  %v1090 = vld [vmem:[%s6 + $0x38] sm:$0xf]
  %v1091 = vld [vmem:[%s6 + $0x3c] sm:$0xf]
  %v1108 = vunpack.c.l.b16 %v1076
  %v1109 = vunpack.c.l.b16 %v1077
  %v1110 = vunpack.c.l.b16 %v1078
  %v1111 = vunpack.c.l.b16 %v1079
  %v1112 = vunpack.c.l.b16 %v1080
  %v1113 = vunpack.c.l.b16 %v1081
  %v1114 = vunpack.c.l.b16 %v1082
  %v1115 = vunpack.c.l.b16 %v1083
  %v1116 = vunpack.c.l.b16 %v1084
  %v1117 = vunpack.c.l.b16 %v1085
  %v1118 = vunpack.c.l.b16 %v1086
  %v1119 = vunpack.c.l.b16 %v1087
  %v1120 = vunpack.c.l.b16 %v1088
  %v1121 = vunpack.c.l.b16 %v1089
  %v1122 = vunpack.c.l.b16 %v1090
  %v1123 = vunpack.c.l.b16 %v1091
  %v1124 = vpack.c.b16 %v1109, %v1108
  %v1125 = vpack.c.b16 %v1111, %v1110
  %v1126 = vpack.c.b16 %v1113, %v1112
  %v1127 = vpack.c.b16 %v1115, %v1114
  %v1128 = vpack.c.b16 %v1117, %v1116
  %v1129 = vpack.c.b16 %v1119, %v1118
  %v1130 = vpack.c.b16 %v1121, %v1120
  %v1131 = vpack.c.b16 %v1123, %v1122
  %1140 = vmatprep.subr.bf16.mxu0 0
  %1141 = vmatpush1.bf16.msra.mxu0 %v1124
  %1142 = vmatprep.subr.bf16.mxu0 0
  %1143 = vmatpush1.bf16.msra.mxu0 %v1125
  %1144 = vmatprep.subr.bf16.mxu0 0
  %1145 = vmatpush1.bf16.msra.mxu0 %v1126
  %1146 = vmatprep.subr.bf16.mxu0 0
  %1147 = vmatpush1.bf16.msra.mxu0 %v1127
  %1148 = vmatprep.subr.bf16.mxu0 0
  %1149 = vmatpush1.bf16.msra.mxu0 %v1128
  %1150 = vmatprep.subr.bf16.mxu0 0
  %1151 = vmatpush1.bf16.msra.mxu0 %v1129
  %1152 = vmatprep.subr.bf16.mxu0 0
  %1153 = vmatpush1.bf16.msra.mxu0 %v1130
  %1154 = vmatprep.subr.bf16.mxu0 0
  %1155 = vmatpush1.bf16.msra.mxu0 %v1131
  %1156 = vmatprep.subr.bf16.mxu0 0
  %1157 = vmatpush1.bf16.msra.mxu0 0
  %1158 = vmatprep.subr.bf16.mxu0 0
  %1159 = vmatpush1.bf16.msra.mxu0 0
  %1160 = vmatprep.subr.bf16.mxu0 0
  %1161 = vmatpush1.bf16.msra.mxu0 0
  %1162 = vmatprep.subr.bf16.mxu0 0
  %1163 = vmatpush1.bf16.msra.mxu0 0
  %1164 = vmatprep.subr.bf16.mxu0 0
  %1165 = vmatpush1.bf16.msra.mxu0 0
  %1166 = vmatprep.subr.bf16.mxu0 0
  %1167 = vmatpush1.bf16.msra.mxu0 0
  %1168 = vmatprep.subr.bf16.mxu0 0
  %1169 = vmatpush1.bf16.msra.mxu0 0
  %1170 = vmatprep.subr.bf16.mxu0 0
  %1171 = vmatpush1.bf16.msra.mxu0 0
  %1172 = vmatprep.mubr.bf16.mxu0 0
  %1173 = vmatmul.mubr.bf16.gmra.mrb[0].mxu0 %v1075
  %v1174 = vpop.f32.mrb[0].mxu0
  %v1175 = vadd.f32 0.0, %v1174
  %v1176 = vpop.f32.mrb[0].mxu0
  %v1177 = vpop.f32.mrb[0].mxu0
  %v1178 = vadd.f32 0.0, %v1177
  %v1179 = vpop.f32.mrb[0].mxu0
  %1180 = vdwg.mxu0
  %v1181 = vadd.f32 %v1073, %v1175
  %v1182 = vadd.f32 %v1074, %v1178
  %v1183 = vxor.u32 %v1181, 2147483648
  %v1184 = vxor.u32 %v1182, 2147483648
  %v1185 = vmul.f32 %v1183, 1.442695
  %v1186 = vpow.pop %v1185
  %v1187 = vmul.f32 %v1184, 1.442695
  %v1188 = vpow.pop %v1187
  %v1189 = vadd.f32 %v1186, 1.0
  %v1190 = vadd.f32 %v1188, 1.0
  %v1191 = vrcp.pop %v1189
  %v1192 = vmul.f32 1.0, %v1191
  %v1193 = vrcp.pop %v1190
  %v1194 = vmul.f32 1.0, %v1193
  %v1195 = vtanh.pop %v1181
  %v1196 = vtanh.pop %v1182
  %1197 = vrot.lane.b32.xlu0 %v1192, 16
  %v1198 = vpop.permute.xlu0 %1197
  %1199 = vrot.lane.b32.xlu0 %v1194, 16
  %v1200 = vpop.permute.xlu0 %1199
  %1201 = vrot.lane.b32.xlu0 %v1195, 32
  %v1202 = vpop.permute.xlu0 %1201
  %1203 = vrot.lane.b32.xlu0 %v1196, 32
  %v1204 = vpop.permute.xlu0 %1203
  %1205 = vrot.lane.b32.xlu0 %v1192, 48
  %v1206 = vpop.permute.xlu0 %1205
  %1207 = vrot.lane.b32.xlu0 %v1194, 48
  %v1208 = vpop.permute.xlu0 %1207
  %v1209 = vmul.f32 %v1198, %v909
  %v1210 = vmul.f32 %v1200, %v910
  %v1211 = vmul.f32 %v1192, %v1202
  %v1212 = vmul.f32 %v1194, %v1204
  %v1213 = vadd.f32 %v1209, %v1211
  %v1214 = vadd.f32 %v1210, %v1212
  %v1215 = vtanh.pop %v1213
  %v1216 = vtanh.pop %v1214
  %v1217 = vmul.f32 %v1206, %v1215
  %v1218 = vmul.f32 %v1208, %v1216
  %v1219 = vsel %vm1068, %v1217, %v907
  %v1220 = vsel %vm1069, %v1218, %v908
  %v1221 = vsel %vm1068, %v1213, %v909
  %v1222 = vsel %vm1069, %v1214, %v910
  %s1223 = scalar_lea.vmem [#allocation6], 64
  %1224 = vst [vmem:[%s1223] sm:$0xff] %v1219
  %1225 = vst [vmem:[%s1223 + $0x10] sm:$0xff] %v1220
  %s1226 = scalar_lea.vmem [#allocation3], 80
  %v1227 = vld [vmem:[%s1226] sm:$0xff]
  %v1228 = vld [vmem:[%s1226 + $0x8] sm:$0xff]
  %v1229 = vpack.c.bf16 %v1062, %v1061
  %v1230 = vld [vmem:[%s7] sm:$0xf]
  %v1231 = vld [vmem:[%s7 + $0x4] sm:$0xf]
  %v1232 = vld [vmem:[%s7 + $0x8] sm:$0xf]
  %v1233 = vld [vmem:[%s7 + $0xc] sm:$0xf]
  %v1234 = vld [vmem:[%s7 + $0x10] sm:$0xf]
  %v1235 = vld [vmem:[%s7 + $0x14] sm:$0xf]
  %v1236 = vld [vmem:[%s7 + $0x18] sm:$0xf]
  %v1237 = vld [vmem:[%s7 + $0x1c] sm:$0xf]
  %v1238 = vld [vmem:[%s7 + $0x20] sm:$0xf]
  %v1239 = vld [vmem:[%s7 + $0x24] sm:$0xf]
  %v1240 = vld [vmem:[%s7 + $0x28] sm:$0xf]
  %v1241 = vld [vmem:[%s7 + $0x2c] sm:$0xf]
  %v1242 = vld [vmem:[%s7 + $0x30] sm:$0xf]
  %v1243 = vld [vmem:[%s7 + $0x34] sm:$0xf]
  %v1244 = vld [vmem:[%s7 + $0x38] sm:$0xf]
  %v1245 = vld [vmem:[%s7 + $0x3c] sm:$0xf]
  %v1262 = vunpack.c.l.b16 %v1230
  %v1263 = vunpack.c.l.b16 %v1231
  %v1264 = vunpack.c.l.b16 %v1232
  %v1265 = vunpack.c.l.b16 %v1233
  %v1266 = vunpack.c.l.b16 %v1234
  %v1267 = vunpack.c.l.b16 %v1235
  %v1268 = vunpack.c.l.b16 %v1236
  %v1269 = vunpack.c.l.b16 %v1237
  %v1270 = vunpack.c.l.b16 %v1238
  %v1271 = vunpack.c.l.b16 %v1239
  %v1272 = vunpack.c.l.b16 %v1240
  %v1273 = vunpack.c.l.b16 %v1241
  %v1274 = vunpack.c.l.b16 %v1242
  %v1275 = vunpack.c.l.b16 %v1243
  %v1276 = vunpack.c.l.b16 %v1244
  %v1277 = vunpack.c.l.b16 %v1245
  %v1278 = vpack.c.b16 %v1263, %v1262
  %v1279 = vpack.c.b16 %v1265, %v1264
  %v1280 = vpack.c.b16 %v1267, %v1266
  %v1281 = vpack.c.b16 %v1269, %v1268
  %v1282 = vpack.c.b16 %v1271, %v1270
  %v1283 = vpack.c.b16 %v1273, %v1272
  %v1284 = vpack.c.b16 %v1275, %v1274
  %v1285 = vpack.c.b16 %v1277, %v1276
  %1294 = vmatprep.subr.bf16.mxu0 0
  %1295 = vmatpush1.bf16.msra.mxu0 %v1278
  %1296 = vmatprep.subr.bf16.mxu0 0
  %1297 = vmatpush1.bf16.msra.mxu0 %v1279
  %1298 = vmatprep.subr.bf16.mxu0 0
  %1299 = vmatpush1.bf16.msra.mxu0 %v1280
  %1300 = vmatprep.subr.bf16.mxu0 0
  %1301 = vmatpush1.bf16.msra.mxu0 %v1281
  %1302 = vmatprep.subr.bf16.mxu0 0
  %1303 = vmatpush1.bf16.msra.mxu0 %v1282
  %1304 = vmatprep.subr.bf16.mxu0 0
  %1305 = vmatpush1.bf16.msra.mxu0 %v1283
  %1306 = vmatprep.subr.bf16.mxu0 0
  %1307 = vmatpush1.bf16.msra.mxu0 %v1284
  %1308 = vmatprep.subr.bf16.mxu0 0
  %1309 = vmatpush1.bf16.msra.mxu0 %v1285
  %1310 = vmatprep.subr.bf16.mxu0 0
  %1311 = vmatpush1.bf16.msra.mxu0 0
  %1312 = vmatprep.subr.bf16.mxu0 0
  %1313 = vmatpush1.bf16.msra.mxu0 0
  %1314 = vmatprep.subr.bf16.mxu0 0
  %1315 = vmatpush1.bf16.msra.mxu0 0
  %1316 = vmatprep.subr.bf16.mxu0 0
  %1317 = vmatpush1.bf16.msra.mxu0 0
  %1318 = vmatprep.subr.bf16.mxu0 0
  %1319 = vmatpush1.bf16.msra.mxu0 0
  %1320 = vmatprep.subr.bf16.mxu0 0
  %1321 = vmatpush1.bf16.msra.mxu0 0
  %1322 = vmatprep.subr.bf16.mxu0 0
  %1323 = vmatpush1.bf16.msra.mxu0 0
  %1324 = vmatprep.subr.bf16.mxu0 0
  %1325 = vmatpush1.bf16.msra.mxu0 0
  %1326 = vmatprep.mubr.bf16.mxu0 0
  %1327 = vmatmul.mubr.bf16.gmra.mrb[0].mxu0 %v1229
  %v1328 = vpop.f32.mrb[0].mxu0
  %v1329 = vadd.f32 0.0, %v1328
  %v1330 = vpop.f32.mrb[0].mxu0
  %v1331 = vpop.f32.mrb[0].mxu0
  %v1332 = vadd.f32 0.0, %v1331
  %v1333 = vpop.f32.mrb[0].mxu0
  %1334 = vdwg.mxu0
  %v1335 = vadd.f32 %v1227, %v1329
  %v1336 = vadd.f32 %v1228, %v1332
  %v1337 = vxor.u32 %v1335, 2147483648
  %v1338 = vxor.u32 %v1336, 2147483648
  %v1339 = vmul.f32 %v1337, 1.442695
  %v1340 = vpow.pop %v1339
  %v1341 = vmul.f32 %v1338, 1.442695
  %v1342 = vpow.pop %v1341
  %v1343 = vadd.f32 %v1340, 1.0
  %v1344 = vadd.f32 %v1342, 1.0
  %v1345 = vrcp.pop %v1343
  %v1346 = vmul.f32 1.0, %v1345
  %v1347 = vrcp.pop %v1344
  %v1348 = vmul.f32 1.0, %v1347
  %v1349 = vtanh.pop %v1335
  %v1350 = vtanh.pop %v1336
  %1351 = vrot.lane.b32.xlu0 %v1346, 16
  %v1352 = vpop.permute.xlu0 %1351
  %1353 = vrot.lane.b32.xlu0 %v1348, 16
  %v1354 = vpop.permute.xlu0 %1353
  %1355 = vrot.lane.b32.xlu0 %v1349, 32
  %v1356 = vpop.permute.xlu0 %1355
  %1357 = vrot.lane.b32.xlu0 %v1350, 32
  %v1358 = vpop.permute.xlu0 %1357
  %1359 = vrot.lane.b32.xlu0 %v1346, 48
  %v1360 = vpop.permute.xlu0 %1359
  %1361 = vrot.lane.b32.xlu0 %v1348, 48
  %v1362 = vpop.permute.xlu0 %1361
  %v1363 = vmul.f32 %v1352, %v1063
  %v1364 = vmul.f32 %v1354, %v1064
  %v1365 = vmul.f32 %v1346, %v1356
  %v1366 = vmul.f32 %v1348, %v1358
  %v1367 = vadd.f32 %v1363, %v1365
  %v1368 = vadd.f32 %v1364, %v1366
  %v1369 = vtanh.pop %v1367
  %v1370 = vtanh.pop %v1368
  %v1371 = vmul.f32 %v1360, %v1369
  %v1372 = vmul.f32 %v1362, %v1370
  %v1373 = vsel %vm1070, %v1371, %v1061
  %v1374 = vsel %vm1071, %v1372, %v1062
  %v1375 = vsel %vm1070, %v1367, %v1063
  %v1376 = vsel %vm1071, %v1368, %v1064
  %s1377 = scalar_lea.vmem [#allocation6], 160
  %1378 = vst [vmem:[%s1377 + $0x8] sm:$0xff] %v1373
  %1379 = vst [vmem:[%s1377 + $0x18] sm:$0xff] %v1374
  %vm1380 = vcmp.gt.f32.partialorder %v54, 3.0
  %vm1381 = vcmp.gt.f32.partialorder %v55, 3.0
  %vm1382 = vcmp.gt.f32.partialorder %v54, 4.0
  %vm1383 = vcmp.gt.f32.partialorder %v55, 4.0
  %s1384 = scalar_lea.vmem [#allocation2], 48
  %v1385 = vld [vmem:[%s1384] sm:$0xff]
  %v1386 = vld [vmem:[%s1384 + $0x8] sm:$0xff]
  %v1387 = vpack.c.bf16 %v1220, %v1219
  %v1388 = vld [vmem:[%s6] sm:$0xf]
  %v1389 = vld [vmem:[%s6 + $0x4] sm:$0xf]
  %v1390 = vld [vmem:[%s6 + $0x8] sm:$0xf]
  %v1391 = vld [vmem:[%s6 + $0xc] sm:$0xf]
  %v1392 = vld [vmem:[%s6 + $0x10] sm:$0xf]
  %v1393 = vld [vmem:[%s6 + $0x14] sm:$0xf]
  %v1394 = vld [vmem:[%s6 + $0x18] sm:$0xf]
  %v1395 = vld [vmem:[%s6 + $0x1c] sm:$0xf]
  %v1396 = vld [vmem:[%s6 + $0x20] sm:$0xf]
  %v1397 = vld [vmem:[%s6 + $0x24] sm:$0xf]
  %v1398 = vld [vmem:[%s6 + $0x28] sm:$0xf]
  %v1399 = vld [vmem:[%s6 + $0x2c] sm:$0xf]
  %v1400 = vld [vmem:[%s6 + $0x30] sm:$0xf]
  %v1401 = vld [vmem:[%s6 + $0x34] sm:$0xf]
  %v1402 = vld [vmem:[%s6 + $0x38] sm:$0xf]
  %v1403 = vld [vmem:[%s6 + $0x3c] sm:$0xf]
  %v1420 = vunpack.c.l.b16 %v1388
  %v1421 = vunpack.c.l.b16 %v1389
  %v1422 = vunpack.c.l.b16 %v1390
  %v1423 = vunpack.c.l.b16 %v1391
  %v1424 = vunpack.c.l.b16 %v1392
  %v1425 = vunpack.c.l.b16 %v1393
  %v1426 = vunpack.c.l.b16 %v1394
  %v1427 = vunpack.c.l.b16 %v1395
  %v1428 = vunpack.c.l.b16 %v1396
  %v1429 = vunpack.c.l.b16 %v1397
  %v1430 = vunpack.c.l.b16 %v1398
  %v1431 = vunpack.c.l.b16 %v1399
  %v1432 = vunpack.c.l.b16 %v1400
  %v1433 = vunpack.c.l.b16 %v1401
  %v1434 = vunpack.c.l.b16 %v1402
  %v1435 = vunpack.c.l.b16 %v1403
  %v1436 = vpack.c.b16 %v1421, %v1420
  %v1437 = vpack.c.b16 %v1423, %v1422
  %v1438 = vpack.c.b16 %v1425, %v1424
  %v1439 = vpack.c.b16 %v1427, %v1426
  %v1440 = vpack.c.b16 %v1429, %v1428
  %v1441 = vpack.c.b16 %v1431, %v1430
  %v1442 = vpack.c.b16 %v1433, %v1432
  %v1443 = vpack.c.b16 %v1435, %v1434
  %1452 = vmatprep.subr.bf16.mxu0 0
  %1453 = vmatpush1.bf16.msra.mxu0 %v1436
  %1454 = vmatprep.subr.bf16.mxu0 0
  %1455 = vmatpush1.bf16.msra.mxu0 %v1437
  %1456 = vmatprep.subr.bf16.mxu0 0
  %1457 = vmatpush1.bf16.msra.mxu0 %v1438
  %1458 = vmatprep.subr.bf16.mxu0 0
  %1459 = vmatpush1.bf16.msra.mxu0 %v1439
  %1460 = vmatprep.subr.bf16.mxu0 0
  %1461 = vmatpush1.bf16.msra.mxu0 %v1440
  %1462 = vmatprep.subr.bf16.mxu0 0
  %1463 = vmatpush1.bf16.msra.mxu0 %v1441
  %1464 = vmatprep.subr.bf16.mxu0 0
  %1465 = vmatpush1.bf16.msra.mxu0 %v1442
  %1466 = vmatprep.subr.bf16.mxu0 0
  %1467 = vmatpush1.bf16.msra.mxu0 %v1443
  %1468 = vmatprep.subr.bf16.mxu0 0
  %1469 = vmatpush1.bf16.msra.mxu0 0
  %1470 = vmatprep.subr.bf16.mxu0 0
  %1471 = vmatpush1.bf16.msra.mxu0 0
  %1472 = vmatprep.subr.bf16.mxu0 0
  %1473 = vmatpush1.bf16.msra.mxu0 0
  %1474 = vmatprep.subr.bf16.mxu0 0
  %1475 = vmatpush1.bf16.msra.mxu0 0
  %1476 = vmatprep.subr.bf16.mxu0 0
  %1477 = vmatpush1.bf16.msra.mxu0 0
  %1478 = vmatprep.subr.bf16.mxu0 0
  %1479 = vmatpush1.bf16.msra.mxu0 0
  %1480 = vmatprep.subr.bf16.mxu0 0
  %1481 = vmatpush1.bf16.msra.mxu0 0
  %1482 = vmatprep.subr.bf16.mxu0 0
  %1483 = vmatpush1.bf16.msra.mxu0 0
  %1484 = vmatprep.mubr.bf16.mxu0 0
  %1485 = vmatmul.mubr.bf16.gmra.mrb[0].mxu0 %v1387
  %v1486 = vpop.f32.mrb[0].mxu0
  %v1487 = vadd.f32 0.0, %v1486
  %v1488 = vpop.f32.mrb[0].mxu0
  %v1489 = vpop.f32.mrb[0].mxu0
  %v1490 = vadd.f32 0.0, %v1489
  %v1491 = vpop.f32.mrb[0].mxu0
  %1492 = vdwg.mxu0
  %v1493 = vadd.f32 %v1385, %v1487
  %v1494 = vadd.f32 %v1386, %v1490
  %v1495 = vxor.u32 %v1493, 2147483648
  %v1496 = vxor.u32 %v1494, 2147483648
  %v1497 = vmul.f32 %v1495, 1.442695
  %v1498 = vpow.pop %v1497
  %v1499 = vmul.f32 %v1496, 1.442695
  %v1500 = vpow.pop %v1499
  %v1501 = vadd.f32 %v1498, 1.0
  %v1502 = vadd.f32 %v1500, 1.0
  %v1503 = vrcp.pop %v1501
  %v1504 = vmul.f32 1.0, %v1503
  %v1505 = vrcp.pop %v1502
  %v1506 = vmul.f32 1.0, %v1505
  %v1507 = vtanh.pop %v1493
  %v1508 = vtanh.pop %v1494
  %1509 = vrot.lane.b32.xlu0 %v1504, 16
  %v1510 = vpop.permute.xlu0 %1509
  %1511 = vrot.lane.b32.xlu0 %v1506, 16
  %v1512 = vpop.permute.xlu0 %1511
  %1513 = vrot.lane.b32.xlu0 %v1507, 32
  %v1514 = vpop.permute.xlu0 %1513
  %1515 = vrot.lane.b32.xlu0 %v1508, 32
  %v1516 = vpop.permute.xlu0 %1515
  %1517 = vrot.lane.b32.xlu0 %v1504, 48
  %v1518 = vpop.permute.xlu0 %1517
  %1519 = vrot.lane.b32.xlu0 %v1506, 48
  %v1520 = vpop.permute.xlu0 %1519
  %v1521 = vmul.f32 %v1510, %v1221
  %v1522 = vmul.f32 %v1512, %v1222
  %v1523 = vmul.f32 %v1504, %v1514
  %v1524 = vmul.f32 %v1506, %v1516
  %v1525 = vadd.f32 %v1521, %v1523
  %v1526 = vadd.f32 %v1522, %v1524
  %v1527 = vtanh.pop %v1525
  %v1528 = vtanh.pop %v1526
  %v1529 = vmul.f32 %v1518, %v1527
  %v1530 = vmul.f32 %v1520, %v1528
  %v1531 = vsel %vm1380, %v1529, %v1219
  %v1532 = vsel %vm1381, %v1530, %v1220
  %v1533 = vsel %vm1380, %v1525, %v1221
  %v1534 = vsel %vm1381, %v1526, %v1222
  %s1535 = scalar_lea.vmem [#allocation6], 96
  %1536 = vst [vmem:[%s1535] sm:$0xff] %v1531
  %1537 = vst [vmem:[%s1535 + $0x10] sm:$0xff] %v1532
  %s1538 = scalar_lea.vmem [#allocation3], 64
  %v1539 = vld [vmem:[%s1538] sm:$0xff]
  %v1540 = vld [vmem:[%s1538 + $0x8] sm:$0xff]
  %v1541 = vpack.c.bf16 %v1374, %v1373
  %v1542 = vld [vmem:[%s7] sm:$0xf]
  %v1543 = vld [vmem:[%s7 + $0x4] sm:$0xf]
  %v1544 = vld [vmem:[%s7 + $0x8] sm:$0xf]
  %v1545 = vld [vmem:[%s7 + $0xc] sm:$0xf]
  %v1546 = vld [vmem:[%s7 + $0x10] sm:$0xf]
  %v1547 = vld [vmem:[%s7 + $0x14] sm:$0xf]
  %v1548 = vld [vmem:[%s7 + $0x18] sm:$0xf]
  %v1549 = vld [vmem:[%s7 + $0x1c] sm:$0xf]
  %v1550 = vld [vmem:[%s7 + $0x20] sm:$0xf]
  %v1551 = vld [vmem:[%s7 + $0x24] sm:$0xf]
  %v1552 = vld [vmem:[%s7 + $0x28] sm:$0xf]
  %v1553 = vld [vmem:[%s7 + $0x2c] sm:$0xf]
  %v1554 = vld [vmem:[%s7 + $0x30] sm:$0xf]
  %v1555 = vld [vmem:[%s7 + $0x34] sm:$0xf]
  %v1556 = vld [vmem:[%s7 + $0x38] sm:$0xf]
  %v1557 = vld [vmem:[%s7 + $0x3c] sm:$0xf]
  %v1574 = vunpack.c.l.b16 %v1542
  %v1575 = vunpack.c.l.b16 %v1543
  %v1576 = vunpack.c.l.b16 %v1544
  %v1577 = vunpack.c.l.b16 %v1545
  %v1578 = vunpack.c.l.b16 %v1546
  %v1579 = vunpack.c.l.b16 %v1547
  %v1580 = vunpack.c.l.b16 %v1548
  %v1581 = vunpack.c.l.b16 %v1549
  %v1582 = vunpack.c.l.b16 %v1550
  %v1583 = vunpack.c.l.b16 %v1551
  %v1584 = vunpack.c.l.b16 %v1552
  %v1585 = vunpack.c.l.b16 %v1553
  %v1586 = vunpack.c.l.b16 %v1554
  %v1587 = vunpack.c.l.b16 %v1555
  %v1588 = vunpack.c.l.b16 %v1556
  %v1589 = vunpack.c.l.b16 %v1557
  %v1590 = vpack.c.b16 %v1575, %v1574
  %v1591 = vpack.c.b16 %v1577, %v1576
  %v1592 = vpack.c.b16 %v1579, %v1578
  %v1593 = vpack.c.b16 %v1581, %v1580
  %v1594 = vpack.c.b16 %v1583, %v1582
  %v1595 = vpack.c.b16 %v1585, %v1584
  %v1596 = vpack.c.b16 %v1587, %v1586
  %v1597 = vpack.c.b16 %v1589, %v1588
  %1606 = vmatprep.subr.bf16.mxu0 0
  %1607 = vmatpush1.bf16.msra.mxu0 %v1590
  %1608 = vmatprep.subr.bf16.mxu0 0
  %1609 = vmatpush1.bf16.msra.mxu0 %v1591
  %1610 = vmatprep.subr.bf16.mxu0 0
  %1611 = vmatpush1.bf16.msra.mxu0 %v1592
  %1612 = vmatprep.subr.bf16.mxu0 0
  %1613 = vmatpush1.bf16.msra.mxu0 %v1593
  %1614 = vmatprep.subr.bf16.mxu0 0
  %1615 = vmatpush1.bf16.msra.mxu0 %v1594
  %1616 = vmatprep.subr.bf16.mxu0 0
  %1617 = vmatpush1.bf16.msra.mxu0 %v1595
  %1618 = vmatprep.subr.bf16.mxu0 0
  %1619 = vmatpush1.bf16.msra.mxu0 %v1596
  %1620 = vmatprep.subr.bf16.mxu0 0
  %1621 = vmatpush1.bf16.msra.mxu0 %v1597
  %1622 = vmatprep.subr.bf16.mxu0 0
  %1623 = vmatpush1.bf16.msra.mxu0 0
  %1624 = vmatprep.subr.bf16.mxu0 0
  %1625 = vmatpush1.bf16.msra.mxu0 0
  %1626 = vmatprep.subr.bf16.mxu0 0
  %1627 = vmatpush1.bf16.msra.mxu0 0
  %1628 = vmatprep.subr.bf16.mxu0 0
  %1629 = vmatpush1.bf16.msra.mxu0 0
  %1630 = vmatprep.subr.bf16.mxu0 0
  %1631 = vmatpush1.bf16.msra.mxu0 0
  %1632 = vmatprep.subr.bf16.mxu0 0
  %1633 = vmatpush1.bf16.msra.mxu0 0
  %1634 = vmatprep.subr.bf16.mxu0 0
  %1635 = vmatpush1.bf16.msra.mxu0 0
  %1636 = vmatprep.subr.bf16.mxu0 0
  %1637 = vmatpush1.bf16.msra.mxu0 0
  %1638 = vmatprep.mubr.bf16.mxu0 0
  %1639 = vmatmul.mubr.bf16.gmra.mrb[0].mxu0 %v1541
  %v1640 = vpop.f32.mrb[0].mxu0
  %v1641 = vadd.f32 0.0, %v1640
  %v1642 = vpop.f32.mrb[0].mxu0
  %v1643 = vpop.f32.mrb[0].mxu0
  %v1644 = vadd.f32 0.0, %v1643
  %v1645 = vpop.f32.mrb[0].mxu0
  %1646 = vdwg.mxu0
  %v1647 = vadd.f32 %v1539, %v1641
  %v1648 = vadd.f32 %v1540, %v1644
  %v1649 = vxor.u32 %v1647, 2147483648
  %v1650 = vxor.u32 %v1648, 2147483648
  %v1651 = vmul.f32 %v1649, 1.442695
  %v1652 = vpow.pop %v1651
  %v1653 = vmul.f32 %v1650, 1.442695
  %v1654 = vpow.pop %v1653
  %v1655 = vadd.f32 %v1652, 1.0
  %v1656 = vadd.f32 %v1654, 1.0
  %v1657 = vrcp.pop %v1655
  %v1658 = vmul.f32 1.0, %v1657
  %v1659 = vrcp.pop %v1656
  %v1660 = vmul.f32 1.0, %v1659
  %v1661 = vtanh.pop %v1647
  %v1662 = vtanh.pop %v1648
  %1663 = vrot.lane.b32.xlu0 %v1658, 16
  %v1664 = vpop.permute.xlu0 %1663
  %1665 = vrot.lane.b32.xlu0 %v1660, 16
  %v1666 = vpop.permute.xlu0 %1665
  %1667 = vrot.lane.b32.xlu0 %v1661, 32
  %v1668 = vpop.permute.xlu0 %1667
  %1669 = vrot.lane.b32.xlu0 %v1662, 32
  %v1670 = vpop.permute.xlu0 %1669
  %1671 = vrot.lane.b32.xlu0 %v1658, 48
  %v1672 = vpop.permute.xlu0 %1671
  %1673 = vrot.lane.b32.xlu0 %v1660, 48
  %v1674 = vpop.permute.xlu0 %1673
  %v1675 = vmul.f32 %v1664, %v1375
  %v1676 = vmul.f32 %v1666, %v1376
  %v1677 = vmul.f32 %v1658, %v1668
  %v1678 = vmul.f32 %v1660, %v1670
  %v1679 = vadd.f32 %v1675, %v1677
  %v1680 = vadd.f32 %v1676, %v1678
  %v1681 = vtanh.pop %v1679
  %v1682 = vtanh.pop %v1680
  %v1683 = vmul.f32 %v1672, %v1681
  %v1684 = vmul.f32 %v1674, %v1682
  %v1685 = vsel %vm1382, %v1683, %v1373
  %v1686 = vsel %vm1383, %v1684, %v1374
  %v1687 = vsel %vm1382, %v1679, %v1375
  %v1688 = vsel %vm1383, %v1680, %v1376
  %s1689 = scalar_lea.vmem [#allocation6], 128
  %1690 = vst [vmem:[%s1689 + $0x8] sm:$0xff] %v1685
  %1691 = vst [vmem:[%s1689 + $0x18] sm:$0xff] %v1686
  %s1692 = scalar_lea.vmem [#allocation2], 64
  %v1693 = vld [vmem:[%s1692] sm:$0xff]
  %v1694 = vld [vmem:[%s1692 + $0x8] sm:$0xff]
  %v1695 = vpack.c.bf16 %v1532, %v1531
  %v1696 = vld [vmem:[%s6] sm:$0xf]
  %v1697 = vld [vmem:[%s6 + $0x4] sm:$0xf]
  %v1698 = vld [vmem:[%s6 + $0x8] sm:$0xf]
  %v1699 = vld [vmem:[%s6 + $0xc] sm:$0xf]
  %v1700 = vld [vmem:[%s6 + $0x10] sm:$0xf]
  %v1701 = vld [vmem:[%s6 + $0x14] sm:$0xf]
  %v1702 = vld [vmem:[%s6 + $0x18] sm:$0xf]
  %v1703 = vld [vmem:[%s6 + $0x1c] sm:$0xf]
  %v1704 = vld [vmem:[%s6 + $0x20] sm:$0xf]
  %v1705 = vld [vmem:[%s6 + $0x24] sm:$0xf]
  %v1706 = vld [vmem:[%s6 + $0x28] sm:$0xf]
  %v1707 = vld [vmem:[%s6 + $0x2c] sm:$0xf]
  %v1708 = vld [vmem:[%s6 + $0x30] sm:$0xf]
  %v1709 = vld [vmem:[%s6 + $0x34] sm:$0xf]
  %v1710 = vld [vmem:[%s6 + $0x38] sm:$0xf]
  %v1711 = vld [vmem:[%s6 + $0x3c] sm:$0xf]
  %v1728 = vunpack.c.l.b16 %v1696
  %v1729 = vunpack.c.l.b16 %v1697
  %v1730 = vunpack.c.l.b16 %v1698
  %v1731 = vunpack.c.l.b16 %v1699
  %v1732 = vunpack.c.l.b16 %v1700
  %v1733 = vunpack.c.l.b16 %v1701
  %v1734 = vunpack.c.l.b16 %v1702
  %v1735 = vunpack.c.l.b16 %v1703
  %v1736 = vunpack.c.l.b16 %v1704
  %v1737 = vunpack.c.l.b16 %v1705
  %v1738 = vunpack.c.l.b16 %v1706
  %v1739 = vunpack.c.l.b16 %v1707
  %v1740 = vunpack.c.l.b16 %v1708
  %v1741 = vunpack.c.l.b16 %v1709
  %v1742 = vunpack.c.l.b16 %v1710
  %v1743 = vunpack.c.l.b16 %v1711
  %v1744 = vpack.c.b16 %v1729, %v1728
  %v1745 = vpack.c.b16 %v1731, %v1730
  %v1746 = vpack.c.b16 %v1733, %v1732
  %v1747 = vpack.c.b16 %v1735, %v1734
  %v1748 = vpack.c.b16 %v1737, %v1736
  %v1749 = vpack.c.b16 %v1739, %v1738
  %v1750 = vpack.c.b16 %v1741, %v1740
  %v1751 = vpack.c.b16 %v1743, %v1742
  %1760 = vmatprep.subr.bf16.mxu0 0
  %1761 = vmatpush1.bf16.msra.mxu0 %v1744
  %1762 = vmatprep.subr.bf16.mxu0 0
  %1763 = vmatpush1.bf16.msra.mxu0 %v1745
  %1764 = vmatprep.subr.bf16.mxu0 0
  %1765 = vmatpush1.bf16.msra.mxu0 %v1746
  %1766 = vmatprep.subr.bf16.mxu0 0
  %1767 = vmatpush1.bf16.msra.mxu0 %v1747
  %1768 = vmatprep.subr.bf16.mxu0 0
  %1769 = vmatpush1.bf16.msra.mxu0 %v1748
  %1770 = vmatprep.subr.bf16.mxu0 0
  %1771 = vmatpush1.bf16.msra.mxu0 %v1749
  %1772 = vmatprep.subr.bf16.mxu0 0
  %1773 = vmatpush1.bf16.msra.mxu0 %v1750
  %1774 = vmatprep.subr.bf16.mxu0 0
  %1775 = vmatpush1.bf16.msra.mxu0 %v1751
  %1776 = vmatprep.subr.bf16.mxu0 0
  %1777 = vmatpush1.bf16.msra.mxu0 0
  %1778 = vmatprep.subr.bf16.mxu0 0
  %1779 = vmatpush1.bf16.msra.mxu0 0
  %1780 = vmatprep.subr.bf16.mxu0 0
  %1781 = vmatpush1.bf16.msra.mxu0 0
  %1782 = vmatprep.subr.bf16.mxu0 0
  %1783 = vmatpush1.bf16.msra.mxu0 0
  %1784 = vmatprep.subr.bf16.mxu0 0
  %1785 = vmatpush1.bf16.msra.mxu0 0
  %1786 = vmatprep.subr.bf16.mxu0 0
  %1787 = vmatpush1.bf16.msra.mxu0 0
  %1788 = vmatprep.subr.bf16.mxu0 0
  %1789 = vmatpush1.bf16.msra.mxu0 0
  %1790 = vmatprep.subr.bf16.mxu0 0
  %1791 = vmatpush1.bf16.msra.mxu0 0
  %1792 = vmatprep.mubr.bf16.mxu0 0
  %1793 = vmatmul.mubr.bf16.gmra.mrb[0].mxu0 %v1695
  %v1794 = vpop.f32.mrb[0].mxu0
  %v1795 = vadd.f32 0.0, %v1794
  %v1796 = vpop.f32.mrb[0].mxu0
  %v1797 = vpop.f32.mrb[0].mxu0
  %v1798 = vadd.f32 0.0, %v1797
  %v1799 = vpop.f32.mrb[0].mxu0
  %1800 = vdwg.mxu0
  %v1801 = vadd.f32 %v1693, %v1795
  %v1802 = vadd.f32 %v1694, %v1798
  %v1803 = vxor.u32 %v1801, 2147483648
  %v1804 = vxor.u32 %v1802, 2147483648
  %v1805 = vmul.f32 %v1803, 1.442695
  %v1806 = vpow.pop %v1805
  %v1807 = vmul.f32 %v1804, 1.442695
  %v1808 = vpow.pop %v1807
  %v1809 = vadd.f32 %v1806, 1.0
  %v1810 = vadd.f32 %v1808, 1.0
  %v1811 = vrcp.pop %v1809
  %v1812 = vmul.f32 1.0, %v1811
  %v1813 = vrcp.pop %v1810
  %v1814 = vmul.f32 1.0, %v1813
  %v1815 = vtanh.pop %v1801
  %v1816 = vtanh.pop %v1802
  %1817 = vrot.lane.b32.xlu0 %v1812, 16
  %v1818 = vpop.permute.xlu0 %1817
  %1819 = vrot.lane.b32.xlu0 %v1814, 16
  %v1820 = vpop.permute.xlu0 %1819
  %1821 = vrot.lane.b32.xlu0 %v1815, 32
  %v1822 = vpop.permute.xlu0 %1821
  %1823 = vrot.lane.b32.xlu0 %v1816, 32
  %v1824 = vpop.permute.xlu0 %1823
  %1825 = vrot.lane.b32.xlu0 %v1812, 48
  %v1826 = vpop.permute.xlu0 %1825
  %1827 = vrot.lane.b32.xlu0 %v1814, 48
  %v1828 = vpop.permute.xlu0 %1827
  %v1829 = vmul.f32 %v1818, %v1533
  %v1830 = vmul.f32 %v1820, %v1534
  %v1831 = vmul.f32 %v1812, %v1822
  %v1832 = vmul.f32 %v1814, %v1824
  %v1833 = vadd.f32 %v1829, %v1831
  %v1834 = vadd.f32 %v1830, %v1832
  %v1835 = vtanh.pop %v1833
  %v1836 = vtanh.pop %v1834
  %v1837 = vmul.f32 %v1826, %v1835
  %v1838 = vmul.f32 %v1828, %v1836
  %v1839 = vsel %vm1382, %v1837, %v1531
  %v1840 = vsel %vm1383, %v1838, %v1532
  %v1841 = vsel %vm1382, %v1833, %v1533
  %v1842 = vsel %vm1383, %v1834, %v1534
  %1843 = vst [vmem:[%s1689] sm:$0xff] %v1839
  %1844 = vst [vmem:[%s1689 + $0x10] sm:$0xff] %v1840
  %s1845 = scalar_lea.vmem [#allocation3], 48
  %v1846 = vld [vmem:[%s1845] sm:$0xff]
  %v1847 = vld [vmem:[%s1845 + $0x8] sm:$0xff]
  %v1848 = vpack.c.bf16 %v1686, %v1685
  %v1849 = vld [vmem:[%s7] sm:$0xf]
  %v1850 = vld [vmem:[%s7 + $0x4] sm:$0xf]
  %v1851 = vld [vmem:[%s7 + $0x8] sm:$0xf]
  %v1852 = vld [vmem:[%s7 + $0xc] sm:$0xf]
  %v1853 = vld [vmem:[%s7 + $0x10] sm:$0xf]
  %v1854 = vld [vmem:[%s7 + $0x14] sm:$0xf]
  %v1855 = vld [vmem:[%s7 + $0x18] sm:$0xf]
  %v1856 = vld [vmem:[%s7 + $0x1c] sm:$0xf]
  %v1857 = vld [vmem:[%s7 + $0x20] sm:$0xf]
  %v1858 = vld [vmem:[%s7 + $0x24] sm:$0xf]
  %v1859 = vld [vmem:[%s7 + $0x28] sm:$0xf]
  %v1860 = vld [vmem:[%s7 + $0x2c] sm:$0xf]
  %v1861 = vld [vmem:[%s7 + $0x30] sm:$0xf]
  %v1862 = vld [vmem:[%s7 + $0x34] sm:$0xf]
  %v1863 = vld [vmem:[%s7 + $0x38] sm:$0xf]
  %v1864 = vld [vmem:[%s7 + $0x3c] sm:$0xf]
  %v1881 = vunpack.c.l.b16 %v1849
  %v1882 = vunpack.c.l.b16 %v1850
  %v1883 = vunpack.c.l.b16 %v1851
  %v1884 = vunpack.c.l.b16 %v1852
  %v1885 = vunpack.c.l.b16 %v1853
  %v1886 = vunpack.c.l.b16 %v1854
  %v1887 = vunpack.c.l.b16 %v1855
  %v1888 = vunpack.c.l.b16 %v1856
  %v1889 = vunpack.c.l.b16 %v1857
  %v1890 = vunpack.c.l.b16 %v1858
  %v1891 = vunpack.c.l.b16 %v1859
  %v1892 = vunpack.c.l.b16 %v1860
  %v1893 = vunpack.c.l.b16 %v1861
  %v1894 = vunpack.c.l.b16 %v1862
  %v1895 = vunpack.c.l.b16 %v1863
  %v1896 = vunpack.c.l.b16 %v1864
  %v1897 = vpack.c.b16 %v1882, %v1881
  %v1898 = vpack.c.b16 %v1884, %v1883
  %v1899 = vpack.c.b16 %v1886, %v1885
  %v1900 = vpack.c.b16 %v1888, %v1887
  %v1901 = vpack.c.b16 %v1890, %v1889
  %v1902 = vpack.c.b16 %v1892, %v1891
  %v1903 = vpack.c.b16 %v1894, %v1893
  %v1904 = vpack.c.b16 %v1896, %v1895
  %1913 = vmatprep.subr.bf16.mxu0 0
  %1914 = vmatpush1.bf16.msra.mxu0 %v1897
  %1915 = vmatprep.subr.bf16.mxu0 0
  %1916 = vmatpush1.bf16.msra.mxu0 %v1898
  %1917 = vmatprep.subr.bf16.mxu0 0
  %1918 = vmatpush1.bf16.msra.mxu0 %v1899
  %1919 = vmatprep.subr.bf16.mxu0 0
  %1920 = vmatpush1.bf16.msra.mxu0 %v1900
  %1921 = vmatprep.subr.bf16.mxu0 0
  %1922 = vmatpush1.bf16.msra.mxu0 %v1901
  %1923 = vmatprep.subr.bf16.mxu0 0
  %1924 = vmatpush1.bf16.msra.mxu0 %v1902
  %1925 = vmatprep.subr.bf16.mxu0 0
  %1926 = vmatpush1.bf16.msra.mxu0 %v1903
  %1927 = vmatprep.subr.bf16.mxu0 0
  %1928 = vmatpush1.bf16.msra.mxu0 %v1904
  %1929 = vmatprep.subr.bf16.mxu0 0
  %1930 = vmatpush1.bf16.msra.mxu0 0
  %1931 = vmatprep.subr.bf16.mxu0 0
  %1932 = vmatpush1.bf16.msra.mxu0 0
  %1933 = vmatprep.subr.bf16.mxu0 0
  %1934 = vmatpush1.bf16.msra.mxu0 0
  %1935 = vmatprep.subr.bf16.mxu0 0
  %1936 = vmatpush1.bf16.msra.mxu0 0
  %1937 = vmatprep.subr.bf16.mxu0 0
  %1938 = vmatpush1.bf16.msra.mxu0 0
  %1939 = vmatprep.subr.bf16.mxu0 0
  %1940 = vmatpush1.bf16.msra.mxu0 0
  %1941 = vmatprep.subr.bf16.mxu0 0
  %1942 = vmatpush1.bf16.msra.mxu0 0
  %1943 = vmatprep.subr.bf16.mxu0 0
  %1944 = vmatpush1.bf16.msra.mxu0 0
  %1945 = vmatprep.mubr.bf16.mxu0 0
  %1946 = vmatmul.mubr.bf16.gmra.mrb[0].mxu0 %v1848
  %v1947 = vpop.f32.mrb[0].mxu0
  %v1948 = vadd.f32 0.0, %v1947
  %v1949 = vpop.f32.mrb[0].mxu0
  %v1950 = vpop.f32.mrb[0].mxu0
  %v1951 = vadd.f32 0.0, %v1950
  %v1952 = vpop.f32.mrb[0].mxu0
  %1953 = vdwg.mxu0
  %v1954 = vadd.f32 %v1846, %v1948
  %v1955 = vadd.f32 %v1847, %v1951
  %v1956 = vxor.u32 %v1954, 2147483648
  %v1957 = vxor.u32 %v1955, 2147483648
  %v1958 = vmul.f32 %v1956, 1.442695
  %v1959 = vpow.pop %v1958
  %v1960 = vmul.f32 %v1957, 1.442695
  %v1961 = vpow.pop %v1960
  %v1962 = vadd.f32 %v1959, 1.0
  %v1963 = vadd.f32 %v1961, 1.0
  %v1964 = vrcp.pop %v1962
  %v1965 = vmul.f32 1.0, %v1964
  %v1966 = vrcp.pop %v1963
  %v1967 = vmul.f32 1.0, %v1966
  %v1968 = vtanh.pop %v1954
  %v1969 = vtanh.pop %v1955
  %1970 = vrot.lane.b32.xlu0 %v1965, 16
  %v1971 = vpop.permute.xlu0 %1970
  %1972 = vrot.lane.b32.xlu0 %v1967, 16
  %v1973 = vpop.permute.xlu0 %1972
  %1974 = vrot.lane.b32.xlu0 %v1968, 32
  %v1975 = vpop.permute.xlu0 %1974
  %1976 = vrot.lane.b32.xlu0 %v1969, 32
  %v1977 = vpop.permute.xlu0 %1976
  %1978 = vrot.lane.b32.xlu0 %v1965, 48
  %v1979 = vpop.permute.xlu0 %1978
  %1980 = vrot.lane.b32.xlu0 %v1967, 48
  %v1981 = vpop.permute.xlu0 %1980
  %v1982 = vmul.f32 %v1971, %v1687
  %v1983 = vmul.f32 %v1973, %v1688
  %v1984 = vmul.f32 %v1965, %v1975
  %v1985 = vmul.f32 %v1967, %v1977
  %v1986 = vadd.f32 %v1982, %v1984
  %v1987 = vadd.f32 %v1983, %v1985
  %v1988 = vtanh.pop %v1986
  %v1989 = vtanh.pop %v1987
  %v1990 = vmul.f32 %v1979, %v1988
  %v1991 = vmul.f32 %v1981, %v1989
  %v1992 = vsel %vm1380, %v1990, %v1685
  %v1993 = vsel %vm1381, %v1991, %v1686
  %v1994 = vsel %vm1380, %v1986, %v1687
  %v1995 = vsel %vm1381, %v1987, %v1688
  %1996 = vst [vmem:[%s1535 + $0x8] sm:$0xff] %v1992
  %1997 = vst [vmem:[%s1535 + $0x18] sm:$0xff] %v1993
  %s1998 = scalar_lea.vmem [#allocation2], 80
  %v1999 = vld [vmem:[%s1998] sm:$0xff]
  %v2000 = vld [vmem:[%s1998 + $0x8] sm:$0xff]
  %v2001 = vpack.c.bf16 %v1840, %v1839
  %v2002 = vld [vmem:[%s6] sm:$0xf]
  %v2003 = vld [vmem:[%s6 + $0x4] sm:$0xf]
  %v2004 = vld [vmem:[%s6 + $0x8] sm:$0xf]
  %v2005 = vld [vmem:[%s6 + $0xc] sm:$0xf]
  %v2006 = vld [vmem:[%s6 + $0x10] sm:$0xf]
  %v2007 = vld [vmem:[%s6 + $0x14] sm:$0xf]
  %v2008 = vld [vmem:[%s6 + $0x18] sm:$0xf]
  %v2009 = vld [vmem:[%s6 + $0x1c] sm:$0xf]
  %v2010 = vld [vmem:[%s6 + $0x20] sm:$0xf]
  %v2011 = vld [vmem:[%s6 + $0x24] sm:$0xf]
  %v2012 = vld [vmem:[%s6 + $0x28] sm:$0xf]
  %v2013 = vld [vmem:[%s6 + $0x2c] sm:$0xf]
  %v2014 = vld [vmem:[%s6 + $0x30] sm:$0xf]
  %v2015 = vld [vmem:[%s6 + $0x34] sm:$0xf]
  %v2016 = vld [vmem:[%s6 + $0x38] sm:$0xf]
  %v2017 = vld [vmem:[%s6 + $0x3c] sm:$0xf]
  %v2034 = vunpack.c.l.b16 %v2002
  %v2035 = vunpack.c.l.b16 %v2003
  %v2036 = vunpack.c.l.b16 %v2004
  %v2037 = vunpack.c.l.b16 %v2005
  %v2038 = vunpack.c.l.b16 %v2006
  %v2039 = vunpack.c.l.b16 %v2007
  %v2040 = vunpack.c.l.b16 %v2008
  %v2041 = vunpack.c.l.b16 %v2009
  %v2042 = vunpack.c.l.b16 %v2010
  %v2043 = vunpack.c.l.b16 %v2011
  %v2044 = vunpack.c.l.b16 %v2012
  %v2045 = vunpack.c.l.b16 %v2013
  %v2046 = vunpack.c.l.b16 %v2014
  %v2047 = vunpack.c.l.b16 %v2015
  %v2048 = vunpack.c.l.b16 %v2016
  %v2049 = vunpack.c.l.b16 %v2017
  %v2050 = vpack.c.b16 %v2035, %v2034
  %v2051 = vpack.c.b16 %v2037, %v2036
  %v2052 = vpack.c.b16 %v2039, %v2038
  %v2053 = vpack.c.b16 %v2041, %v2040
  %v2054 = vpack.c.b16 %v2043, %v2042
  %v2055 = vpack.c.b16 %v2045, %v2044
  %v2056 = vpack.c.b16 %v2047, %v2046
  %v2057 = vpack.c.b16 %v2049, %v2048
  %2066 = vmatprep.subr.bf16.mxu0 0
  %2067 = vmatpush1.bf16.msra.mxu0 %v2050
  %2068 = vmatprep.subr.bf16.mxu0 0
  %2069 = vmatpush1.bf16.msra.mxu0 %v2051
  %2070 = vmatprep.subr.bf16.mxu0 0
  %2071 = vmatpush1.bf16.msra.mxu0 %v2052
  %2072 = vmatprep.subr.bf16.mxu0 0
  %2073 = vmatpush1.bf16.msra.mxu0 %v2053
  %2074 = vmatprep.subr.bf16.mxu0 0
  %2075 = vmatpush1.bf16.msra.mxu0 %v2054
  %2076 = vmatprep.subr.bf16.mxu0 0
  %2077 = vmatpush1.bf16.msra.mxu0 %v2055
  %2078 = vmatprep.subr.bf16.mxu0 0
  %2079 = vmatpush1.bf16.msra.mxu0 %v2056
  %2080 = vmatprep.subr.bf16.mxu0 0
  %2081 = vmatpush1.bf16.msra.mxu0 %v2057
  %2082 = vmatprep.subr.bf16.mxu0 0
  %2083 = vmatpush1.bf16.msra.mxu0 0
  %2084 = vmatprep.subr.bf16.mxu0 0
  %2085 = vmatpush1.bf16.msra.mxu0 0
  %2086 = vmatprep.subr.bf16.mxu0 0
  %2087 = vmatpush1.bf16.msra.mxu0 0
  %2088 = vmatprep.subr.bf16.mxu0 0
  %2089 = vmatpush1.bf16.msra.mxu0 0
  %2090 = vmatprep.subr.bf16.mxu0 0
  %2091 = vmatpush1.bf16.msra.mxu0 0
  %2092 = vmatprep.subr.bf16.mxu0 0
  %2093 = vmatpush1.bf16.msra.mxu0 0
  %2094 = vmatprep.subr.bf16.mxu0 0
  %2095 = vmatpush1.bf16.msra.mxu0 0
  %2096 = vmatprep.subr.bf16.mxu0 0
  %2097 = vmatpush1.bf16.msra.mxu0 0
  %2098 = vmatprep.mubr.bf16.mxu0 0
  %2099 = vmatmul.mubr.bf16.gmra.mrb[0].mxu0 %v2001
  %v2100 = vpop.f32.mrb[0].mxu0
  %v2101 = vadd.f32 0.0, %v2100
  %v2102 = vpop.f32.mrb[0].mxu0
  %v2103 = vpop.f32.mrb[0].mxu0
  %v2104 = vadd.f32 0.0, %v2103
  %v2105 = vpop.f32.mrb[0].mxu0
  %2106 = vdwg.mxu0
  %v2107 = vadd.f32 %v1999, %v2101
  %v2108 = vadd.f32 %v2000, %v2104
  %v2109 = vxor.u32 %v2107, 2147483648
  %v2110 = vxor.u32 %v2108, 2147483648
  %v2111 = vmul.f32 %v2109, 1.442695
  %v2112 = vpow.pop %v2111
  %v2113 = vmul.f32 %v2110, 1.442695
  %v2114 = vpow.pop %v2113
  %v2115 = vadd.f32 %v2112, 1.0
  %v2116 = vadd.f32 %v2114, 1.0
  %v2117 = vrcp.pop %v2115
  %v2118 = vmul.f32 1.0, %v2117
  %v2119 = vrcp.pop %v2116
  %v2120 = vmul.f32 1.0, %v2119
  %v2121 = vtanh.pop %v2107
  %v2122 = vtanh.pop %v2108
  %2123 = vrot.lane.b32.xlu0 %v2118, 16
  %v2124 = vpop.permute.xlu0 %2123
  %2125 = vrot.lane.b32.xlu0 %v2120, 16
  %v2126 = vpop.permute.xlu0 %2125
  %2127 = vrot.lane.b32.xlu0 %v2121, 32
  %v2128 = vpop.permute.xlu0 %2127
  %2129 = vrot.lane.b32.xlu0 %v2122, 32
  %v2130 = vpop.permute.xlu0 %2129
  %2131 = vrot.lane.b32.xlu0 %v2118, 48
  %v2132 = vpop.permute.xlu0 %2131
  %2133 = vrot.lane.b32.xlu0 %v2120, 48
  %v2134 = vpop.permute.xlu0 %2133
  %v2135 = vmul.f32 %v2124, %v1841
  %v2136 = vmul.f32 %v2126, %v1842
  %v2137 = vmul.f32 %v2118, %v2128
  %v2138 = vmul.f32 %v2120, %v2130
  %v2139 = vadd.f32 %v2135, %v2137
  %v2140 = vadd.f32 %v2136, %v2138
  %v2141 = vtanh.pop %v2139
  %v2142 = vtanh.pop %v2140
  %v2143 = vmul.f32 %v2132, %v2141
  %v2144 = vmul.f32 %v2134, %v2142
  %v2145 = vsel %vm1070, %v2143, %v1839
  %v2146 = vsel %vm1071, %v2144, %v1840
  %v2147 = vsel %vm1070, %v2139, %v1841
  %v2148 = vsel %vm1071, %v2140, %v1842
  %2149 = vst [vmem:[%s1377] sm:$0xff] %v2145
  %2150 = vst [vmem:[%s1377 + $0x10] sm:$0xff] %v2146
  %s2151 = scalar_lea.vmem [#allocation3], 32
  %v2152 = vld [vmem:[%s2151] sm:$0xff]
  %v2153 = vld [vmem:[%s2151 + $0x8] sm:$0xff]
  %v2154 = vpack.c.bf16 %v1993, %v1992
  %v2155 = vld [vmem:[%s7] sm:$0xf]
  %v2156 = vld [vmem:[%s7 + $0x4] sm:$0xf]
  %v2157 = vld [vmem:[%s7 + $0x8] sm:$0xf]
  %v2158 = vld [vmem:[%s7 + $0xc] sm:$0xf]
  %v2159 = vld [vmem:[%s7 + $0x10] sm:$0xf]
  %v2160 = vld [vmem:[%s7 + $0x14] sm:$0xf]
  %v2161 = vld [vmem:[%s7 + $0x18] sm:$0xf]
  %v2162 = vld [vmem:[%s7 + $0x1c] sm:$0xf]
  %v2163 = vld [vmem:[%s7 + $0x20] sm:$0xf]
  %v2164 = vld [vmem:[%s7 + $0x24] sm:$0xf]
  %v2165 = vld [vmem:[%s7 + $0x28] sm:$0xf]
  %v2166 = vld [vmem:[%s7 + $0x2c] sm:$0xf]
  %v2167 = vld [vmem:[%s7 + $0x30] sm:$0xf]
  %v2168 = vld [vmem:[%s7 + $0x34] sm:$0xf]
  %v2169 = vld [vmem:[%s7 + $0x38] sm:$0xf]
  %v2170 = vld [vmem:[%s7 + $0x3c] sm:$0xf]
  %v2187 = vunpack.c.l.b16 %v2155
  %v2188 = vunpack.c.l.b16 %v2156
  %v2189 = vunpack.c.l.b16 %v2157
  %v2190 = vunpack.c.l.b16 %v2158
  %v2191 = vunpack.c.l.b16 %v2159
  %v2192 = vunpack.c.l.b16 %v2160
  %v2193 = vunpack.c.l.b16 %v2161
  %v2194 = vunpack.c.l.b16 %v2162
  %v2195 = vunpack.c.l.b16 %v2163
  %v2196 = vunpack.c.l.b16 %v2164
  %v2197 = vunpack.c.l.b16 %v2165
  %v2198 = vunpack.c.l.b16 %v2166
  %v2199 = vunpack.c.l.b16 %v2167
  %v2200 = vunpack.c.l.b16 %v2168
  %v2201 = vunpack.c.l.b16 %v2169
  %v2202 = vunpack.c.l.b16 %v2170
  %v2203 = vpack.c.b16 %v2188, %v2187
  %v2204 = vpack.c.b16 %v2190, %v2189
  %v2205 = vpack.c.b16 %v2192, %v2191
  %v2206 = vpack.c.b16 %v2194, %v2193
  %v2207 = vpack.c.b16 %v2196, %v2195
  %v2208 = vpack.c.b16 %v2198, %v2197
  %v2209 = vpack.c.b16 %v2200, %v2199
  %v2210 = vpack.c.b16 %v2202, %v2201
  %2219 = vmatprep.subr.bf16.mxu0 0
  %2220 = vmatpush1.bf16.msra.mxu0 %v2203
  %2221 = vmatprep.subr.bf16.mxu0 0
  %2222 = vmatpush1.bf16.msra.mxu0 %v2204
  %2223 = vmatprep.subr.bf16.mxu0 0
  %2224 = vmatpush1.bf16.msra.mxu0 %v2205
  %2225 = vmatprep.subr.bf16.mxu0 0
  %2226 = vmatpush1.bf16.msra.mxu0 %v2206
  %2227 = vmatprep.subr.bf16.mxu0 0
  %2228 = vmatpush1.bf16.msra.mxu0 %v2207
  %2229 = vmatprep.subr.bf16.mxu0 0
  %2230 = vmatpush1.bf16.msra.mxu0 %v2208
  %2231 = vmatprep.subr.bf16.mxu0 0
  %2232 = vmatpush1.bf16.msra.mxu0 %v2209
  %2233 = vmatprep.subr.bf16.mxu0 0
  %2234 = vmatpush1.bf16.msra.mxu0 %v2210
  %2235 = vmatprep.subr.bf16.mxu0 0
  %2236 = vmatpush1.bf16.msra.mxu0 0
  %2237 = vmatprep.subr.bf16.mxu0 0
  %2238 = vmatpush1.bf16.msra.mxu0 0
  %2239 = vmatprep.subr.bf16.mxu0 0
  %2240 = vmatpush1.bf16.msra.mxu0 0
  %2241 = vmatprep.subr.bf16.mxu0 0
  %2242 = vmatpush1.bf16.msra.mxu0 0
  %2243 = vmatprep.subr.bf16.mxu0 0
  %2244 = vmatpush1.bf16.msra.mxu0 0
  %2245 = vmatprep.subr.bf16.mxu0 0
  %2246 = vmatpush1.bf16.msra.mxu0 0
  %2247 = vmatprep.subr.bf16.mxu0 0
  %2248 = vmatpush1.bf16.msra.mxu0 0
  %2249 = vmatprep.subr.bf16.mxu0 0
  %2250 = vmatpush1.bf16.msra.mxu0 0
  %2251 = vmatprep.mubr.bf16.mxu0 0
  %2252 = vmatmul.mubr.bf16.gmra.mrb[0].mxu0 %v2154
  %v2253 = vpop.f32.mrb[0].mxu0
  %v2254 = vadd.f32 0.0, %v2253
  %v2255 = vpop.f32.mrb[0].mxu0
  %v2256 = vpop.f32.mrb[0].mxu0
  %v2257 = vadd.f32 0.0, %v2256
  %v2258 = vpop.f32.mrb[0].mxu0
  %2259 = vdwg.mxu0
  %v2260 = vadd.f32 %v2152, %v2254
  %v2261 = vadd.f32 %v2153, %v2257
  %v2262 = vxor.u32 %v2260, 2147483648
  %v2263 = vxor.u32 %v2261, 2147483648
  %v2264 = vmul.f32 %v2262, 1.442695
  %v2265 = vpow.pop %v2264
  %v2266 = vmul.f32 %v2263, 1.442695
  %v2267 = vpow.pop %v2266
  %v2268 = vadd.f32 %v2265, 1.0
  %v2269 = vadd.f32 %v2267, 1.0
  %v2270 = vrcp.pop %v2268
  %v2271 = vmul.f32 1.0, %v2270
  %v2272 = vrcp.pop %v2269
  %v2273 = vmul.f32 1.0, %v2272
  %v2274 = vtanh.pop %v2260
  %v2275 = vtanh.pop %v2261
  %2276 = vrot.lane.b32.xlu0 %v2271, 16
  %v2277 = vpop.permute.xlu0 %2276
  %2278 = vrot.lane.b32.xlu0 %v2273, 16
  %v2279 = vpop.permute.xlu0 %2278
  %2280 = vrot.lane.b32.xlu0 %v2274, 32
  %v2281 = vpop.permute.xlu0 %2280
  %2282 = vrot.lane.b32.xlu0 %v2275, 32
  %v2283 = vpop.permute.xlu0 %2282
  %2284 = vrot.lane.b32.xlu0 %v2271, 48
  %v2285 = vpop.permute.xlu0 %2284
  %2286 = vrot.lane.b32.xlu0 %v2273, 48
  %v2287 = vpop.permute.xlu0 %2286
  %v2288 = vmul.f32 %v2277, %v1994
  %v2289 = vmul.f32 %v2279, %v1995
  %v2290 = vmul.f32 %v2271, %v2281
  %v2291 = vmul.f32 %v2273, %v2283
  %v2292 = vadd.f32 %v2288, %v2290
  %v2293 = vadd.f32 %v2289, %v2291
  %v2294 = vtanh.pop %v2292
  %v2295 = vtanh.pop %v2293
  %v2296 = vmul.f32 %v2285, %v2294
  %v2297 = vmul.f32 %v2287, %v2295
  %v2298 = vsel %vm1068, %v2296, %v1992
  %v2299 = vsel %vm1069, %v2297, %v1993
  %v2300 = vsel %vm1068, %v2292, %v1994
  %v2301 = vsel %vm1069, %v2293, %v1995
  %2302 = vst [vmem:[%s1223 + $0x8] sm:$0xff] %v2298
  %2303 = vst [vmem:[%s1223 + $0x18] sm:$0xff] %v2299
  %s2304 = scalar_lea.vmem [#allocation2], 96
  %v2305 = vld [vmem:[%s2304] sm:$0xff]
  %v2306 = vld [vmem:[%s2304 + $0x8] sm:$0xff]
  %v2307 = vpack.c.bf16 %v2146, %v2145
  %v2308 = vld [vmem:[%s6] sm:$0xf]
  %v2309 = vld [vmem:[%s6 + $0x4] sm:$0xf]
  %v2310 = vld [vmem:[%s6 + $0x8] sm:$0xf]
  %v2311 = vld [vmem:[%s6 + $0xc] sm:$0xf]
  %v2312 = vld [vmem:[%s6 + $0x10] sm:$0xf]
  %v2313 = vld [vmem:[%s6 + $0x14] sm:$0xf]
  %v2314 = vld [vmem:[%s6 + $0x18] sm:$0xf]
  %v2315 = vld [vmem:[%s6 + $0x1c] sm:$0xf]
  %v2316 = vld [vmem:[%s6 + $0x20] sm:$0xf]
  %v2317 = vld [vmem:[%s6 + $0x24] sm:$0xf]
  %v2318 = vld [vmem:[%s6 + $0x28] sm:$0xf]
  %v2319 = vld [vmem:[%s6 + $0x2c] sm:$0xf]
  %v2320 = vld [vmem:[%s6 + $0x30] sm:$0xf]
  %v2321 = vld [vmem:[%s6 + $0x34] sm:$0xf]
  %v2322 = vld [vmem:[%s6 + $0x38] sm:$0xf]
  %v2323 = vld [vmem:[%s6 + $0x3c] sm:$0xf]
  %v2340 = vunpack.c.l.b16 %v2308
  %v2341 = vunpack.c.l.b16 %v2309
  %v2342 = vunpack.c.l.b16 %v2310
  %v2343 = vunpack.c.l.b16 %v2311
  %v2344 = vunpack.c.l.b16 %v2312
  %v2345 = vunpack.c.l.b16 %v2313
  %v2346 = vunpack.c.l.b16 %v2314
  %v2347 = vunpack.c.l.b16 %v2315
  %v2348 = vunpack.c.l.b16 %v2316
  %v2349 = vunpack.c.l.b16 %v2317
  %v2350 = vunpack.c.l.b16 %v2318
  %v2351 = vunpack.c.l.b16 %v2319
  %v2352 = vunpack.c.l.b16 %v2320
  %v2353 = vunpack.c.l.b16 %v2321
  %v2354 = vunpack.c.l.b16 %v2322
  %v2355 = vunpack.c.l.b16 %v2323
  %v2356 = vpack.c.b16 %v2341, %v2340
  %v2357 = vpack.c.b16 %v2343, %v2342
  %v2358 = vpack.c.b16 %v2345, %v2344
  %v2359 = vpack.c.b16 %v2347, %v2346
  %v2360 = vpack.c.b16 %v2349, %v2348
  %v2361 = vpack.c.b16 %v2351, %v2350
  %v2362 = vpack.c.b16 %v2353, %v2352
  %v2363 = vpack.c.b16 %v2355, %v2354
  %2372 = vmatprep.subr.bf16.mxu0 0
  %2373 = vmatpush1.bf16.msra.mxu0 %v2356
  %2374 = vmatprep.subr.bf16.mxu0 0
  %2375 = vmatpush1.bf16.msra.mxu0 %v2357
  %2376 = vmatprep.subr.bf16.mxu0 0
  %2377 = vmatpush1.bf16.msra.mxu0 %v2358
  %2378 = vmatprep.subr.bf16.mxu0 0
  %2379 = vmatpush1.bf16.msra.mxu0 %v2359
  %2380 = vmatprep.subr.bf16.mxu0 0
  %2381 = vmatpush1.bf16.msra.mxu0 %v2360
  %2382 = vmatprep.subr.bf16.mxu0 0
  %2383 = vmatpush1.bf16.msra.mxu0 %v2361
  %2384 = vmatprep.subr.bf16.mxu0 0
  %2385 = vmatpush1.bf16.msra.mxu0 %v2362
  %2386 = vmatprep.subr.bf16.mxu0 0
  %2387 = vmatpush1.bf16.msra.mxu0 %v2363
  %2388 = vmatprep.subr.bf16.mxu0 0
  %2389 = vmatpush1.bf16.msra.mxu0 0
  %2390 = vmatprep.subr.bf16.mxu0 0
  %2391 = vmatpush1.bf16.msra.mxu0 0
  %2392 = vmatprep.subr.bf16.mxu0 0
  %2393 = vmatpush1.bf16.msra.mxu0 0
  %2394 = vmatprep.subr.bf16.mxu0 0
  %2395 = vmatpush1.bf16.msra.mxu0 0
  %2396 = vmatprep.subr.bf16.mxu0 0
  %2397 = vmatpush1.bf16.msra.mxu0 0
  %2398 = vmatprep.subr.bf16.mxu0 0
  %2399 = vmatpush1.bf16.msra.mxu0 0
  %2400 = vmatprep.subr.bf16.mxu0 0
  %2401 = vmatpush1.bf16.msra.mxu0 0
  %2402 = vmatprep.subr.bf16.mxu0 0
  %2403 = vmatpush1.bf16.msra.mxu0 0
  %2404 = vmatprep.mubr.bf16.mxu0 0
  %2405 = vmatmul.mubr.bf16.gmra.mrb[0].mxu0 %v2307
  %v2406 = vpop.f32.mrb[0].mxu0
  %v2407 = vadd.f32 0.0, %v2406
  %v2408 = vpop.f32.mrb[0].mxu0
  %v2409 = vpop.f32.mrb[0].mxu0
  %v2410 = vadd.f32 0.0, %v2409
  %v2411 = vpop.f32.mrb[0].mxu0
  %2412 = vdwg.mxu0
  %v2413 = vadd.f32 %v2305, %v2407
  %v2414 = vadd.f32 %v2306, %v2410
  %v2415 = vxor.u32 %v2413, 2147483648
  %v2416 = vxor.u32 %v2414, 2147483648
  %v2417 = vmul.f32 %v2415, 1.442695
  %v2418 = vpow.pop %v2417
  %v2419 = vmul.f32 %v2416, 1.442695
  %v2420 = vpow.pop %v2419
  %v2421 = vadd.f32 %v2418, 1.0
  %v2422 = vadd.f32 %v2420, 1.0
  %v2423 = vrcp.pop %v2421
  %v2424 = vmul.f32 1.0, %v2423
  %v2425 = vrcp.pop %v2422
  %v2426 = vmul.f32 1.0, %v2425
  %v2427 = vtanh.pop %v2413
  %v2428 = vtanh.pop %v2414
  %2429 = vrot.lane.b32.xlu0 %v2424, 16
  %v2430 = vpop.permute.xlu0 %2429
  %2431 = vrot.lane.b32.xlu0 %v2426, 16
  %v2432 = vpop.permute.xlu0 %2431
  %2433 = vrot.lane.b32.xlu0 %v2427, 32
  %v2434 = vpop.permute.xlu0 %2433
  %2435 = vrot.lane.b32.xlu0 %v2428, 32
  %v2436 = vpop.permute.xlu0 %2435
  %2437 = vrot.lane.b32.xlu0 %v2424, 48
  %v2438 = vpop.permute.xlu0 %2437
  %2439 = vrot.lane.b32.xlu0 %v2426, 48
  %v2440 = vpop.permute.xlu0 %2439
  %v2441 = vmul.f32 %v2430, %v2147
  %v2442 = vmul.f32 %v2432, %v2148
  %v2443 = vmul.f32 %v2424, %v2434
  %v2444 = vmul.f32 %v2426, %v2436
  %v2445 = vadd.f32 %v2441, %v2443
  %v2446 = vadd.f32 %v2442, %v2444
  %v2447 = vtanh.pop %v2445
  %v2448 = vtanh.pop %v2446
  %v2449 = vmul.f32 %v2438, %v2447
  %v2450 = vmul.f32 %v2440, %v2448
  %v2451 = vsel %vm758, %v2449, %v2145
  %v2452 = vsel %vm759, %v2450, %v2146
  %v2453 = vsel %vm758, %v2445, %v2147
  %v2454 = vsel %vm759, %v2446, %v2148
  %2455 = vst [vmem:[%s1065] sm:$0xff] %v2451
  %2456 = vst [vmem:[%s1065 + $0x10] sm:$0xff] %v2452
  %s2457 = scalar_lea.vmem [#allocation3], 16
  %v2458 = vld [vmem:[%s2457] sm:$0xff]
  %v2459 = vld [vmem:[%s2457 + $0x8] sm:$0xff]
  %v2460 = vpack.c.bf16 %v2299, %v2298
  %v2461 = vld [vmem:[%s7] sm:$0xf]
  %v2462 = vld [vmem:[%s7 + $0x4] sm:$0xf]
  %v2463 = vld [vmem:[%s7 + $0x8] sm:$0xf]
  %v2464 = vld [vmem:[%s7 + $0xc] sm:$0xf]
  %v2465 = vld [vmem:[%s7 + $0x10] sm:$0xf]
  %v2466 = vld [vmem:[%s7 + $0x14] sm:$0xf]
  %v2467 = vld [vmem:[%s7 + $0x18] sm:$0xf]
  %v2468 = vld [vmem:[%s7 + $0x1c] sm:$0xf]
  %v2469 = vld [vmem:[%s7 + $0x20] sm:$0xf]
  %v2470 = vld [vmem:[%s7 + $0x24] sm:$0xf]
  %v2471 = vld [vmem:[%s7 + $0x28] sm:$0xf]
  %v2472 = vld [vmem:[%s7 + $0x2c] sm:$0xf]
  %v2473 = vld [vmem:[%s7 + $0x30] sm:$0xf]
  %v2474 = vld [vmem:[%s7 + $0x34] sm:$0xf]
  %v2475 = vld [vmem:[%s7 + $0x38] sm:$0xf]
  %v2476 = vld [vmem:[%s7 + $0x3c] sm:$0xf]
  %v2493 = vunpack.c.l.b16 %v2461
  %v2494 = vunpack.c.l.b16 %v2462
  %v2495 = vunpack.c.l.b16 %v2463
  %v2496 = vunpack.c.l.b16 %v2464
  %v2497 = vunpack.c.l.b16 %v2465
  %v2498 = vunpack.c.l.b16 %v2466
  %v2499 = vunpack.c.l.b16 %v2467
  %v2500 = vunpack.c.l.b16 %v2468
  %v2501 = vunpack.c.l.b16 %v2469
  %v2502 = vunpack.c.l.b16 %v2470
  %v2503 = vunpack.c.l.b16 %v2471
  %v2504 = vunpack.c.l.b16 %v2472
  %v2505 = vunpack.c.l.b16 %v2473
  %v2506 = vunpack.c.l.b16 %v2474
  %v2507 = vunpack.c.l.b16 %v2475
  %v2508 = vunpack.c.l.b16 %v2476
  %v2509 = vpack.c.b16 %v2494, %v2493
  %v2510 = vpack.c.b16 %v2496, %v2495
  %v2511 = vpack.c.b16 %v2498, %v2497
  %v2512 = vpack.c.b16 %v2500, %v2499
  %v2513 = vpack.c.b16 %v2502, %v2501
  %v2514 = vpack.c.b16 %v2504, %v2503
  %v2515 = vpack.c.b16 %v2506, %v2505
  %v2516 = vpack.c.b16 %v2508, %v2507
  %2525 = vmatprep.subr.bf16.mxu0 0
  %2526 = vmatpush1.bf16.msra.mxu0 %v2509
  %2527 = vmatprep.subr.bf16.mxu0 0
  %2528 = vmatpush1.bf16.msra.mxu0 %v2510
  %2529 = vmatprep.subr.bf16.mxu0 0
  %2530 = vmatpush1.bf16.msra.mxu0 %v2511
  %2531 = vmatprep.subr.bf16.mxu0 0
  %2532 = vmatpush1.bf16.msra.mxu0 %v2512
  %2533 = vmatprep.subr.bf16.mxu0 0
  %2534 = vmatpush1.bf16.msra.mxu0 %v2513
  %2535 = vmatprep.subr.bf16.mxu0 0
  %2536 = vmatpush1.bf16.msra.mxu0 %v2514
  %2537 = vmatprep.subr.bf16.mxu0 0
  %2538 = vmatpush1.bf16.msra.mxu0 %v2515
  %2539 = vmatprep.subr.bf16.mxu0 0
  %2540 = vmatpush1.bf16.msra.mxu0 %v2516
  %2541 = vmatprep.subr.bf16.mxu0 0
  %2542 = vmatpush1.bf16.msra.mxu0 0
  %2543 = vmatprep.subr.bf16.mxu0 0
  %2544 = vmatpush1.bf16.msra.mxu0 0
  %2545 = vmatprep.subr.bf16.mxu0 0
  %2546 = vmatpush1.bf16.msra.mxu0 0
  %2547 = vmatprep.subr.bf16.mxu0 0
  %2548 = vmatpush1.bf16.msra.mxu0 0
  %2549 = vmatprep.subr.bf16.mxu0 0
  %2550 = vmatpush1.bf16.msra.mxu0 0
  %2551 = vmatprep.subr.bf16.mxu0 0
  %2552 = vmatpush1.bf16.msra.mxu0 0
  %2553 = vmatprep.subr.bf16.mxu0 0
  %2554 = vmatpush1.bf16.msra.mxu0 0
  %2555 = vmatprep.subr.bf16.mxu0 0
  %2556 = vmatpush1.bf16.msra.mxu0 0
  %2557 = vmatprep.mubr.bf16.mxu0 0
  %2558 = vmatmul.mubr.bf16.gmra.mrb[0].mxu0 %v2460
  %v2559 = vpop.f32.mrb[0].mxu0
  %v2560 = vadd.f32 0.0, %v2559
  %v2561 = vpop.f32.mrb[0].mxu0
  %v2562 = vpop.f32.mrb[0].mxu0
  %v2563 = vadd.f32 0.0, %v2562
  %v2564 = vpop.f32.mrb[0].mxu0
  %2565 = vdwg.mxu0
  %v2566 = vadd.f32 %v2458, %v2560
  %v2567 = vadd.f32 %v2459, %v2563
  %v2568 = vxor.u32 %v2566, 2147483648
  %v2569 = vxor.u32 %v2567, 2147483648
  %v2570 = vmul.f32 %v2568, 1.442695
  %v2571 = vpow.pop %v2570
  %v2572 = vmul.f32 %v2569, 1.442695
  %v2573 = vpow.pop %v2572
  %v2574 = vadd.f32 %v2571, 1.0
  %v2575 = vadd.f32 %v2573, 1.0
  %v2576 = vrcp.pop %v2574
  %v2577 = vmul.f32 1.0, %v2576
  %v2578 = vrcp.pop %v2575
  %v2579 = vmul.f32 1.0, %v2578
  %v2580 = vtanh.pop %v2566
  %v2581 = vtanh.pop %v2567
  %2582 = vrot.lane.b32.xlu0 %v2577, 16
  %v2583 = vpop.permute.xlu0 %2582
  %2584 = vrot.lane.b32.xlu0 %v2579, 16
  %v2585 = vpop.permute.xlu0 %2584
  %2586 = vrot.lane.b32.xlu0 %v2580, 32
  %v2587 = vpop.permute.xlu0 %2586
  %2588 = vrot.lane.b32.xlu0 %v2581, 32
  %v2589 = vpop.permute.xlu0 %2588
  %2590 = vrot.lane.b32.xlu0 %v2577, 48
  %v2591 = vpop.permute.xlu0 %2590
  %2592 = vrot.lane.b32.xlu0 %v2579, 48
  %v2593 = vpop.permute.xlu0 %2592
  %v2594 = vmul.f32 %v2583, %v2300
  %v2595 = vmul.f32 %v2585, %v2301
  %v2596 = vmul.f32 %v2577, %v2587
  %v2597 = vmul.f32 %v2579, %v2589
  %v2598 = vadd.f32 %v2594, %v2596
  %v2599 = vadd.f32 %v2595, %v2597
  %v2600 = vtanh.pop %v2598
  %v2601 = vtanh.pop %v2599
  %v2602 = vmul.f32 %v2591, %v2600
  %v2603 = vmul.f32 %v2593, %v2601
  %v2604 = vsel %vm756, %v2602, %v2298
  %v2605 = vsel %vm757, %v2603, %v2299
  %v2606 = vsel %vm756, %v2598, %v2300
  %v2607 = vsel %vm757, %v2599, %v2301
  %2608 = vst [vmem:[%s911 + $0x8] sm:$0xff] %v2604
  %2609 = vst [vmem:[%s911 + $0x18] sm:$0xff] %v2605
  %s2610 = scalar_lea.vmem [#allocation2], 112
  %v2611 = vld [vmem:[%s2610] sm:$0xff]
  %v2612 = vld [vmem:[%s2610 + $0x8] sm:$0xff]
  %v2613 = vpack.c.bf16 %v2452, %v2451
  %v2614 = vld [vmem:[%s6] sm:$0xf]
  %v2615 = vld [vmem:[%s6 + $0x4] sm:$0xf]
  %v2616 = vld [vmem:[%s6 + $0x8] sm:$0xf]
  %v2617 = vld [vmem:[%s6 + $0xc] sm:$0xf]
  %v2618 = vld [vmem:[%s6 + $0x10] sm:$0xf]
  %v2619 = vld [vmem:[%s6 + $0x14] sm:$0xf]
  %v2620 = vld [vmem:[%s6 + $0x18] sm:$0xf]
  %v2621 = vld [vmem:[%s6 + $0x1c] sm:$0xf]
  %v2622 = vld [vmem:[%s6 + $0x20] sm:$0xf]
  %v2623 = vld [vmem:[%s6 + $0x24] sm:$0xf]
  %v2624 = vld [vmem:[%s6 + $0x28] sm:$0xf]
  %v2625 = vld [vmem:[%s6 + $0x2c] sm:$0xf]
  %v2626 = vld [vmem:[%s6 + $0x30] sm:$0xf]
  %v2627 = vld [vmem:[%s6 + $0x34] sm:$0xf]
  %v2628 = vld [vmem:[%s6 + $0x38] sm:$0xf]
  %v2629 = vld [vmem:[%s6 + $0x3c] sm:$0xf]
  %v2646 = vunpack.c.l.b16 %v2614
  %v2647 = vunpack.c.l.b16 %v2615
  %v2648 = vunpack.c.l.b16 %v2616
  %v2649 = vunpack.c.l.b16 %v2617
  %v2650 = vunpack.c.l.b16 %v2618
  %v2651 = vunpack.c.l.b16 %v2619
  %v2652 = vunpack.c.l.b16 %v2620
  %v2653 = vunpack.c.l.b16 %v2621
  %v2654 = vunpack.c.l.b16 %v2622
  %v2655 = vunpack.c.l.b16 %v2623
  %v2656 = vunpack.c.l.b16 %v2624
  %v2657 = vunpack.c.l.b16 %v2625
  %v2658 = vunpack.c.l.b16 %v2626
  %v2659 = vunpack.c.l.b16 %v2627
  %v2660 = vunpack.c.l.b16 %v2628
  %v2661 = vunpack.c.l.b16 %v2629
  %v2662 = vpack.c.b16 %v2647, %v2646
  %v2663 = vpack.c.b16 %v2649, %v2648
  %v2664 = vpack.c.b16 %v2651, %v2650
  %v2665 = vpack.c.b16 %v2653, %v2652
  %v2666 = vpack.c.b16 %v2655, %v2654
  %v2667 = vpack.c.b16 %v2657, %v2656
  %v2668 = vpack.c.b16 %v2659, %v2658
  %v2669 = vpack.c.b16 %v2661, %v2660
  %2678 = vmatprep.subr.bf16.mxu0 0
  %2679 = vmatpush1.bf16.msra.mxu0 %v2662
  %2680 = vmatprep.subr.bf16.mxu0 0
  %2681 = vmatpush1.bf16.msra.mxu0 %v2663
  %2682 = vmatprep.subr.bf16.mxu0 0
  %2683 = vmatpush1.bf16.msra.mxu0 %v2664
  %2684 = vmatprep.subr.bf16.mxu0 0
  %2685 = vmatpush1.bf16.msra.mxu0 %v2665
  %2686 = vmatprep.subr.bf16.mxu0 0
  %2687 = vmatpush1.bf16.msra.mxu0 %v2666
  %2688 = vmatprep.subr.bf16.mxu0 0
  %2689 = vmatpush1.bf16.msra.mxu0 %v2667
  %2690 = vmatprep.subr.bf16.mxu0 0
  %2691 = vmatpush1.bf16.msra.mxu0 %v2668
  %2692 = vmatprep.subr.bf16.mxu0 0
  %2693 = vmatpush1.bf16.msra.mxu0 %v2669
  %2694 = vmatprep.subr.bf16.mxu0 0
  %2695 = vmatpush1.bf16.msra.mxu0 0
  %2696 = vmatprep.subr.bf16.mxu0 0
  %2697 = vmatpush1.bf16.msra.mxu0 0
  %2698 = vmatprep.subr.bf16.mxu0 0
  %2699 = vmatpush1.bf16.msra.mxu0 0
  %2700 = vmatprep.subr.bf16.mxu0 0
  %2701 = vmatpush1.bf16.msra.mxu0 0
  %2702 = vmatprep.subr.bf16.mxu0 0
  %2703 = vmatpush1.bf16.msra.mxu0 0
  %2704 = vmatprep.subr.bf16.mxu0 0
  %2705 = vmatpush1.bf16.msra.mxu0 0
  %2706 = vmatprep.subr.bf16.mxu0 0
  %2707 = vmatpush1.bf16.msra.mxu0 0
  %2708 = vmatprep.subr.bf16.mxu0 0
  %2709 = vmatpush1.bf16.msra.mxu0 0
  %2710 = vmatprep.mubr.bf16.mxu0 0
  %2711 = vmatmul.mubr.bf16.gmra.mrb[0].mxu0 %v2613
  %v2712 = vpop.f32.mrb[0].mxu0
  %v2713 = vadd.f32 0.0, %v2712
  %v2714 = vpop.f32.mrb[0].mxu0
  %v2715 = vpop.f32.mrb[0].mxu0
  %v2716 = vadd.f32 0.0, %v2715
  %v2717 = vpop.f32.mrb[0].mxu0
  %2718 = vdwg.mxu0
  %v2719 = vadd.f32 %v2611, %v2713
  %v2720 = vadd.f32 %v2612, %v2716
  %v2721 = vxor.u32 %v2719, 2147483648
  %v2722 = vxor.u32 %v2720, 2147483648
  %v2723 = vmul.f32 %v2721, 1.442695
  %v2724 = vpow.pop %v2723
  %v2725 = vmul.f32 %v2722, 1.442695
  %v2726 = vpow.pop %v2725
  %v2727 = vadd.f32 %v2724, 1.0
  %v2728 = vadd.f32 %v2726, 1.0
  %v2729 = vrcp.pop %v2727
  %v2730 = vmul.f32 1.0, %v2729
  %v2731 = vrcp.pop %v2728
  %v2732 = vmul.f32 1.0, %v2731
  %v2733 = vtanh.pop %v2719
  %v2734 = vtanh.pop %v2720
  %2735 = vrot.lane.b32.xlu0 %v2730, 16
  %v2736 = vpop.permute.xlu0 %2735
  %2737 = vrot.lane.b32.xlu0 %v2732, 16
  %v2738 = vpop.permute.xlu0 %2737
  %2739 = vrot.lane.b32.xlu0 %v2733, 32
  %v2740 = vpop.permute.xlu0 %2739
  %2741 = vrot.lane.b32.xlu0 %v2734, 32
  %v2742 = vpop.permute.xlu0 %2741
  %2743 = vrot.lane.b32.xlu0 %v2730, 48
  %v2744 = vpop.permute.xlu0 %2743
  %2745 = vrot.lane.b32.xlu0 %v2732, 48
  %v2746 = vpop.permute.xlu0 %2745
  %v2747 = vmul.f32 %v2736, %v2453
  %v2748 = vmul.f32 %v2738, %v2454
  %v2749 = vmul.f32 %v2730, %v2740
  %v2750 = vmul.f32 %v2732, %v2742
  %v2751 = vadd.f32 %v2747, %v2749
  %v2752 = vadd.f32 %v2748, %v2750
  %v2753 = vtanh.pop %v2751
  %v2754 = vtanh.pop %v2752
  %v2755 = vmul.f32 %v2744, %v2753
  %v2756 = vmul.f32 %v2746, %v2754
  %v2757 = vsel %vm450, %v2755, %v2451
  %v2758 = vsel %vm451, %v2756, %v2452
  %2759 = vst [vmem:[%s753] sm:$0xff] %v2757
  %2760 = vst [vmem:[%s753 + $0x10] sm:$0xff] %v2758
  %v2761 = vld [vmem:[#allocation3] sm:$0xff]
  %v2762 = vld [vmem:[#allocation3 + $0x8] sm:$0xff]
  %v2763 = vpack.c.bf16 %v2605, %v2604
  %v2764 = vld [vmem:[%s7] sm:$0xf]
  %v2765 = vld [vmem:[%s7 + $0x4] sm:$0xf]
  %v2766 = vld [vmem:[%s7 + $0x8] sm:$0xf]
  %v2767 = vld [vmem:[%s7 + $0xc] sm:$0xf]
  %v2768 = vld [vmem:[%s7 + $0x10] sm:$0xf]
  %v2769 = vld [vmem:[%s7 + $0x14] sm:$0xf]
  %v2770 = vld [vmem:[%s7 + $0x18] sm:$0xf]
  %v2771 = vld [vmem:[%s7 + $0x1c] sm:$0xf]
  %v2772 = vld [vmem:[%s7 + $0x20] sm:$0xf]
  %v2773 = vld [vmem:[%s7 + $0x24] sm:$0xf]
  %v2774 = vld [vmem:[%s7 + $0x28] sm:$0xf]
  %v2775 = vld [vmem:[%s7 + $0x2c] sm:$0xf]
  %v2776 = vld [vmem:[%s7 + $0x30] sm:$0xf]
  %v2777 = vld [vmem:[%s7 + $0x34] sm:$0xf]
  %v2778 = vld [vmem:[%s7 + $0x38] sm:$0xf]
  %v2779 = vld [vmem:[%s7 + $0x3c] sm:$0xf]
  %v2796 = vunpack.c.l.b16 %v2764
  %v2797 = vunpack.c.l.b16 %v2765
  %v2798 = vunpack.c.l.b16 %v2766
  %v2799 = vunpack.c.l.b16 %v2767
  %v2800 = vunpack.c.l.b16 %v2768
  %v2801 = vunpack.c.l.b16 %v2769
  %v2802 = vunpack.c.l.b16 %v2770
  %v2803 = vunpack.c.l.b16 %v2771
  %v2804 = vunpack.c.l.b16 %v2772
  %v2805 = vunpack.c.l.b16 %v2773
  %v2806 = vunpack.c.l.b16 %v2774
  %v2807 = vunpack.c.l.b16 %v2775
  %v2808 = vunpack.c.l.b16 %v2776
  %v2809 = vunpack.c.l.b16 %v2777
  %v2810 = vunpack.c.l.b16 %v2778
  %v2811 = vunpack.c.l.b16 %v2779
  %v2812 = vpack.c.b16 %v2797, %v2796
  %v2813 = vpack.c.b16 %v2799, %v2798
  %v2814 = vpack.c.b16 %v2801, %v2800
  %v2815 = vpack.c.b16 %v2803, %v2802
  %v2816 = vpack.c.b16 %v2805, %v2804
  %v2817 = vpack.c.b16 %v2807, %v2806
  %v2818 = vpack.c.b16 %v2809, %v2808
  %v2819 = vpack.c.b16 %v2811, %v2810
  %2828 = vmatprep.subr.bf16.mxu0 0
  %2829 = vmatpush1.bf16.msra.mxu0 %v2812
  %2830 = vmatprep.subr.bf16.mxu0 0
  %2831 = vmatpush1.bf16.msra.mxu0 %v2813
  %2832 = vmatprep.subr.bf16.mxu0 0
  %2833 = vmatpush1.bf16.msra.mxu0 %v2814
  %2834 = vmatprep.subr.bf16.mxu0 0
  %2835 = vmatpush1.bf16.msra.mxu0 %v2815
  %2836 = vmatprep.subr.bf16.mxu0 0
  %2837 = vmatpush1.bf16.msra.mxu0 %v2816
  %2838 = vmatprep.subr.bf16.mxu0 0
  %2839 = vmatpush1.bf16.msra.mxu0 %v2817
  %2840 = vmatprep.subr.bf16.mxu0 0
  %2841 = vmatpush1.bf16.msra.mxu0 %v2818
  %2842 = vmatprep.subr.bf16.mxu0 0
  %2843 = vmatpush1.bf16.msra.mxu0 %v2819
  %2844 = vmatprep.subr.bf16.mxu0 0
  %2845 = vmatpush1.bf16.msra.mxu0 0
  %2846 = vmatprep.subr.bf16.mxu0 0
  %2847 = vmatpush1.bf16.msra.mxu0 0
  %2848 = vmatprep.subr.bf16.mxu0 0
  %2849 = vmatpush1.bf16.msra.mxu0 0
  %2850 = vmatprep.subr.bf16.mxu0 0
  %2851 = vmatpush1.bf16.msra.mxu0 0
  %2852 = vmatprep.subr.bf16.mxu0 0
  %2853 = vmatpush1.bf16.msra.mxu0 0
  %2854 = vmatprep.subr.bf16.mxu0 0
  %2855 = vmatpush1.bf16.msra.mxu0 0
  %2856 = vmatprep.subr.bf16.mxu0 0
  %2857 = vmatpush1.bf16.msra.mxu0 0
  %2858 = vmatprep.subr.bf16.mxu0 0
  %2859 = vmatpush1.bf16.msra.mxu0 0
  %2860 = vmatprep.mubr.bf16.mxu0 0
  %2861 = vmatmul.mubr.bf16.gmra.mrb[0].mxu0 %v2763
  %v2862 = vpop.f32.mrb[0].mxu0
  %v2863 = vadd.f32 0.0, %v2862
  %v2864 = vpop.f32.mrb[0].mxu0
  %v2865 = vpop.f32.mrb[0].mxu0
  %v2866 = vadd.f32 0.0, %v2865
  %v2867 = vpop.f32.mrb[0].mxu0
  %2868 = vdwg.mxu0
  %v2869 = vadd.f32 %v2761, %v2863
  %v2870 = vadd.f32 %v2762, %v2866
  %v2871 = vxor.u32 %v2869, 2147483648
  %v2872 = vxor.u32 %v2870, 2147483648
  %v2873 = vmul.f32 %v2871, 1.442695
  %v2874 = vpow.pop %v2873
  %v2875 = vmul.f32 %v2872, 1.442695
  %v2876 = vpow.pop %v2875
  %v2877 = vadd.f32 %v2874, 1.0
  %v2878 = vadd.f32 %v2876, 1.0
  %v2879 = vrcp.pop %v2877
  %v2880 = vmul.f32 1.0, %v2879
  %v2881 = vrcp.pop %v2878
  %v2882 = vmul.f32 1.0, %v2881
  %v2883 = vtanh.pop %v2869
  %v2884 = vtanh.pop %v2870
  %2885 = vrot.lane.b32.xlu0 %v2880, 16
  %v2886 = vpop.permute.xlu0 %2885
  %2887 = vrot.lane.b32.xlu0 %v2882, 16
  %v2888 = vpop.permute.xlu0 %2887
  %2889 = vrot.lane.b32.xlu0 %v2883, 32
  %v2890 = vpop.permute.xlu0 %2889
  %2891 = vrot.lane.b32.xlu0 %v2884, 32
  %v2892 = vpop.permute.xlu0 %2891
  %2893 = vrot.lane.b32.xlu0 %v2880, 48
  %v2894 = vpop.permute.xlu0 %2893
  %2895 = vrot.lane.b32.xlu0 %v2882, 48
  %v2896 = vpop.permute.xlu0 %2895
  %v2897 = vmul.f32 %v2886, %v2606
  %v2898 = vmul.f32 %v2888, %v2607
  %v2899 = vmul.f32 %v2880, %v2890
  %v2900 = vmul.f32 %v2882, %v2892
  %v2901 = vadd.f32 %v2897, %v2899
  %v2902 = vadd.f32 %v2898, %v2900
  %v2903 = vtanh.pop %v2901
  %v2904 = vtanh.pop %v2902
  %v2905 = vmul.f32 %v2894, %v2903
  %v2906 = vmul.f32 %v2896, %v2904
  %v2907 = vsel %vm448, %v2905, %v2604
  %v2908 = vsel %vm449, %v2906, %v2605
  %2909 = vst [vmem:[#allocation6 + $0x8] sm:$0xff] %v2907
  %2910 = vst [vmem:[#allocation6 + $0x18] sm:$0xff] %v2908
  %v2911 = vld [vmem:[#allocation6] sm:$0xff]
  %v2912 = vld [vmem:[#allocation6 + $0x8] sm:$0xff]
  %v2913 = vld [vmem:[#allocation6 + $0x10] sm:$0xff]
  %v2914 = vld [vmem:[#allocation6 + $0x18] sm:$0xff]
  %v2915 = vld [vmem:[#allocation6 + $0x20] sm:$0xff]
  %v2916 = vld [vmem:[#allocation6 + $0x28] sm:$0xff]
  %v2917 = vld [vmem:[#allocation6 + $0x30] sm:$0xff]
  %v2918 = vld [vmem:[#allocation6 + $0x38] sm:$0xff]
  %v2919 = vld [vmem:[#allocation6 + $0x40] sm:$0xff]
  %v2920 = vld [vmem:[#allocation6 + $0x48] sm:$0xff]
  %v2921 = vld [vmem:[#allocation6 + $0x50] sm:$0xff]
  %v2922 = vld [vmem:[#allocation6 + $0x58] sm:$0xff]
  %v2923 = vld [vmem:[#allocation6 + $0x60] sm:$0xff]
  %v2924 = vld [vmem:[#allocation6 + $0x68] sm:$0xff]
  %v2925 = vld [vmem:[#allocation6 + $0x70] sm:$0xff]
  %v2926 = vld [vmem:[#allocation6 + $0x78] sm:$0xff]
  %v2927 = vld [vmem:[#allocation6 + $0x80] sm:$0xff]
  %v2928 = vld [vmem:[#allocation6 + $0x88] sm:$0xff]
  %v2929 = vld [vmem:[#allocation6 + $0x90] sm:$0xff]
  %v2930 = vld [vmem:[#allocation6 + $0x98] sm:$0xff]
  %v2931 = vld [vmem:[#allocation6 + $0xa0] sm:$0xff]
  %v2932 = vld [vmem:[#allocation6 + $0xa8] sm:$0xff]
  %v2933 = vld [vmem:[#allocation6 + $0xb0] sm:$0xff]
  %v2934 = vld [vmem:[#allocation6 + $0xb8] sm:$0xff]
  %v2935 = vld [vmem:[#allocation6 + $0xc0] sm:$0xff]
  %v2936 = vld [vmem:[#allocation6 + $0xc8] sm:$0xff]
  %v2937 = vld [vmem:[#allocation6 + $0xd0] sm:$0xff]
  %v2938 = vld [vmem:[#allocation6 + $0xd8] sm:$0xff]
  %v2939 = vld [vmem:[#allocation6 + $0xe0] sm:$0xff]
  %v2940 = vld [vmem:[#allocation6 + $0xe8] sm:$0xff]
  %v2941 = vld [vmem:[#allocation6 + $0xf0] sm:$0xff]
  %v2942 = vld [vmem:[#allocation6 + $0xf8] sm:$0xff]
  %v2943 = vpack.c.bf16 %v2913, %v2911
  %v2944 = vpack.c.bf16 %v2914, %v2912
  %v2945 = vpack.c.bf16 %v2917, %v2915
  %v2946 = vpack.c.bf16 %v2918, %v2916
  %v2947 = vpack.c.bf16 %v2921, %v2919
  %v2948 = vpack.c.bf16 %v2922, %v2920
  %v2949 = vpack.c.bf16 %v2925, %v2923
  %v2950 = vpack.c.bf16 %v2926, %v2924
  %v2951 = vpack.c.bf16 %v2929, %v2927
  %v2952 = vpack.c.bf16 %v2930, %v2928
  %v2953 = vpack.c.bf16 %v2933, %v2931
  %v2954 = vpack.c.bf16 %v2934, %v2932
  %v2955 = vpack.c.bf16 %v2937, %v2935
  %v2956 = vpack.c.bf16 %v2938, %v2936
  %v2957 = vpack.c.bf16 %v2941, %v2939
  %v2958 = vpack.c.bf16 %v2942, %v2940
  %v2959 = vld [vmem:[%s4] sm:$0xf]
  %v2960 = vld [vmem:[%s4 + $0x4] sm:$0xf]
  %v2961 = vld [vmem:[%s4 + $0x8] sm:$0xf]
  %v2962 = vld [vmem:[%s4 + $0xc] sm:$0xf]
  %v2963 = vld [vmem:[%s4 + $0x10] sm:$0xf]
  %v2964 = vld [vmem:[%s4 + $0x14] sm:$0xf]
  %v2965 = vld [vmem:[%s4 + $0x18] sm:$0xf]
  %v2966 = vld [vmem:[%s4 + $0x1c] sm:$0xf]
  %v2967 = vld [vmem:[%s4 + $0x20] sm:$0xf]
  %v2968 = vld [vmem:[%s4 + $0x24] sm:$0xf]
  %v2969 = vld [vmem:[%s4 + $0x28] sm:$0xf]
  %v2970 = vld [vmem:[%s4 + $0x2c] sm:$0xf]
  %v2971 = vld [vmem:[%s4 + $0x30] sm:$0xf]
  %v2972 = vld [vmem:[%s4 + $0x34] sm:$0xf]
  %v2973 = vld [vmem:[%s4 + $0x38] sm:$0xf]
  %v2974 = vld [vmem:[%s4 + $0x3c] sm:$0xf]
  %v2975 = vld [vmem:[%s4 + $0x40] sm:$0xf]
  %v2976 = vld [vmem:[%s4 + $0x44] sm:$0xf]
  %v2977 = vld [vmem:[%s4 + $0x48] sm:$0xf]
  %v2978 = vld [vmem:[%s4 + $0x4c] sm:$0xf]
  %v2979 = vld [vmem:[%s4 + $0x50] sm:$0xf]
  %v2980 = vld [vmem:[%s4 + $0x54] sm:$0xf]
  %v2981 = vld [vmem:[%s4 + $0x58] sm:$0xf]
  %v2982 = vld [vmem:[%s4 + $0x5c] sm:$0xf]
  %v2983 = vld [vmem:[%s4 + $0x60] sm:$0xf]
  %v2984 = vld [vmem:[%s4 + $0x64] sm:$0xf]
  %v2985 = vld [vmem:[%s4 + $0x68] sm:$0xf]
  %v2986 = vld [vmem:[%s4 + $0x6c] sm:$0xf]
  %v2987 = vld [vmem:[%s4 + $0x70] sm:$0xf]
  %v2988 = vld [vmem:[%s4 + $0x74] sm:$0xf]
  %v2989 = vld [vmem:[%s4 + $0x78] sm:$0xf]
  %v2990 = vld [vmem:[%s4 + $0x7c] sm:$0xf]
  %v2991 = vld [vmem:[%s13] sm:$0x1]
  %v2993 = vlaneseq
  %v2994 = vshrl.u32 %v2993, 7
  %v2995 = vsub.s32 0, %v2994
  %v2996 = vrot.slane %v2991, %v2995
  %v3030 = vunpack.c.l.b16 %v2959
  %v3031 = vunpack.c.l.b16 %v2960
  %v3032 = vunpack.c.l.b16 %v2961
  %v3033 = vunpack.c.l.b16 %v2962
  %v3034 = vunpack.c.l.b16 %v2963
  %v3035 = vunpack.c.l.b16 %v2964
  %v3036 = vunpack.c.l.b16 %v2965
  %v3037 = vunpack.c.l.b16 %v2966
  %v3038 = vunpack.c.l.b16 %v2967
  %v3039 = vunpack.c.l.b16 %v2968
  %v3040 = vunpack.c.l.b16 %v2969
  %v3041 = vunpack.c.l.b16 %v2970
  %v3042 = vunpack.c.l.b16 %v2971
  %v3043 = vunpack.c.l.b16 %v2972
  %v3044 = vunpack.c.l.b16 %v2973
  %v3045 = vunpack.c.l.b16 %v2974
  %v3046 = vunpack.c.l.b16 %v2975
  %v3047 = vunpack.c.l.b16 %v2976
  %v3048 = vunpack.c.l.b16 %v2977
  %v3049 = vunpack.c.l.b16 %v2978
  %v3050 = vunpack.c.l.b16 %v2979
  %v3051 = vunpack.c.l.b16 %v2980
  %v3052 = vunpack.c.l.b16 %v2981
  %v3053 = vunpack.c.l.b16 %v2982
  %v3054 = vunpack.c.l.b16 %v2983
  %v3055 = vunpack.c.l.b16 %v2984
  %v3056 = vunpack.c.l.b16 %v2985
  %v3057 = vunpack.c.l.b16 %v2986
  %v3058 = vunpack.c.l.b16 %v2987
  %v3059 = vunpack.c.l.b16 %v2988
  %v3060 = vunpack.c.l.b16 %v2989
  %v3061 = vunpack.c.l.b16 %v2990
  %v3062 = vpack.c.b16 %v3031, %v3030
  %v3063 = vpack.c.b16 %v3033, %v3032
  %v3064 = vpack.c.b16 %v3035, %v3034
  %v3065 = vpack.c.b16 %v3037, %v3036
  %v3066 = vpack.c.b16 %v3039, %v3038
  %v3067 = vpack.c.b16 %v3041, %v3040
  %v3068 = vpack.c.b16 %v3043, %v3042
  %v3069 = vpack.c.b16 %v3045, %v3044
  %v3070 = vpack.c.b16 %v3047, %v3046
  %v3071 = vpack.c.b16 %v3049, %v3048
  %v3072 = vpack.c.b16 %v3051, %v3050
  %v3073 = vpack.c.b16 %v3053, %v3052
  %v3074 = vpack.c.b16 %v3055, %v3054
  %v3075 = vpack.c.b16 %v3057, %v3056
  %v3076 = vpack.c.b16 %v3059, %v3058
  %v3077 = vpack.c.b16 %v3061, %v3060
  %3094 = vmatprep.subr.bf16.mxu0 0
  %3095 = vmatpush1.bf16.msra.mxu0 %v3062
  %3096 = vmatprep.subr.bf16.mxu0 0
  %3097 = vmatpush1.bf16.msra.mxu0 %v3063
  %3098 = vmatprep.subr.bf16.mxu0 0
  %3099 = vmatpush1.bf16.msra.mxu0 %v3064
  %3100 = vmatprep.subr.bf16.mxu0 0
  %3101 = vmatpush1.bf16.msra.mxu0 %v3065
  %3102 = vmatprep.subr.bf16.mxu0 0
  %3103 = vmatpush1.bf16.msra.mxu0 %v3066
  %3104 = vmatprep.subr.bf16.mxu0 0
  %3105 = vmatpush1.bf16.msra.mxu0 %v3067
  %3106 = vmatprep.subr.bf16.mxu0 0
  %3107 = vmatpush1.bf16.msra.mxu0 %v3068
  %3108 = vmatprep.subr.bf16.mxu0 0
  %3109 = vmatpush1.bf16.msra.mxu0 %v3069
  %3110 = vmatprep.subr.bf16.mxu0 0
  %3111 = vmatpush1.bf16.msra.mxu0 %v3070
  %3112 = vmatprep.subr.bf16.mxu0 0
  %3113 = vmatpush1.bf16.msra.mxu0 %v3071
  %3114 = vmatprep.subr.bf16.mxu0 0
  %3115 = vmatpush1.bf16.msra.mxu0 %v3072
  %3116 = vmatprep.subr.bf16.mxu0 0
  %3117 = vmatpush1.bf16.msra.mxu0 %v3073
  %3118 = vmatprep.subr.bf16.mxu0 0
  %3119 = vmatpush1.bf16.msra.mxu0 %v3074
  %3120 = vmatprep.subr.bf16.mxu0 0
  %3121 = vmatpush1.bf16.msra.mxu0 %v3075
  %3122 = vmatprep.subr.bf16.mxu0 0
  %3123 = vmatpush1.bf16.msra.mxu0 %v3076
  %3124 = vmatprep.subr.bf16.mxu0 0
  %3125 = vmatpush1.bf16.msra.mxu0 %v3077
  %3126 = vmatprep.mubr.bf16.mxu0 %v2944
  %3127 = vmatmul.mubr.bf16.gmra.mrb[0].mxu0 %v2943
  %v3128 = vpop.f32.mrb[0].mxu0
  %v3129 = vadd.f32 %v2996, %v3128
  %v3130 = vpop.f32.mrb[0].mxu0
  %v3131 = vpop.f32.mrb[0].mxu0
  %v3132 = vadd.f32 %v2996, %v3131
  %v3133 = vpop.f32.mrb[0].mxu0
  %3134 = vmatprep.mubr.bf16.mxu0 %v2946
  %3135 = vmatmul.mubr.bf16.gmra.mrb[0].mxu0 %v2945
  %v3136 = vpop.f32.mrb[0].mxu0
  %v3137 = vadd.f32 %v2996, %v3136
  %v3138 = vpop.f32.mrb[0].mxu0
  %v3139 = vpop.f32.mrb[0].mxu0
  %v3140 = vadd.f32 %v2996, %v3139
  %v3141 = vpop.f32.mrb[0].mxu0
  %3142 = vmatprep.mubr.bf16.mxu0 %v2948
  %3143 = vmatmul.mubr.bf16.gmra.mrb[0].mxu0 %v2947
  %v3144 = vpop.f32.mrb[0].mxu0
  %v3145 = vadd.f32 %v2996, %v3144
  %v3146 = vpop.f32.mrb[0].mxu0
  %v3147 = vpop.f32.mrb[0].mxu0
  %v3148 = vadd.f32 %v2996, %v3147
  %v3149 = vpop.f32.mrb[0].mxu0
  %3150 = vmatprep.mubr.bf16.mxu0 %v2950
  %3151 = vmatmul.mubr.bf16.gmra.mrb[0].mxu0 %v2949
  %v3152 = vpop.f32.mrb[0].mxu0
  %v3153 = vadd.f32 %v2996, %v3152
  %v3154 = vpop.f32.mrb[0].mxu0
  %v3155 = vpop.f32.mrb[0].mxu0
  %v3156 = vadd.f32 %v2996, %v3155
  %v3157 = vpop.f32.mrb[0].mxu0
  %3158 = vmatprep.mubr.bf16.mxu0 %v2952
  %3159 = vmatmul.mubr.bf16.gmra.mrb[0].mxu0 %v2951
  %v3160 = vpop.f32.mrb[0].mxu0
  %v3161 = vadd.f32 %v2996, %v3160
  %v3162 = vpop.f32.mrb[0].mxu0
  %v3163 = vpop.f32.mrb[0].mxu0
  %v3164 = vadd.f32 %v2996, %v3163
  %v3165 = vpop.f32.mrb[0].mxu0
  %3166 = vmatprep.mubr.bf16.mxu0 %v2954
  %3167 = vmatmul.mubr.bf16.gmra.mrb[0].mxu0 %v2953
  %v3168 = vpop.f32.mrb[0].mxu0
  %v3169 = vadd.f32 %v2996, %v3168
  %v3170 = vpop.f32.mrb[0].mxu0
  %v3171 = vpop.f32.mrb[0].mxu0
  %v3172 = vadd.f32 %v2996, %v3171
  %v3173 = vpop.f32.mrb[0].mxu0
  %3174 = vmatprep.mubr.bf16.mxu0 %v2956
  %3175 = vmatmul.mubr.bf16.gmra.mrb[0].mxu0 %v2955
  %v3176 = vpop.f32.mrb[0].mxu0
  %v3177 = vadd.f32 %v2996, %v3176
  %v3178 = vpop.f32.mrb[0].mxu0
  %v3179 = vpop.f32.mrb[0].mxu0
  %v3180 = vadd.f32 %v2996, %v3179
  %v3181 = vpop.f32.mrb[0].mxu0
  %3182 = vmatprep.mubr.bf16.mxu0 %v2958
  %3183 = vmatmul.mubr.bf16.gmra.mrb[0].mxu0 %v2957
  %v3184 = vpop.f32.mrb[0].mxu0
  %v3185 = vadd.f32 %v2996, %v3184
  %v3186 = vpop.f32.mrb[0].mxu0
  %v3187 = vpop.f32.mrb[0].mxu0
  %v3188 = vadd.f32 %v2996, %v3187
  %v3189 = vpop.f32.mrb[0].mxu0
  %3190 = vdwg.mxu0
  %3191 = vst [vmem:[#allocation4] sm:$0xff] %v3129
  %3192 = vst [vmem:[#allocation4 + $0x8] sm:$0xff] %v3132
  %3193 = vst [vmem:[#allocation4 + $0x10] sm:$0xff] %v3137
  %3194 = vst [vmem:[#allocation4 + $0x18] sm:$0xff] %v3140
  %3195 = vst [vmem:[#allocation4 + $0x20] sm:$0xff] %v3145
  %3196 = vst [vmem:[#allocation4 + $0x28] sm:$0xff] %v3148
  %3197 = vst [vmem:[#allocation4 + $0x30] sm:$0xff] %v3153
  %3198 = vst [vmem:[#allocation4 + $0x38] sm:$0xff] %v3156
  %3199 = vst [vmem:[#allocation4 + $0x40] sm:$0xff] %v3161
  %3200 = vst [vmem:[#allocation4 + $0x48] sm:$0xff] %v3164
  %3201 = vst [vmem:[#allocation4 + $0x50] sm:$0xff] %v3169
  %3202 = vst [vmem:[#allocation4 + $0x58] sm:$0xff] %v3172
  %3203 = vst [vmem:[#allocation4 + $0x60] sm:$0xff] %v3177
  %3204 = vst [vmem:[#allocation4 + $0x68] sm:$0xff] %v3180
  %3205 = vst [vmem:[#allocation4 + $0x70] sm:$0xff] %v3185
  %3206 = vst [vmem:[#allocation4 + $0x78] sm:$0xff] %v3188
  %v3207 = vld [vmem:[%s5] sm:$0xf]
  %v3208 = vld [vmem:[%s5 + $0x4] sm:$0xf]
  %v3209 = vld [vmem:[%s5 + $0x8] sm:$0xf]
  %v3210 = vld [vmem:[%s5 + $0xc] sm:$0xf]
  %v3211 = vld [vmem:[%s5 + $0x10] sm:$0xf]
  %v3212 = vld [vmem:[%s5 + $0x14] sm:$0xf]
  %v3213 = vld [vmem:[%s5 + $0x18] sm:$0xf]
  %v3214 = vld [vmem:[%s5 + $0x1c] sm:$0xf]
  %v3215 = vld [vmem:[%s5 + $0x20] sm:$0xf]
  %v3216 = vld [vmem:[%s5 + $0x24] sm:$0xf]
  %v3217 = vld [vmem:[%s5 + $0x28] sm:$0xf]
  %v3218 = vld [vmem:[%s5 + $0x2c] sm:$0xf]
  %v3219 = vld [vmem:[%s5 + $0x30] sm:$0xf]
  %v3220 = vld [vmem:[%s5 + $0x34] sm:$0xf]
  %v3221 = vld [vmem:[%s5 + $0x38] sm:$0xf]
  %v3222 = vld [vmem:[%s5 + $0x3c] sm:$0xf]
  %v3223 = vld [vmem:[%s5 + $0x40] sm:$0xf]
  %v3224 = vld [vmem:[%s5 + $0x44] sm:$0xf]
  %v3225 = vld [vmem:[%s5 + $0x48] sm:$0xf]
  %v3226 = vld [vmem:[%s5 + $0x4c] sm:$0xf]
  %v3227 = vld [vmem:[%s5 + $0x50] sm:$0xf]
  %v3228 = vld [vmem:[%s5 + $0x54] sm:$0xf]
  %v3229 = vld [vmem:[%s5 + $0x58] sm:$0xf]
  %v3230 = vld [vmem:[%s5 + $0x5c] sm:$0xf]
  %v3231 = vld [vmem:[%s5 + $0x60] sm:$0xf]
  %v3232 = vld [vmem:[%s5 + $0x64] sm:$0xf]
  %v3233 = vld [vmem:[%s5 + $0x68] sm:$0xf]
  %v3234 = vld [vmem:[%s5 + $0x6c] sm:$0xf]
  %v3235 = vld [vmem:[%s5 + $0x70] sm:$0xf]
  %v3236 = vld [vmem:[%s5 + $0x74] sm:$0xf]
  %v3237 = vld [vmem:[%s5 + $0x78] sm:$0xf]
  %v3238 = vld [vmem:[%s5 + $0x7c] sm:$0xf]
  %v3239 = vld [vmem:[%s14] sm:$0x1]
  %v3241 = vlaneseq
  %v3242 = vshrl.u32 %v3241, 7
  %v3243 = vsub.s32 0, %v3242
  %v3244 = vrot.slane %v3239, %v3243
  %v3278 = vunpack.c.l.b16 %v3207
  %v3279 = vunpack.c.l.b16 %v3208
  %v3280 = vunpack.c.l.b16 %v3209
  %v3281 = vunpack.c.l.b16 %v3210
  %v3282 = vunpack.c.l.b16 %v3211
  %v3283 = vunpack.c.l.b16 %v3212
  %v3284 = vunpack.c.l.b16 %v3213
  %v3285 = vunpack.c.l.b16 %v3214
  %v3286 = vunpack.c.l.b16 %v3215
  %v3287 = vunpack.c.l.b16 %v3216
  %v3288 = vunpack.c.l.b16 %v3217
  %v3289 = vunpack.c.l.b16 %v3218
  %v3290 = vunpack.c.l.b16 %v3219
  %v3291 = vunpack.c.l.b16 %v3220
  %v3292 = vunpack.c.l.b16 %v3221
  %v3293 = vunpack.c.l.b16 %v3222
  %v3294 = vunpack.c.l.b16 %v3223
  %v3295 = vunpack.c.l.b16 %v3224
  %v3296 = vunpack.c.l.b16 %v3225
  %v3297 = vunpack.c.l.b16 %v3226
  %v3298 = vunpack.c.l.b16 %v3227
  %v3299 = vunpack.c.l.b16 %v3228
  %v3300 = vunpack.c.l.b16 %v3229
  %v3301 = vunpack.c.l.b16 %v3230
  %v3302 = vunpack.c.l.b16 %v3231
  %v3303 = vunpack.c.l.b16 %v3232
  %v3304 = vunpack.c.l.b16 %v3233
  %v3305 = vunpack.c.l.b16 %v3234
  %v3306 = vunpack.c.l.b16 %v3235
  %v3307 = vunpack.c.l.b16 %v3236
  %v3308 = vunpack.c.l.b16 %v3237
  %v3309 = vunpack.c.l.b16 %v3238
  %v3310 = vpack.c.b16 %v3279, %v3278
  %v3311 = vpack.c.b16 %v3281, %v3280
  %v3312 = vpack.c.b16 %v3283, %v3282
  %v3313 = vpack.c.b16 %v3285, %v3284
  %v3314 = vpack.c.b16 %v3287, %v3286
  %v3315 = vpack.c.b16 %v3289, %v3288
  %v3316 = vpack.c.b16 %v3291, %v3290
  %v3317 = vpack.c.b16 %v3293, %v3292
  %v3318 = vpack.c.b16 %v3295, %v3294
  %v3319 = vpack.c.b16 %v3297, %v3296
  %v3320 = vpack.c.b16 %v3299, %v3298
  %v3321 = vpack.c.b16 %v3301, %v3300
  %v3322 = vpack.c.b16 %v3303, %v3302
  %v3323 = vpack.c.b16 %v3305, %v3304
  %v3324 = vpack.c.b16 %v3307, %v3306
  %v3325 = vpack.c.b16 %v3309, %v3308
  %3342 = vmatprep.subr.bf16.mxu0 0
  %3343 = vmatpush1.bf16.msra.mxu0 %v3310
  %3344 = vmatprep.subr.bf16.mxu0 0
  %3345 = vmatpush1.bf16.msra.mxu0 %v3311
  %3346 = vmatprep.subr.bf16.mxu0 0
  %3347 = vmatpush1.bf16.msra.mxu0 %v3312
  %3348 = vmatprep.subr.bf16.mxu0 0
  %3349 = vmatpush1.bf16.msra.mxu0 %v3313
  %3350 = vmatprep.subr.bf16.mxu0 0
  %3351 = vmatpush1.bf16.msra.mxu0 %v3314
  %3352 = vmatprep.subr.bf16.mxu0 0
  %3353 = vmatpush1.bf16.msra.mxu0 %v3315
  %3354 = vmatprep.subr.bf16.mxu0 0
  %3355 = vmatpush1.bf16.msra.mxu0 %v3316
  %3356 = vmatprep.subr.bf16.mxu0 0
  %3357 = vmatpush1.bf16.msra.mxu0 %v3317
  %3358 = vmatprep.subr.bf16.mxu0 0
  %3359 = vmatpush1.bf16.msra.mxu0 %v3318
  %3360 = vmatprep.subr.bf16.mxu0 0
  %3361 = vmatpush1.bf16.msra.mxu0 %v3319
  %3362 = vmatprep.subr.bf16.mxu0 0
  %3363 = vmatpush1.bf16.msra.mxu0 %v3320
  %3364 = vmatprep.subr.bf16.mxu0 0
  %3365 = vmatpush1.bf16.msra.mxu0 %v3321
  %3366 = vmatprep.subr.bf16.mxu0 0
  %3367 = vmatpush1.bf16.msra.mxu0 %v3322
  %3368 = vmatprep.subr.bf16.mxu0 0
  %3369 = vmatpush1.bf16.msra.mxu0 %v3323
  %3370 = vmatprep.subr.bf16.mxu0 0
  %3371 = vmatpush1.bf16.msra.mxu0 %v3324
  %3372 = vmatprep.subr.bf16.mxu0 0
  %3373 = vmatpush1.bf16.msra.mxu0 %v3325
  %3374 = vmatprep.mubr.bf16.mxu0 %v2944
  %3375 = vmatmul.mubr.bf16.gmra.mrb[0].mxu0 %v2943
  %v3376 = vpop.f32.mrb[0].mxu0
  %v3377 = vadd.f32 %v3244, %v3376
  %v3378 = vpop.f32.mrb[0].mxu0
  %v3379 = vpop.f32.mrb[0].mxu0
  %v3380 = vadd.f32 %v3244, %v3379
  %v3381 = vpop.f32.mrb[0].mxu0
  %3382 = vmatprep.mubr.bf16.mxu0 %v2946
  %3383 = vmatmul.mubr.bf16.gmra.mrb[0].mxu0 %v2945
  %v3384 = vpop.f32.mrb[0].mxu0
  %v3385 = vadd.f32 %v3244, %v3384
  %v3386 = vpop.f32.mrb[0].mxu0
  %v3387 = vpop.f32.mrb[0].mxu0
  %v3388 = vadd.f32 %v3244, %v3387
  %v3389 = vpop.f32.mrb[0].mxu0
  %3390 = vmatprep.mubr.bf16.mxu0 %v2948
  %3391 = vmatmul.mubr.bf16.gmra.mrb[0].mxu0 %v2947
  %v3392 = vpop.f32.mrb[0].mxu0
  %v3393 = vadd.f32 %v3244, %v3392
  %v3394 = vpop.f32.mrb[0].mxu0
  %v3395 = vpop.f32.mrb[0].mxu0
  %v3396 = vadd.f32 %v3244, %v3395
  %v3397 = vpop.f32.mrb[0].mxu0
  %3398 = vmatprep.mubr.bf16.mxu0 %v2950
  %3399 = vmatmul.mubr.bf16.gmra.mrb[0].mxu0 %v2949
  %v3400 = vpop.f32.mrb[0].mxu0
  %v3401 = vadd.f32 %v3244, %v3400
  %v3402 = vpop.f32.mrb[0].mxu0
  %v3403 = vpop.f32.mrb[0].mxu0
  %v3404 = vadd.f32 %v3244, %v3403
  %v3405 = vpop.f32.mrb[0].mxu0
  %3406 = vmatprep.mubr.bf16.mxu0 %v2952
  %3407 = vmatmul.mubr.bf16.gmra.mrb[0].mxu0 %v2951
  %v3408 = vpop.f32.mrb[0].mxu0
  %v3409 = vadd.f32 %v3244, %v3408
  %v3410 = vpop.f32.mrb[0].mxu0
  %v3411 = vpop.f32.mrb[0].mxu0
  %v3412 = vadd.f32 %v3244, %v3411
  %v3413 = vpop.f32.mrb[0].mxu0
  %3414 = vmatprep.mubr.bf16.mxu0 %v2954
  %3415 = vmatmul.mubr.bf16.gmra.mrb[0].mxu0 %v2953
  %v3416 = vpop.f32.mrb[0].mxu0
  %v3417 = vadd.f32 %v3244, %v3416
  %v3418 = vpop.f32.mrb[0].mxu0
  %v3419 = vpop.f32.mrb[0].mxu0
  %v3420 = vadd.f32 %v3244, %v3419
  %v3421 = vpop.f32.mrb[0].mxu0
  %3422 = vmatprep.mubr.bf16.mxu0 %v2956
  %3423 = vmatmul.mubr.bf16.gmra.mrb[0].mxu0 %v2955
  %v3424 = vpop.f32.mrb[0].mxu0
  %v3425 = vadd.f32 %v3244, %v3424
  %v3426 = vpop.f32.mrb[0].mxu0
  %v3427 = vpop.f32.mrb[0].mxu0
  %v3428 = vadd.f32 %v3244, %v3427
  %v3429 = vpop.f32.mrb[0].mxu0
  %3430 = vmatprep.mubr.bf16.mxu0 %v2958
  %3431 = vmatmul.mubr.bf16.gmra.mrb[0].mxu0 %v2957
  %v3432 = vpop.f32.mrb[0].mxu0
  %v3433 = vadd.f32 %v3244, %v3432
  %v3434 = vpop.f32.mrb[0].mxu0
  %v3435 = vpop.f32.mrb[0].mxu0
  %v3436 = vadd.f32 %v3244, %v3435
  %v3437 = vpop.f32.mrb[0].mxu0
  %3438 = vdwg.mxu0
  %3439 = vst [vmem:[#allocation5] sm:$0xff] %v3377
  %3440 = vst [vmem:[#allocation5 + $0x8] sm:$0xff] %v3380
  %3441 = vst [vmem:[#allocation5 + $0x10] sm:$0xff] %v3385
  %3442 = vst [vmem:[#allocation5 + $0x18] sm:$0xff] %v3388
  %3443 = vst [vmem:[#allocation5 + $0x20] sm:$0xff] %v3393
  %3444 = vst [vmem:[#allocation5 + $0x28] sm:$0xff] %v3396
  %3445 = vst [vmem:[#allocation5 + $0x30] sm:$0xff] %v3401
  %3446 = vst [vmem:[#allocation5 + $0x38] sm:$0xff] %v3404
  %3447 = vst [vmem:[#allocation5 + $0x40] sm:$0xff] %v3409
  %3448 = vst [vmem:[#allocation5 + $0x48] sm:$0xff] %v3412
  %3449 = vst [vmem:[#allocation5 + $0x50] sm:$0xff] %v3417
  %3450 = vst [vmem:[#allocation5 + $0x58] sm:$0xff] %v3420
  %3451 = vst [vmem:[#allocation5 + $0x60] sm:$0xff] %v3425
  %3452 = vst [vmem:[#allocation5 + $0x68] sm:$0xff] %v3428
  %3453 = vst [vmem:[#allocation5 + $0x70] sm:$0xff] %v3433
  %3454 = vst [vmem:[#allocation5 + $0x78] sm:$0xff] %v3436
  %v3455 = vld [vmem:[#allocation4] sm:$0xff]
  %v3456 = vld [vmem:[#allocation4 + $0x8] sm:$0xff]
  %v3457 = vld [vmem:[%s8] sm:$0xf]
  %v3458 = vld [vmem:[%s8 + $0x4] sm:$0xf]
  %v3459 = vld [vmem:[%s8 + $0x8] sm:$0xf]
  %v3460 = vld [vmem:[%s8 + $0xc] sm:$0xf]
  %v3461 = vld [vmem:[%s8 + $0x10] sm:$0xf]
  %v3462 = vld [vmem:[%s8 + $0x14] sm:$0xf]
  %v3463 = vld [vmem:[%s8 + $0x18] sm:$0xf]
  %v3464 = vld [vmem:[%s8 + $0x1c] sm:$0xf]
  %v3465 = vld [vmem:[%s8 + $0x20] sm:$0xf]
  %v3466 = vld [vmem:[%s8 + $0x24] sm:$0xf]
  %v3467 = vld [vmem:[%s8 + $0x28] sm:$0xf]
  %v3468 = vld [vmem:[%s8 + $0x2c] sm:$0xf]
  %v3469 = vld [vmem:[%s8 + $0x30] sm:$0xf]
  %v3470 = vld [vmem:[%s8 + $0x34] sm:$0xf]
  %v3471 = vld [vmem:[%s8 + $0x38] sm:$0xf]
  %v3472 = vld [vmem:[%s8 + $0x3c] sm:$0xf]
  %v3489 = vunpack.c.l.b16 %v3457
  %v3490 = vunpack.c.l.b16 %v3458
  %v3491 = vunpack.c.l.b16 %v3459
  %v3492 = vunpack.c.l.b16 %v3460
  %v3493 = vunpack.c.l.b16 %v3461
  %v3494 = vunpack.c.l.b16 %v3462
  %v3495 = vunpack.c.l.b16 %v3463
  %v3496 = vunpack.c.l.b16 %v3464
  %v3497 = vunpack.c.l.b16 %v3465
  %v3498 = vunpack.c.l.b16 %v3466
  %v3499 = vunpack.c.l.b16 %v3467
  %v3500 = vunpack.c.l.b16 %v3468
  %v3501 = vunpack.c.l.b16 %v3469
  %v3502 = vunpack.c.l.b16 %v3470
  %v3503 = vunpack.c.l.b16 %v3471
  %v3504 = vunpack.c.l.b16 %v3472
  %v3505 = vpack.c.b16 %v3490, %v3489
  %v3506 = vpack.c.b16 %v3492, %v3491
  %v3507 = vpack.c.b16 %v3494, %v3493
  %v3508 = vpack.c.b16 %v3496, %v3495
  %v3509 = vpack.c.b16 %v3498, %v3497
  %v3510 = vpack.c.b16 %v3500, %v3499
  %v3511 = vpack.c.b16 %v3502, %v3501
  %v3512 = vpack.c.b16 %v3504, %v3503
  %3521 = vmatprep.subr.bf16.mxu0 0
  %3522 = vmatpush1.bf16.msra.mxu0 %v3505
  %3523 = vmatprep.subr.bf16.mxu0 0
  %3524 = vmatpush1.bf16.msra.mxu0 %v3506
  %3525 = vmatprep.subr.bf16.mxu0 0
  %3526 = vmatpush1.bf16.msra.mxu0 %v3507
  %3527 = vmatprep.subr.bf16.mxu0 0
  %3528 = vmatpush1.bf16.msra.mxu0 %v3508
  %3529 = vmatprep.subr.bf16.mxu0 0
  %3530 = vmatpush1.bf16.msra.mxu0 %v3509
  %3531 = vmatprep.subr.bf16.mxu0 0
  %3532 = vmatpush1.bf16.msra.mxu0 %v3510
  %3533 = vmatprep.subr.bf16.mxu0 0
  %3534 = vmatpush1.bf16.msra.mxu0 %v3511
  %3535 = vmatprep.subr.bf16.mxu0 0
  %3536 = vmatpush1.bf16.msra.mxu0 %v3512
  %3537 = vmatprep.subr.bf16.mxu0 0
  %3538 = vmatpush1.bf16.msra.mxu0 0
  %3539 = vmatprep.subr.bf16.mxu0 0
  %3540 = vmatpush1.bf16.msra.mxu0 0
  %3541 = vmatprep.subr.bf16.mxu0 0
  %3542 = vmatpush1.bf16.msra.mxu0 0
  %3543 = vmatprep.subr.bf16.mxu0 0
  %3544 = vmatpush1.bf16.msra.mxu0 0
  %3545 = vmatprep.subr.bf16.mxu0 0
  %3546 = vmatpush1.bf16.msra.mxu0 0
  %3547 = vmatprep.subr.bf16.mxu0 0
  %3548 = vmatpush1.bf16.msra.mxu0 0
  %3549 = vmatprep.subr.bf16.mxu0 0
  %3550 = vmatpush1.bf16.msra.mxu0 0
  %3551 = vmatprep.subr.bf16.mxu0 0
  %3552 = vmatpush1.bf16.msra.mxu0 0
  %3553 = vmatprep.mubr.bf16.mxu0 0
  %3554 = vmatmul.mubr.bf16.gmra.mrb[0].mxu0 0
  %v3555 = vpop.f32.mrb[0].mxu0
  %v3556 = vadd.f32 0.0, %v3555
  %v3557 = vpop.f32.mrb[0].mxu0
  %v3558 = vpop.f32.mrb[0].mxu0
  %v3559 = vadd.f32 0.0, %v3558
  %v3560 = vpop.f32.mrb[0].mxu0
  %3561 = vdwg.mxu0
  %v3562 = vadd.f32 %v3455, %v3556
  %v3563 = vadd.f32 %v3456, %v3559
  %v3564 = vxor.u32 %v3562, 2147483648
  %v3565 = vxor.u32 %v3563, 2147483648
  %v3566 = vmul.f32 %v3564, 1.442695
  %v3567 = vpow.pop %v3566
  %v3568 = vmul.f32 %v3565, 1.442695
  %v3569 = vpow.pop %v3568
  %v3570 = vadd.f32 %v3567, 1.0
  %v3571 = vadd.f32 %v3569, 1.0
  %v3572 = vrcp.pop %v3570
  %v3573 = vmul.f32 1.0, %v3572
  %v3574 = vrcp.pop %v3571
  %v3575 = vmul.f32 1.0, %v3574
  %v3576 = vtanh.pop %v3562
  %v3577 = vtanh.pop %v3563
  %3578 = vrot.lane.b32.xlu0 %v3573, 16
  %v3579 = vpop.permute.xlu0 %3578
  %3580 = vrot.lane.b32.xlu0 %v3575, 16
  %v3581 = vpop.permute.xlu0 %3580
  %3582 = vrot.lane.b32.xlu0 %v3576, 32
  %v3583 = vpop.permute.xlu0 %3582
  %3584 = vrot.lane.b32.xlu0 %v3577, 32
  %v3585 = vpop.permute.xlu0 %3584
  %3586 = vrot.lane.b32.xlu0 %v3573, 48
  %v3587 = vpop.permute.xlu0 %3586
  %3588 = vrot.lane.b32.xlu0 %v3575, 48
  %v3589 = vpop.permute.xlu0 %3588
  %v3590 = vmul.f32 %v3579, 0.0
  %v3591 = vmul.f32 %v3581, 0.0
  %v3592 = vmul.f32 %v3573, %v3583
  %v3593 = vmul.f32 %v3575, %v3585
  %v3594 = vadd.f32 %v3590, %v3592
  %v3595 = vadd.f32 %v3591, %v3593
  %v3596 = vtanh.pop %v3594
  %v3597 = vtanh.pop %v3595
  %v3598 = vmul.f32 %v3587, %v3596
  %v3599 = vmul.f32 %v3589, %v3597
  %v3600 = vsel %vm448, %v3598, 0.0
  %v3601 = vsel %vm449, %v3599, 0.0
  %v3602 = vsel %vm448, %v3594, 0.0
  %v3603 = vsel %vm449, %v3595, 0.0
  %3604 = vst [vmem:[#allocation7] sm:$0xff] %v3600
  %3605 = vst [vmem:[#allocation7 + $0x10] sm:$0xff] %v3601
  %s3606 = scalar_lea.vmem [#allocation5], 112
  %v3607 = vld [vmem:[%s3606] sm:$0xff]
  %v3608 = vld [vmem:[%s3606 + $0x8] sm:$0xff]
  %v3609 = vld [vmem:[%s9] sm:$0xf]
  %v3610 = vld [vmem:[%s9 + $0x4] sm:$0xf]
  %v3611 = vld [vmem:[%s9 + $0x8] sm:$0xf]
  %v3612 = vld [vmem:[%s9 + $0xc] sm:$0xf]
  %v3613 = vld [vmem:[%s9 + $0x10] sm:$0xf]
  %v3614 = vld [vmem:[%s9 + $0x14] sm:$0xf]
  %v3615 = vld [vmem:[%s9 + $0x18] sm:$0xf]
  %v3616 = vld [vmem:[%s9 + $0x1c] sm:$0xf]
  %v3617 = vld [vmem:[%s9 + $0x20] sm:$0xf]
  %v3618 = vld [vmem:[%s9 + $0x24] sm:$0xf]
  %v3619 = vld [vmem:[%s9 + $0x28] sm:$0xf]
  %v3620 = vld [vmem:[%s9 + $0x2c] sm:$0xf]
  %v3621 = vld [vmem:[%s9 + $0x30] sm:$0xf]
  %v3622 = vld [vmem:[%s9 + $0x34] sm:$0xf]
  %v3623 = vld [vmem:[%s9 + $0x38] sm:$0xf]
  %v3624 = vld [vmem:[%s9 + $0x3c] sm:$0xf]
  %v3641 = vunpack.c.l.b16 %v3609
  %v3642 = vunpack.c.l.b16 %v3610
  %v3643 = vunpack.c.l.b16 %v3611
  %v3644 = vunpack.c.l.b16 %v3612
  %v3645 = vunpack.c.l.b16 %v3613
  %v3646 = vunpack.c.l.b16 %v3614
  %v3647 = vunpack.c.l.b16 %v3615
  %v3648 = vunpack.c.l.b16 %v3616
  %v3649 = vunpack.c.l.b16 %v3617
  %v3650 = vunpack.c.l.b16 %v3618
  %v3651 = vunpack.c.l.b16 %v3619
  %v3652 = vunpack.c.l.b16 %v3620
  %v3653 = vunpack.c.l.b16 %v3621
  %v3654 = vunpack.c.l.b16 %v3622
  %v3655 = vunpack.c.l.b16 %v3623
  %v3656 = vunpack.c.l.b16 %v3624
  %v3657 = vpack.c.b16 %v3642, %v3641
  %v3658 = vpack.c.b16 %v3644, %v3643
  %v3659 = vpack.c.b16 %v3646, %v3645
  %v3660 = vpack.c.b16 %v3648, %v3647
  %v3661 = vpack.c.b16 %v3650, %v3649
  %v3662 = vpack.c.b16 %v3652, %v3651
  %v3663 = vpack.c.b16 %v3654, %v3653
  %v3664 = vpack.c.b16 %v3656, %v3655
  %3673 = vmatprep.subr.bf16.mxu0 0
  %3674 = vmatpush1.bf16.msra.mxu0 %v3657
  %3675 = vmatprep.subr.bf16.mxu0 0
  %3676 = vmatpush1.bf16.msra.mxu0 %v3658
  %3677 = vmatprep.subr.bf16.mxu0 0
  %3678 = vmatpush1.bf16.msra.mxu0 %v3659
  %3679 = vmatprep.subr.bf16.mxu0 0
  %3680 = vmatpush1.bf16.msra.mxu0 %v3660
  %3681 = vmatprep.subr.bf16.mxu0 0
  %3682 = vmatpush1.bf16.msra.mxu0 %v3661
  %3683 = vmatprep.subr.bf16.mxu0 0
  %3684 = vmatpush1.bf16.msra.mxu0 %v3662
  %3685 = vmatprep.subr.bf16.mxu0 0
  %3686 = vmatpush1.bf16.msra.mxu0 %v3663
  %3687 = vmatprep.subr.bf16.mxu0 0
  %3688 = vmatpush1.bf16.msra.mxu0 %v3664
  %3689 = vmatprep.subr.bf16.mxu0 0
  %3690 = vmatpush1.bf16.msra.mxu0 0
  %3691 = vmatprep.subr.bf16.mxu0 0
  %3692 = vmatpush1.bf16.msra.mxu0 0
  %3693 = vmatprep.subr.bf16.mxu0 0
  %3694 = vmatpush1.bf16.msra.mxu0 0
  %3695 = vmatprep.subr.bf16.mxu0 0
  %3696 = vmatpush1.bf16.msra.mxu0 0
  %3697 = vmatprep.subr.bf16.mxu0 0
  %3698 = vmatpush1.bf16.msra.mxu0 0
  %3699 = vmatprep.subr.bf16.mxu0 0
  %3700 = vmatpush1.bf16.msra.mxu0 0
  %3701 = vmatprep.subr.bf16.mxu0 0
  %3702 = vmatpush1.bf16.msra.mxu0 0
  %3703 = vmatprep.subr.bf16.mxu0 0
  %3704 = vmatpush1.bf16.msra.mxu0 0
  %3705 = vmatprep.mubr.bf16.mxu0 0
  %3706 = vmatmul.mubr.bf16.gmra.mrb[0].mxu0 0
  %v3707 = vpop.f32.mrb[0].mxu0
  %v3708 = vadd.f32 0.0, %v3707
  %v3709 = vpop.f32.mrb[0].mxu0
  %v3710 = vpop.f32.mrb[0].mxu0
  %v3711 = vadd.f32 0.0, %v3710
  %v3712 = vpop.f32.mrb[0].mxu0
  %3713 = vdwg.mxu0
  %v3714 = vadd.f32 %v3607, %v3708
  %v3715 = vadd.f32 %v3608, %v3711
  %v3716 = vxor.u32 %v3714, 2147483648
  %v3717 = vxor.u32 %v3715, 2147483648
  %v3718 = vmul.f32 %v3716, 1.442695
  %v3719 = vpow.pop %v3718
  %v3720 = vmul.f32 %v3717, 1.442695
  %v3721 = vpow.pop %v3720
  %v3722 = vadd.f32 %v3719, 1.0
  %v3723 = vadd.f32 %v3721, 1.0
  %v3724 = vrcp.pop %v3722
  %v3725 = vmul.f32 1.0, %v3724
  %v3726 = vrcp.pop %v3723
  %v3727 = vmul.f32 1.0, %v3726
  %v3728 = vtanh.pop %v3714
  %v3729 = vtanh.pop %v3715
  %3730 = vrot.lane.b32.xlu0 %v3725, 16
  %v3731 = vpop.permute.xlu0 %3730
  %3732 = vrot.lane.b32.xlu0 %v3727, 16
  %v3733 = vpop.permute.xlu0 %3732
  %3734 = vrot.lane.b32.xlu0 %v3728, 32
  %v3735 = vpop.permute.xlu0 %3734
  %3736 = vrot.lane.b32.xlu0 %v3729, 32
  %v3737 = vpop.permute.xlu0 %3736
  %3738 = vrot.lane.b32.xlu0 %v3725, 48
  %v3739 = vpop.permute.xlu0 %3738
  %3740 = vrot.lane.b32.xlu0 %v3727, 48
  %v3741 = vpop.permute.xlu0 %3740
  %v3742 = vmul.f32 %v3731, 0.0
  %v3743 = vmul.f32 %v3733, 0.0
  %v3744 = vmul.f32 %v3725, %v3735
  %v3745 = vmul.f32 %v3727, %v3737
  %v3746 = vadd.f32 %v3742, %v3744
  %v3747 = vadd.f32 %v3743, %v3745
  %v3748 = vtanh.pop %v3746
  %v3749 = vtanh.pop %v3747
  %v3750 = vmul.f32 %v3739, %v3748
  %v3751 = vmul.f32 %v3741, %v3749
  %v3752 = vsel %vm450, %v3750, 0.0
  %v3753 = vsel %vm451, %v3751, 0.0
  %v3754 = vsel %vm450, %v3746, 0.0
  %v3755 = vsel %vm451, %v3747, 0.0
  %s3756 = scalar_lea.vmem [#allocation7], 224
  %3757 = vst [vmem:[%s3756 + $0x8] sm:$0xff] %v3752
  %3758 = vst [vmem:[%s3756 + $0x18] sm:$0xff] %v3753
  %s3759 = scalar_lea.vmem [#allocation4], 16
  %v3760 = vld [vmem:[%s3759] sm:$0xff]
  %v3761 = vld [vmem:[%s3759 + $0x8] sm:$0xff]
  %v3762 = vpack.c.bf16 %v3601, %v3600
  %v3763 = vld [vmem:[%s8] sm:$0xf]
  %v3764 = vld [vmem:[%s8 + $0x4] sm:$0xf]
  %v3765 = vld [vmem:[%s8 + $0x8] sm:$0xf]
  %v3766 = vld [vmem:[%s8 + $0xc] sm:$0xf]
  %v3767 = vld [vmem:[%s8 + $0x10] sm:$0xf]
  %v3768 = vld [vmem:[%s8 + $0x14] sm:$0xf]
  %v3769 = vld [vmem:[%s8 + $0x18] sm:$0xf]
  %v3770 = vld [vmem:[%s8 + $0x1c] sm:$0xf]
  %v3771 = vld [vmem:[%s8 + $0x20] sm:$0xf]
  %v3772 = vld [vmem:[%s8 + $0x24] sm:$0xf]
  %v3773 = vld [vmem:[%s8 + $0x28] sm:$0xf]
  %v3774 = vld [vmem:[%s8 + $0x2c] sm:$0xf]
  %v3775 = vld [vmem:[%s8 + $0x30] sm:$0xf]
  %v3776 = vld [vmem:[%s8 + $0x34] sm:$0xf]
  %v3777 = vld [vmem:[%s8 + $0x38] sm:$0xf]
  %v3778 = vld [vmem:[%s8 + $0x3c] sm:$0xf]
  %v3795 = vunpack.c.l.b16 %v3763
  %v3796 = vunpack.c.l.b16 %v3764
  %v3797 = vunpack.c.l.b16 %v3765
  %v3798 = vunpack.c.l.b16 %v3766
  %v3799 = vunpack.c.l.b16 %v3767
  %v3800 = vunpack.c.l.b16 %v3768
  %v3801 = vunpack.c.l.b16 %v3769
  %v3802 = vunpack.c.l.b16 %v3770
  %v3803 = vunpack.c.l.b16 %v3771
  %v3804 = vunpack.c.l.b16 %v3772
  %v3805 = vunpack.c.l.b16 %v3773
  %v3806 = vunpack.c.l.b16 %v3774
  %v3807 = vunpack.c.l.b16 %v3775
  %v3808 = vunpack.c.l.b16 %v3776
  %v3809 = vunpack.c.l.b16 %v3777
  %v3810 = vunpack.c.l.b16 %v3778
  %v3811 = vpack.c.b16 %v3796, %v3795
  %v3812 = vpack.c.b16 %v3798, %v3797
  %v3813 = vpack.c.b16 %v3800, %v3799
  %v3814 = vpack.c.b16 %v3802, %v3801
  %v3815 = vpack.c.b16 %v3804, %v3803
  %v3816 = vpack.c.b16 %v3806, %v3805
  %v3817 = vpack.c.b16 %v3808, %v3807
  %v3818 = vpack.c.b16 %v3810, %v3809
  %3827 = vmatprep.subr.bf16.mxu0 0
  %3828 = vmatpush1.bf16.msra.mxu0 %v3811
  %3829 = vmatprep.subr.bf16.mxu0 0
  %3830 = vmatpush1.bf16.msra.mxu0 %v3812
  %3831 = vmatprep.subr.bf16.mxu0 0
  %3832 = vmatpush1.bf16.msra.mxu0 %v3813
  %3833 = vmatprep.subr.bf16.mxu0 0
  %3834 = vmatpush1.bf16.msra.mxu0 %v3814
  %3835 = vmatprep.subr.bf16.mxu0 0
  %3836 = vmatpush1.bf16.msra.mxu0 %v3815
  %3837 = vmatprep.subr.bf16.mxu0 0
  %3838 = vmatpush1.bf16.msra.mxu0 %v3816
  %3839 = vmatprep.subr.bf16.mxu0 0
  %3840 = vmatpush1.bf16.msra.mxu0 %v3817
  %3841 = vmatprep.subr.bf16.mxu0 0
  %3842 = vmatpush1.bf16.msra.mxu0 %v3818
  %3843 = vmatprep.subr.bf16.mxu0 0
  %3844 = vmatpush1.bf16.msra.mxu0 0
  %3845 = vmatprep.subr.bf16.mxu0 0
  %3846 = vmatpush1.bf16.msra.mxu0 0
  %3847 = vmatprep.subr.bf16.mxu0 0
  %3848 = vmatpush1.bf16.msra.mxu0 0
  %3849 = vmatprep.subr.bf16.mxu0 0
  %3850 = vmatpush1.bf16.msra.mxu0 0
  %3851 = vmatprep.subr.bf16.mxu0 0
  %3852 = vmatpush1.bf16.msra.mxu0 0
  %3853 = vmatprep.subr.bf16.mxu0 0
  %3854 = vmatpush1.bf16.msra.mxu0 0
  %3855 = vmatprep.subr.bf16.mxu0 0
  %3856 = vmatpush1.bf16.msra.mxu0 0
  %3857 = vmatprep.subr.bf16.mxu0 0
  %3858 = vmatpush1.bf16.msra.mxu0 0
  %3859 = vmatprep.mubr.bf16.mxu0 0
  %3860 = vmatmul.mubr.bf16.gmra.mrb[0].mxu0 %v3762
  %v3861 = vpop.f32.mrb[0].mxu0
  %v3862 = vadd.f32 0.0, %v3861
  %v3863 = vpop.f32.mrb[0].mxu0
  %v3864 = vpop.f32.mrb[0].mxu0
  %v3865 = vadd.f32 0.0, %v3864
  %v3866 = vpop.f32.mrb[0].mxu0
  %3867 = vdwg.mxu0
  %v3868 = vadd.f32 %v3760, %v3862
  %v3869 = vadd.f32 %v3761, %v3865
  %v3870 = vxor.u32 %v3868, 2147483648
  %v3871 = vxor.u32 %v3869, 2147483648
  %v3872 = vmul.f32 %v3870, 1.442695
  %v3873 = vpow.pop %v3872
  %v3874 = vmul.f32 %v3871, 1.442695
  %v3875 = vpow.pop %v3874
  %v3876 = vadd.f32 %v3873, 1.0
  %v3877 = vadd.f32 %v3875, 1.0
  %v3878 = vrcp.pop %v3876
  %v3879 = vmul.f32 1.0, %v3878
  %v3880 = vrcp.pop %v3877
  %v3881 = vmul.f32 1.0, %v3880
  %v3882 = vtanh.pop %v3868
  %v3883 = vtanh.pop %v3869
  %3884 = vrot.lane.b32.xlu0 %v3879, 16
  %v3885 = vpop.permute.xlu0 %3884
  %3886 = vrot.lane.b32.xlu0 %v3881, 16
  %v3887 = vpop.permute.xlu0 %3886
  %3888 = vrot.lane.b32.xlu0 %v3882, 32
  %v3889 = vpop.permute.xlu0 %3888
  %3890 = vrot.lane.b32.xlu0 %v3883, 32
  %v3891 = vpop.permute.xlu0 %3890
  %3892 = vrot.lane.b32.xlu0 %v3879, 48
  %v3893 = vpop.permute.xlu0 %3892
  %3894 = vrot.lane.b32.xlu0 %v3881, 48
  %v3895 = vpop.permute.xlu0 %3894
  %v3896 = vmul.f32 %v3885, %v3602
  %v3897 = vmul.f32 %v3887, %v3603
  %v3898 = vmul.f32 %v3879, %v3889
  %v3899 = vmul.f32 %v3881, %v3891
  %v3900 = vadd.f32 %v3896, %v3898
  %v3901 = vadd.f32 %v3897, %v3899
  %v3902 = vtanh.pop %v3900
  %v3903 = vtanh.pop %v3901
  %v3904 = vmul.f32 %v3893, %v3902
  %v3905 = vmul.f32 %v3895, %v3903
  %v3906 = vsel %vm756, %v3904, %v3600
  %v3907 = vsel %vm757, %v3905, %v3601
  %v3908 = vsel %vm756, %v3900, %v3602
  %v3909 = vsel %vm757, %v3901, %v3603
  %s3910 = scalar_lea.vmem [#allocation7], 32
  %3911 = vst [vmem:[%s3910] sm:$0xff] %v3906
  %3912 = vst [vmem:[%s3910 + $0x10] sm:$0xff] %v3907
  %s3913 = scalar_lea.vmem [#allocation5], 96
  %v3914 = vld [vmem:[%s3913] sm:$0xff]
  %v3915 = vld [vmem:[%s3913 + $0x8] sm:$0xff]
  %v3916 = vpack.c.bf16 %v3753, %v3752
  %v3917 = vld [vmem:[%s9] sm:$0xf]
  %v3918 = vld [vmem:[%s9 + $0x4] sm:$0xf]
  %v3919 = vld [vmem:[%s9 + $0x8] sm:$0xf]
  %v3920 = vld [vmem:[%s9 + $0xc] sm:$0xf]
  %v3921 = vld [vmem:[%s9 + $0x10] sm:$0xf]
  %v3922 = vld [vmem:[%s9 + $0x14] sm:$0xf]
  %v3923 = vld [vmem:[%s9 + $0x18] sm:$0xf]
  %v3924 = vld [vmem:[%s9 + $0x1c] sm:$0xf]
  %v3925 = vld [vmem:[%s9 + $0x20] sm:$0xf]
  %v3926 = vld [vmem:[%s9 + $0x24] sm:$0xf]
  %v3927 = vld [vmem:[%s9 + $0x28] sm:$0xf]
  %v3928 = vld [vmem:[%s9 + $0x2c] sm:$0xf]
  %v3929 = vld [vmem:[%s9 + $0x30] sm:$0xf]
  %v3930 = vld [vmem:[%s9 + $0x34] sm:$0xf]
  %v3931 = vld [vmem:[%s9 + $0x38] sm:$0xf]
  %v3932 = vld [vmem:[%s9 + $0x3c] sm:$0xf]
  %v3949 = vunpack.c.l.b16 %v3917
  %v3950 = vunpack.c.l.b16 %v3918
  %v3951 = vunpack.c.l.b16 %v3919
  %v3952 = vunpack.c.l.b16 %v3920
  %v3953 = vunpack.c.l.b16 %v3921
  %v3954 = vunpack.c.l.b16 %v3922
  %v3955 = vunpack.c.l.b16 %v3923
  %v3956 = vunpack.c.l.b16 %v3924
  %v3957 = vunpack.c.l.b16 %v3925
  %v3958 = vunpack.c.l.b16 %v3926
  %v3959 = vunpack.c.l.b16 %v3927
  %v3960 = vunpack.c.l.b16 %v3928
  %v3961 = vunpack.c.l.b16 %v3929
  %v3962 = vunpack.c.l.b16 %v3930
  %v3963 = vunpack.c.l.b16 %v3931
  %v3964 = vunpack.c.l.b16 %v3932
  %v3965 = vpack.c.b16 %v3950, %v3949
  %v3966 = vpack.c.b16 %v3952, %v3951
  %v3967 = vpack.c.b16 %v3954, %v3953
  %v3968 = vpack.c.b16 %v3956, %v3955
  %v3969 = vpack.c.b16 %v3958, %v3957
  %v3970 = vpack.c.b16 %v3960, %v3959
  %v3971 = vpack.c.b16 %v3962, %v3961
  %v3972 = vpack.c.b16 %v3964, %v3963
  %3981 = vmatprep.subr.bf16.mxu0 0
  %3982 = vmatpush1.bf16.msra.mxu0 %v3965
  %3983 = vmatprep.subr.bf16.mxu0 0
  %3984 = vmatpush1.bf16.msra.mxu0 %v3966
  %3985 = vmatprep.subr.bf16.mxu0 0
  %3986 = vmatpush1.bf16.msra.mxu0 %v3967
  %3987 = vmatprep.subr.bf16.mxu0 0
  %3988 = vmatpush1.bf16.msra.mxu0 %v3968
  %3989 = vmatprep.subr.bf16.mxu0 0
  %3990 = vmatpush1.bf16.msra.mxu0 %v3969
  %3991 = vmatprep.subr.bf16.mxu0 0
  %3992 = vmatpush1.bf16.msra.mxu0 %v3970
  %3993 = vmatprep.subr.bf16.mxu0 0
  %3994 = vmatpush1.bf16.msra.mxu0 %v3971
  %3995 = vmatprep.subr.bf16.mxu0 0
  %3996 = vmatpush1.bf16.msra.mxu0 %v3972
  %3997 = vmatprep.subr.bf16.mxu0 0
  %3998 = vmatpush1.bf16.msra.mxu0 0
  %3999 = vmatprep.subr.bf16.mxu0 0
  %4000 = vmatpush1.bf16.msra.mxu0 0
  %4001 = vmatprep.subr.bf16.mxu0 0
  %4002 = vmatpush1.bf16.msra.mxu0 0
  %4003 = vmatprep.subr.bf16.mxu0 0
  %4004 = vmatpush1.bf16.msra.mxu0 0
  %4005 = vmatprep.subr.bf16.mxu0 0
  %4006 = vmatpush1.bf16.msra.mxu0 0
  %4007 = vmatprep.subr.bf16.mxu0 0
  %4008 = vmatpush1.bf16.msra.mxu0 0
  %4009 = vmatprep.subr.bf16.mxu0 0
  %4010 = vmatpush1.bf16.msra.mxu0 0
  %4011 = vmatprep.subr.bf16.mxu0 0
  %4012 = vmatpush1.bf16.msra.mxu0 0
  %4013 = vmatprep.mubr.bf16.mxu0 0
  %4014 = vmatmul.mubr.bf16.gmra.mrb[0].mxu0 %v3916
  %v4015 = vpop.f32.mrb[0].mxu0
  %v4016 = vadd.f32 0.0, %v4015
  %v4017 = vpop.f32.mrb[0].mxu0
  %v4018 = vpop.f32.mrb[0].mxu0
  %v4019 = vadd.f32 0.0, %v4018
  %v4020 = vpop.f32.mrb[0].mxu0
  %4021 = vdwg.mxu0
  %v4022 = vadd.f32 %v3914, %v4016
  %v4023 = vadd.f32 %v3915, %v4019
  %v4024 = vxor.u32 %v4022, 2147483648
  %v4025 = vxor.u32 %v4023, 2147483648
  %v4026 = vmul.f32 %v4024, 1.442695
  %v4027 = vpow.pop %v4026
  %v4028 = vmul.f32 %v4025, 1.442695
  %v4029 = vpow.pop %v4028
  %v4030 = vadd.f32 %v4027, 1.0
  %v4031 = vadd.f32 %v4029, 1.0
  %v4032 = vrcp.pop %v4030
  %v4033 = vmul.f32 1.0, %v4032
  %v4034 = vrcp.pop %v4031
  %v4035 = vmul.f32 1.0, %v4034
  %v4036 = vtanh.pop %v4022
  %v4037 = vtanh.pop %v4023
  %4038 = vrot.lane.b32.xlu0 %v4033, 16
  %v4039 = vpop.permute.xlu0 %4038
  %4040 = vrot.lane.b32.xlu0 %v4035, 16
  %v4041 = vpop.permute.xlu0 %4040
  %4042 = vrot.lane.b32.xlu0 %v4036, 32
  %v4043 = vpop.permute.xlu0 %4042
  %4044 = vrot.lane.b32.xlu0 %v4037, 32
  %v4045 = vpop.permute.xlu0 %4044
  %4046 = vrot.lane.b32.xlu0 %v4033, 48
  %v4047 = vpop.permute.xlu0 %4046
  %4048 = vrot.lane.b32.xlu0 %v4035, 48
  %v4049 = vpop.permute.xlu0 %4048
  %v4050 = vmul.f32 %v4039, %v3754
  %v4051 = vmul.f32 %v4041, %v3755
  %v4052 = vmul.f32 %v4033, %v4043
  %v4053 = vmul.f32 %v4035, %v4045
  %v4054 = vadd.f32 %v4050, %v4052
  %v4055 = vadd.f32 %v4051, %v4053
  %v4056 = vtanh.pop %v4054
  %v4057 = vtanh.pop %v4055
  %v4058 = vmul.f32 %v4047, %v4056
  %v4059 = vmul.f32 %v4049, %v4057
  %v4060 = vsel %vm758, %v4058, %v3752
  %v4061 = vsel %vm759, %v4059, %v3753
  %v4062 = vsel %vm758, %v4054, %v3754
  %v4063 = vsel %vm759, %v4055, %v3755
  %s4064 = scalar_lea.vmem [#allocation7], 192
  %4065 = vst [vmem:[%s4064 + $0x8] sm:$0xff] %v4060
  %4066 = vst [vmem:[%s4064 + $0x18] sm:$0xff] %v4061
  %s4067 = scalar_lea.vmem [#allocation4], 32
  %v4068 = vld [vmem:[%s4067] sm:$0xff]
  %v4069 = vld [vmem:[%s4067 + $0x8] sm:$0xff]
  %v4070 = vpack.c.bf16 %v3907, %v3906
  %v4071 = vld [vmem:[%s8] sm:$0xf]
  %v4072 = vld [vmem:[%s8 + $0x4] sm:$0xf]
  %v4073 = vld [vmem:[%s8 + $0x8] sm:$0xf]
  %v4074 = vld [vmem:[%s8 + $0xc] sm:$0xf]
  %v4075 = vld [vmem:[%s8 + $0x10] sm:$0xf]
  %v4076 = vld [vmem:[%s8 + $0x14] sm:$0xf]
  %v4077 = vld [vmem:[%s8 + $0x18] sm:$0xf]
  %v4078 = vld [vmem:[%s8 + $0x1c] sm:$0xf]
  %v4079 = vld [vmem:[%s8 + $0x20] sm:$0xf]
  %v4080 = vld [vmem:[%s8 + $0x24] sm:$0xf]
  %v4081 = vld [vmem:[%s8 + $0x28] sm:$0xf]
  %v4082 = vld [vmem:[%s8 + $0x2c] sm:$0xf]
  %v4083 = vld [vmem:[%s8 + $0x30] sm:$0xf]
  %v4084 = vld [vmem:[%s8 + $0x34] sm:$0xf]
  %v4085 = vld [vmem:[%s8 + $0x38] sm:$0xf]
  %v4086 = vld [vmem:[%s8 + $0x3c] sm:$0xf]
  %v4103 = vunpack.c.l.b16 %v4071
  %v4104 = vunpack.c.l.b16 %v4072
  %v4105 = vunpack.c.l.b16 %v4073
  %v4106 = vunpack.c.l.b16 %v4074
  %v4107 = vunpack.c.l.b16 %v4075
  %v4108 = vunpack.c.l.b16 %v4076
  %v4109 = vunpack.c.l.b16 %v4077
  %v4110 = vunpack.c.l.b16 %v4078
  %v4111 = vunpack.c.l.b16 %v4079
  %v4112 = vunpack.c.l.b16 %v4080
  %v4113 = vunpack.c.l.b16 %v4081
  %v4114 = vunpack.c.l.b16 %v4082
  %v4115 = vunpack.c.l.b16 %v4083
  %v4116 = vunpack.c.l.b16 %v4084
  %v4117 = vunpack.c.l.b16 %v4085
  %v4118 = vunpack.c.l.b16 %v4086
  %v4119 = vpack.c.b16 %v4104, %v4103
  %v4120 = vpack.c.b16 %v4106, %v4105
  %v4121 = vpack.c.b16 %v4108, %v4107
  %v4122 = vpack.c.b16 %v4110, %v4109
  %v4123 = vpack.c.b16 %v4112, %v4111
  %v4124 = vpack.c.b16 %v4114, %v4113
  %v4125 = vpack.c.b16 %v4116, %v4115
  %v4126 = vpack.c.b16 %v4118, %v4117
  %4135 = vmatprep.subr.bf16.mxu0 0
  %4136 = vmatpush1.bf16.msra.mxu0 %v4119
  %4137 = vmatprep.subr.bf16.mxu0 0
  %4138 = vmatpush1.bf16.msra.mxu0 %v4120
  %4139 = vmatprep.subr.bf16.mxu0 0
  %4140 = vmatpush1.bf16.msra.mxu0 %v4121
  %4141 = vmatprep.subr.bf16.mxu0 0
  %4142 = vmatpush1.bf16.msra.mxu0 %v4122
  %4143 = vmatprep.subr.bf16.mxu0 0
  %4144 = vmatpush1.bf16.msra.mxu0 %v4123
  %4145 = vmatprep.subr.bf16.mxu0 0
  %4146 = vmatpush1.bf16.msra.mxu0 %v4124
  %4147 = vmatprep.subr.bf16.mxu0 0
  %4148 = vmatpush1.bf16.msra.mxu0 %v4125
  %4149 = vmatprep.subr.bf16.mxu0 0
  %4150 = vmatpush1.bf16.msra.mxu0 %v4126
  %4151 = vmatprep.subr.bf16.mxu0 0
  %4152 = vmatpush1.bf16.msra.mxu0 0
  %4153 = vmatprep.subr.bf16.mxu0 0
  %4154 = vmatpush1.bf16.msra.mxu0 0
  %4155 = vmatprep.subr.bf16.mxu0 0
  %4156 = vmatpush1.bf16.msra.mxu0 0
  %4157 = vmatprep.subr.bf16.mxu0 0
  %4158 = vmatpush1.bf16.msra.mxu0 0
  %4159 = vmatprep.subr.bf16.mxu0 0
  %4160 = vmatpush1.bf16.msra.mxu0 0
  %4161 = vmatprep.subr.bf16.mxu0 0
  %4162 = vmatpush1.bf16.msra.mxu0 0
  %4163 = vmatprep.subr.bf16.mxu0 0
  %4164 = vmatpush1.bf16.msra.mxu0 0
  %4165 = vmatprep.subr.bf16.mxu0 0
  %4166 = vmatpush1.bf16.msra.mxu0 0
  %4167 = vmatprep.mubr.bf16.mxu0 0
  %4168 = vmatmul.mubr.bf16.gmra.mrb[0].mxu0 %v4070
  %v4169 = vpop.f32.mrb[0].mxu0
  %v4170 = vadd.f32 0.0, %v4169
  %v4171 = vpop.f32.mrb[0].mxu0
  %v4172 = vpop.f32.mrb[0].mxu0
  %v4173 = vadd.f32 0.0, %v4172
  %v4174 = vpop.f32.mrb[0].mxu0
  %4175 = vdwg.mxu0
  %v4176 = vadd.f32 %v4068, %v4170
  %v4177 = vadd.f32 %v4069, %v4173
  %v4178 = vxor.u32 %v4176, 2147483648
  %v4179 = vxor.u32 %v4177, 2147483648
  %v4180 = vmul.f32 %v4178, 1.442695
  %v4181 = vpow.pop %v4180
  %v4182 = vmul.f32 %v4179, 1.442695
  %v4183 = vpow.pop %v4182
  %v4184 = vadd.f32 %v4181, 1.0
  %v4185 = vadd.f32 %v4183, 1.0
  %v4186 = vrcp.pop %v4184
  %v4187 = vmul.f32 1.0, %v4186
  %v4188 = vrcp.pop %v4185
  %v4189 = vmul.f32 1.0, %v4188
  %v4190 = vtanh.pop %v4176
  %v4191 = vtanh.pop %v4177
  %4192 = vrot.lane.b32.xlu0 %v4187, 16
  %v4193 = vpop.permute.xlu0 %4192
  %4194 = vrot.lane.b32.xlu0 %v4189, 16
  %v4195 = vpop.permute.xlu0 %4194
  %4196 = vrot.lane.b32.xlu0 %v4190, 32
  %v4197 = vpop.permute.xlu0 %4196
  %4198 = vrot.lane.b32.xlu0 %v4191, 32
  %v4199 = vpop.permute.xlu0 %4198
  %4200 = vrot.lane.b32.xlu0 %v4187, 48
  %v4201 = vpop.permute.xlu0 %4200
  %4202 = vrot.lane.b32.xlu0 %v4189, 48
  %v4203 = vpop.permute.xlu0 %4202
  %v4204 = vmul.f32 %v4193, %v3908
  %v4205 = vmul.f32 %v4195, %v3909
  %v4206 = vmul.f32 %v4187, %v4197
  %v4207 = vmul.f32 %v4189, %v4199
  %v4208 = vadd.f32 %v4204, %v4206
  %v4209 = vadd.f32 %v4205, %v4207
  %v4210 = vtanh.pop %v4208
  %v4211 = vtanh.pop %v4209
  %v4212 = vmul.f32 %v4201, %v4210
  %v4213 = vmul.f32 %v4203, %v4211
  %v4214 = vsel %vm1068, %v4212, %v3906
  %v4215 = vsel %vm1069, %v4213, %v3907
  %v4216 = vsel %vm1068, %v4208, %v3908
  %v4217 = vsel %vm1069, %v4209, %v3909
  %s4218 = scalar_lea.vmem [#allocation7], 64
  %4219 = vst [vmem:[%s4218] sm:$0xff] %v4214
  %4220 = vst [vmem:[%s4218 + $0x10] sm:$0xff] %v4215
  %s4221 = scalar_lea.vmem [#allocation5], 80
  %v4222 = vld [vmem:[%s4221] sm:$0xff]
  %v4223 = vld [vmem:[%s4221 + $0x8] sm:$0xff]
  %v4224 = vpack.c.bf16 %v4061, %v4060
  %v4225 = vld [vmem:[%s9] sm:$0xf]
  %v4226 = vld [vmem:[%s9 + $0x4] sm:$0xf]
  %v4227 = vld [vmem:[%s9 + $0x8] sm:$0xf]
  %v4228 = vld [vmem:[%s9 + $0xc] sm:$0xf]
  %v4229 = vld [vmem:[%s9 + $0x10] sm:$0xf]
  %v4230 = vld [vmem:[%s9 + $0x14] sm:$0xf]
  %v4231 = vld [vmem:[%s9 + $0x18] sm:$0xf]
  %v4232 = vld [vmem:[%s9 + $0x1c] sm:$0xf]
  %v4233 = vld [vmem:[%s9 + $0x20] sm:$0xf]
  %v4234 = vld [vmem:[%s9 + $0x24] sm:$0xf]
  %v4235 = vld [vmem:[%s9 + $0x28] sm:$0xf]
  %v4236 = vld [vmem:[%s9 + $0x2c] sm:$0xf]
  %v4237 = vld [vmem:[%s9 + $0x30] sm:$0xf]
  %v4238 = vld [vmem:[%s9 + $0x34] sm:$0xf]
  %v4239 = vld [vmem:[%s9 + $0x38] sm:$0xf]
  %v4240 = vld [vmem:[%s9 + $0x3c] sm:$0xf]
  %v4257 = vunpack.c.l.b16 %v4225
  %v4258 = vunpack.c.l.b16 %v4226
  %v4259 = vunpack.c.l.b16 %v4227
  %v4260 = vunpack.c.l.b16 %v4228
  %v4261 = vunpack.c.l.b16 %v4229
  %v4262 = vunpack.c.l.b16 %v4230
  %v4263 = vunpack.c.l.b16 %v4231
  %v4264 = vunpack.c.l.b16 %v4232
  %v4265 = vunpack.c.l.b16 %v4233
  %v4266 = vunpack.c.l.b16 %v4234
  %v4267 = vunpack.c.l.b16 %v4235
  %v4268 = vunpack.c.l.b16 %v4236
  %v4269 = vunpack.c.l.b16 %v4237
  %v4270 = vunpack.c.l.b16 %v4238
  %v4271 = vunpack.c.l.b16 %v4239
  %v4272 = vunpack.c.l.b16 %v4240
  %v4273 = vpack.c.b16 %v4258, %v4257
  %v4274 = vpack.c.b16 %v4260, %v4259
  %v4275 = vpack.c.b16 %v4262, %v4261
  %v4276 = vpack.c.b16 %v4264, %v4263
  %v4277 = vpack.c.b16 %v4266, %v4265
  %v4278 = vpack.c.b16 %v4268, %v4267
  %v4279 = vpack.c.b16 %v4270, %v4269
  %v4280 = vpack.c.b16 %v4272, %v4271
  %4289 = vmatprep.subr.bf16.mxu0 0
  %4290 = vmatpush1.bf16.msra.mxu0 %v4273
  %4291 = vmatprep.subr.bf16.mxu0 0
  %4292 = vmatpush1.bf16.msra.mxu0 %v4274
  %4293 = vmatprep.subr.bf16.mxu0 0
  %4294 = vmatpush1.bf16.msra.mxu0 %v4275
  %4295 = vmatprep.subr.bf16.mxu0 0
  %4296 = vmatpush1.bf16.msra.mxu0 %v4276
  %4297 = vmatprep.subr.bf16.mxu0 0
  %4298 = vmatpush1.bf16.msra.mxu0 %v4277
  %4299 = vmatprep.subr.bf16.mxu0 0
  %4300 = vmatpush1.bf16.msra.mxu0 %v4278
  %4301 = vmatprep.subr.bf16.mxu0 0
  %4302 = vmatpush1.bf16.msra.mxu0 %v4279
  %4303 = vmatprep.subr.bf16.mxu0 0
  %4304 = vmatpush1.bf16.msra.mxu0 %v4280
  %4305 = vmatprep.subr.bf16.mxu0 0
  %4306 = vmatpush1.bf16.msra.mxu0 0
  %4307 = vmatprep.subr.bf16.mxu0 0
  %4308 = vmatpush1.bf16.msra.mxu0 0
  %4309 = vmatprep.subr.bf16.mxu0 0
  %4310 = vmatpush1.bf16.msra.mxu0 0
  %4311 = vmatprep.subr.bf16.mxu0 0
  %4312 = vmatpush1.bf16.msra.mxu0 0
  %4313 = vmatprep.subr.bf16.mxu0 0
  %4314 = vmatpush1.bf16.msra.mxu0 0
  %4315 = vmatprep.subr.bf16.mxu0 0
  %4316 = vmatpush1.bf16.msra.mxu0 0
  %4317 = vmatprep.subr.bf16.mxu0 0
  %4318 = vmatpush1.bf16.msra.mxu0 0
  %4319 = vmatprep.subr.bf16.mxu0 0
  %4320 = vmatpush1.bf16.msra.mxu0 0
  %4321 = vmatprep.mubr.bf16.mxu0 0
  %4322 = vmatmul.mubr.bf16.gmra.mrb[0].mxu0 %v4224
  %v4323 = vpop.f32.mrb[0].mxu0
  %v4324 = vadd.f32 0.0, %v4323
  %v4325 = vpop.f32.mrb[0].mxu0
  %v4326 = vpop.f32.mrb[0].mxu0
  %v4327 = vadd.f32 0.0, %v4326
  %v4328 = vpop.f32.mrb[0].mxu0
  %4329 = vdwg.mxu0
  %v4330 = vadd.f32 %v4222, %v4324
  %v4331 = vadd.f32 %v4223, %v4327
  %v4332 = vxor.u32 %v4330, 2147483648
  %v4333 = vxor.u32 %v4331, 2147483648
  %v4334 = vmul.f32 %v4332, 1.442695
  %v4335 = vpow.pop %v4334
  %v4336 = vmul.f32 %v4333, 1.442695
  %v4337 = vpow.pop %v4336
  %v4338 = vadd.f32 %v4335, 1.0
  %v4339 = vadd.f32 %v4337, 1.0
  %v4340 = vrcp.pop %v4338
  %v4341 = vmul.f32 1.0, %v4340
  %v4342 = vrcp.pop %v4339
  %v4343 = vmul.f32 1.0, %v4342
  %v4344 = vtanh.pop %v4330
  %v4345 = vtanh.pop %v4331
  %4346 = vrot.lane.b32.xlu0 %v4341, 16
  %v4347 = vpop.permute.xlu0 %4346
  %4348 = vrot.lane.b32.xlu0 %v4343, 16
  %v4349 = vpop.permute.xlu0 %4348
  %4350 = vrot.lane.b32.xlu0 %v4344, 32
  %v4351 = vpop.permute.xlu0 %4350
  %4352 = vrot.lane.b32.xlu0 %v4345, 32
  %v4353 = vpop.permute.xlu0 %4352
  %4354 = vrot.lane.b32.xlu0 %v4341, 48
  %v4355 = vpop.permute.xlu0 %4354
  %4356 = vrot.lane.b32.xlu0 %v4343, 48
  %v4357 = vpop.permute.xlu0 %4356
  %v4358 = vmul.f32 %v4347, %v4062
  %v4359 = vmul.f32 %v4349, %v4063
  %v4360 = vmul.f32 %v4341, %v4351
  %v4361 = vmul.f32 %v4343, %v4353
  %v4362 = vadd.f32 %v4358, %v4360
  %v4363 = vadd.f32 %v4359, %v4361
  %v4364 = vtanh.pop %v4362
  %v4365 = vtanh.pop %v4363
  %v4366 = vmul.f32 %v4355, %v4364
  %v4367 = vmul.f32 %v4357, %v4365
  %v4368 = vsel %vm1070, %v4366, %v4060
  %v4369 = vsel %vm1071, %v4367, %v4061
  %v4370 = vsel %vm1070, %v4362, %v4062
  %v4371 = vsel %vm1071, %v4363, %v4063
  %s4372 = scalar_lea.vmem [#allocation7], 160
  %4373 = vst [vmem:[%s4372 + $0x8] sm:$0xff] %v4368
  %4374 = vst [vmem:[%s4372 + $0x18] sm:$0xff] %v4369
  %s4375 = scalar_lea.vmem [#allocation4], 48
  %v4376 = vld [vmem:[%s4375] sm:$0xff]
  %v4377 = vld [vmem:[%s4375 + $0x8] sm:$0xff]
  %v4378 = vpack.c.bf16 %v4215, %v4214
  %v4379 = vld [vmem:[%s8] sm:$0xf]
  %v4380 = vld [vmem:[%s8 + $0x4] sm:$0xf]
  %v4381 = vld [vmem:[%s8 + $0x8] sm:$0xf]
  %v4382 = vld [vmem:[%s8 + $0xc] sm:$0xf]
  %v4383 = vld [vmem:[%s8 + $0x10] sm:$0xf]
  %v4384 = vld [vmem:[%s8 + $0x14] sm:$0xf]
  %v4385 = vld [vmem:[%s8 + $0x18] sm:$0xf]
  %v4386 = vld [vmem:[%s8 + $0x1c] sm:$0xf]
  %v4387 = vld [vmem:[%s8 + $0x20] sm:$0xf]
  %v4388 = vld [vmem:[%s8 + $0x24] sm:$0xf]
  %v4389 = vld [vmem:[%s8 + $0x28] sm:$0xf]
  %v4390 = vld [vmem:[%s8 + $0x2c] sm:$0xf]
  %v4391 = vld [vmem:[%s8 + $0x30] sm:$0xf]
  %v4392 = vld [vmem:[%s8 + $0x34] sm:$0xf]
  %v4393 = vld [vmem:[%s8 + $0x38] sm:$0xf]
  %v4394 = vld [vmem:[%s8 + $0x3c] sm:$0xf]
  %v4411 = vunpack.c.l.b16 %v4379
  %v4412 = vunpack.c.l.b16 %v4380
  %v4413 = vunpack.c.l.b16 %v4381
  %v4414 = vunpack.c.l.b16 %v4382
  %v4415 = vunpack.c.l.b16 %v4383
  %v4416 = vunpack.c.l.b16 %v4384
  %v4417 = vunpack.c.l.b16 %v4385
  %v4418 = vunpack.c.l.b16 %v4386
  %v4419 = vunpack.c.l.b16 %v4387
  %v4420 = vunpack.c.l.b16 %v4388
  %v4421 = vunpack.c.l.b16 %v4389
  %v4422 = vunpack.c.l.b16 %v4390
  %v4423 = vunpack.c.l.b16 %v4391
  %v4424 = vunpack.c.l.b16 %v4392
  %v4425 = vunpack.c.l.b16 %v4393
  %v4426 = vunpack.c.l.b16 %v4394
  %v4427 = vpack.c.b16 %v4412, %v4411
  %v4428 = vpack.c.b16 %v4414, %v4413
  %v4429 = vpack.c.b16 %v4416, %v4415
  %v4430 = vpack.c.b16 %v4418, %v4417
  %v4431 = vpack.c.b16 %v4420, %v4419
  %v4432 = vpack.c.b16 %v4422, %v4421
  %v4433 = vpack.c.b16 %v4424, %v4423
  %v4434 = vpack.c.b16 %v4426, %v4425
  %4443 = vmatprep.subr.bf16.mxu0 0
  %4444 = vmatpush1.bf16.msra.mxu0 %v4427
  %4445 = vmatprep.subr.bf16.mxu0 0
  %4446 = vmatpush1.bf16.msra.mxu0 %v4428
  %4447 = vmatprep.subr.bf16.mxu0 0
  %4448 = vmatpush1.bf16.msra.mxu0 %v4429
  %4449 = vmatprep.subr.bf16.mxu0 0
  %4450 = vmatpush1.bf16.msra.mxu0 %v4430
  %4451 = vmatprep.subr.bf16.mxu0 0
  %4452 = vmatpush1.bf16.msra.mxu0 %v4431
  %4453 = vmatprep.subr.bf16.mxu0 0
  %4454 = vmatpush1.bf16.msra.mxu0 %v4432
  %4455 = vmatprep.subr.bf16.mxu0 0
  %4456 = vmatpush1.bf16.msra.mxu0 %v4433
  %4457 = vmatprep.subr.bf16.mxu0 0
  %4458 = vmatpush1.bf16.msra.mxu0 %v4434
  %4459 = vmatprep.subr.bf16.mxu0 0
  %4460 = vmatpush1.bf16.msra.mxu0 0
  %4461 = vmatprep.subr.bf16.mxu0 0
  %4462 = vmatpush1.bf16.msra.mxu0 0
  %4463 = vmatprep.subr.bf16.mxu0 0
  %4464 = vmatpush1.bf16.msra.mxu0 0
  %4465 = vmatprep.subr.bf16.mxu0 0
  %4466 = vmatpush1.bf16.msra.mxu0 0
  %4467 = vmatprep.subr.bf16.mxu0 0
  %4468 = vmatpush1.bf16.msra.mxu0 0
  %4469 = vmatprep.subr.bf16.mxu0 0
  %4470 = vmatpush1.bf16.msra.mxu0 0
  %4471 = vmatprep.subr.bf16.mxu0 0
  %4472 = vmatpush1.bf16.msra.mxu0 0
  %4473 = vmatprep.subr.bf16.mxu0 0
  %4474 = vmatpush1.bf16.msra.mxu0 0
  %4475 = vmatprep.mubr.bf16.mxu0 0
  %4476 = vmatmul.mubr.bf16.gmra.mrb[0].mxu0 %v4378
  %v4477 = vpop.f32.mrb[0].mxu0
  %v4478 = vadd.f32 0.0, %v4477
  %v4479 = vpop.f32.mrb[0].mxu0
  %v4480 = vpop.f32.mrb[0].mxu0
  %v4481 = vadd.f32 0.0, %v4480
  %v4482 = vpop.f32.mrb[0].mxu0
  %4483 = vdwg.mxu0
  %v4484 = vadd.f32 %v4376, %v4478
  %v4485 = vadd.f32 %v4377, %v4481
  %v4486 = vxor.u32 %v4484, 2147483648
  %v4487 = vxor.u32 %v4485, 2147483648
  %v4488 = vmul.f32 %v4486, 1.442695
  %v4489 = vpow.pop %v4488
  %v4490 = vmul.f32 %v4487, 1.442695
  %v4491 = vpow.pop %v4490
  %v4492 = vadd.f32 %v4489, 1.0
  %v4493 = vadd.f32 %v4491, 1.0
  %v4494 = vrcp.pop %v4492
  %v4495 = vmul.f32 1.0, %v4494
  %v4496 = vrcp.pop %v4493
  %v4497 = vmul.f32 1.0, %v4496
  %v4498 = vtanh.pop %v4484
  %v4499 = vtanh.pop %v4485
  %4500 = vrot.lane.b32.xlu0 %v4495, 16
  %v4501 = vpop.permute.xlu0 %4500
  %4502 = vrot.lane.b32.xlu0 %v4497, 16
  %v4503 = vpop.permute.xlu0 %4502
  %4504 = vrot.lane.b32.xlu0 %v4498, 32
  %v4505 = vpop.permute.xlu0 %4504
  %4506 = vrot.lane.b32.xlu0 %v4499, 32
  %v4507 = vpop.permute.xlu0 %4506
  %4508 = vrot.lane.b32.xlu0 %v4495, 48
  %v4509 = vpop.permute.xlu0 %4508
  %4510 = vrot.lane.b32.xlu0 %v4497, 48
  %v4511 = vpop.permute.xlu0 %4510
  %v4512 = vmul.f32 %v4501, %v4216
  %v4513 = vmul.f32 %v4503, %v4217
  %v4514 = vmul.f32 %v4495, %v4505
  %v4515 = vmul.f32 %v4497, %v4507
  %v4516 = vadd.f32 %v4512, %v4514
  %v4517 = vadd.f32 %v4513, %v4515
  %v4518 = vtanh.pop %v4516
  %v4519 = vtanh.pop %v4517
  %v4520 = vmul.f32 %v4509, %v4518
  %v4521 = vmul.f32 %v4511, %v4519
  %v4522 = vsel %vm1380, %v4520, %v4214
  %v4523 = vsel %vm1381, %v4521, %v4215
  %v4524 = vsel %vm1380, %v4516, %v4216
  %v4525 = vsel %vm1381, %v4517, %v4217
  %s4526 = scalar_lea.vmem [#allocation7], 96
  %4527 = vst [vmem:[%s4526] sm:$0xff] %v4522
  %4528 = vst [vmem:[%s4526 + $0x10] sm:$0xff] %v4523
  %s4529 = scalar_lea.vmem [#allocation5], 64
  %v4530 = vld [vmem:[%s4529] sm:$0xff]
  %v4531 = vld [vmem:[%s4529 + $0x8] sm:$0xff]
  %v4532 = vpack.c.bf16 %v4369, %v4368
  %v4533 = vld [vmem:[%s9] sm:$0xf]
  %v4534 = vld [vmem:[%s9 + $0x4] sm:$0xf]
  %v4535 = vld [vmem:[%s9 + $0x8] sm:$0xf]
  %v4536 = vld [vmem:[%s9 + $0xc] sm:$0xf]
  %v4537 = vld [vmem:[%s9 + $0x10] sm:$0xf]
  %v4538 = vld [vmem:[%s9 + $0x14] sm:$0xf]
  %v4539 = vld [vmem:[%s9 + $0x18] sm:$0xf]
  %v4540 = vld [vmem:[%s9 + $0x1c] sm:$0xf]
  %v4541 = vld [vmem:[%s9 + $0x20] sm:$0xf]
  %v4542 = vld [vmem:[%s9 + $0x24] sm:$0xf]
  %v4543 = vld [vmem:[%s9 + $0x28] sm:$0xf]
  %v4544 = vld [vmem:[%s9 + $0x2c] sm:$0xf]
  %v4545 = vld [vmem:[%s9 + $0x30] sm:$0xf]
  %v4546 = vld [vmem:[%s9 + $0x34] sm:$0xf]
  %v4547 = vld [vmem:[%s9 + $0x38] sm:$0xf]
  %v4548 = vld [vmem:[%s9 + $0x3c] sm:$0xf]
  %v4565 = vunpack.c.l.b16 %v4533
  %v4566 = vunpack.c.l.b16 %v4534
  %v4567 = vunpack.c.l.b16 %v4535
  %v4568 = vunpack.c.l.b16 %v4536
  %v4569 = vunpack.c.l.b16 %v4537
  %v4570 = vunpack.c.l.b16 %v4538
  %v4571 = vunpack.c.l.b16 %v4539
  %v4572 = vunpack.c.l.b16 %v4540
  %v4573 = vunpack.c.l.b16 %v4541
  %v4574 = vunpack.c.l.b16 %v4542
  %v4575 = vunpack.c.l.b16 %v4543
  %v4576 = vunpack.c.l.b16 %v4544
  %v4577 = vunpack.c.l.b16 %v4545
  %v4578 = vunpack.c.l.b16 %v4546
  %v4579 = vunpack.c.l.b16 %v4547
  %v4580 = vunpack.c.l.b16 %v4548
  %v4581 = vpack.c.b16 %v4566, %v4565
  %v4582 = vpack.c.b16 %v4568, %v4567
  %v4583 = vpack.c.b16 %v4570, %v4569
  %v4584 = vpack.c.b16 %v4572, %v4571
  %v4585 = vpack.c.b16 %v4574, %v4573
  %v4586 = vpack.c.b16 %v4576, %v4575
  %v4587 = vpack.c.b16 %v4578, %v4577
  %v4588 = vpack.c.b16 %v4580, %v4579
  %4597 = vmatprep.subr.bf16.mxu0 0
  %4598 = vmatpush1.bf16.msra.mxu0 %v4581
  %4599 = vmatprep.subr.bf16.mxu0 0
  %4600 = vmatpush1.bf16.msra.mxu0 %v4582
  %4601 = vmatprep.subr.bf16.mxu0 0
  %4602 = vmatpush1.bf16.msra.mxu0 %v4583
  %4603 = vmatprep.subr.bf16.mxu0 0
  %4604 = vmatpush1.bf16.msra.mxu0 %v4584
  %4605 = vmatprep.subr.bf16.mxu0 0
  %4606 = vmatpush1.bf16.msra.mxu0 %v4585
  %4607 = vmatprep.subr.bf16.mxu0 0
  %4608 = vmatpush1.bf16.msra.mxu0 %v4586
  %4609 = vmatprep.subr.bf16.mxu0 0
  %4610 = vmatpush1.bf16.msra.mxu0 %v4587
  %4611 = vmatprep.subr.bf16.mxu0 0
  %4612 = vmatpush1.bf16.msra.mxu0 %v4588
  %4613 = vmatprep.subr.bf16.mxu0 0
  %4614 = vmatpush1.bf16.msra.mxu0 0
  %4615 = vmatprep.subr.bf16.mxu0 0
  %4616 = vmatpush1.bf16.msra.mxu0 0
  %4617 = vmatprep.subr.bf16.mxu0 0
  %4618 = vmatpush1.bf16.msra.mxu0 0
  %4619 = vmatprep.subr.bf16.mxu0 0
  %4620 = vmatpush1.bf16.msra.mxu0 0
  %4621 = vmatprep.subr.bf16.mxu0 0
  %4622 = vmatpush1.bf16.msra.mxu0 0
  %4623 = vmatprep.subr.bf16.mxu0 0
  %4624 = vmatpush1.bf16.msra.mxu0 0
  %4625 = vmatprep.subr.bf16.mxu0 0
  %4626 = vmatpush1.bf16.msra.mxu0 0
  %4627 = vmatprep.subr.bf16.mxu0 0
  %4628 = vmatpush1.bf16.msra.mxu0 0
  %4629 = vmatprep.mubr.bf16.mxu0 0
  %4630 = vmatmul.mubr.bf16.gmra.mrb[0].mxu0 %v4532
  %v4631 = vpop.f32.mrb[0].mxu0
  %v4632 = vadd.f32 0.0, %v4631
  %v4633 = vpop.f32.mrb[0].mxu0
  %v4634 = vpop.f32.mrb[0].mxu0
  %v4635 = vadd.f32 0.0, %v4634
  %v4636 = vpop.f32.mrb[0].mxu0
  %4637 = vdwg.mxu0
  %v4638 = vadd.f32 %v4530, %v4632
  %v4639 = vadd.f32 %v4531, %v4635
  %v4640 = vxor.u32 %v4638, 2147483648
  %v4641 = vxor.u32 %v4639, 2147483648
  %v4642 = vmul.f32 %v4640, 1.442695
  %v4643 = vpow.pop %v4642
  %v4644 = vmul.f32 %v4641, 1.442695
  %v4645 = vpow.pop %v4644
  %v4646 = vadd.f32 %v4643, 1.0
  %v4647 = vadd.f32 %v4645, 1.0
  %v4648 = vrcp.pop %v4646
  %v4649 = vmul.f32 1.0, %v4648
  %v4650 = vrcp.pop %v4647
  %v4651 = vmul.f32 1.0, %v4650
  %v4652 = vtanh.pop %v4638
  %v4653 = vtanh.pop %v4639
  %4654 = vrot.lane.b32.xlu0 %v4649, 16
  %v4655 = vpop.permute.xlu0 %4654
  %4656 = vrot.lane.b32.xlu0 %v4651, 16
  %v4657 = vpop.permute.xlu0 %4656
  %4658 = vrot.lane.b32.xlu0 %v4652, 32
  %v4659 = vpop.permute.xlu0 %4658
  %4660 = vrot.lane.b32.xlu0 %v4653, 32
  %v4661 = vpop.permute.xlu0 %4660
  %4662 = vrot.lane.b32.xlu0 %v4649, 48
  %v4663 = vpop.permute.xlu0 %4662
  %4664 = vrot.lane.b32.xlu0 %v4651, 48
  %v4665 = vpop.permute.xlu0 %4664
  %v4666 = vmul.f32 %v4655, %v4370
  %v4667 = vmul.f32 %v4657, %v4371
  %v4668 = vmul.f32 %v4649, %v4659
  %v4669 = vmul.f32 %v4651, %v4661
  %v4670 = vadd.f32 %v4666, %v4668
  %v4671 = vadd.f32 %v4667, %v4669
  %v4672 = vtanh.pop %v4670
  %v4673 = vtanh.pop %v4671
  %v4674 = vmul.f32 %v4663, %v4672
  %v4675 = vmul.f32 %v4665, %v4673
  %v4676 = vsel %vm1382, %v4674, %v4368
  %v4677 = vsel %vm1383, %v4675, %v4369
  %v4678 = vsel %vm1382, %v4670, %v4370
  %v4679 = vsel %vm1383, %v4671, %v4371
  %s4680 = scalar_lea.vmem [#allocation7], 128
  %4681 = vst [vmem:[%s4680 + $0x8] sm:$0xff] %v4676
  %4682 = vst [vmem:[%s4680 + $0x18] sm:$0xff] %v4677
  %s4683 = scalar_lea.vmem [#allocation4], 64
  %v4684 = vld [vmem:[%s4683] sm:$0xff]
  %v4685 = vld [vmem:[%s4683 + $0x8] sm:$0xff]
  %v4686 = vpack.c.bf16 %v4523, %v4522
  %v4687 = vld [vmem:[%s8] sm:$0xf]
  %v4688 = vld [vmem:[%s8 + $0x4] sm:$0xf]
  %v4689 = vld [vmem:[%s8 + $0x8] sm:$0xf]
  %v4690 = vld [vmem:[%s8 + $0xc] sm:$0xf]
  %v4691 = vld [vmem:[%s8 + $0x10] sm:$0xf]
  %v4692 = vld [vmem:[%s8 + $0x14] sm:$0xf]
  %v4693 = vld [vmem:[%s8 + $0x18] sm:$0xf]
  %v4694 = vld [vmem:[%s8 + $0x1c] sm:$0xf]
  %v4695 = vld [vmem:[%s8 + $0x20] sm:$0xf]
  %v4696 = vld [vmem:[%s8 + $0x24] sm:$0xf]
  %v4697 = vld [vmem:[%s8 + $0x28] sm:$0xf]
  %v4698 = vld [vmem:[%s8 + $0x2c] sm:$0xf]
  %v4699 = vld [vmem:[%s8 + $0x30] sm:$0xf]
  %v4700 = vld [vmem:[%s8 + $0x34] sm:$0xf]
  %v4701 = vld [vmem:[%s8 + $0x38] sm:$0xf]
  %v4702 = vld [vmem:[%s8 + $0x3c] sm:$0xf]
  %v4719 = vunpack.c.l.b16 %v4687
  %v4720 = vunpack.c.l.b16 %v4688
  %v4721 = vunpack.c.l.b16 %v4689
  %v4722 = vunpack.c.l.b16 %v4690
  %v4723 = vunpack.c.l.b16 %v4691
  %v4724 = vunpack.c.l.b16 %v4692
  %v4725 = vunpack.c.l.b16 %v4693
  %v4726 = vunpack.c.l.b16 %v4694
  %v4727 = vunpack.c.l.b16 %v4695
  %v4728 = vunpack.c.l.b16 %v4696
  %v4729 = vunpack.c.l.b16 %v4697
  %v4730 = vunpack.c.l.b16 %v4698
  %v4731 = vunpack.c.l.b16 %v4699
  %v4732 = vunpack.c.l.b16 %v4700
  %v4733 = vunpack.c.l.b16 %v4701
  %v4734 = vunpack.c.l.b16 %v4702
  %v4735 = vpack.c.b16 %v4720, %v4719
  %v4736 = vpack.c.b16 %v4722, %v4721
  %v4737 = vpack.c.b16 %v4724, %v4723
  %v4738 = vpack.c.b16 %v4726, %v4725
  %v4739 = vpack.c.b16 %v4728, %v4727
  %v4740 = vpack.c.b16 %v4730, %v4729
  %v4741 = vpack.c.b16 %v4732, %v4731
  %v4742 = vpack.c.b16 %v4734, %v4733
  %4751 = vmatprep.subr.bf16.mxu0 0
  %4752 = vmatpush1.bf16.msra.mxu0 %v4735
  %4753 = vmatprep.subr.bf16.mxu0 0
  %4754 = vmatpush1.bf16.msra.mxu0 %v4736
  %4755 = vmatprep.subr.bf16.mxu0 0
  %4756 = vmatpush1.bf16.msra.mxu0 %v4737
  %4757 = vmatprep.subr.bf16.mxu0 0
  %4758 = vmatpush1.bf16.msra.mxu0 %v4738
  %4759 = vmatprep.subr.bf16.mxu0 0
  %4760 = vmatpush1.bf16.msra.mxu0 %v4739
  %4761 = vmatprep.subr.bf16.mxu0 0
  %4762 = vmatpush1.bf16.msra.mxu0 %v4740
  %4763 = vmatprep.subr.bf16.mxu0 0
  %4764 = vmatpush1.bf16.msra.mxu0 %v4741
  %4765 = vmatprep.subr.bf16.mxu0 0
  %4766 = vmatpush1.bf16.msra.mxu0 %v4742
  %4767 = vmatprep.subr.bf16.mxu0 0
  %4768 = vmatpush1.bf16.msra.mxu0 0
  %4769 = vmatprep.subr.bf16.mxu0 0
  %4770 = vmatpush1.bf16.msra.mxu0 0
  %4771 = vmatprep.subr.bf16.mxu0 0
  %4772 = vmatpush1.bf16.msra.mxu0 0
  %4773 = vmatprep.subr.bf16.mxu0 0
  %4774 = vmatpush1.bf16.msra.mxu0 0
  %4775 = vmatprep.subr.bf16.mxu0 0
  %4776 = vmatpush1.bf16.msra.mxu0 0
  %4777 = vmatprep.subr.bf16.mxu0 0
  %4778 = vmatpush1.bf16.msra.mxu0 0
  %4779 = vmatprep.subr.bf16.mxu0 0
  %4780 = vmatpush1.bf16.msra.mxu0 0
  %4781 = vmatprep.subr.bf16.mxu0 0
  %4782 = vmatpush1.bf16.msra.mxu0 0
  %4783 = vmatprep.mubr.bf16.mxu0 0
  %4784 = vmatmul.mubr.bf16.gmra.mrb[0].mxu0 %v4686
  %v4785 = vpop.f32.mrb[0].mxu0
  %v4786 = vadd.f32 0.0, %v4785
  %v4787 = vpop.f32.mrb[0].mxu0
  %v4788 = vpop.f32.mrb[0].mxu0
  %v4789 = vadd.f32 0.0, %v4788
  %v4790 = vpop.f32.mrb[0].mxu0
  %4791 = vdwg.mxu0
  %v4792 = vadd.f32 %v4684, %v4786
  %v4793 = vadd.f32 %v4685, %v4789
  %v4794 = vxor.u32 %v4792, 2147483648
  %v4795 = vxor.u32 %v4793, 2147483648
  %v4796 = vmul.f32 %v4794, 1.442695
  %v4797 = vpow.pop %v4796
  %v4798 = vmul.f32 %v4795, 1.442695
  %v4799 = vpow.pop %v4798
  %v4800 = vadd.f32 %v4797, 1.0
  %v4801 = vadd.f32 %v4799, 1.0
  %v4802 = vrcp.pop %v4800
  %v4803 = vmul.f32 1.0, %v4802
  %v4804 = vrcp.pop %v4801
  %v4805 = vmul.f32 1.0, %v4804
  %v4806 = vtanh.pop %v4792
  %v4807 = vtanh.pop %v4793
  %4808 = vrot.lane.b32.xlu0 %v4803, 16
  %v4809 = vpop.permute.xlu0 %4808
  %4810 = vrot.lane.b32.xlu0 %v4805, 16
  %v4811 = vpop.permute.xlu0 %4810
  %4812 = vrot.lane.b32.xlu0 %v4806, 32
  %v4813 = vpop.permute.xlu0 %4812
  %4814 = vrot.lane.b32.xlu0 %v4807, 32
  %v4815 = vpop.permute.xlu0 %4814
  %4816 = vrot.lane.b32.xlu0 %v4803, 48
  %v4817 = vpop.permute.xlu0 %4816
  %4818 = vrot.lane.b32.xlu0 %v4805, 48
  %v4819 = vpop.permute.xlu0 %4818
  %v4820 = vmul.f32 %v4809, %v4524
  %v4821 = vmul.f32 %v4811, %v4525
  %v4822 = vmul.f32 %v4803, %v4813
  %v4823 = vmul.f32 %v4805, %v4815
  %v4824 = vadd.f32 %v4820, %v4822
  %v4825 = vadd.f32 %v4821, %v4823
  %v4826 = vtanh.pop %v4824
  %v4827 = vtanh.pop %v4825
  %v4828 = vmul.f32 %v4817, %v4826
  %v4829 = vmul.f32 %v4819, %v4827
  %v4830 = vsel %vm1382, %v4828, %v4522
  %v4831 = vsel %vm1383, %v4829, %v4523
  %v4832 = vsel %vm1382, %v4824, %v4524
  %v4833 = vsel %vm1383, %v4825, %v4525
  %4834 = vst [vmem:[%s4680] sm:$0xff] %v4830
  %4835 = vst [vmem:[%s4680 + $0x10] sm:$0xff] %v4831
  %s4836 = scalar_lea.vmem [#allocation5], 48
  %v4837 = vld [vmem:[%s4836] sm:$0xff]
  %v4838 = vld [vmem:[%s4836 + $0x8] sm:$0xff]
  %v4839 = vpack.c.bf16 %v4677, %v4676
  %v4840 = vld [vmem:[%s9] sm:$0xf]
  %v4841 = vld [vmem:[%s9 + $0x4] sm:$0xf]
  %v4842 = vld [vmem:[%s9 + $0x8] sm:$0xf]
  %v4843 = vld [vmem:[%s9 + $0xc] sm:$0xf]
  %v4844 = vld [vmem:[%s9 + $0x10] sm:$0xf]
  %v4845 = vld [vmem:[%s9 + $0x14] sm:$0xf]
  %v4846 = vld [vmem:[%s9 + $0x18] sm:$0xf]
  %v4847 = vld [vmem:[%s9 + $0x1c] sm:$0xf]
  %v4848 = vld [vmem:[%s9 + $0x20] sm:$0xf]
  %v4849 = vld [vmem:[%s9 + $0x24] sm:$0xf]
  %v4850 = vld [vmem:[%s9 + $0x28] sm:$0xf]
  %v4851 = vld [vmem:[%s9 + $0x2c] sm:$0xf]
  %v4852 = vld [vmem:[%s9 + $0x30] sm:$0xf]
  %v4853 = vld [vmem:[%s9 + $0x34] sm:$0xf]
  %v4854 = vld [vmem:[%s9 + $0x38] sm:$0xf]
  %v4855 = vld [vmem:[%s9 + $0x3c] sm:$0xf]
  %v4872 = vunpack.c.l.b16 %v4840
  %v4873 = vunpack.c.l.b16 %v4841
  %v4874 = vunpack.c.l.b16 %v4842
  %v4875 = vunpack.c.l.b16 %v4843
  %v4876 = vunpack.c.l.b16 %v4844
  %v4877 = vunpack.c.l.b16 %v4845
  %v4878 = vunpack.c.l.b16 %v4846
  %v4879 = vunpack.c.l.b16 %v4847
  %v4880 = vunpack.c.l.b16 %v4848
  %v4881 = vunpack.c.l.b16 %v4849
  %v4882 = vunpack.c.l.b16 %v4850
  %v4883 = vunpack.c.l.b16 %v4851
  %v4884 = vunpack.c.l.b16 %v4852
  %v4885 = vunpack.c.l.b16 %v4853
  %v4886 = vunpack.c.l.b16 %v4854
  %v4887 = vunpack.c.l.b16 %v4855
  %v4888 = vpack.c.b16 %v4873, %v4872
  %v4889 = vpack.c.b16 %v4875, %v4874
  %v4890 = vpack.c.b16 %v4877, %v4876
  %v4891 = vpack.c.b16 %v4879, %v4878
  %v4892 = vpack.c.b16 %v4881, %v4880
  %v4893 = vpack.c.b16 %v4883, %v4882
  %v4894 = vpack.c.b16 %v4885, %v4884
  %v4895 = vpack.c.b16 %v4887, %v4886
  %4904 = vmatprep.subr.bf16.mxu0 0
  %4905 = vmatpush1.bf16.msra.mxu0 %v4888
  %4906 = vmatprep.subr.bf16.mxu0 0
  %4907 = vmatpush1.bf16.msra.mxu0 %v4889
  %4908 = vmatprep.subr.bf16.mxu0 0
  %4909 = vmatpush1.bf16.msra.mxu0 %v4890
  %4910 = vmatprep.subr.bf16.mxu0 0
  %4911 = vmatpush1.bf16.msra.mxu0 %v4891
  %4912 = vmatprep.subr.bf16.mxu0 0
  %4913 = vmatpush1.bf16.msra.mxu0 %v4892
  %4914 = vmatprep.subr.bf16.mxu0 0
  %4915 = vmatpush1.bf16.msra.mxu0 %v4893
  %4916 = vmatprep.subr.bf16.mxu0 0
  %4917 = vmatpush1.bf16.msra.mxu0 %v4894
  %4918 = vmatprep.subr.bf16.mxu0 0
  %4919 = vmatpush1.bf16.msra.mxu0 %v4895
  %4920 = vmatprep.subr.bf16.mxu0 0
  %4921 = vmatpush1.bf16.msra.mxu0 0
  %4922 = vmatprep.subr.bf16.mxu0 0
  %4923 = vmatpush1.bf16.msra.mxu0 0
  %4924 = vmatprep.subr.bf16.mxu0 0
  %4925 = vmatpush1.bf16.msra.mxu0 0
  %4926 = vmatprep.subr.bf16.mxu0 0
  %4927 = vmatpush1.bf16.msra.mxu0 0
  %4928 = vmatprep.subr.bf16.mxu0 0
  %4929 = vmatpush1.bf16.msra.mxu0 0
  %4930 = vmatprep.subr.bf16.mxu0 0
  %4931 = vmatpush1.bf16.msra.mxu0 0
  %4932 = vmatprep.subr.bf16.mxu0 0
  %4933 = vmatpush1.bf16.msra.mxu0 0
  %4934 = vmatprep.subr.bf16.mxu0 0
  %4935 = vmatpush1.bf16.msra.mxu0 0
  %4936 = vmatprep.mubr.bf16.mxu0 0
  %4937 = vmatmul.mubr.bf16.gmra.mrb[0].mxu0 %v4839
  %v4938 = vpop.f32.mrb[0].mxu0
  %v4939 = vadd.f32 0.0, %v4938
  %v4940 = vpop.f32.mrb[0].mxu0
  %v4941 = vpop.f32.mrb[0].mxu0
  %v4942 = vadd.f32 0.0, %v4941
  %v4943 = vpop.f32.mrb[0].mxu0
  %4944 = vdwg.mxu0
  %v4945 = vadd.f32 %v4837, %v4939
  %v4946 = vadd.f32 %v4838, %v4942
  %v4947 = vxor.u32 %v4945, 2147483648
  %v4948 = vxor.u32 %v4946, 2147483648
  %v4949 = vmul.f32 %v4947, 1.442695
  %v4950 = vpow.pop %v4949
  %v4951 = vmul.f32 %v4948, 1.442695
  %v4952 = vpow.pop %v4951
  %v4953 = vadd.f32 %v4950, 1.0
  %v4954 = vadd.f32 %v4952, 1.0
  %v4955 = vrcp.pop %v4953
  %v4956 = vmul.f32 1.0, %v4955
  %v4957 = vrcp.pop %v4954
  %v4958 = vmul.f32 1.0, %v4957
  %v4959 = vtanh.pop %v4945
  %v4960 = vtanh.pop %v4946
  %4961 = vrot.lane.b32.xlu0 %v4956, 16
  %v4962 = vpop.permute.xlu0 %4961
  %4963 = vrot.lane.b32.xlu0 %v4958, 16
  %v4964 = vpop.permute.xlu0 %4963
  %4965 = vrot.lane.b32.xlu0 %v4959, 32
  %v4966 = vpop.permute.xlu0 %4965
  %4967 = vrot.lane.b32.xlu0 %v4960, 32
  %v4968 = vpop.permute.xlu0 %4967
  %4969 = vrot.lane.b32.xlu0 %v4956, 48
  %v4970 = vpop.permute.xlu0 %4969
  %4971 = vrot.lane.b32.xlu0 %v4958, 48
  %v4972 = vpop.permute.xlu0 %4971
  %v4973 = vmul.f32 %v4962, %v4678
  %v4974 = vmul.f32 %v4964, %v4679
  %v4975 = vmul.f32 %v4956, %v4966
  %v4976 = vmul.f32 %v4958, %v4968
  %v4977 = vadd.f32 %v4973, %v4975
  %v4978 = vadd.f32 %v4974, %v4976
  %v4979 = vtanh.pop %v4977
  %v4980 = vtanh.pop %v4978
  %v4981 = vmul.f32 %v4970, %v4979
  %v4982 = vmul.f32 %v4972, %v4980
  %v4983 = vsel %vm1380, %v4981, %v4676
  %v4984 = vsel %vm1381, %v4982, %v4677
  %v4985 = vsel %vm1380, %v4977, %v4678
  %v4986 = vsel %vm1381, %v4978, %v4679
  %4987 = vst [vmem:[%s4526 + $0x8] sm:$0xff] %v4983
  %4988 = vst [vmem:[%s4526 + $0x18] sm:$0xff] %v4984
  %s4989 = scalar_lea.vmem [#allocation4], 80
  %v4990 = vld [vmem:[%s4989] sm:$0xff]
  %v4991 = vld [vmem:[%s4989 + $0x8] sm:$0xff]
  %v4992 = vpack.c.bf16 %v4831, %v4830
  %v4993 = vld [vmem:[%s8] sm:$0xf]
  %v4994 = vld [vmem:[%s8 + $0x4] sm:$0xf]
  %v4995 = vld [vmem:[%s8 + $0x8] sm:$0xf]
  %v4996 = vld [vmem:[%s8 + $0xc] sm:$0xf]
  %v4997 = vld [vmem:[%s8 + $0x10] sm:$0xf]
  %v4998 = vld [vmem:[%s8 + $0x14] sm:$0xf]
  %v4999 = vld [vmem:[%s8 + $0x18] sm:$0xf]
  %v5000 = vld [vmem:[%s8 + $0x1c] sm:$0xf]
  %v5001 = vld [vmem:[%s8 + $0x20] sm:$0xf]
  %v5002 = vld [vmem:[%s8 + $0x24] sm:$0xf]
  %v5003 = vld [vmem:[%s8 + $0x28] sm:$0xf]
  %v5004 = vld [vmem:[%s8 + $0x2c] sm:$0xf]
  %v5005 = vld [vmem:[%s8 + $0x30] sm:$0xf]
  %v5006 = vld [vmem:[%s8 + $0x34] sm:$0xf]
  %v5007 = vld [vmem:[%s8 + $0x38] sm:$0xf]
  %v5008 = vld [vmem:[%s8 + $0x3c] sm:$0xf]
  %v5025 = vunpack.c.l.b16 %v4993
  %v5026 = vunpack.c.l.b16 %v4994
  %v5027 = vunpack.c.l.b16 %v4995
  %v5028 = vunpack.c.l.b16 %v4996
  %v5029 = vunpack.c.l.b16 %v4997
  %v5030 = vunpack.c.l.b16 %v4998
  %v5031 = vunpack.c.l.b16 %v4999
  %v5032 = vunpack.c.l.b16 %v5000
  %v5033 = vunpack.c.l.b16 %v5001
  %v5034 = vunpack.c.l.b16 %v5002
  %v5035 = vunpack.c.l.b16 %v5003
  %v5036 = vunpack.c.l.b16 %v5004
  %v5037 = vunpack.c.l.b16 %v5005
  %v5038 = vunpack.c.l.b16 %v5006
  %v5039 = vunpack.c.l.b16 %v5007
  %v5040 = vunpack.c.l.b16 %v5008
  %v5041 = vpack.c.b16 %v5026, %v5025
  %v5042 = vpack.c.b16 %v5028, %v5027
  %v5043 = vpack.c.b16 %v5030, %v5029
  %v5044 = vpack.c.b16 %v5032, %v5031
  %v5045 = vpack.c.b16 %v5034, %v5033
  %v5046 = vpack.c.b16 %v5036, %v5035
  %v5047 = vpack.c.b16 %v5038, %v5037
  %v5048 = vpack.c.b16 %v5040, %v5039
  %5057 = vmatprep.subr.bf16.mxu0 0
  %5058 = vmatpush1.bf16.msra.mxu0 %v5041
  %5059 = vmatprep.subr.bf16.mxu0 0
  %5060 = vmatpush1.bf16.msra.mxu0 %v5042
  %5061 = vmatprep.subr.bf16.mxu0 0
  %5062 = vmatpush1.bf16.msra.mxu0 %v5043
  %5063 = vmatprep.subr.bf16.mxu0 0
  %5064 = vmatpush1.bf16.msra.mxu0 %v5044
  %5065 = vmatprep.subr.bf16.mxu0 0
  %5066 = vmatpush1.bf16.msra.mxu0 %v5045
  %5067 = vmatprep.subr.bf16.mxu0 0
  %5068 = vmatpush1.bf16.msra.mxu0 %v5046
  %5069 = vmatprep.subr.bf16.mxu0 0
  %5070 = vmatpush1.bf16.msra.mxu0 %v5047
  %5071 = vmatprep.subr.bf16.mxu0 0
  %5072 = vmatpush1.bf16.msra.mxu0 %v5048
  %5073 = vmatprep.subr.bf16.mxu0 0
  %5074 = vmatpush1.bf16.msra.mxu0 0
  %5075 = vmatprep.subr.bf16.mxu0 0
  %5076 = vmatpush1.bf16.msra.mxu0 0
  %5077 = vmatprep.subr.bf16.mxu0 0
  %5078 = vmatpush1.bf16.msra.mxu0 0
  %5079 = vmatprep.subr.bf16.mxu0 0
  %5080 = vmatpush1.bf16.msra.mxu0 0
  %5081 = vmatprep.subr.bf16.mxu0 0
  %5082 = vmatpush1.bf16.msra.mxu0 0
  %5083 = vmatprep.subr.bf16.mxu0 0
  %5084 = vmatpush1.bf16.msra.mxu0 0
  %5085 = vmatprep.subr.bf16.mxu0 0
  %5086 = vmatpush1.bf16.msra.mxu0 0
  %5087 = vmatprep.subr.bf16.mxu0 0
  %5088 = vmatpush1.bf16.msra.mxu0 0
  %5089 = vmatprep.mubr.bf16.mxu0 0
  %5090 = vmatmul.mubr.bf16.gmra.mrb[0].mxu0 %v4992
  %v5091 = vpop.f32.mrb[0].mxu0
  %v5092 = vadd.f32 0.0, %v5091
  %v5093 = vpop.f32.mrb[0].mxu0
  %v5094 = vpop.f32.mrb[0].mxu0
  %v5095 = vadd.f32 0.0, %v5094
  %v5096 = vpop.f32.mrb[0].mxu0
  %5097 = vdwg.mxu0
  %v5098 = vadd.f32 %v4990, %v5092
  %v5099 = vadd.f32 %v4991, %v5095
  %v5100 = vxor.u32 %v5098, 2147483648
  %v5101 = vxor.u32 %v5099, 2147483648
  %v5102 = vmul.f32 %v5100, 1.442695
  %v5103 = vpow.pop %v5102
  %v5104 = vmul.f32 %v5101, 1.442695
  %v5105 = vpow.pop %v5104
  %v5106 = vadd.f32 %v5103, 1.0
  %v5107 = vadd.f32 %v5105, 1.0
  %v5108 = vrcp.pop %v5106
  %v5109 = vmul.f32 1.0, %v5108
  %v5110 = vrcp.pop %v5107
  %v5111 = vmul.f32 1.0, %v5110
  %v5112 = vtanh.pop %v5098
  %v5113 = vtanh.pop %v5099
  %5114 = vrot.lane.b32.xlu0 %v5109, 16
  %v5115 = vpop.permute.xlu0 %5114
  %5116 = vrot.lane.b32.xlu0 %v5111, 16
  %v5117 = vpop.permute.xlu0 %5116
  %5118 = vrot.lane.b32.xlu0 %v5112, 32
  %v5119 = vpop.permute.xlu0 %5118
  %5120 = vrot.lane.b32.xlu0 %v5113, 32
  %v5121 = vpop.permute.xlu0 %5120
  %5122 = vrot.lane.b32.xlu0 %v5109, 48
  %v5123 = vpop.permute.xlu0 %5122
  %5124 = vrot.lane.b32.xlu0 %v5111, 48
  %v5125 = vpop.permute.xlu0 %5124
  %v5126 = vmul.f32 %v5115, %v4832
  %v5127 = vmul.f32 %v5117, %v4833
  %v5128 = vmul.f32 %v5109, %v5119
  %v5129 = vmul.f32 %v5111, %v5121
  %v5130 = vadd.f32 %v5126, %v5128
  %v5131 = vadd.f32 %v5127, %v5129
  %v5132 = vtanh.pop %v5130
  %v5133 = vtanh.pop %v5131
  %v5134 = vmul.f32 %v5123, %v5132
  %v5135 = vmul.f32 %v5125, %v5133
  %v5136 = vsel %vm1070, %v5134, %v4830
  %v5137 = vsel %vm1071, %v5135, %v4831
  %v5138 = vsel %vm1070, %v5130, %v4832
  %v5139 = vsel %vm1071, %v5131, %v4833
  %5140 = vst [vmem:[%s4372] sm:$0xff] %v5136
  %5141 = vst [vmem:[%s4372 + $0x10] sm:$0xff] %v5137
  %s5142 = scalar_lea.vmem [#allocation5], 32
  %v5143 = vld [vmem:[%s5142] sm:$0xff]
  %v5144 = vld [vmem:[%s5142 + $0x8] sm:$0xff]
  %v5145 = vpack.c.bf16 %v4984, %v4983
  %v5146 = vld [vmem:[%s9] sm:$0xf]
  %v5147 = vld [vmem:[%s9 + $0x4] sm:$0xf]
  %v5148 = vld [vmem:[%s9 + $0x8] sm:$0xf]
  %v5149 = vld [vmem:[%s9 + $0xc] sm:$0xf]
  %v5150 = vld [vmem:[%s9 + $0x10] sm:$0xf]
  %v5151 = vld [vmem:[%s9 + $0x14] sm:$0xf]
  %v5152 = vld [vmem:[%s9 + $0x18] sm:$0xf]
  %v5153 = vld [vmem:[%s9 + $0x1c] sm:$0xf]
  %v5154 = vld [vmem:[%s9 + $0x20] sm:$0xf]
  %v5155 = vld [vmem:[%s9 + $0x24] sm:$0xf]
  %v5156 = vld [vmem:[%s9 + $0x28] sm:$0xf]
  %v5157 = vld [vmem:[%s9 + $0x2c] sm:$0xf]
  %v5158 = vld [vmem:[%s9 + $0x30] sm:$0xf]
  %v5159 = vld [vmem:[%s9 + $0x34] sm:$0xf]
  %v5160 = vld [vmem:[%s9 + $0x38] sm:$0xf]
  %v5161 = vld [vmem:[%s9 + $0x3c] sm:$0xf]
  %v5178 = vunpack.c.l.b16 %v5146
  %v5179 = vunpack.c.l.b16 %v5147
  %v5180 = vunpack.c.l.b16 %v5148
  %v5181 = vunpack.c.l.b16 %v5149
  %v5182 = vunpack.c.l.b16 %v5150
  %v5183 = vunpack.c.l.b16 %v5151
  %v5184 = vunpack.c.l.b16 %v5152
  %v5185 = vunpack.c.l.b16 %v5153
  %v5186 = vunpack.c.l.b16 %v5154
  %v5187 = vunpack.c.l.b16 %v5155
  %v5188 = vunpack.c.l.b16 %v5156
  %v5189 = vunpack.c.l.b16 %v5157
  %v5190 = vunpack.c.l.b16 %v5158
  %v5191 = vunpack.c.l.b16 %v5159
  %v5192 = vunpack.c.l.b16 %v5160
  %v5193 = vunpack.c.l.b16 %v5161
  %v5194 = vpack.c.b16 %v5179, %v5178
  %v5195 = vpack.c.b16 %v5181, %v5180
  %v5196 = vpack.c.b16 %v5183, %v5182
  %v5197 = vpack.c.b16 %v5185, %v5184
  %v5198 = vpack.c.b16 %v5187, %v5186
  %v5199 = vpack.c.b16 %v5189, %v5188
  %v5200 = vpack.c.b16 %v5191, %v5190
  %v5201 = vpack.c.b16 %v5193, %v5192
  %5210 = vmatprep.subr.bf16.mxu0 0
  %5211 = vmatpush1.bf16.msra.mxu0 %v5194
  %5212 = vmatprep.subr.bf16.mxu0 0
  %5213 = vmatpush1.bf16.msra.mxu0 %v5195
  %5214 = vmatprep.subr.bf16.mxu0 0
  %5215 = vmatpush1.bf16.msra.mxu0 %v5196
  %5216 = vmatprep.subr.bf16.mxu0 0
  %5217 = vmatpush1.bf16.msra.mxu0 %v5197
  %5218 = vmatprep.subr.bf16.mxu0 0
  %5219 = vmatpush1.bf16.msra.mxu0 %v5198
  %5220 = vmatprep.subr.bf16.mxu0 0
  %5221 = vmatpush1.bf16.msra.mxu0 %v5199
  %5222 = vmatprep.subr.bf16.mxu0 0
  %5223 = vmatpush1.bf16.msra.mxu0 %v5200
  %5224 = vmatprep.subr.bf16.mxu0 0
  %5225 = vmatpush1.bf16.msra.mxu0 %v5201
  %5226 = vmatprep.subr.bf16.mxu0 0
  %5227 = vmatpush1.bf16.msra.mxu0 0
  %5228 = vmatprep.subr.bf16.mxu0 0
  %5229 = vmatpush1.bf16.msra.mxu0 0
  %5230 = vmatprep.subr.bf16.mxu0 0
  %5231 = vmatpush1.bf16.msra.mxu0 0
  %5232 = vmatprep.subr.bf16.mxu0 0
  %5233 = vmatpush1.bf16.msra.mxu0 0
  %5234 = vmatprep.subr.bf16.mxu0 0
  %5235 = vmatpush1.bf16.msra.mxu0 0
  %5236 = vmatprep.subr.bf16.mxu0 0
  %5237 = vmatpush1.bf16.msra.mxu0 0
  %5238 = vmatprep.subr.bf16.mxu0 0
  %5239 = vmatpush1.bf16.msra.mxu0 0
  %5240 = vmatprep.subr.bf16.mxu0 0
  %5241 = vmatpush1.bf16.msra.mxu0 0
  %5242 = vmatprep.mubr.bf16.mxu0 0
  %5243 = vmatmul.mubr.bf16.gmra.mrb[0].mxu0 %v5145
  %v5244 = vpop.f32.mrb[0].mxu0
  %v5245 = vadd.f32 0.0, %v5244
  %v5246 = vpop.f32.mrb[0].mxu0
  %v5247 = vpop.f32.mrb[0].mxu0
  %v5248 = vadd.f32 0.0, %v5247
  %v5249 = vpop.f32.mrb[0].mxu0
  %5250 = vdwg.mxu0
  %v5251 = vadd.f32 %v5143, %v5245
  %v5252 = vadd.f32 %v5144, %v5248
  %v5253 = vxor.u32 %v5251, 2147483648
  %v5254 = vxor.u32 %v5252, 2147483648
  %v5255 = vmul.f32 %v5253, 1.442695
  %v5256 = vpow.pop %v5255
  %v5257 = vmul.f32 %v5254, 1.442695
  %v5258 = vpow.pop %v5257
  %v5259 = vadd.f32 %v5256, 1.0
  %v5260 = vadd.f32 %v5258, 1.0
  %v5261 = vrcp.pop %v5259
  %v5262 = vmul.f32 1.0, %v5261
  %v5263 = vrcp.pop %v5260
  %v5264 = vmul.f32 1.0, %v5263
  %v5265 = vtanh.pop %v5251
  %v5266 = vtanh.pop %v5252
  %5267 = vrot.lane.b32.xlu0 %v5262, 16
  %v5268 = vpop.permute.xlu0 %5267
  %5269 = vrot.lane.b32.xlu0 %v5264, 16
  %v5270 = vpop.permute.xlu0 %5269
  %5271 = vrot.lane.b32.xlu0 %v5265, 32
  %v5272 = vpop.permute.xlu0 %5271
  %5273 = vrot.lane.b32.xlu0 %v5266, 32
  %v5274 = vpop.permute.xlu0 %5273
  %5275 = vrot.lane.b32.xlu0 %v5262, 48
  %v5276 = vpop.permute.xlu0 %5275
  %5277 = vrot.lane.b32.xlu0 %v5264, 48
  %v5278 = vpop.permute.xlu0 %5277
  %v5279 = vmul.f32 %v5268, %v4985
  %v5280 = vmul.f32 %v5270, %v4986
  %v5281 = vmul.f32 %v5262, %v5272
  %v5282 = vmul.f32 %v5264, %v5274
  %v5283 = vadd.f32 %v5279, %v5281
  %v5284 = vadd.f32 %v5280, %v5282
  %v5285 = vtanh.pop %v5283
  %v5286 = vtanh.pop %v5284
  %v5287 = vmul.f32 %v5276, %v5285
  %v5288 = vmul.f32 %v5278, %v5286
  %v5289 = vsel %vm1068, %v5287, %v4983
  %v5290 = vsel %vm1069, %v5288, %v4984
  %v5291 = vsel %vm1068, %v5283, %v4985
  %v5292 = vsel %vm1069, %v5284, %v4986
  %5293 = vst [vmem:[%s4218 + $0x8] sm:$0xff] %v5289
  %5294 = vst [vmem:[%s4218 + $0x18] sm:$0xff] %v5290
  %s5295 = scalar_lea.vmem [#allocation4], 96
  %v5296 = vld [vmem:[%s5295] sm:$0xff]
  %v5297 = vld [vmem:[%s5295 + $0x8] sm:$0xff]
  %v5298 = vpack.c.bf16 %v5137, %v5136
  %v5299 = vld [vmem:[%s8] sm:$0xf]
  %v5300 = vld [vmem:[%s8 + $0x4] sm:$0xf]
  %v5301 = vld [vmem:[%s8 + $0x8] sm:$0xf]
  %v5302 = vld [vmem:[%s8 + $0xc] sm:$0xf]
  %v5303 = vld [vmem:[%s8 + $0x10] sm:$0xf]
  %v5304 = vld [vmem:[%s8 + $0x14] sm:$0xf]
  %v5305 = vld [vmem:[%s8 + $0x18] sm:$0xf]
  %v5306 = vld [vmem:[%s8 + $0x1c] sm:$0xf]
  %v5307 = vld [vmem:[%s8 + $0x20] sm:$0xf]
  %v5308 = vld [vmem:[%s8 + $0x24] sm:$0xf]
  %v5309 = vld [vmem:[%s8 + $0x28] sm:$0xf]
  %v5310 = vld [vmem:[%s8 + $0x2c] sm:$0xf]
  %v5311 = vld [vmem:[%s8 + $0x30] sm:$0xf]
  %v5312 = vld [vmem:[%s8 + $0x34] sm:$0xf]
  %v5313 = vld [vmem:[%s8 + $0x38] sm:$0xf]
  %v5314 = vld [vmem:[%s8 + $0x3c] sm:$0xf]
  %v5331 = vunpack.c.l.b16 %v5299
  %v5332 = vunpack.c.l.b16 %v5300
  %v5333 = vunpack.c.l.b16 %v5301
  %v5334 = vunpack.c.l.b16 %v5302
  %v5335 = vunpack.c.l.b16 %v5303
  %v5336 = vunpack.c.l.b16 %v5304
  %v5337 = vunpack.c.l.b16 %v5305
  %v5338 = vunpack.c.l.b16 %v5306
  %v5339 = vunpack.c.l.b16 %v5307
  %v5340 = vunpack.c.l.b16 %v5308
  %v5341 = vunpack.c.l.b16 %v5309
  %v5342 = vunpack.c.l.b16 %v5310
  %v5343 = vunpack.c.l.b16 %v5311
  %v5344 = vunpack.c.l.b16 %v5312
  %v5345 = vunpack.c.l.b16 %v5313
  %v5346 = vunpack.c.l.b16 %v5314
  %v5347 = vpack.c.b16 %v5332, %v5331
  %v5348 = vpack.c.b16 %v5334, %v5333
  %v5349 = vpack.c.b16 %v5336, %v5335
  %v5350 = vpack.c.b16 %v5338, %v5337
  %v5351 = vpack.c.b16 %v5340, %v5339
  %v5352 = vpack.c.b16 %v5342, %v5341
  %v5353 = vpack.c.b16 %v5344, %v5343
  %v5354 = vpack.c.b16 %v5346, %v5345
  %5363 = vmatprep.subr.bf16.mxu0 0
  %5364 = vmatpush1.bf16.msra.mxu0 %v5347
  %5365 = vmatprep.subr.bf16.mxu0 0
  %5366 = vmatpush1.bf16.msra.mxu0 %v5348
  %5367 = vmatprep.subr.bf16.mxu0 0
  %5368 = vmatpush1.bf16.msra.mxu0 %v5349
  %5369 = vmatprep.subr.bf16.mxu0 0
  %5370 = vmatpush1.bf16.msra.mxu0 %v5350
  %5371 = vmatprep.subr.bf16.mxu0 0
  %5372 = vmatpush1.bf16.msra.mxu0 %v5351
  %5373 = vmatprep.subr.bf16.mxu0 0
  %5374 = vmatpush1.bf16.msra.mxu0 %v5352
  %5375 = vmatprep.subr.bf16.mxu0 0
  %5376 = vmatpush1.bf16.msra.mxu0 %v5353
  %5377 = vmatprep.subr.bf16.mxu0 0
  %5378 = vmatpush1.bf16.msra.mxu0 %v5354
  %5379 = vmatprep.subr.bf16.mxu0 0
  %5380 = vmatpush1.bf16.msra.mxu0 0
  %5381 = vmatprep.subr.bf16.mxu0 0
  %5382 = vmatpush1.bf16.msra.mxu0 0
  %5383 = vmatprep.subr.bf16.mxu0 0
  %5384 = vmatpush1.bf16.msra.mxu0 0
  %5385 = vmatprep.subr.bf16.mxu0 0
  %5386 = vmatpush1.bf16.msra.mxu0 0
  %5387 = vmatprep.subr.bf16.mxu0 0
  %5388 = vmatpush1.bf16.msra.mxu0 0
  %5389 = vmatprep.subr.bf16.mxu0 0
  %5390 = vmatpush1.bf16.msra.mxu0 0
  %5391 = vmatprep.subr.bf16.mxu0 0
  %5392 = vmatpush1.bf16.msra.mxu0 0
  %5393 = vmatprep.subr.bf16.mxu0 0
  %5394 = vmatpush1.bf16.msra.mxu0 0
  %5395 = vmatprep.mubr.bf16.mxu0 0
  %5396 = vmatmul.mubr.bf16.gmra.mrb[0].mxu0 %v5298
  %v5397 = vpop.f32.mrb[0].mxu0
  %v5398 = vadd.f32 0.0, %v5397
  %v5399 = vpop.f32.mrb[0].mxu0
  %v5400 = vpop.f32.mrb[0].mxu0
  %v5401 = vadd.f32 0.0, %v5400
  %v5402 = vpop.f32.mrb[0].mxu0
  %5403 = vdwg.mxu0
  %v5404 = vadd.f32 %v5296, %v5398
  %v5405 = vadd.f32 %v5297, %v5401
  %v5406 = vxor.u32 %v5404, 2147483648
  %v5407 = vxor.u32 %v5405, 2147483648
  %v5408 = vmul.f32 %v5406, 1.442695
  %v5409 = vpow.pop %v5408
  %v5410 = vmul.f32 %v5407, 1.442695
  %v5411 = vpow.pop %v5410
  %v5412 = vadd.f32 %v5409, 1.0
  %v5413 = vadd.f32 %v5411, 1.0
  %v5414 = vrcp.pop %v5412
  %v5415 = vmul.f32 1.0, %v5414
  %v5416 = vrcp.pop %v5413
  %v5417 = vmul.f32 1.0, %v5416
  %v5418 = vtanh.pop %v5404
  %v5419 = vtanh.pop %v5405
  %5420 = vrot.lane.b32.xlu0 %v5415, 16
  %v5421 = vpop.permute.xlu0 %5420
  %5422 = vrot.lane.b32.xlu0 %v5417, 16
  %v5423 = vpop.permute.xlu0 %5422
  %5424 = vrot.lane.b32.xlu0 %v5418, 32
  %v5425 = vpop.permute.xlu0 %5424
  %5426 = vrot.lane.b32.xlu0 %v5419, 32
  %v5427 = vpop.permute.xlu0 %5426
  %5428 = vrot.lane.b32.xlu0 %v5415, 48
  %v5429 = vpop.permute.xlu0 %5428
  %5430 = vrot.lane.b32.xlu0 %v5417, 48
  %v5431 = vpop.permute.xlu0 %5430
  %v5432 = vmul.f32 %v5421, %v5138
  %v5433 = vmul.f32 %v5423, %v5139
  %v5434 = vmul.f32 %v5415, %v5425
  %v5435 = vmul.f32 %v5417, %v5427
  %v5436 = vadd.f32 %v5432, %v5434
  %v5437 = vadd.f32 %v5433, %v5435
  %v5438 = vtanh.pop %v5436
  %v5439 = vtanh.pop %v5437
  %v5440 = vmul.f32 %v5429, %v5438
  %v5441 = vmul.f32 %v5431, %v5439
  %v5442 = vsel %vm758, %v5440, %v5136
  %v5443 = vsel %vm759, %v5441, %v5137
  %v5444 = vsel %vm758, %v5436, %v5138
  %v5445 = vsel %vm759, %v5437, %v5139
  %5446 = vst [vmem:[%s4064] sm:$0xff] %v5442
  %5447 = vst [vmem:[%s4064 + $0x10] sm:$0xff] %v5443
  %s5448 = scalar_lea.vmem [#allocation5], 16
  %v5449 = vld [vmem:[%s5448] sm:$0xff]
  %v5450 = vld [vmem:[%s5448 + $0x8] sm:$0xff]
  %v5451 = vpack.c.bf16 %v5290, %v5289
  %v5452 = vld [vmem:[%s9] sm:$0xf]
  %v5453 = vld [vmem:[%s9 + $0x4] sm:$0xf]
  %v5454 = vld [vmem:[%s9 + $0x8] sm:$0xf]
  %v5455 = vld [vmem:[%s9 + $0xc] sm:$0xf]
  %v5456 = vld [vmem:[%s9 + $0x10] sm:$0xf]
  %v5457 = vld [vmem:[%s9 + $0x14] sm:$0xf]
  %v5458 = vld [vmem:[%s9 + $0x18] sm:$0xf]
  %v5459 = vld [vmem:[%s9 + $0x1c] sm:$0xf]
  %v5460 = vld [vmem:[%s9 + $0x20] sm:$0xf]
  %v5461 = vld [vmem:[%s9 + $0x24] sm:$0xf]
  %v5462 = vld [vmem:[%s9 + $0x28] sm:$0xf]
  %v5463 = vld [vmem:[%s9 + $0x2c] sm:$0xf]
  %v5464 = vld [vmem:[%s9 + $0x30] sm:$0xf]
  %v5465 = vld [vmem:[%s9 + $0x34] sm:$0xf]
  %v5466 = vld [vmem:[%s9 + $0x38] sm:$0xf]
  %v5467 = vld [vmem:[%s9 + $0x3c] sm:$0xf]
  %v5484 = vunpack.c.l.b16 %v5452
  %v5485 = vunpack.c.l.b16 %v5453
  %v5486 = vunpack.c.l.b16 %v5454
  %v5487 = vunpack.c.l.b16 %v5455
  %v5488 = vunpack.c.l.b16 %v5456
  %v5489 = vunpack.c.l.b16 %v5457
  %v5490 = vunpack.c.l.b16 %v5458
  %v5491 = vunpack.c.l.b16 %v5459
  %v5492 = vunpack.c.l.b16 %v5460
  %v5493 = vunpack.c.l.b16 %v5461
  %v5494 = vunpack.c.l.b16 %v5462
  %v5495 = vunpack.c.l.b16 %v5463
  %v5496 = vunpack.c.l.b16 %v5464
  %v5497 = vunpack.c.l.b16 %v5465
  %v5498 = vunpack.c.l.b16 %v5466
  %v5499 = vunpack.c.l.b16 %v5467
  %v5500 = vpack.c.b16 %v5485, %v5484
  %v5501 = vpack.c.b16 %v5487, %v5486
  %v5502 = vpack.c.b16 %v5489, %v5488
  %v5503 = vpack.c.b16 %v5491, %v5490
  %v5504 = vpack.c.b16 %v5493, %v5492
  %v5505 = vpack.c.b16 %v5495, %v5494
  %v5506 = vpack.c.b16 %v5497, %v5496
  %v5507 = vpack.c.b16 %v5499, %v5498
  %5516 = vmatprep.subr.bf16.mxu0 0
  %5517 = vmatpush1.bf16.msra.mxu0 %v5500
  %5518 = vmatprep.subr.bf16.mxu0 0
  %5519 = vmatpush1.bf16.msra.mxu0 %v5501
  %5520 = vmatprep.subr.bf16.mxu0 0
  %5521 = vmatpush1.bf16.msra.mxu0 %v5502
  %5522 = vmatprep.subr.bf16.mxu0 0
  %5523 = vmatpush1.bf16.msra.mxu0 %v5503
  %5524 = vmatprep.subr.bf16.mxu0 0
  %5525 = vmatpush1.bf16.msra.mxu0 %v5504
  %5526 = vmatprep.subr.bf16.mxu0 0
  %5527 = vmatpush1.bf16.msra.mxu0 %v5505
  %5528 = vmatprep.subr.bf16.mxu0 0
  %5529 = vmatpush1.bf16.msra.mxu0 %v5506
  %5530 = vmatprep.subr.bf16.mxu0 0
  %5531 = vmatpush1.bf16.msra.mxu0 %v5507
  %5532 = vmatprep.subr.bf16.mxu0 0
  %5533 = vmatpush1.bf16.msra.mxu0 0
  %5534 = vmatprep.subr.bf16.mxu0 0
  %5535 = vmatpush1.bf16.msra.mxu0 0
  %5536 = vmatprep.subr.bf16.mxu0 0
  %5537 = vmatpush1.bf16.msra.mxu0 0
  %5538 = vmatprep.subr.bf16.mxu0 0
  %5539 = vmatpush1.bf16.msra.mxu0 0
  %5540 = vmatprep.subr.bf16.mxu0 0
  %5541 = vmatpush1.bf16.msra.mxu0 0
  %5542 = vmatprep.subr.bf16.mxu0 0
  %5543 = vmatpush1.bf16.msra.mxu0 0
  %5544 = vmatprep.subr.bf16.mxu0 0
  %5545 = vmatpush1.bf16.msra.mxu0 0
  %5546 = vmatprep.subr.bf16.mxu0 0
  %5547 = vmatpush1.bf16.msra.mxu0 0
  %5548 = vmatprep.mubr.bf16.mxu0 0
  %5549 = vmatmul.mubr.bf16.gmra.mrb[0].mxu0 %v5451
  %v5550 = vpop.f32.mrb[0].mxu0
  %v5551 = vadd.f32 0.0, %v5550
  %v5552 = vpop.f32.mrb[0].mxu0
  %v5553 = vpop.f32.mrb[0].mxu0
  %v5554 = vadd.f32 0.0, %v5553
  %v5555 = vpop.f32.mrb[0].mxu0
  %5556 = vdwg.mxu0
  %v5557 = vadd.f32 %v5449, %v5551
  %v5558 = vadd.f32 %v5450, %v5554
  %v5559 = vxor.u32 %v5557, 2147483648
  %v5560 = vxor.u32 %v5558, 2147483648
  %v5561 = vmul.f32 %v5559, 1.442695
  %v5562 = vpow.pop %v5561
  %v5563 = vmul.f32 %v5560, 1.442695
  %v5564 = vpow.pop %v5563
  %v5565 = vadd.f32 %v5562, 1.0
  %v5566 = vadd.f32 %v5564, 1.0
  %v5567 = vrcp.pop %v5565
  %v5568 = vmul.f32 1.0, %v5567
  %v5569 = vrcp.pop %v5566
  %v5570 = vmul.f32 1.0, %v5569
  %v5571 = vtanh.pop %v5557
  %v5572 = vtanh.pop %v5558
  %5573 = vrot.lane.b32.xlu0 %v5568, 16
  %v5574 = vpop.permute.xlu0 %5573
  %5575 = vrot.lane.b32.xlu0 %v5570, 16
  %v5576 = vpop.permute.xlu0 %5575
  %5577 = vrot.lane.b32.xlu0 %v5571, 32
  %v5578 = vpop.permute.xlu0 %5577
  %5579 = vrot.lane.b32.xlu0 %v5572, 32
  %v5580 = vpop.permute.xlu0 %5579
  %5581 = vrot.lane.b32.xlu0 %v5568, 48
  %v5582 = vpop.permute.xlu0 %5581
  %5583 = vrot.lane.b32.xlu0 %v5570, 48
  %v5584 = vpop.permute.xlu0 %5583
  %v5585 = vmul.f32 %v5574, %v5291
  %v5586 = vmul.f32 %v5576, %v5292
  %v5587 = vmul.f32 %v5568, %v5578
  %v5588 = vmul.f32 %v5570, %v5580
  %v5589 = vadd.f32 %v5585, %v5587
  %v5590 = vadd.f32 %v5586, %v5588
  %v5591 = vtanh.pop %v5589
  %v5592 = vtanh.pop %v5590
  %v5593 = vmul.f32 %v5582, %v5591
  %v5594 = vmul.f32 %v5584, %v5592
  %v5595 = vsel %vm756, %v5593, %v5289
  %v5596 = vsel %vm757, %v5594, %v5290
  %v5597 = vsel %vm756, %v5589, %v5291
  %v5598 = vsel %vm757, %v5590, %v5292
  %5599 = vst [vmem:[%s3910 + $0x8] sm:$0xff] %v5595
  %5600 = vst [vmem:[%s3910 + $0x18] sm:$0xff] %v5596
  %s5601 = scalar_lea.vmem [#allocation4], 112
  %v5602 = vld [vmem:[%s5601] sm:$0xff]
  %v5603 = vld [vmem:[%s5601 + $0x8] sm:$0xff]
  %v5604 = vpack.c.bf16 %v5443, %v5442
  %v5605 = vld [vmem:[%s8] sm:$0xf]
  %v5606 = vld [vmem:[%s8 + $0x4] sm:$0xf]
  %v5607 = vld [vmem:[%s8 + $0x8] sm:$0xf]
  %v5608 = vld [vmem:[%s8 + $0xc] sm:$0xf]
  %v5609 = vld [vmem:[%s8 + $0x10] sm:$0xf]
  %v5610 = vld [vmem:[%s8 + $0x14] sm:$0xf]
  %v5611 = vld [vmem:[%s8 + $0x18] sm:$0xf]
  %v5612 = vld [vmem:[%s8 + $0x1c] sm:$0xf]
  %v5613 = vld [vmem:[%s8 + $0x20] sm:$0xf]
  %v5614 = vld [vmem:[%s8 + $0x24] sm:$0xf]
  %v5615 = vld [vmem:[%s8 + $0x28] sm:$0xf]
  %v5616 = vld [vmem:[%s8 + $0x2c] sm:$0xf]
  %v5617 = vld [vmem:[%s8 + $0x30] sm:$0xf]
  %v5618 = vld [vmem:[%s8 + $0x34] sm:$0xf]
  %v5619 = vld [vmem:[%s8 + $0x38] sm:$0xf]
  %v5620 = vld [vmem:[%s8 + $0x3c] sm:$0xf]
  %v5637 = vunpack.c.l.b16 %v5605
  %v5638 = vunpack.c.l.b16 %v5606
  %v5639 = vunpack.c.l.b16 %v5607
  %v5640 = vunpack.c.l.b16 %v5608
  %v5641 = vunpack.c.l.b16 %v5609
  %v5642 = vunpack.c.l.b16 %v5610
  %v5643 = vunpack.c.l.b16 %v5611
  %v5644 = vunpack.c.l.b16 %v5612
  %v5645 = vunpack.c.l.b16 %v5613
  %v5646 = vunpack.c.l.b16 %v5614
  %v5647 = vunpack.c.l.b16 %v5615
  %v5648 = vunpack.c.l.b16 %v5616
  %v5649 = vunpack.c.l.b16 %v5617
  %v5650 = vunpack.c.l.b16 %v5618
  %v5651 = vunpack.c.l.b16 %v5619
  %v5652 = vunpack.c.l.b16 %v5620
  %v5653 = vpack.c.b16 %v5638, %v5637
  %v5654 = vpack.c.b16 %v5640, %v5639
  %v5655 = vpack.c.b16 %v5642, %v5641
  %v5656 = vpack.c.b16 %v5644, %v5643
  %v5657 = vpack.c.b16 %v5646, %v5645
  %v5658 = vpack.c.b16 %v5648, %v5647
  %v5659 = vpack.c.b16 %v5650, %v5649
  %v5660 = vpack.c.b16 %v5652, %v5651
  %5669 = vmatprep.subr.bf16.mxu0 0
  %5670 = vmatpush1.bf16.msra.mxu0 %v5653
  %5671 = vmatprep.subr.bf16.mxu0 0
  %5672 = vmatpush1.bf16.msra.mxu0 %v5654
  %5673 = vmatprep.subr.bf16.mxu0 0
  %5674 = vmatpush1.bf16.msra.mxu0 %v5655
  %5675 = vmatprep.subr.bf16.mxu0 0
  %5676 = vmatpush1.bf16.msra.mxu0 %v5656
  %5677 = vmatprep.subr.bf16.mxu0 0
  %5678 = vmatpush1.bf16.msra.mxu0 %v5657
  %5679 = vmatprep.subr.bf16.mxu0 0
  %5680 = vmatpush1.bf16.msra.mxu0 %v5658
  %5681 = vmatprep.subr.bf16.mxu0 0
  %5682 = vmatpush1.bf16.msra.mxu0 %v5659
  %5683 = vmatprep.subr.bf16.mxu0 0
  %5684 = vmatpush1.bf16.msra.mxu0 %v5660
  %5685 = vmatprep.subr.bf16.mxu0 0
  %5686 = vmatpush1.bf16.msra.mxu0 0
  %5687 = vmatprep.subr.bf16.mxu0 0
  %5688 = vmatpush1.bf16.msra.mxu0 0
  %5689 = vmatprep.subr.bf16.mxu0 0
  %5690 = vmatpush1.bf16.msra.mxu0 0
  %5691 = vmatprep.subr.bf16.mxu0 0
  %5692 = vmatpush1.bf16.msra.mxu0 0
  %5693 = vmatprep.subr.bf16.mxu0 0
  %5694 = vmatpush1.bf16.msra.mxu0 0
  %5695 = vmatprep.subr.bf16.mxu0 0
  %5696 = vmatpush1.bf16.msra.mxu0 0
  %5697 = vmatprep.subr.bf16.mxu0 0
  %5698 = vmatpush1.bf16.msra.mxu0 0
  %5699 = vmatprep.subr.bf16.mxu0 0
  %5700 = vmatpush1.bf16.msra.mxu0 0
  %5701 = vmatprep.mubr.bf16.mxu0 0
  %5702 = vmatmul.mubr.bf16.gmra.mrb[0].mxu0 %v5604
  %v5703 = vpop.f32.mrb[0].mxu0
  %v5704 = vadd.f32 0.0, %v5703
  %v5705 = vpop.f32.mrb[0].mxu0
  %v5706 = vpop.f32.mrb[0].mxu0
  %v5707 = vadd.f32 0.0, %v5706
  %v5708 = vpop.f32.mrb[0].mxu0
  %5709 = vdwg.mxu0
  %v5710 = vadd.f32 %v5602, %v5704
  %v5711 = vadd.f32 %v5603, %v5707
  %v5712 = vxor.u32 %v5710, 2147483648
  %v5713 = vxor.u32 %v5711, 2147483648
  %v5714 = vmul.f32 %v5712, 1.442695
  %v5715 = vpow.pop %v5714
  %v5716 = vmul.f32 %v5713, 1.442695
  %v5717 = vpow.pop %v5716
  %v5718 = vadd.f32 %v5715, 1.0
  %v5719 = vadd.f32 %v5717, 1.0
  %v5720 = vrcp.pop %v5718
  %v5721 = vmul.f32 1.0, %v5720
  %v5722 = vrcp.pop %v5719
  %v5723 = vmul.f32 1.0, %v5722
  %v5724 = vtanh.pop %v5710
  %v5725 = vtanh.pop %v5711
  %5726 = vrot.lane.b32.xlu0 %v5721, 16
  %v5727 = vpop.permute.xlu0 %5726
  %5728 = vrot.lane.b32.xlu0 %v5723, 16
  %v5729 = vpop.permute.xlu0 %5728
  %5730 = vrot.lane.b32.xlu0 %v5724, 32
  %v5731 = vpop.permute.xlu0 %5730
  %5732 = vrot.lane.b32.xlu0 %v5725, 32
  %v5733 = vpop.permute.xlu0 %5732
  %5734 = vrot.lane.b32.xlu0 %v5721, 48
  %v5735 = vpop.permute.xlu0 %5734
  %5736 = vrot.lane.b32.xlu0 %v5723, 48
  %v5737 = vpop.permute.xlu0 %5736
  %v5738 = vmul.f32 %v5727, %v5444
  %v5739 = vmul.f32 %v5729, %v5445
  %v5740 = vmul.f32 %v5721, %v5731
  %v5741 = vmul.f32 %v5723, %v5733
  %v5742 = vadd.f32 %v5738, %v5740
  %v5743 = vadd.f32 %v5739, %v5741
  %v5744 = vtanh.pop %v5742
  %v5745 = vtanh.pop %v5743
  %v5746 = vmul.f32 %v5735, %v5744
  %v5747 = vmul.f32 %v5737, %v5745
  %v5748 = vsel %vm450, %v5746, %v5442
  %v5749 = vsel %vm451, %v5747, %v5443
  %5750 = vst [vmem:[%s3756] sm:$0xff] %v5748
  %5751 = vst [vmem:[%s3756 + $0x10] sm:$0xff] %v5749
  %v5752 = vld [vmem:[#allocation5] sm:$0xff]
  %v5753 = vld [vmem:[#allocation5 + $0x8] sm:$0xff]
  %v5754 = vpack.c.bf16 %v5596, %v5595
  %v5755 = vld [vmem:[%s9] sm:$0xf]
  %v5756 = vld [vmem:[%s9 + $0x4] sm:$0xf]
  %v5757 = vld [vmem:[%s9 + $0x8] sm:$0xf]
  %v5758 = vld [vmem:[%s9 + $0xc] sm:$0xf]
  %v5759 = vld [vmem:[%s9 + $0x10] sm:$0xf]
  %v5760 = vld [vmem:[%s9 + $0x14] sm:$0xf]
  %v5761 = vld [vmem:[%s9 + $0x18] sm:$0xf]
  %v5762 = vld [vmem:[%s9 + $0x1c] sm:$0xf]
  %v5763 = vld [vmem:[%s9 + $0x20] sm:$0xf]
  %v5764 = vld [vmem:[%s9 + $0x24] sm:$0xf]
  %v5765 = vld [vmem:[%s9 + $0x28] sm:$0xf]
  %v5766 = vld [vmem:[%s9 + $0x2c] sm:$0xf]
  %v5767 = vld [vmem:[%s9 + $0x30] sm:$0xf]
  %v5768 = vld [vmem:[%s9 + $0x34] sm:$0xf]
  %v5769 = vld [vmem:[%s9 + $0x38] sm:$0xf]
  %v5770 = vld [vmem:[%s9 + $0x3c] sm:$0xf]
  %v5787 = vunpack.c.l.b16 %v5755
  %v5788 = vunpack.c.l.b16 %v5756
  %v5789 = vunpack.c.l.b16 %v5757
  %v5790 = vunpack.c.l.b16 %v5758
  %v5791 = vunpack.c.l.b16 %v5759
  %v5792 = vunpack.c.l.b16 %v5760
  %v5793 = vunpack.c.l.b16 %v5761
  %v5794 = vunpack.c.l.b16 %v5762
  %v5795 = vunpack.c.l.b16 %v5763
  %v5796 = vunpack.c.l.b16 %v5764
  %v5797 = vunpack.c.l.b16 %v5765
  %v5798 = vunpack.c.l.b16 %v5766
  %v5799 = vunpack.c.l.b16 %v5767
  %v5800 = vunpack.c.l.b16 %v5768
  %v5801 = vunpack.c.l.b16 %v5769
  %v5802 = vunpack.c.l.b16 %v5770
  %v5803 = vpack.c.b16 %v5788, %v5787
  %v5804 = vpack.c.b16 %v5790, %v5789
  %v5805 = vpack.c.b16 %v5792, %v5791
  %v5806 = vpack.c.b16 %v5794, %v5793
  %v5807 = vpack.c.b16 %v5796, %v5795
  %v5808 = vpack.c.b16 %v5798, %v5797
  %v5809 = vpack.c.b16 %v5800, %v5799
  %v5810 = vpack.c.b16 %v5802, %v5801
  %5819 = vmatprep.subr.bf16.mxu0 0
  %5820 = vmatpush1.bf16.msra.mxu0 %v5803
  %5821 = vmatprep.subr.bf16.mxu0 0
  %5822 = vmatpush1.bf16.msra.mxu0 %v5804
  %5823 = vmatprep.subr.bf16.mxu0 0
  %5824 = vmatpush1.bf16.msra.mxu0 %v5805
  %5825 = vmatprep.subr.bf16.mxu0 0
  %5826 = vmatpush1.bf16.msra.mxu0 %v5806
  %5827 = vmatprep.subr.bf16.mxu0 0
  %5828 = vmatpush1.bf16.msra.mxu0 %v5807
  %5829 = vmatprep.subr.bf16.mxu0 0
  %5830 = vmatpush1.bf16.msra.mxu0 %v5808
  %5831 = vmatprep.subr.bf16.mxu0 0
  %5832 = vmatpush1.bf16.msra.mxu0 %v5809
  %5833 = vmatprep.subr.bf16.mxu0 0
  %5834 = vmatpush1.bf16.msra.mxu0 %v5810
  %5835 = vmatprep.subr.bf16.mxu0 0
  %5836 = vmatpush1.bf16.msra.mxu0 0
  %5837 = vmatprep.subr.bf16.mxu0 0
  %5838 = vmatpush1.bf16.msra.mxu0 0
  %5839 = vmatprep.subr.bf16.mxu0 0
  %5840 = vmatpush1.bf16.msra.mxu0 0
  %5841 = vmatprep.subr.bf16.mxu0 0
  %5842 = vmatpush1.bf16.msra.mxu0 0
  %5843 = vmatprep.subr.bf16.mxu0 0
  %5844 = vmatpush1.bf16.msra.mxu0 0
  %5845 = vmatprep.subr.bf16.mxu0 0
  %5846 = vmatpush1.bf16.msra.mxu0 0
  %5847 = vmatprep.subr.bf16.mxu0 0
  %5848 = vmatpush1.bf16.msra.mxu0 0
  %5849 = vmatprep.subr.bf16.mxu0 0
  %5850 = vmatpush1.bf16.msra.mxu0 0
  %5851 = vmatprep.mubr.bf16.mxu0 0
  %5852 = vmatmul.mubr.bf16.gmra.mrb[0].mxu0 %v5754
  %v5853 = vpop.f32.mrb[0].mxu0
  %v5854 = vadd.f32 0.0, %v5853
  %v5855 = vpop.f32.mrb[0].mxu0
  %v5856 = vpop.f32.mrb[0].mxu0
  %v5857 = vadd.f32 0.0, %v5856
  %v5858 = vpop.f32.mrb[0].mxu0
  %5859 = vdwg.mxu0
  %v5860 = vadd.f32 %v5752, %v5854
  %v5861 = vadd.f32 %v5753, %v5857
  %v5862 = vxor.u32 %v5860, 2147483648
  %v5863 = vxor.u32 %v5861, 2147483648
  %v5864 = vmul.f32 %v5862, 1.442695
  %v5865 = vpow.pop %v5864
  %v5866 = vmul.f32 %v5863, 1.442695
  %v5867 = vpow.pop %v5866
  %v5868 = vadd.f32 %v5865, 1.0
  %v5869 = vadd.f32 %v5867, 1.0
  %v5870 = vrcp.pop %v5868
  %v5871 = vmul.f32 1.0, %v5870
  %v5872 = vrcp.pop %v5869
  %v5873 = vmul.f32 1.0, %v5872
  %v5874 = vtanh.pop %v5860
  %v5875 = vtanh.pop %v5861
  %5876 = vrot.lane.b32.xlu0 %v5871, 16
  %v5877 = vpop.permute.xlu0 %5876
  %5878 = vrot.lane.b32.xlu0 %v5873, 16
  %v5879 = vpop.permute.xlu0 %5878
  %5880 = vrot.lane.b32.xlu0 %v5874, 32
  %v5881 = vpop.permute.xlu0 %5880
  %5882 = vrot.lane.b32.xlu0 %v5875, 32
  %v5883 = vpop.permute.xlu0 %5882
  %5884 = vrot.lane.b32.xlu0 %v5871, 48
  %v5885 = vpop.permute.xlu0 %5884
  %5886 = vrot.lane.b32.xlu0 %v5873, 48
  %v5887 = vpop.permute.xlu0 %5886
  %v5888 = vmul.f32 %v5877, %v5597
  %v5889 = vmul.f32 %v5879, %v5598
  %v5890 = vmul.f32 %v5871, %v5881
  %v5891 = vmul.f32 %v5873, %v5883
  %v5892 = vadd.f32 %v5888, %v5890
  %v5893 = vadd.f32 %v5889, %v5891
  %v5894 = vtanh.pop %v5892
  %v5895 = vtanh.pop %v5893
  %v5896 = vmul.f32 %v5885, %v5894
  %v5897 = vmul.f32 %v5887, %v5895
  %v5898 = vsel %vm448, %v5896, %v5595
  %v5899 = vsel %vm449, %v5897, %v5596
  %5900 = vst [vmem:[#allocation7 + $0x8] sm:$0xff] %v5898
  %5901 = vst [vmem:[#allocation7 + $0x18] sm:$0xff] %v5899
  %v5902 = vld [vmem:[#allocation7] sm:$0xff]
  %v5903 = vld [vmem:[#allocation7 + $0x8] sm:$0xff]
  %v5904 = vld [vmem:[#allocation7 + $0x10] sm:$0xff]
  %v5905 = vld [vmem:[#allocation7 + $0x18] sm:$0xff]
  %v5906 = vld [vmem:[#allocation7 + $0x20] sm:$0xff]
  %v5907 = vld [vmem:[#allocation7 + $0x28] sm:$0xff]
  %v5908 = vld [vmem:[#allocation7 + $0x30] sm:$0xff]
  %v5909 = vld [vmem:[#allocation7 + $0x38] sm:$0xff]
  %v5910 = vld [vmem:[#allocation7 + $0x40] sm:$0xff]
  %v5911 = vld [vmem:[#allocation7 + $0x48] sm:$0xff]
  %v5912 = vld [vmem:[#allocation7 + $0x50] sm:$0xff]
  %v5913 = vld [vmem:[#allocation7 + $0x58] sm:$0xff]
  %v5914 = vld [vmem:[#allocation7 + $0x60] sm:$0xff]
  %v5915 = vld [vmem:[#allocation7 + $0x68] sm:$0xff]
  %v5916 = vld [vmem:[#allocation7 + $0x70] sm:$0xff]
  %v5917 = vld [vmem:[#allocation7 + $0x78] sm:$0xff]
  %v5918 = vld [vmem:[#allocation7 + $0x80] sm:$0xff]
  %v5919 = vld [vmem:[#allocation7 + $0x88] sm:$0xff]
  %v5920 = vld [vmem:[#allocation7 + $0x90] sm:$0xff]
  %v5921 = vld [vmem:[#allocation7 + $0x98] sm:$0xff]
  %v5922 = vld [vmem:[#allocation7 + $0xa0] sm:$0xff]
  %v5923 = vld [vmem:[#allocation7 + $0xa8] sm:$0xff]
  %v5924 = vld [vmem:[#allocation7 + $0xb0] sm:$0xff]
  %v5925 = vld [vmem:[#allocation7 + $0xb8] sm:$0xff]
  %v5926 = vld [vmem:[#allocation7 + $0xc0] sm:$0xff]
  %v5927 = vld [vmem:[#allocation7 + $0xc8] sm:$0xff]
  %v5928 = vld [vmem:[#allocation7 + $0xd0] sm:$0xff]
  %v5929 = vld [vmem:[#allocation7 + $0xd8] sm:$0xff]
  %v5930 = vld [vmem:[#allocation7 + $0xe0] sm:$0xff]
  %v5931 = vld [vmem:[#allocation7 + $0xe8] sm:$0xff]
  %v5932 = vld [vmem:[#allocation7 + $0xf0] sm:$0xff]
  %v5933 = vld [vmem:[#allocation7 + $0xf8] sm:$0xff]
  %v5934 = vpack.c.bf16 %v5904, %v5902
  %v5935 = vpack.c.bf16 %v5905, %v5903
  %v5936 = vpack.c.bf16 %v5908, %v5906
  %v5937 = vpack.c.bf16 %v5909, %v5907
  %v5938 = vpack.c.bf16 %v5912, %v5910
  %v5939 = vpack.c.bf16 %v5913, %v5911
  %v5940 = vpack.c.bf16 %v5916, %v5914
  %v5941 = vpack.c.bf16 %v5917, %v5915
  %v5942 = vpack.c.bf16 %v5920, %v5918
  %v5943 = vpack.c.bf16 %v5921, %v5919
  %v5944 = vpack.c.bf16 %v5924, %v5922
  %v5945 = vpack.c.bf16 %v5925, %v5923
  %v5946 = vpack.c.bf16 %v5928, %v5926
  %v5947 = vpack.c.bf16 %v5929, %v5927
  %v5948 = vpack.c.bf16 %v5932, %v5930
  %v5949 = vpack.c.bf16 %v5933, %v5931
  %v5950 = vld [vmem:[%s10] sm:$0xf]
  %v5951 = vld [vmem:[%s10 + $0x4] sm:$0xf]
  %v5952 = vld [vmem:[%s10 + $0x8] sm:$0xf]
  %v5953 = vld [vmem:[%s10 + $0xc] sm:$0xf]
  %v5954 = vld [vmem:[%s10 + $0x10] sm:$0xf]
  %v5955 = vld [vmem:[%s10 + $0x14] sm:$0xf]
  %v5956 = vld [vmem:[%s10 + $0x18] sm:$0xf]
  %v5957 = vld [vmem:[%s10 + $0x1c] sm:$0xf]
  %v5958 = vld [vmem:[%s10 + $0x20] sm:$0xf]
  %v5959 = vld [vmem:[%s10 + $0x24] sm:$0xf]
  %v5960 = vld [vmem:[%s10 + $0x28] sm:$0xf]
  %v5961 = vld [vmem:[%s10 + $0x2c] sm:$0xf]
  %v5962 = vld [vmem:[%s10 + $0x30] sm:$0xf]
  %v5963 = vld [vmem:[%s10 + $0x34] sm:$0xf]
  %v5964 = vld [vmem:[%s10 + $0x38] sm:$0xf]
  %v5965 = vld [vmem:[%s10 + $0x3c] sm:$0xf]
  %v5966 = vld [vmem:[%s10 + $0x40] sm:$0xf]
  %v5967 = vld [vmem:[%s10 + $0x44] sm:$0xf]
  %v5968 = vld [vmem:[%s10 + $0x48] sm:$0xf]
  %v5969 = vld [vmem:[%s10 + $0x4c] sm:$0xf]
  %v5970 = vld [vmem:[%s10 + $0x50] sm:$0xf]
  %v5971 = vld [vmem:[%s10 + $0x54] sm:$0xf]
  %v5972 = vld [vmem:[%s10 + $0x58] sm:$0xf]
  %v5973 = vld [vmem:[%s10 + $0x5c] sm:$0xf]
  %v5974 = vld [vmem:[%s10 + $0x60] sm:$0xf]
  %v5975 = vld [vmem:[%s10 + $0x64] sm:$0xf]
  %v5976 = vld [vmem:[%s10 + $0x68] sm:$0xf]
  %v5977 = vld [vmem:[%s10 + $0x6c] sm:$0xf]
  %v5978 = vld [vmem:[%s10 + $0x70] sm:$0xf]
  %v5979 = vld [vmem:[%s10 + $0x74] sm:$0xf]
  %v5980 = vld [vmem:[%s10 + $0x78] sm:$0xf]
  %v5981 = vld [vmem:[%s10 + $0x7c] sm:$0xf]
  %v5982 = vld [vmem:[%s15] sm:$0x1]
  %v5984 = vlaneseq
  %v5985 = vshrl.u32 %v5984, 7
  %v5986 = vsub.s32 0, %v5985
  %v5987 = vrot.slane %v5982, %v5986
  %v6021 = vunpack.c.l.b16 %v5950
  %v6022 = vunpack.c.l.b16 %v5951
  %v6023 = vunpack.c.l.b16 %v5952
  %v6024 = vunpack.c.l.b16 %v5953
  %v6025 = vunpack.c.l.b16 %v5954
  %v6026 = vunpack.c.l.b16 %v5955
  %v6027 = vunpack.c.l.b16 %v5956
  %v6028 = vunpack.c.l.b16 %v5957
  %v6029 = vunpack.c.l.b16 %v5958
  %v6030 = vunpack.c.l.b16 %v5959
  %v6031 = vunpack.c.l.b16 %v5960
  %v6032 = vunpack.c.l.b16 %v5961
  %v6033 = vunpack.c.l.b16 %v5962
  %v6034 = vunpack.c.l.b16 %v5963
  %v6035 = vunpack.c.l.b16 %v5964
  %v6036 = vunpack.c.l.b16 %v5965
  %v6037 = vunpack.c.l.b16 %v5966
  %v6038 = vunpack.c.l.b16 %v5967
  %v6039 = vunpack.c.l.b16 %v5968
  %v6040 = vunpack.c.l.b16 %v5969
  %v6041 = vunpack.c.l.b16 %v5970
  %v6042 = vunpack.c.l.b16 %v5971
  %v6043 = vunpack.c.l.b16 %v5972
  %v6044 = vunpack.c.l.b16 %v5973
  %v6045 = vunpack.c.l.b16 %v5974
  %v6046 = vunpack.c.l.b16 %v5975
  %v6047 = vunpack.c.l.b16 %v5976
  %v6048 = vunpack.c.l.b16 %v5977
  %v6049 = vunpack.c.l.b16 %v5978
  %v6050 = vunpack.c.l.b16 %v5979
  %v6051 = vunpack.c.l.b16 %v5980
  %v6052 = vunpack.c.l.b16 %v5981
  %v6053 = vpack.c.b16 %v6022, %v6021
  %v6054 = vpack.c.b16 %v6024, %v6023
  %v6055 = vpack.c.b16 %v6026, %v6025
  %v6056 = vpack.c.b16 %v6028, %v6027
  %v6057 = vpack.c.b16 %v6030, %v6029
  %v6058 = vpack.c.b16 %v6032, %v6031
  %v6059 = vpack.c.b16 %v6034, %v6033
  %v6060 = vpack.c.b16 %v6036, %v6035
  %v6061 = vpack.c.b16 %v6038, %v6037
  %v6062 = vpack.c.b16 %v6040, %v6039
  %v6063 = vpack.c.b16 %v6042, %v6041
  %v6064 = vpack.c.b16 %v6044, %v6043
  %v6065 = vpack.c.b16 %v6046, %v6045
  %v6066 = vpack.c.b16 %v6048, %v6047
  %v6067 = vpack.c.b16 %v6050, %v6049
  %v6068 = vpack.c.b16 %v6052, %v6051
  %6085 = vmatprep.subr.bf16.mxu0 0
  %6086 = vmatpush1.bf16.msra.mxu0 %v6053
  %6087 = vmatprep.subr.bf16.mxu0 0
  %6088 = vmatpush1.bf16.msra.mxu0 %v6054
  %6089 = vmatprep.subr.bf16.mxu0 0
  %6090 = vmatpush1.bf16.msra.mxu0 %v6055
  %6091 = vmatprep.subr.bf16.mxu0 0
  %6092 = vmatpush1.bf16.msra.mxu0 %v6056
  %6093 = vmatprep.subr.bf16.mxu0 0
  %6094 = vmatpush1.bf16.msra.mxu0 %v6057
  %6095 = vmatprep.subr.bf16.mxu0 0
  %6096 = vmatpush1.bf16.msra.mxu0 %v6058
  %6097 = vmatprep.subr.bf16.mxu0 0
  %6098 = vmatpush1.bf16.msra.mxu0 %v6059
  %6099 = vmatprep.subr.bf16.mxu0 0
  %6100 = vmatpush1.bf16.msra.mxu0 %v6060
  %6101 = vmatprep.subr.bf16.mxu0 0
  %6102 = vmatpush1.bf16.msra.mxu0 %v6061
  %6103 = vmatprep.subr.bf16.mxu0 0
  %6104 = vmatpush1.bf16.msra.mxu0 %v6062
  %6105 = vmatprep.subr.bf16.mxu0 0
  %6106 = vmatpush1.bf16.msra.mxu0 %v6063
  %6107 = vmatprep.subr.bf16.mxu0 0
  %6108 = vmatpush1.bf16.msra.mxu0 %v6064
  %6109 = vmatprep.subr.bf16.mxu0 0
  %6110 = vmatpush1.bf16.msra.mxu0 %v6065
  %6111 = vmatprep.subr.bf16.mxu0 0
  %6112 = vmatpush1.bf16.msra.mxu0 %v6066
  %6113 = vmatprep.subr.bf16.mxu0 0
  %6114 = vmatpush1.bf16.msra.mxu0 %v6067
  %6115 = vmatprep.subr.bf16.mxu0 0
  %6116 = vmatpush1.bf16.msra.mxu0 %v6068
  %6117 = vmatprep.mubr.bf16.mxu0 %v5935
  %6118 = vmatmul.mubr.bf16.gmra.mrb[0].mxu0 %v5934
  %v6119 = vpop.f32.mrb[0].mxu0
  %v6120 = vadd.f32 %v5987, %v6119
  %v6121 = vpop.f32.mrb[0].mxu0
  %v6122 = vpop.f32.mrb[0].mxu0
  %v6123 = vadd.f32 %v5987, %v6122
  %v6124 = vpop.f32.mrb[0].mxu0
  %6125 = vmatprep.mubr.bf16.mxu0 %v5937
  %6126 = vmatmul.mubr.bf16.gmra.mrb[0].mxu0 %v5936
  %v6127 = vpop.f32.mrb[0].mxu0
  %v6128 = vadd.f32 %v5987, %v6127
  %v6129 = vpop.f32.mrb[0].mxu0
  %v6130 = vpop.f32.mrb[0].mxu0
  %v6131 = vadd.f32 %v5987, %v6130
  %v6132 = vpop.f32.mrb[0].mxu0
  %6133 = vmatprep.mubr.bf16.mxu0 %v5939
  %6134 = vmatmul.mubr.bf16.gmra.mrb[0].mxu0 %v5938
  %v6135 = vpop.f32.mrb[0].mxu0
  %v6136 = vadd.f32 %v5987, %v6135
  %v6137 = vpop.f32.mrb[0].mxu0
  %v6138 = vpop.f32.mrb[0].mxu0
  %v6139 = vadd.f32 %v5987, %v6138
  %v6140 = vpop.f32.mrb[0].mxu0
  %6141 = vmatprep.mubr.bf16.mxu0 %v5941
  %6142 = vmatmul.mubr.bf16.gmra.mrb[0].mxu0 %v5940
  %v6143 = vpop.f32.mrb[0].mxu0
  %v6144 = vadd.f32 %v5987, %v6143
  %v6145 = vpop.f32.mrb[0].mxu0
  %v6146 = vpop.f32.mrb[0].mxu0
  %v6147 = vadd.f32 %v5987, %v6146
  %v6148 = vpop.f32.mrb[0].mxu0
  %6149 = vmatprep.mubr.bf16.mxu0 %v5943
  %6150 = vmatmul.mubr.bf16.gmra.mrb[0].mxu0 %v5942
  %v6151 = vpop.f32.mrb[0].mxu0
  %v6152 = vadd.f32 %v5987, %v6151
  %v6153 = vpop.f32.mrb[0].mxu0
  %v6154 = vpop.f32.mrb[0].mxu0
  %v6155 = vadd.f32 %v5987, %v6154
  %v6156 = vpop.f32.mrb[0].mxu0
  %6157 = vmatprep.mubr.bf16.mxu0 %v5945
  %6158 = vmatmul.mubr.bf16.gmra.mrb[0].mxu0 %v5944
  %v6159 = vpop.f32.mrb[0].mxu0
  %v6160 = vadd.f32 %v5987, %v6159
  %v6161 = vpop.f32.mrb[0].mxu0
  %v6162 = vpop.f32.mrb[0].mxu0
  %v6163 = vadd.f32 %v5987, %v6162
  %v6164 = vpop.f32.mrb[0].mxu0
  %6165 = vmatprep.mubr.bf16.mxu0 %v5947
  %6166 = vmatmul.mubr.bf16.gmra.mrb[0].mxu0 %v5946
  %v6167 = vpop.f32.mrb[0].mxu0
  %v6168 = vadd.f32 %v5987, %v6167
  %v6169 = vpop.f32.mrb[0].mxu0
  %v6170 = vpop.f32.mrb[0].mxu0
  %v6171 = vadd.f32 %v5987, %v6170
  %v6172 = vpop.f32.mrb[0].mxu0
  %6173 = vmatprep.mubr.bf16.mxu0 %v5949
  %6174 = vmatmul.mubr.bf16.gmra.mrb[0].mxu0 %v5948
  %v6175 = vpop.f32.mrb[0].mxu0
  %v6176 = vadd.f32 %v5987, %v6175
  %v6177 = vpop.f32.mrb[0].mxu0
  %v6178 = vpop.f32.mrb[0].mxu0
  %v6179 = vadd.f32 %v5987, %v6178
  %v6180 = vpop.f32.mrb[0].mxu0
  %6181 = vdwg.mxu0
  %v6182 = vsel %vm448, %v6120, 0.0
  %v6183 = vsel %vm449, %v6123, 0.0
  %6184 = vst [vmem:[%s16] sm:$0xff] %v6182
  %6185 = vst [vmem:[%s16 + $0x8] sm:$0xff] %v6183
  %v6186 = vsel %vm756, %v6128, 0.0
  %v6187 = vsel %vm757, %v6131, 0.0
  %s6188 = scalar_lea.vmem %s16, 16
  %6189 = vst [vmem:[%s6188] sm:$0xff] %v6186
  %6190 = vst [vmem:[%s6188 + $0x8] sm:$0xff] %v6187
  %v6191 = vsel %vm1068, %v6136, 0.0
  %v6192 = vsel %vm1069, %v6139, 0.0
  %s6193 = scalar_lea.vmem %s16, 32
  %6194 = vst [vmem:[%s6193] sm:$0xff] %v6191
  %6195 = vst [vmem:[%s6193 + $0x8] sm:$0xff] %v6192
  %v6196 = vsel %vm1380, %v6144, 0.0
  %v6197 = vsel %vm1381, %v6147, 0.0
  %s6198 = scalar_lea.vmem %s16, 48
  %6199 = vst [vmem:[%s6198] sm:$0xff] %v6196
  %6200 = vst [vmem:[%s6198 + $0x8] sm:$0xff] %v6197
  %v6201 = vsel %vm1382, %v6152, 0.0
  %v6202 = vsel %vm1383, %v6155, 0.0
  %s6203 = scalar_lea.vmem %s16, 64
  %6204 = vst [vmem:[%s6203] sm:$0xff] %v6201
  %6205 = vst [vmem:[%s6203 + $0x8] sm:$0xff] %v6202
  %v6206 = vsel %vm1070, %v6160, 0.0
  %v6207 = vsel %vm1071, %v6163, 0.0
  %s6208 = scalar_lea.vmem %s16, 80
  %6209 = vst [vmem:[%s6208] sm:$0xff] %v6206
  %6210 = vst [vmem:[%s6208 + $0x8] sm:$0xff] %v6207
  %v6211 = vsel %vm758, %v6168, 0.0
  %v6212 = vsel %vm759, %v6171, 0.0
  %s6213 = scalar_lea.vmem %s16, 96
  %6214 = vst [vmem:[%s6213] sm:$0xff] %v6211
  %6215 = vst [vmem:[%s6213 + $0x8] sm:$0xff] %v6212
  %v6216 = vsel %vm450, %v6176, 0.0
  %v6217 = vsel %vm451, %v6179, 0.0
  %s6218 = scalar_lea.vmem %s16, 112
  %6219 = vst [vmem:[%s6218] sm:$0xff] %v6216
  %6220 = vst [vmem:[%s6218 + $0x8] sm:$0xff] %v6217
  // Predicated region
  $region66: #{lstm_forward.1} parent=0 // pred_check
    _
  $region67: #{lstm_forward.1} parent=0 // pred_check_branch
    %6222 = sbr.rel (0) target = $region69
  $region68: #{lstm_forward.1} parent=0 // pred_region
    _
  $region69: #{lstm_forward.1} parent=0 // pred_fallthru
    _
  // Predicated region
  $region70: #{lstm_forward.1} parent=0 // pred_check
    _
  $region71: #{lstm_forward.1} parent=0 // pred_check_branch
    %6224 = sbr.rel (0) target = $region73
  $region72: #{lstm_forward.1} parent=0 // pred_region
    _
  $region73: #{lstm_forward.1} parent=0 // pred_fallthru
    _

</llo_original>
